<compile_context>
chip_gen: v7x
topology: tpu7x:2x2x1
jax: 0.10.0
libtpu: 0.0.40
codegen_flags: <defaults>
</compile_context>

<pallas_src>
import functools
import numpy as np
import jax
import jax.numpy as jnp
from jax.experimental import pallas as pl
from jax.experimental.pallas import tpu as pltpu

F32 = jnp.float32
BF16 = jnp.bfloat16
LN_EPS = 1e-6              # MAE / timm ViT convention (norm_layer=LayerNorm(eps=1e-6))
FIRST_PATCH_IDX = 1        # cls token occupies index 0
VMEM_LIMIT = 32 * 1024 * 1024  # explicit scoped-VMEM budget; safe on v5e/v6e/v7x (64 MiB phys)


def _pick_block(dim, cap, quantum):
    """Largest block <= cap that is a multiple of `quantum` and divides `dim`,
    else the full dim (full-dim blocks are always legal for BlockSpec)."""
    if dim <= cap:
        return dim
    b = (cap // quantum) * quantum
    while b >= quantum:
        if dim % b == 0:
            return b
        b -= quantum
    return dim


def _gelu(y):
    # tanh-approx GELU (EUP-friendly); see TODO above re: exact erf.
    c = 0.7978845608028654
    return 0.5 * y * (1.0 + jnp.tanh(c * (y + 0.044715 * y * y * y)))


# -------------------- fused LN + matmul (+bias, +gelu, +residual) --------------------

def _fused_linear_kernel(*refs, has_ln, has_resid, act):
    idx = 0
    x_ref = refs[idx]; idx += 1
    if has_ln:
        g_ref, bln_ref = refs[idx], refs[idx + 1]; idx += 2
    w_ref, b_ref = refs[idx], refs[idx + 1]; idx += 2
    if has_resid:
        r_ref = refs[idx]; idx += 1
    o_ref = refs[idx]

    x = x_ref[...]
    if has_ln:
        xf = x.astype(F32)
        mu = jnp.mean(xf, axis=-1, keepdims=True)
        var = jnp.mean(jnp.square(xf - mu), axis=-1, keepdims=True)
        xf = (xf - mu) * jax.lax.rsqrt(var + LN_EPS)
        xf = xf * g_ref[...].astype(F32) + bln_ref[...].astype(F32)
        xmm = xf.astype(BF16)
    else:
        xmm = x.astype(BF16)

    y = jnp.dot(xmm, w_ref[...], preferred_element_type=F32)   # bf16 MXU, f32 acc
    y = y + b_ref[...].astype(F32)
    if act == "gelu":
        y = _gelu(y)
    if has_resid:
        y = y + r_ref[...].astype(F32)
    o_ref[...] = y.astype(o_ref.dtype)


def fused_linear(x, w, b, *, ln=None, resid=None, act=None, out_dtype=BF16):
    """y = [resid +] act( LN?(x) @ w + b ), tiled over (rows, cols)."""
    *lead, K = x.shape
    M = int(np.prod(lead))
    N = w.shape[1]
    x2 = x.reshape(M, K).astype(BF16)
    w = w.astype(BF16)

    bm = _pick_block(M, 512, 8)
    bn = _pick_block(N, 512, 128)
    grid = (M // bm, N // bn)

    args = [x2]
    in_specs = [pl.BlockSpec((bm, K), lambda i, j: (i, 0))]
    if ln is not None:
        g, bln = ln
        args += [g.reshape(1, K).astype(F32), bln.reshape(1, K).astype(F32)]
        in_specs += [pl.BlockSpec((1, K), lambda i, j: (0, 0)),
                     pl.BlockSpec((1, K), lambda i, j: (0, 0))]
    args += [w, b.reshape(1, N).astype(F32)]
    in_specs += [pl.BlockSpec((K, bn), lambda i, j: (0, j)),
                 pl.BlockSpec((1, bn), lambda i, j: (0, j))]
    if resid is not None:
        args.append(resid.reshape(M, N).astype(BF16))
        in_specs.append(pl.BlockSpec((bm, bn), lambda i, j: (i, j)))

    kernel = functools.partial(_fused_linear_kernel,
                               has_ln=ln is not None,
                               has_resid=resid is not None,
                               act=act)
    bytes_acc = int(2 * M * K + 2 * K * N + jnp.dtype(out_dtype).itemsize * M * N)
    out = pl.pallas_call(
        kernel,
        grid=grid,
        in_specs=in_specs,
        out_specs=pl.BlockSpec((bm, bn), lambda i, j: (i, j)),
        out_shape=jax.ShapeDtypeStruct((M, N), out_dtype),
        compiler_params=pltpu.CompilerParams(
            dimension_semantics=("parallel", "parallel"),
            vmem_limit_bytes=VMEM_LIMIT),
        cost_estimate=pl.CostEstimate(
            flops=2 * M * K * N,
            transcendentals=(M * N if act == "gelu" else 0),
            bytes_accessed=bytes_acc),
    )(*args)
    return out.reshape(*lead, N)


# -------------------- fused MLP block: x + fc2(gelu(fc1(LN(x)))) --------------------

def _mlp_block_kernel(x_ref, g_ref, bln_ref, w1_ref, b1_ref, w2_ref, b2_ref, o_ref):
    x = x_ref[...].astype(F32)
    mu = jnp.mean(x, axis=-1, keepdims=True)
    var = jnp.mean(jnp.square(x - mu), axis=-1, keepdims=True)
    xn = (x - mu) * jax.lax.rsqrt(var + LN_EPS)
    xn = xn * g_ref[...].astype(F32) + bln_ref[...].astype(F32)
    h = jnp.dot(xn.astype(BF16), w1_ref[...], preferred_element_type=F32)
    h = _gelu(h + b1_ref[...].astype(F32))
    y = jnp.dot(h.astype(BF16), w2_ref[...], preferred_element_type=F32)
    y = y + b2_ref[...].astype(F32)
    o_ref[...] = (x + y).astype(o_ref.dtype)


def mlp_block(x, p):
    """Second half of a transformer block, fully fused (hidden 4D never hits HBM)."""
    *lead, D = x.shape
    M = int(np.prod(lead))
    Dh = p['fc1_w'].shape[1]
    x2 = x.reshape(M, D).astype(BF16)
    bm = _pick_block(M, 256, 8)   # 256-row cap: keeps [bm, 4D] f32 hidden small on v7x
    out = pl.pallas_call(
        _mlp_block_kernel,
        grid=(M // bm,),
        in_specs=[
            pl.BlockSpec((bm, D), lambda i: (i, 0)),
            pl.BlockSpec((1, D), lambda i: (0, 0)),
            pl.BlockSpec((1, D), lambda i: (0, 0)),
            pl.BlockSpec((D, Dh), lambda i: (0, 0)),
            pl.BlockSpec((1, Dh), lambda i: (0, 0)),
            pl.BlockSpec((Dh, D), lambda i: (0, 0)),
            pl.BlockSpec((1, D), lambda i: (0, 0)),
        ],
        out_specs=pl.BlockSpec((bm, D), lambda i: (i, 0)),
        out_shape=jax.ShapeDtypeStruct((M, D), BF16),
        compiler_params=pltpu.CompilerParams(
            dimension_semantics=("parallel",), vmem_limit_bytes=VMEM_LIMIT),
        cost_estimate=pl.CostEstimate(
            flops=4 * M * D * Dh,
            transcendentals=M * Dh,
            bytes_accessed=int(4 * 2 * M * D + 2 * 2 * D * Dh)),
    )(x2,
      p['ln2_g'].reshape(1, D).astype(F32),
      p['ln2_b'].reshape(1, D).astype(F32),
      p['fc1_w'].astype(BF16),
      p['fc1_b'].reshape(1, Dh).astype(F32),
      p['fc2_w'].astype(BF16),
      p['fc2_b'].reshape(1, D).astype(F32))
    return out.reshape(*lead, D)


# -------------------- attention: consumes [B, L, 3D] directly, emits [B, L, D] --------------------

def _attn_kernel(qkv_ref, o_ref, *, num_heads, head_dim, model_dim, scale):
    qkv = qkv_ref[0]                                   # [L, 3D] bf16
    outs = []
    for h in range(num_heads):                         # static loop over heads
        q = qkv[:, h * head_dim:(h + 1) * head_dim]
        k = qkv[:, model_dim + h * head_dim: model_dim + (h + 1) * head_dim]
        v = qkv[:, 2 * model_dim + h * head_dim: 2 * model_dim + (h + 1) * head_dim]
        # contract last dims directly (no explicit k.T / XLU transpose)
        s = jax.lax.dot_general(q, k, (((1,), (1,)), ((), ())),
                                preferred_element_type=F32) * scale
        s = s - jnp.max(s, axis=-1, keepdims=True)
        p = jnp.exp(s)
        p = p * pl.reciprocal(jnp.sum(p, axis=-1, keepdims=True), approx=True)
        outs.append(jnp.dot(p.astype(BF16), v, preferred_element_type=F32))
    # lane-dense [L, D] output (all heads packed on the lane axis)
    o_ref[0] = jnp.concatenate(outs, axis=-1).astype(o_ref.dtype)


def attention(qkv, num_heads):
    # TODO(synk): for long sequences, tile L with an online-softmax (flash) variant.
    B, L, threeD = qkv.shape
    D = threeD // 3
    dh = D // num_heads
    kernel = functools.partial(_attn_kernel, num_heads=num_heads, head_dim=dh,
                               model_dim=D, scale=1.0 / float(dh) ** 0.5)
    return pl.pallas_call(
        kernel,
        grid=(B,),
        in_specs=[pl.BlockSpec((1, L, threeD), lambda b: (b, 0, 0))],
        out_specs=pl.BlockSpec((1, L, D), lambda b: (b, 0, 0)),
        out_shape=jax.ShapeDtypeStruct((B, L, D), BF16),
        compiler_params=pltpu.CompilerParams(
            dimension_semantics=("parallel",), vmem_limit_bytes=VMEM_LIMIT),
        cost_estimate=pl.CostEstimate(
            flops=4 * B * L * L * D,
            transcendentals=B * num_heads * L * L,
            bytes_accessed=int(2 * B * L * threeD + 2 * B * L * D)),
    )(qkv.astype(BF16))


# -------------------- transformer block --------------------

def transformer_block(x, p, num_heads):
    # attention half: fused LN1+QKV, lane-dense attention, fused proj+residual
    qkv = fused_linear(x, p['qkv_w'], p['qkv_b'], ln=(p['ln1_g'], p['ln1_b']))
    attn = attention(qkv, num_heads)
    x = fused_linear(attn, p['proj_w'], p['proj_b'], resid=x)
    # MLP half: fused LN2+fc1+GELU+fc2+residual
    return mlp_block(x, p)


# -------------------- encoder / decoder / head --------------------

def patchify(img, patch):
    # NCHW -> [B, num_patches, C*patch*patch]; ordering matches Conv2d(patch, stride=patch).
    B, C, H, W = img.shape
    gh, gw = H // patch, W // patch
    x = img.reshape(B, C, gh, patch, gw, patch)
    x = jnp.transpose(x, (0, 2, 4, 1, 3, 5))
    return x.reshape(B, gh * gw, C * patch * patch)


def encoder_forward(p, img, kept_ids, cfg):
    """ViT encoder up to (not including) its final LN; final LN is fused downstream."""
    B = img.shape[0]
    D = cfg['D_ENC']
    patches = patchify(img, cfg['PATCH']).astype(BF16)
    t = fused_linear(patches, p['patch_w'], p['patch_b'])       # conv patch-embed as matmul
    t = t + p['pos_embed'][:, 1:, :]
    if kept_ids is not None:
        # TODO(synk): fold this gather into the patch-embed kernel via PrefetchScalarGridSpec.
        t = t[:, kept_ids, :]
    cls = jnp.broadcast_to(p['cls_token'] + p['pos_embed'][:, :1, :], (B, 1, D))
    x = jnp.concatenate([cls, t], axis=1).astype(BF16)
    for blk in p['blocks']:
        x = transformer_block(x, blk, cfg['H_ENC'])
    return x


def decoder_head_forward(dec, head, enc_out, enc_ln, kept_ids, cfg):
    B = enc_out.shape[0]
    Dd = cfg['D_DEC']
    L = cfg['NUM_PATCHES']
    # encoder final LN fused with decoder_embed
    x = fused_linear(enc_out, dec['embed_w'], dec['embed_b'], ln=enc_ln)   # [B, 1+kept, Dd]
    cls, kept_tok = x[:, :1, :], x[:, 1:, :]
    # insert mask tokens at masked positions (symmetric masking -> static ids)
    # TODO(synk): fold this scatter into the decoder_embed kernel via scalar-prefetch indices.
    full = jnp.broadcast_to(dec['mask_token'].astype(BF16), (B, L, Dd))
    full = full.at[:, kept_ids, :].set(kept_tok)
    x = (jnp.concatenate([cls, full], axis=1) + dec['pos_embed']).astype(BF16)
    for blk in dec['blocks']:
        x = transformer_block(x, blk, cfg['H_DEC'])
    # decoder final LN fused with the prediction head; cls dropped afterwards
    out = fused_linear(x, head['w'], head['b'],
                       ln=(dec['ln_g'], dec['ln_b']), out_dtype=F32)
    return out[:, FIRST_PATCH_IDX:, :]


# -------------------- MAE forward (matches the nn.Module spec) --------------------

def mae_forward_masked(params, x, mask_dict, cfg):
    kept_ids = mask_dict['kept_ids']
    enc_out = encoder_forward(params['encoder'], x, kept_ids, cfg)
    enc_ln = (params['encoder']['ln_g'], params['encoder']['ln_b'])
    return decoder_head_forward(params['decoder'], params['head'],
                                enc_out, enc_ln, kept_ids, cfg)


def mae_forward_standard(params, x, cfg):
    enc_out = encoder_forward(params['encoder'], x, None, cfg)
    enc_ln = (params['encoder']['ln_g'], params['encoder']['ln_b'])
    return fused_linear(enc_out, params['head']['w'], params['head']['b'],
                        ln=enc_ln, out_dtype=F32)


def mae_forward(params, x, mask=None, cfg=None):
    if mask is not None:
        return mae_forward_masked(params, x, mask, cfg)
    return mae_forward_standard(params, x, cfg)


# -------------------- deterministic parameter init (bf16 weights, f32 norms/bias) --------------------

def _dense(key, fan_in, fan_out):
    w = (jax.random.normal(key, (fan_in, fan_out), F32) * 0.02).astype(BF16)
    return w, jnp.zeros((fan_out,), F32)


def _init_block(key, D):
    ks = jax.random.split(key, 4)
    qkv_w, qkv_b = _dense(ks[0], D, 3 * D)
    proj_w, proj_b = _dense(ks[1], D, D)
    fc1_w, fc1_b = _dense(ks[2], D, 4 * D)
    fc2_w, fc2_b = _dense(ks[3], 4 * D, D)
    return dict(qkv_w=qkv_w, qkv_b=qkv_b, proj_w=proj_w, proj_b=proj_b,
                fc1_w=fc1_w, fc1_b=fc1_b, fc2_w=fc2_w, fc2_b=fc2_b,
                ln1_g=jnp.ones((D,), F32), ln1_b=jnp.zeros((D,), F32),
                ln2_g=jnp.ones((D,), F32), ln2_b=jnp.zeros((D,), F32))


def init_params(key, cfg):
    D, Dd, P, C, L = cfg['D_ENC'], cfg['D_DEC'], cfg['PATCH'], cfg['C'], cfg['NUM_PATCHES']
    keys = jax.random.split(key, 9)
    pw, pb = _dense(keys[0], P * P * C, D)
    enc = dict(
        patch_w=pw, patch_b=pb,
        cls_token=jax.random.normal(keys[1], (1, 1, D), F32) * 0.02,
        pos_embed=jax.random.normal(keys[2], (1, 1 + L, D), F32) * 0.02,
        blocks=[_init_block(jax.random.fold_in(keys[3], i), D)
                for i in range(cfg['DEPTH_ENC'])],
        ln_g=jnp.ones((D,), F32), ln_b=jnp.zeros((D,), F32))
    ew, eb = _dense(keys[4], D, Dd)
    dec = dict(
        embed_w=ew, embed_b=eb,
        mask_token=jax.random.normal(keys[5], (1, 1, Dd), F32) * 0.02,
        pos_embed=jax.random.normal(keys[6], (1, 1 + L, Dd), F32) * 0.02,
        blocks=[_init_block(jax.random.fold_in(keys[7], i), Dd)
                for i in range(cfg['DEPTH_DEC'])],
        ln_g=jnp.ones((Dd,), F32), ln_b=jnp.zeros((Dd,), F32))
    hw, hb = _dense(keys[8], Dd, P * P * C)
    return dict(encoder=enc, decoder=dec, head=dict(w=hw, b=hb))


# -------------------- main --------------------

if __name__ == "__main__":
    cfg = dict(PATCH=4, C=3, IMG=32,
               D_ENC=128, H_ENC=4, DEPTH_ENC=2,
               D_DEC=128, H_DEC=4, DEPTH_DEC=1)
    g = cfg['IMG'] // cfg['PATCH']
    cfg['NUM_PATCHES'] = g * g                            # 64 patches

    key = jax.random.PRNGKey(0)
    kp, kx = jax.random.split(key)
    params = init_params(kp, cfg)

    B = 2
    img = jax.random.normal(kx, (B, cfg['C'], cfg['IMG'], cfg['IMG']), F32)

    # symmetric batch masking: same kept ids for every sample (50% masked)
    L = cfg['NUM_PATCHES']
    rng = np.random.RandomState(0)
    kept = np.sort(rng.permutation(L)[: L // 2]).astype(np.int32)
    mask = np.ones((B, L), np.float32)
    mask[:, kept] = 0.0
    mask_dict = {'mask': jnp.asarray(mask), 'kept_ids': kept}

    fwd = jax.jit(lambda p_, x_: mae_forward(p_, x_, mask=mask_dict, cfg=cfg))
    out = jax.block_until_ready(fwd(params, img))

    expected = (B, cfg['NUM_PATCHES'], cfg['PATCH'] ** 2 * cfg['C'])
    assert out.shape == expected, (out.shape, expected)
    assert np.all(np.isfinite(np.asarray(out, dtype=np.float32)))

    print("KERNEL_OK")
</pallas_src>

<mosaic_0001>
module attributes {stable_mosaic.version = 11 : i64} {
  func.func @_fused_linear_kernel(%arg0: i32, %arg1: i32, %arg2: memref<128x48xbf16, #tpu.memory_space<vmem>>, %arg3: memref<48x128xbf16, #tpu.memory_space<vmem>>, %arg4: memref<1x128xf32, #tpu.memory_space<vmem>>, %arg5: memref<128x128xbf16, #tpu.memory_space<vmem>>) attributes {dimension_semantics = [#tpu.dimension_semantics<parallel>, #tpu.dimension_semantics<parallel>], iteration_bounds = array<i64: 1, 1>, scalar_prefetch = 0 : i64, scratch_operands = 0 : i64, tpu.core_type = #tpu.core_type<tc>, window_params = [{transform_indices = @transform_0, window_bounds = array<i64: 128, 48>}, {transform_indices = @transform_1, window_bounds = array<i64: 48, 128>}, {transform_indices = @transform_2, window_bounds = array<i64: 1, 128>}, {transform_indices = @transform_3, window_bounds = array<i64: 128, 128>}]} {
    %c0 = arith.constant 0 : index
    %c0_0 = arith.constant 0 : index
    %0 = vector.load %arg2[%c0, %c0_0] : memref<128x48xbf16, #tpu.memory_space<vmem>>, vector<128x48xbf16>
    %c0_1 = arith.constant 0 : index
    %c0_2 = arith.constant 0 : index
    %1 = vector.load %arg3[%c0_1, %c0_2] : memref<48x128xbf16, #tpu.memory_space<vmem>>, vector<48x128xbf16>
    %cst = arith.constant dense<0.000000e+00> : vector<128x128xf32>
    %2 = tpu.matmul %0, %1, %cst {dimension_numbers = #tpu.dot_dimension_numbers<[1], [0], [0], [1], [0, 0, 1, 1], [], []>} : vector<128x48xbf16>, vector<48x128xbf16>, vector<128x128xf32> -> vector<128x128xf32>
    %c0_3 = arith.constant 0 : index
    %c0_4 = arith.constant 0 : index
    %3 = vector.load %arg4[%c0_3, %c0_4] : memref<1x128xf32, #tpu.memory_space<vmem>>, vector<1x128xf32>
    %4 = vector.broadcast %3 : vector<1x128xf32> to vector<128x128xf32>
    %5 = arith.addf %2, %4 : vector<128x128xf32>
    %6 = arith.truncf %5 : vector<128x128xf32> to vector<128x128xbf16>
    %c0_5 = arith.constant 0 : index
    %c0_6 = arith.constant 0 : index
    %7 = vector.load %arg5[%c0_5, %c0_6] : memref<128x128xbf16, #tpu.memory_space<vmem>>, vector<128x128xbf16>
    tpu.vector_store %arg5[%c0_5, %c0_6], %6 {strides = array<i32>} : memref<128x128xbf16, #tpu.memory_space<vmem>>, vector<128x128xbf16>,
    return
  }
  func.func @transform_0(%arg0: i32, %arg1: i32) -> (i32, i32) {
    %c0_i32 = arith.constant 0 : i32
    %c0_i32_0 = arith.constant 0 : i32
    return %arg0, %c0_i32 : i32, i32
  }
  func.func @transform_1(%arg0: i32, %arg1: i32) -> (i32, i32) {
    %c0_i32 = arith.constant 0 : i32
    %c0_i32_0 = arith.constant 0 : i32
    return %c0_i32, %arg1 : i32, i32
  }
  func.func @transform_2(%arg0: i32, %arg1: i32) -> (i32, i32) {
    %c0_i32 = arith.constant 0 : i32
    %c0_i32_0 = arith.constant 0 : i32
    return %c0_i32, %arg1 : i32, i32
  }
  func.func @transform_3(%arg0: i32, %arg1: i32) -> (i32, i32) {
    %c0_i32 = arith.constant 0 : i32
    return %arg0, %arg1 : i32, i32
  }
}

module attributes {stable_mosaic.version = 11 : i64} {
  func.func @_fused_linear_kernel(%arg0: i32, %arg1: i32, %arg2: memref<66x128xbf16, #tpu.memory_space<vmem>>, %arg3: memref<1x128xf32, #tpu.memory_space<vmem>>, %arg4: memref<1x128xf32, #tpu.memory_space<vmem>>, %arg5: memref<128x384xbf16, #tpu.memory_space<vmem>>, %arg6: memref<1x384xf32, #tpu.memory_space<vmem>>, %arg7: memref<66x384xbf16, #tpu.memory_space<vmem>>) attributes {dimension_semantics = [#tpu.dimension_semantics<parallel>, #tpu.dimension_semantics<parallel>], iteration_bounds = array<i64: 1, 1>, scalar_prefetch = 0 : i64, scratch_operands = 0 : i64, tpu.core_type = #tpu.core_type<tc>, window_params = [{transform_indices = @transform_0, window_bounds = array<i64: 66, 128>}, {pipeline_mode = #tpu.pipeline_mode<synchronous>, transform_indices = @transform_1, window_bounds = array<i64: 1, 128>}, {pipeline_mode = #tpu.pipeline_mode<synchronous>, transform_indices = @transform_2, window_bounds = array<i64: 1, 128>}, {transform_indices = @transform_3, window_bounds = array<i64: 128, 384>}, {transform_indices = @transform_4, window_bounds = array<i64: 1, 384>}, {transform_indices = @transform_5, window_bounds = array<i64: 66, 384>}]} {
    %c0 = arith.constant 0 : index
    %c0_0 = arith.constant 0 : index
    %0 = vector.load %arg2[%c0, %c0_0] : memref<66x128xbf16, #tpu.memory_space<vmem>>, vector<66x128xbf16>
    %1 = arith.extf %0 : vector<66x128xbf16> to vector<66x128xf32>
    %cst = arith.constant dense<0.000000e+00> : vector<66xf32>
    %2 = vector.multi_reduction <add>, %1, %cst [1] : vector<66x128xf32> to vector<66xf32>
    %3 = vector.shape_cast %2 : vector<66xf32> to vector<66x1xf32>
    %cst_1 = arith.constant 1.280000e+02 : f32
    %4 = vector.broadcast %cst_1 : f32 to vector<66x1xf32>
    %5 = arith.divf %3, %4 : vector<66x1xf32>
    %6 = vector.broadcast %5 : vector<66x1xf32> to vector<66x128xf32>
    %7 = arith.subf %1, %6 : vector<66x128xf32>
    %8 = arith.mulf %7, %7 : vector<66x128xf32>
    %cst_2 = arith.constant dense<0.000000e+00> : vector<66xf32>
    %9 = vector.multi_reduction <add>, %8, %cst_2 [1] : vector<66x128xf32> to vector<66xf32>
    %10 = vector.shape_cast %9 : vector<66xf32> to vector<66x1xf32>
    %cst_3 = arith.constant 1.280000e+02 : f32
    %11 = vector.broadcast %cst_3 : f32 to vector<66x1xf32>
    %12 = arith.divf %10, %11 : vector<66x1xf32>
    %13 = vector.broadcast %5 : vector<66x1xf32> to vector<66x128xf32>
    %14 = arith.subf %1, %13 : vector<66x128xf32>
    %cst_4 = arith.constant 9.99999997E-7 : f32
    %15 = vector.broadcast %cst_4 : f32 to vector<66x1xf32>
    %16 = arith.addf %12, %15 : vector<66x1xf32>
    %17 = math.rsqrt %16 : vector<66x1xf32>
    %18 = vector.broadcast %17 : vector<66x1xf32> to vector<66x128xf32>
    %19 = arith.mulf %14, %18 : vector<66x128xf32>
    %c0_5 = arith.constant 0 : index
    %c0_6 = arith.constant 0 : index
    %20 = vector.load %arg3[%c0_5, %c0_6] : memref<1x128xf32, #tpu.memory_space<vmem>>, vector<1x128xf32>
    %21 = vector.broadcast %20 : vector<1x128xf32> to vector<66x128xf32>
    %22 = arith.mulf %19, %21 : vector<66x128xf32>
    %c0_7 = arith.constant 0 : index
    %c0_8 = arith.constant 0 : index
    %23 = vector.load %arg4[%c0_7, %c0_8] : memref<1x128xf32, #tpu.memory_space<vmem>>, vector<1x128xf32>
    %24 = vector.broadcast %23 : vector<1x128xf32> to vector<66x128xf32>
    %25 = arith.addf %22, %24 : vector<66x128xf32>
    %26 = arith.truncf %25 : vector<66x128xf32> to vector<66x128xbf16>
    %c0_9 = arith.constant 0 : index
    %c0_10 = arith.constant 0 : index
    %27 = vector.load %arg5[%c0_9, %c0_10] : memref<128x384xbf16, #tpu.memory_space<vmem>>, vector<128x384xbf16>
    %cst_11 = arith.constant dense<0.000000e+00> : vector<66x384xf32>
    %28 = tpu.matmul %26, %27, %cst_11 {dimension_numbers = #tpu.dot_dimension_numbers<[1], [0], [0], [1], [0, 0, 1, 1], [], []>} : vector<66x128xbf16>, vector<128x384xbf16>, vector<66x384xf32> -> vector<66x384xf32>
    %c0_12 = arith.constant 0 : index
    %c0_13 = arith.constant 0 : index
    %29 = vector.load %arg6[%c0_12, %c0_13] : memref<1x384xf32, #tpu.memory_space<vmem>>, vector<1x384xf32>
    %30 = vector.broadcast %29 : vector<1x384xf32> to vector<66x384xf32>
    %31 = arith.addf %28, %30 : vector<66x384xf32>
    %32 = arith.truncf %31 : vector<66x384xf32> to vector<66x384xbf16>
    %c0_14 = arith.constant 0 : index
    %c0_15 = arith.constant 0 : index
    %33 = vector.load %arg7[%c0_14, %c0_15] : memref<66x384xbf16, #tpu.memory_space<vmem>>, vector<66x384xbf16>
    tpu.vector_store %arg7[%c0_14, %c0_15], %32 {strides = array<i32>} : memref<66x384xbf16, #tpu.memory_space<vmem>>, vector<66x384xbf16>,
    return
  }
  func.func @transform_0(%arg0: i32, %arg1: i32) -> (i32, i32) {
    %c0_i32 = arith.constant 0 : i32
    %c0_i32_0 = arith.constant 0 : i32
    return %arg0, %c0_i32 : i32, i32
  }
  func.func @transform_1(%arg0: i32, %arg1: i32) -> (i32, i32) {
    %c0_i32 = arith.constant 0 : i32
    %c0_i32_0 = arith.constant 0 : i32
    %c0_i32_1 = arith.constant 0 : i32
    return %c0_i32, %c0_i32_0 : i32, i32
  }
  func.func @transform_2(%arg0: i32, %arg1: i32) -> (i32, i32) {
    %c0_i32 = arith.constant 0 : i32
    %c0_i32_0 = arith.constant 0 : i32
    %c0_i32_1 = arith.constant 0 : i32
    return %c0_i32, %c0_i32_0 : i32, i32
  }
  func.func @transform_3(%arg0: i32, %arg1: i32) -> (i32, i32) {
    %c0_i32 = arith.constant 0 : i32
    %c0_i32_0 = arith.constant 0 : i32
    return %c0_i32, %arg1 : i32, i32
  }
  func.func @transform_4(%arg0: i32, %arg1: i32) -> (i32, i32) {
    %c0_i32 = arith.constant 0 : i32
    %c0_i32_0 = arith.constant 0 : i32
    return %c0_i32, %arg1 : i32, i32
  }
  func.func @transform_5(%arg0: i32, %arg1: i32) -> (i32, i32) {
    %c0_i32 = arith.constant 0 : i32
    return %arg0, %arg1 : i32, i32
  }
}

module attributes {stable_mosaic.version = 11 : i64} {
  func.func @_attn_kernel(%arg0: i32, %arg1: memref<1x33x384xbf16, #tpu.memory_space<vmem>>, %arg2: memref<1x33x128xbf16, #tpu.memory_space<vmem>>) attributes {dimension_semantics = [#tpu.dimension_semantics<parallel>], iteration_bounds = array<i64: 2>, scalar_prefetch = 0 : i64, scratch_operands = 0 : i64, tpu.core_type = #tpu.core_type<tc>, window_params = [{transform_indices = @transform_0, window_bounds = array<i64: 1, 33, 384>}, {transform_indices = @transform_1, window_bounds = array<i64: 1, 33, 128>}]} {
    %c0 = arith.constant 0 : index
    %c0_0 = arith.constant 0 : index
    %c0_1 = arith.constant 0 : index
    %0 = vector.load %arg1[%c0, %c0_0, %c0_1] : memref<1x33x384xbf16, #tpu.memory_space<vmem>>, vector<1x33x384xbf16>
    %1 = vector.shape_cast %0 : vector<1x33x384xbf16> to vector<33x384xbf16>
    %2 = vector.extract_strided_slice %1 {offsets = [0, 0], sizes = [33, 32], strides = [1, 1]} : vector<33x384xbf16> to vector<33x32xbf16>
    %3 = vector.extract_strided_slice %1 {offsets = [0, 128], sizes = [33, 32], strides = [1, 1]} : vector<33x384xbf16> to vector<33x32xbf16>
    %4 = vector.extract_strided_slice %1 {offsets = [0, 256], sizes = [33, 32], strides = [1, 1]} : vector<33x384xbf16> to vector<33x32xbf16>
    %cst = arith.constant dense<0.000000e+00> : vector<33x33xf32>
    %5 = tpu.matmul %2, %3, %cst {dimension_numbers = #tpu.dot_dimension_numbers<[1], [1], [0], [0], [0, 0, 1, 0], [], []>} : vector<33x32xbf16>, vector<33x32xbf16>, vector<33x33xf32> -> vector<33x33xf32>
    %cst_2 = arith.constant 0.176776692 : f32
    %6 = vector.broadcast %cst_2 : f32 to vector<33x33xf32>
    %7 = arith.mulf %5, %6 : vector<33x33xf32>
    %cst_3 = arith.constant dense<0xFF800000> : vector<33xf32>
    %8 = vector.multi_reduction <maximumf>, %7, %cst_3 [1] : vector<33x33xf32> to vector<33xf32>
    %9 = vector.shape_cast %8 : vector<33xf32> to vector<33x1xf32>
    %10 = vector.broadcast %9 : vector<33x1xf32> to vector<33x33xf32>
    %11 = arith.subf %7, %10 : vector<33x33xf32>
    %12 = math.exp %11 : vector<33x33xf32>
    %cst_4 = arith.constant dense<0.000000e+00> : vector<33xf32>
    %13 = vector.multi_reduction <add>, %12, %cst_4 [1] : vector<33x33xf32> to vector<33xf32>
    %14 = vector.shape_cast %13 : vector<33xf32> to vector<33x1xf32>
    %15 = tpu.reciprocal %14 {approx = true} : vector<33x1xf32> -> vector<33x1xf32>
    %16 = vector.broadcast %15 : vector<33x1xf32> to vector<33x33xf32>
    %17 = arith.mulf %12, %16 : vector<33x33xf32>
    %18 = arith.truncf %17 : vector<33x33xf32> to vector<33x33xbf16>
    %cst_5 = arith.constant dense<0.000000e+00> : vector<33x32xf32>
    %19 = tpu.matmul %18, %4, %cst_5 {dimension_numbers = #tpu.dot_dimension_numbers<[1], [0], [0], [1], [0, 0, 1, 1], [], []>} : vector<33x33xbf16>, vector<33x32xbf16>, vector<33x32xf32> -> vector<33x32xf32>
    %20 = vector.extract_strided_slice %1 {offsets = [0, 32], sizes = [33, 32], strides = [1, 1]} : vector<33x384xbf16> to vector<33x32xbf16>
    %21 = vector.extract_strided_slice %1 {offsets = [0, 160], sizes = [33, 32], strides = [1, 1]} : vector<33x384xbf16> to vector<33x32xbf16>
    %22 = vector.extract_strided_slice %1 {offsets = [0, 288], sizes = [33, 32], strides = [1, 1]} : vector<33x384xbf16> to vector<33x32xbf16>
    %cst_6 = arith.constant dense<0.000000e+00> : vector<33x33xf32>
    %23 = tpu.matmul %20, %21, %cst_6 {dimension_numbers = #tpu.dot_dimension_numbers<[1], [1], [0], [0], [0, 0, 1, 0], [], []>} : vector<33x32xbf16>, vector<33x32xbf16>, vector<33x33xf32> -> vector<33x33xf32>
    %cst_7 = arith.constant 0.176776692 : f32
    %24 = vector.broadcast %cst_7 : f32 to vector<33x33xf32>
    %25 = arith.mulf %23, %24 : vector<33x33xf32>
    %cst_8 = arith.constant dense<0xFF800000> : vector<33xf32>
    %26 = vector.multi_reduction <maximumf>, %25, %cst_8 [1] : vector<33x33xf32> to vector<33xf32>
    %27 = vector.shape_cast %26 : vector<33xf32> to vector<33x1xf32>
    %28 = vector.broadcast %27 : vector<33x1xf32> to vector<33x33xf32>
    %29 = arith.subf %25, %28 : vector<33x33xf32>
    %30 = math.exp %29 : vector<33x33xf32>
    %cst_9 = arith.constant dense<0.000000e+00> : vector<33xf32>
    %31 = vector.multi_reduction <add>, %30, %cst_9 [1] : vector<33x33xf32> to vector<33xf32>
    %32 = vector.shape_cast %31 : vector<33xf32> to vector<33x1xf32>
    %33 = tpu.reciprocal %32 {approx = true} : vector<33x1xf32> -> vector<33x1xf32>
    %34 = vector.broadcast %33 : vector<33x1xf32> to vector<33x33xf32>
    %35 = arith.mulf %30, %34 : vector<33x33xf32>
    %36 = arith.truncf %35 : vector<33x33xf32> to vector<33x33xbf16>
    %cst_10 = arith.constant dense<0.000000e+00> : vector<33x32xf32>
    %37 = tpu.matmul %36, %22, %cst_10 {dimension_numbers = #tpu.dot_dimension_numbers<[1], [0], [0], [1], [0, 0, 1, 1], [], []>} : vector<33x33xbf16>, vector<33x32xbf16>, vector<33x32xf32> -> vector<33x32xf32>
    %38 = vector.extract_strided_slice %1 {offsets = [0, 64], sizes = [33, 32], strides = [1, 1]} : vector<33x384xbf16> to vector<33x32xbf16>
    %39 = vector.extract_strided_slice %1 {offsets = [0, 192], sizes = [33, 32], strides = [1, 1]} : vector<33x384xbf16> to vector<33x32xbf16>
    %40 = vector.extract_strided_slice %1 {offsets = [0, 320], sizes = [33, 32], strides = [1, 1]} : vector<33x384xbf16> to vector<33x32xbf16>
    %cst_11 = arith.constant dense<0.000000e+00> : vector<33x33xf32>
    %41 = tpu.matmul %38, %39, %cst_11 {dimension_numbers = #tpu.dot_dimension_numbers<[1], [1], [0], [0], [0, 0, 1, 0], [], []>} : vector<33x32xbf16>, vector<33x32xbf16>, vector<33x33xf32> -> vector<33x33xf32>
    %cst_12 = arith.constant 0.176776692 : f32
    %42 = vector.broadcast %cst_12 : f32 to vector<33x33xf32>
    %43 = arith.mulf %41, %42 : vector<33x33xf32>
    %cst_13 = arith.constant dense<0xFF800000> : vector<33xf32>
    %44 = vector.multi_reduction <maximumf>, %43, %cst_13 [1] : vector<33x33xf32> to vector<33xf32>
    %45 = vector.shape_cast %44 : vector<33xf32> to vector<33x1xf32>
    %46 = vector.broadcast %45 : vector<33x1xf32> to vector<33x33xf32>
    %47 = arith.subf %43, %46 : vector<33x33xf32>
    %48 = math.exp %47 : vector<33x33xf32>
    %cst_14 = arith.constant dense<0.000000e+00> : vector<33xf32>
    %49 = vector.multi_reduction <add>, %48, %cst_14 [1] : vector<33x33xf32> to vector<33xf32>
    %50 = vector.shape_cast %49 : vector<33xf32> to vector<33x1xf32>
    %51 = tpu.reciprocal %50 {approx = true} : vector<33x1xf32> -> vector<33x1xf32>
    %52 = vector.broadcast %51 : vector<33x1xf32> to vector<33x33xf32>
    %53 = arith.mulf %48, %52 : vector<33x33xf32>
    %54 = arith.truncf %53 : vector<33x33xf32> to vector<33x33xbf16>
    %cst_15 = arith.constant dense<0.000000e+00> : vector<33x32xf32>
    %55 = tpu.matmul %54, %40, %cst_15 {dimension_numbers = #tpu.dot_dimension_numbers<[1], [0], [0], [1], [0, 0, 1, 1], [], []>} : vector<33x33xbf16>, vector<33x32xbf16>, vector<33x32xf32> -> vector<33x32xf32>
    %56 = vector.extract_strided_slice %1 {offsets = [0, 96], sizes = [33, 32], strides = [1, 1]} : vector<33x384xbf16> to vector<33x32xbf16>
    %57 = vector.extract_strided_slice %1 {offsets = [0, 224], sizes = [33, 32], strides = [1, 1]} : vector<33x384xbf16> to vector<33x32xbf16>
    %58 = vector.extract_strided_slice %1 {offsets = [0, 352], sizes = [33, 32], strides = [1, 1]} : vector<33x384xbf16> to vector<33x32xbf16>
    %cst_16 = arith.constant dense<0.000000e+00> : vector<33x33xf32>
    %59 = tpu.matmul %56, %57, %cst_16 {dimension_numbers = #tpu.dot_dimension_numbers<[1], [1], [0], [0], [0, 0, 1, 0], [], []>} : vector<33x32xbf16>, vector<33x32xbf16>, vector<33x33xf32> -> vector<33x33xf32>
    %cst_17 = arith.constant 0.176776692 : f32
    %60 = vector.broadcast %cst_17 : f32 to vector<33x33xf32>
    %61 = arith.mulf %59, %60 : vector<33x33xf32>
    %cst_18 = arith.constant dense<0xFF800000> : vector<33xf32>
    %62 = vector.multi_reduction <maximumf>, %61, %cst_18 [1] : vector<33x33xf32> to vector<33xf32>
    %63 = vector.shape_cast %62 : vector<33xf32> to vector<33x1xf32>
    %64 = vector.broadcast %63 : vector<33x1xf32> to vector<33x33xf32>
    %65 = arith.subf %61, %64 : vector<33x33xf32>
    %66 = math.exp %65 : vector<33x33xf32>
    %cst_19 = arith.constant dense<0.000000e+00> : vector<33xf32>
    %67 = vector.multi_reduction <add>, %66, %cst_19 [1] : vector<33x33xf32> to vector<33xf32>
    %68 = vector.shape_cast %67 : vector<33xf32> to vector<33x1xf32>
    %69 = tpu.reciprocal %68 {approx = true} : vector<33x1xf32> -> vector<33x1xf32>
    %70 = vector.broadcast %69 : vector<33x1xf32> to vector<33x33xf32>
    %71 = arith.mulf %66, %70 : vector<33x33xf32>
    %72 = arith.truncf %71 : vector<33x33xf32> to vector<33x33xbf16>
    %cst_20 = arith.constant dense<0.000000e+00> : vector<33x32xf32>
    %73 = tpu.matmul %72, %58, %cst_20 {dimension_numbers = #tpu.dot_dimension_numbers<[1], [0], [0], [1], [0, 0, 1, 1], [], []>} : vector<33x33xbf16>, vector<33x32xbf16>, vector<33x32xf32> -> vector<33x32xf32>
    %74 = tpu.concatenate %19, %37, %55, %73 in 1 : vector<33x32xf32>, vector<33x32xf32>, vector<33x32xf32>, vector<33x32xf32> -> vector<33x128xf32>
    %75 = arith.truncf %74 : vector<33x128xf32> to vector<33x128xbf16>
    %c0_21 = arith.constant 0 : index
    %c0_22 = arith.constant 0 : index
    %c0_23 = arith.constant 0 : index
    %76 = vector.load %arg2[%c0_21, %c0_22, %c0_23] : memref<1x33x128xbf16, #tpu.memory_space<vmem>>, vector<1x33x128xbf16>
    %77 = vector.shape_cast %76 : vector<1x33x128xbf16> to vector<33x128xbf16>
    %78 = vector.shape_cast %75 : vector<33x128xbf16> to vector<1x33x128xbf16>
    tpu.vector_store %arg2[%c0_21, %c0_22, %c0_23], %78 {strides = array<i32>} : memref<1x33x128xbf16, #tpu.memory_space<vmem>>, vector<1x33x128xbf16>,
    return
  }
  func.func @transform_0(%arg0: i32) -> (i32, i32, i32) {
    %c0_i32 = arith.constant 0 : i32
    %c0_i32_0 = arith.constant 0 : i32
    %c0_i32_1 = arith.constant 0 : i32
    return %arg0, %c0_i32, %c0_i32_0 : i32, i32, i32
  }
  func.func @transform_1(%arg0: i32) -> (i32, i32, i32) {
    %c0_i32 = arith.constant 0 : i32
    %c0_i32_0 = arith.constant 0 : i32
    %c0_i32_1 = arith.constant 0 : i32
    return %arg0, %c0_i32, %c0_i32_0 : i32, i32, i32
  }
}

module attributes {stable_mosaic.version = 11 : i64} {
  func.func @_fused_linear_kernel(%arg0: i32, %arg1: i32, %arg2: memref<66x128xbf16, #tpu.memory_space<vmem>>, %arg3: memref<128x128xbf16, #tpu.memory_space<vmem>>, %arg4: memref<1x128xf32, #tpu.memory_space<vmem>>, %arg5: memref<66x128xbf16, #tpu.memory_space<vmem>>, %arg6: memref<66x128xbf16, #tpu.memory_space<vmem>>) attributes {dimension_semantics = [#tpu.dimension_semantics<parallel>, #tpu.dimension_semantics<parallel>], iteration_bounds = array<i64: 1, 1>, scalar_prefetch = 0 : i64, scratch_operands = 0 : i64, tpu.core_type = #tpu.core_type<tc>, window_params = [{transform_indices = @transform_0, window_bounds = array<i64: 66, 128>}, {transform_indices = @transform_1, window_bounds = array<i64: 128, 128>}, {transform_indices = @transform_2, window_bounds = array<i64: 1, 128>}, {transform_indices = @transform_3, window_bounds = array<i64: 66, 128>}, {transform_indices = @transform_4, window_bounds = array<i64: 66, 128>}]} {
    %c0 = arith.constant 0 : index
    %c0_0 = arith.constant 0 : index
    %0 = vector.load %arg2[%c0, %c0_0] : memref<66x128xbf16, #tpu.memory_space<vmem>>, vector<66x128xbf16>
    %c0_1 = arith.constant 0 : index
    %c0_2 = arith.constant 0 : index
    %1 = vector.load %arg3[%c0_1, %c0_2] : memref<128x128xbf16, #tpu.memory_space<vmem>>, vector<128x128xbf16>
    %cst = arith.constant dense<0.000000e+00> : vector<66x128xf32>
    %2 = tpu.matmul %0, %1, %cst {dimension_numbers = #tpu.dot_dimension_numbers<[1], [0], [0], [1], [0, 0, 1, 1], [], []>} : vector<66x128xbf16>, vector<128x128xbf16>, vector<66x128xf32> -> vector<66x128xf32>
    %c0_3 = arith.constant 0 : index
    %c0_4 = arith.constant 0 : index
    %3 = vector.load %arg4[%c0_3, %c0_4] : memref<1x128xf32, #tpu.memory_space<vmem>>, vector<1x128xf32>
    %4 = vector.broadcast %3 : vector<1x128xf32> to vector<66x128xf32>
    %5 = arith.addf %2, %4 : vector<66x128xf32>
    %c0_5 = arith.constant 0 : index
    %c0_6 = arith.constant 0 : index
    %6 = vector.load %arg5[%c0_5, %c0_6] : memref<66x128xbf16, #tpu.memory_space<vmem>>, vector<66x128xbf16>
    %7 = arith.extf %6 : vector<66x128xbf16> to vector<66x128xf32>
    %8 = arith.addf %5, %7 : vector<66x128xf32>
    %9 = arith.truncf %8 : vector<66x128xf32> to vector<66x128xbf16>
    %c0_7 = arith.constant 0 : index
    %c0_8 = arith.constant 0 : index
    %10 = vector.load %arg6[%c0_7, %c0_8] : memref<66x128xbf16, #tpu.memory_space<vmem>>, vector<66x128xbf16>
    tpu.vector_store %arg6[%c0_7, %c0_8], %9 {strides = array<i32>} : memref<66x128xbf16, #tpu.memory_space<vmem>>, vector<66x128xbf16>,
    return
  }
  func.func @transform_0(%arg0: i32, %arg1: i32) -> (i32, i32) {
    %c0_i32 = arith.constant 0 : i32
    %c0_i32_0 = arith.constant 0 : i32
    return %arg0, %c0_i32 : i32, i32
  }
  func.func @transform_1(%arg0: i32, %arg1: i32) -> (i32, i32) {
    %c0_i32 = arith.constant 0 : i32
    %c0_i32_0 = arith.constant 0 : i32
    return %c0_i32, %arg1 : i32, i32
  }
  func.func @transform_2(%arg0: i32, %arg1: i32) -> (i32, i32) {
    %c0_i32 = arith.constant 0 : i32
    %c0_i32_0 = arith.constant 0 : i32
    return %c0_i32, %arg1 : i32, i32
  }
  func.func @transform_3(%arg0: i32, %arg1: i32) -> (i32, i32) {
    %c0_i32 = arith.constant 0 : i32
    return %arg0, %arg1 : i32, i32
  }
  func.func @transform_4(%arg0: i32, %arg1: i32) -> (i32, i32) {
    %c0_i32 = arith.constant 0 : i32
    return %arg0, %arg1 : i32, i32
  }
}

module attributes {stable_mosaic.version = 11 : i64} {
  func.func @_mlp_block_kernel(%arg0: i32, %arg1: memref<66x128xbf16, #tpu.memory_space<vmem>>, %arg2: memref<1x128xf32, #tpu.memory_space<vmem>>, %arg3: memref<1x128xf32, #tpu.memory_space<vmem>>, %arg4: memref<128x512xbf16, #tpu.memory_space<vmem>>, %arg5: memref<1x512xf32, #tpu.memory_space<vmem>>, %arg6: memref<512x128xbf16, #tpu.memory_space<vmem>>, %arg7: memref<1x128xf32, #tpu.memory_space<vmem>>, %arg8: memref<66x128xbf16, #tpu.memory_space<vmem>>) attributes {dimension_semantics = [#tpu.dimension_semantics<parallel>], iteration_bounds = array<i64: 1>, scalar_prefetch = 0 : i64, scratch_operands = 0 : i64, tpu.core_type = #tpu.core_type<tc>, window_params = [{transform_indices = @transform_0, window_bounds = array<i64: 66, 128>}, {pipeline_mode = #tpu.pipeline_mode<synchronous>, transform_indices = @transform_1, window_bounds = array<i64: 1, 128>}, {pipeline_mode = #tpu.pipeline_mode<synchronous>, transform_indices = @transform_2, window_bounds = array<i64: 1, 128>}, {pipeline_mode = #tpu.pipeline_mode<synchronous>, transform_indices = @transform_3, window_bounds = array<i64: 128, 512>}, {pipeline_mode = #tpu.pipeline_mode<synchronous>, transform_indices = @transform_4, window_bounds = array<i64: 1, 512>}, {pipeline_mode = #tpu.pipeline_mode<synchronous>, transform_indices = @transform_5, window_bounds = array<i64: 512, 128>}, {pipeline_mode = #tpu.pipeline_mode<synchronous>, transform_indices = @transform_6, window_bounds = array<i64: 1, 128>}, {transform_indices = @transform_7, window_bounds = array<i64: 66, 128>}]} {
    %c0 = arith.constant 0 : index
    %c0_0 = arith.constant 0 : index
    %0 = vector.load %arg1[%c0, %c0_0] : memref<66x128xbf16, #tpu.memory_space<vmem>>, vector<66x128xbf16>
    %1 = arith.extf %0 : vector<66x128xbf16> to vector<66x128xf32>
    %cst = arith.constant dense<0.000000e+00> : vector<66xf32>
    %2 = vector.multi_reduction <add>, %1, %cst [1] : vector<66x128xf32> to vector<66xf32>
    %3 = vector.shape_cast %2 : vector<66xf32> to vector<66x1xf32>
    %cst_1 = arith.constant 1.280000e+02 : f32
    %4 = vector.broadcast %cst_1 : f32 to vector<66x1xf32>
    %5 = arith.divf %3, %4 : vector<66x1xf32>
    %6 = vector.broadcast %5 : vector<66x1xf32> to vector<66x128xf32>
    %7 = arith.subf %1, %6 : vector<66x128xf32>
    %8 = arith.mulf %7, %7 : vector<66x128xf32>
    %cst_2 = arith.constant dense<0.000000e+00> : vector<66xf32>
    %9 = vector.multi_reduction <add>, %8, %cst_2 [1] : vector<66x128xf32> to vector<66xf32>
    %10 = vector.shape_cast %9 : vector<66xf32> to vector<66x1xf32>
    %cst_3 = arith.constant 1.280000e+02 : f32
    %11 = vector.broadcast %cst_3 : f32 to vector<66x1xf32>
    %12 = arith.divf %10, %11 : vector<66x1xf32>
    %13 = vector.broadcast %5 : vector<66x1xf32> to vector<66x128xf32>
    %14 = arith.subf %1, %13 : vector<66x128xf32>
    %cst_4 = arith.constant 9.99999997E-7 : f32
    %15 = vector.broadcast %cst_4 : f32 to vector<66x1xf32>
    %16 = arith.addf %12, %15 : vector<66x1xf32>
    %17 = math.rsqrt %16 : vector<66x1xf32>
    %18 = vector.broadcast %17 : vector<66x1xf32> to vector<66x128xf32>
    %19 = arith.mulf %14, %18 : vector<66x128xf32>
    %c0_5 = arith.constant 0 : index
    %c0_6 = arith.constant 0 : index
    %20 = vector.load %arg2[%c0_5, %c0_6] : memref<1x128xf32, #tpu.memory_space<vmem>>, vector<1x128xf32>
    %21 = vector.broadcast %20 : vector<1x128xf32> to vector<66x128xf32>
    %22 = arith.mulf %19, %21 : vector<66x128xf32>
    %c0_7 = arith.constant 0 : index
    %c0_8 = arith.constant 0 : index
    %23 = vector.load %arg3[%c0_7, %c0_8] : memref<1x128xf32, #tpu.memory_space<vmem>>, vector<1x128xf32>
    %24 = vector.broadcast %23 : vector<1x128xf32> to vector<66x128xf32>
    %25 = arith.addf %22, %24 : vector<66x128xf32>
    %26 = arith.truncf %25 : vector<66x128xf32> to vector<66x128xbf16>
    %c0_9 = arith.constant 0 : index
    %c0_10 = arith.constant 0 : index
    %27 = vector.load %arg4[%c0_9, %c0_10] : memref<128x512xbf16, #tpu.memory_space<vmem>>, vector<128x512xbf16>
    %cst_11 = arith.constant dense<0.000000e+00> : vector<66x512xf32>
    %28 = tpu.matmul %26, %27, %cst_11 {dimension_numbers = #tpu.dot_dimension_numbers<[1], [0], [0], [1], [0, 0, 1, 1], [], []>} : vector<66x128xbf16>, vector<128x512xbf16>, vector<66x512xf32> -> vector<66x512xf32>
    %c0_12 = arith.constant 0 : index
    %c0_13 = arith.constant 0 : index
    %29 = vector.load %arg5[%c0_12, %c0_13] : memref<1x512xf32, #tpu.memory_space<vmem>>, vector<1x512xf32>
    %30 = vector.broadcast %29 : vector<1x512xf32> to vector<66x512xf32>
    %31 = arith.addf %28, %30 : vector<66x512xf32>
    %cst_14 = arith.constant 5.000000e-01 : f32
    %32 = vector.broadcast %cst_14 : f32 to vector<66x512xf32>
    %33 = arith.mulf %32, %31 : vector<66x512xf32>
    %cst_15 = arith.constant 4.471500e-02 : f32
    %34 = vector.broadcast %cst_15 : f32 to vector<66x512xf32>
    %35 = arith.mulf %34, %31 : vector<66x512xf32>
    %36 = arith.mulf %35, %31 : vector<66x512xf32>
    %37 = arith.mulf %36, %31 : vector<66x512xf32>
    %38 = arith.addf %31, %37 : vector<66x512xf32>
    %cst_16 = arith.constant 0.797884583 : f32
    %39 = vector.broadcast %cst_16 : f32 to vector<66x512xf32>
    %40 = arith.mulf %39, %38 : vector<66x512xf32>
    %41 = math.tanh %40 : vector<66x512xf32>
    %cst_17 = arith.constant 1.000000e+00 : f32
    %42 = vector.broadcast %cst_17 : f32 to vector<66x512xf32>
    %43 = arith.addf %42, %41 : vector<66x512xf32>
    %44 = arith.mulf %33, %43 : vector<66x512xf32>
    %45 = arith.truncf %44 : vector<66x512xf32> to vector<66x512xbf16>
    %c0_18 = arith.constant 0 : index
    %c0_19 = arith.constant 0 : index
    %46 = vector.load %arg6[%c0_18, %c0_19] : memref<512x128xbf16, #tpu.memory_space<vmem>>, vector<512x128xbf16>
    %cst_20 = arith.constant dense<0.000000e+00> : vector<66x128xf32>
    %47 = tpu.matmul %45, %46, %cst_20 {dimension_numbers = #tpu.dot_dimension_numbers<[1], [0], [0], [1], [0, 0, 1, 1], [], []>} : vector<66x512xbf16>, vector<512x128xbf16>, vector<66x128xf32> -> vector<66x128xf32>
    %c0_21 = arith.constant 0 : index
    %c0_22 = arith.constant 0 : index
    %48 = vector.load %arg7[%c0_21, %c0_22] : memref<1x128xf32, #tpu.memory_space<vmem>>, vector<1x128xf32>
    %49 = vector.broadcast %48 : vector<1x128xf32> to vector<66x128xf32>
    %50 = arith.addf %47, %49 : vector<66x128xf32>
    %51 = arith.addf %1, %50 : vector<66x128xf32>
    %52 = arith.truncf %51 : vector<66x128xf32> to vector<66x128xbf16>
    %c0_23 = arith.constant 0 : index
    %c0_24 = arith.constant 0 : index
    %53 = vector.load %arg8[%c0_23, %c0_24] : memref<66x128xbf16, #tpu.memory_space<vmem>>, vector<66x128xbf16>
    tpu.vector_store %arg8[%c0_23, %c0_24], %52 {strides = array<i32>} : memref<66x128xbf16, #tpu.memory_space<vmem>>, vector<66x128xbf16>,
    return
  }
  func.func @transform_0(%arg0: i32) -> (i32, i32) {
    %c0_i32 = arith.constant 0 : i32
    %c0_i32_0 = arith.constant 0 : i32
    return %arg0, %c0_i32 : i32, i32
  }
  func.func @transform_1(%arg0: i32) -> (i32, i32) {
    %c0_i32 = arith.constant 0 : i32
    %c0_i32_0 = arith.constant 0 : i32
    %c0_i32_1 = arith.constant 0 : i32
    return %c0_i32, %c0_i32_0 : i32, i32
  }
  func.func @transform_2(%arg0: i32) -> (i32, i32) {
    %c0_i32 = arith.constant 0 : i32
    %c0_i32_0 = arith.constant 0 : i32
    %c0_i32_1 = arith.constant 0 : i32
    return %c0_i32, %c0_i32_0 : i32, i32
  }
  func.func @transform_3(%arg0: i32) -> (i32, i32) {
    %c0_i32 = arith.constant 0 : i32
    %c0_i32_0 = arith.constant 0 : i32
    %c0_i32_1 = arith.constant 0 : i32
    return %c0_i32, %c0_i32_0 : i32, i32
  }
  func.func @transform_4(%arg0: i32) -> (i32, i32) {
    %c0_i32 = arith.constant 0 : i32
    %c0_i32_0 = arith.constant 0 : i32
    %c0_i32_1 = arith.constant 0 : i32
    return %c0_i32, %c0_i32_0 : i32, i32
  }
  func.func @transform_5(%arg0: i32) -> (i32, i32) {
    %c0_i32 = arith.constant 0 : i32
    %c0_i32_0 = arith.constant 0 : i32
    %c0_i32_1 = arith.constant 0 : i32
    return %c0_i32, %c0_i32_0 : i32, i32
  }
  func.func @transform_6(%arg0: i32) -> (i32, i32) {
    %c0_i32 = arith.constant 0 : i32
    %c0_i32_0 = arith.constant 0 : i32
    %c0_i32_1 = arith.constant 0 : i32
    return %c0_i32, %c0_i32_0 : i32, i32
  }
  func.func @transform_7(%arg0: i32) -> (i32, i32) {
    %c0_i32 = arith.constant 0 : i32
    %c0_i32_0 = arith.constant 0 : i32
    return %arg0, %c0_i32 : i32, i32
  }
}

module attributes {stable_mosaic.version = 11 : i64} {
  func.func @_fused_linear_kernel(%arg0: i32, %arg1: i32, %arg2: memref<66x128xbf16, #tpu.memory_space<vmem>>, %arg3: memref<1x128xf32, #tpu.memory_space<vmem>>, %arg4: memref<1x128xf32, #tpu.memory_space<vmem>>, %arg5: memref<128x128xbf16, #tpu.memory_space<vmem>>, %arg6: memref<1x128xf32, #tpu.memory_space<vmem>>, %arg7: memref<66x128xbf16, #tpu.memory_space<vmem>>) attributes {dimension_semantics = [#tpu.dimension_semantics<parallel>, #tpu.dimension_semantics<parallel>], iteration_bounds = array<i64: 1, 1>, scalar_prefetch = 0 : i64, scratch_operands = 0 : i64, tpu.core_type = #tpu.core_type<tc>, window_params = [{transform_indices = @transform_0, window_bounds = array<i64: 66, 128>}, {pipeline_mode = #tpu.pipeline_mode<synchronous>, transform_indices = @transform_1, window_bounds = array<i64: 1, 128>}, {pipeline_mode = #tpu.pipeline_mode<synchronous>, transform_indices = @transform_2, window_bounds = array<i64: 1, 128>}, {transform_indices = @transform_3, window_bounds = array<i64: 128, 128>}, {transform_indices = @transform_4, window_bounds = array<i64: 1, 128>}, {transform_indices = @transform_5, window_bounds = array<i64: 66, 128>}]} {
    %c0 = arith.constant 0 : index
    %c0_0 = arith.constant 0 : index
    %0 = vector.load %arg2[%c0, %c0_0] : memref<66x128xbf16, #tpu.memory_space<vmem>>, vector<66x128xbf16>
    %1 = arith.extf %0 : vector<66x128xbf16> to vector<66x128xf32>
    %cst = arith.constant dense<0.000000e+00> : vector<66xf32>
    %2 = vector.multi_reduction <add>, %1, %cst [1] : vector<66x128xf32> to vector<66xf32>
    %3 = vector.shape_cast %2 : vector<66xf32> to vector<66x1xf32>
    %cst_1 = arith.constant 1.280000e+02 : f32
    %4 = vector.broadcast %cst_1 : f32 to vector<66x1xf32>
    %5 = arith.divf %3, %4 : vector<66x1xf32>
    %6 = vector.broadcast %5 : vector<66x1xf32> to vector<66x128xf32>
    %7 = arith.subf %1, %6 : vector<66x128xf32>
    %8 = arith.mulf %7, %7 : vector<66x128xf32>
    %cst_2 = arith.constant dense<0.000000e+00> : vector<66xf32>
    %9 = vector.multi_reduction <add>, %8, %cst_2 [1] : vector<66x128xf32> to vector<66xf32>
    %10 = vector.shape_cast %9 : vector<66xf32> to vector<66x1xf32>
    %cst_3 = arith.constant 1.280000e+02 : f32
    %11 = vector.broadcast %cst_3 : f32 to vector<66x1xf32>
    %12 = arith.divf %10, %11 : vector<66x1xf32>
    %13 = vector.broadcast %5 : vector<66x1xf32> to vector<66x128xf32>
    %14 = arith.subf %1, %13 : vector<66x128xf32>
    %cst_4 = arith.constant 9.99999997E-7 : f32
    %15 = vector.broadcast %cst_4 : f32 to vector<66x1xf32>
    %16 = arith.addf %12, %15 : vector<66x1xf32>
    %17 = math.rsqrt %16 : vector<66x1xf32>
    %18 = vector.broadcast %17 : vector<66x1xf32> to vector<66x128xf32>
    %19 = arith.mulf %14, %18 : vector<66x128xf32>
    %c0_5 = arith.constant 0 : index
    %c0_6 = arith.constant 0 : index
    %20 = vector.load %arg3[%c0_5, %c0_6] : memref<1x128xf32, #tpu.memory_space<vmem>>, vector<1x128xf32>
    %21 = vector.broadcast %20 : vector<1x128xf32> to vector<66x128xf32>
    %22 = arith.mulf %19, %21 : vector<66x128xf32>
    %c0_7 = arith.constant 0 : index
    %c0_8 = arith.constant 0 : index
    %23 = vector.load %arg4[%c0_7, %c0_8] : memref<1x128xf32, #tpu.memory_space<vmem>>, vector<1x128xf32>
    %24 = vector.broadcast %23 : vector<1x128xf32> to vector<66x128xf32>
    %25 = arith.addf %22, %24 : vector<66x128xf32>
    %26 = arith.truncf %25 : vector<66x128xf32> to vector<66x128xbf16>
    %c0_9 = arith.constant 0 : index
    %c0_10 = arith.constant 0 : index
    %27 = vector.load %arg5[%c0_9, %c0_10] : memref<128x128xbf16, #tpu.memory_space<vmem>>, vector<128x128xbf16>
    %cst_11 = arith.constant dense<0.000000e+00> : vector<66x128xf32>
    %28 = tpu.matmul %26, %27, %cst_11 {dimension_numbers = #tpu.dot_dimension_numbers<[1], [0], [0], [1], [0, 0, 1, 1], [], []>} : vector<66x128xbf16>, vector<128x128xbf16>, vector<66x128xf32> -> vector<66x128xf32>
    %c0_12 = arith.constant 0 : index
    %c0_13 = arith.constant 0 : index
    %29 = vector.load %arg6[%c0_12, %c0_13] : memref<1x128xf32, #tpu.memory_space<vmem>>, vector<1x128xf32>
    %30 = vector.broadcast %29 : vector<1x128xf32> to vector<66x128xf32>
    %31 = arith.addf %28, %30 : vector<66x128xf32>
    %32 = arith.truncf %31 : vector<66x128xf32> to vector<66x128xbf16>
    %c0_14 = arith.constant 0 : index
    %c0_15 = arith.constant 0 : index
    %33 = vector.load %arg7[%c0_14, %c0_15] : memref<66x128xbf16, #tpu.memory_space<vmem>>, vector<66x128xbf16>
    tpu.vector_store %arg7[%c0_14, %c0_15], %32 {strides = array<i32>} : memref<66x128xbf16, #tpu.memory_space<vmem>>, vector<66x128xbf16>,
    return
  }
  func.func @transform_0(%arg0: i32, %arg1: i32) -> (i32, i32) {
    %c0_i32 = arith.constant 0 : i32
    %c0_i32_0 = arith.constant 0 : i32
    return %arg0, %c0_i32 : i32, i32
  }
  func.func @transform_1(%arg0: i32, %arg1: i32) -> (i32, i32) {
    %c0_i32 = arith.constant 0 : i32
    %c0_i32_0 = arith.constant 0 : i32
    %c0_i32_1 = arith.constant 0 : i32
    return %c0_i32, %c0_i32_0 : i32, i32
  }
  func.func @transform_2(%arg0: i32, %arg1: i32) -> (i32, i32) {
    %c0_i32 = arith.constant 0 : i32
    %c0_i32_0 = arith.constant 0 : i32
    %c0_i32_1 = arith.constant 0 : i32
    return %c0_i32, %c0_i32_0 : i32, i32
  }
  func.func @transform_3(%arg0: i32, %arg1: i32) -> (i32, i32) {
    %c0_i32 = arith.constant 0 : i32
    %c0_i32_0 = arith.constant 0 : i32
    return %c0_i32, %arg1 : i32, i32
  }
  func.func @transform_4(%arg0: i32, %arg1: i32) -> (i32, i32) {
    %c0_i32 = arith.constant 0 : i32
    %c0_i32_0 = arith.constant 0 : i32
    return %c0_i32, %arg1 : i32, i32
  }
  func.func @transform_5(%arg0: i32, %arg1: i32) -> (i32, i32) {
    %c0_i32 = arith.constant 0 : i32
    return %arg0, %arg1 : i32, i32
  }
}

module attributes {stable_mosaic.version = 11 : i64} {
  func.func @_fused_linear_kernel(%arg0: i32, %arg1: i32, %arg2: memref<130x128xbf16, #tpu.memory_space<vmem>>, %arg3: memref<1x128xf32, #tpu.memory_space<vmem>>, %arg4: memref<1x128xf32, #tpu.memory_space<vmem>>, %arg5: memref<128x384xbf16, #tpu.memory_space<vmem>>, %arg6: memref<1x384xf32, #tpu.memory_space<vmem>>, %arg7: memref<130x384xbf16, #tpu.memory_space<vmem>>) attributes {dimension_semantics = [#tpu.dimension_semantics<parallel>, #tpu.dimension_semantics<parallel>], iteration_bounds = array<i64: 1, 1>, scalar_prefetch = 0 : i64, scratch_operands = 0 : i64, tpu.core_type = #tpu.core_type<tc>, window_params = [{transform_indices = @transform_0, window_bounds = array<i64: 130, 128>}, {pipeline_mode = #tpu.pipeline_mode<synchronous>, transform_indices = @transform_1, window_bounds = array<i64: 1, 128>}, {pipeline_mode = #tpu.pipeline_mode<synchronous>, transform_indices = @transform_2, window_bounds = array<i64: 1, 128>}, {transform_indices = @transform_3, window_bounds = array<i64: 128, 384>}, {transform_indices = @transform_4, window_bounds = array<i64: 1, 384>}, {transform_indices = @transform_5, window_bounds = array<i64: 130, 384>}]} {
    %c0 = arith.constant 0 : index
    %c0_0 = arith.constant 0 : index
    %0 = vector.load %arg2[%c0, %c0_0] : memref<130x128xbf16, #tpu.memory_space<vmem>>, vector<130x128xbf16>
    %1 = arith.extf %0 : vector<130x128xbf16> to vector<130x128xf32>
    %cst = arith.constant dense<0.000000e+00> : vector<130xf32>
    %2 = vector.multi_reduction <add>, %1, %cst [1] : vector<130x128xf32> to vector<130xf32>
    %3 = vector.shape_cast %2 : vector<130xf32> to vector<130x1xf32>
    %cst_1 = arith.constant 1.280000e+02 : f32
    %4 = vector.broadcast %cst_1 : f32 to vector<130x1xf32>
    %5 = arith.divf %3, %4 : vector<130x1xf32>
    %6 = vector.broadcast %5 : vector<130x1xf32> to vector<130x128xf32>
    %7 = arith.subf %1, %6 : vector<130x128xf32>
    %8 = arith.mulf %7, %7 : vector<130x128xf32>
    %cst_2 = arith.constant dense<0.000000e+00> : vector<130xf32>
    %9 = vector.multi_reduction <add>, %8, %cst_2 [1] : vector<130x128xf32> to vector<130xf32>
    %10 = vector.shape_cast %9 : vector<130xf32> to vector<130x1xf32>
    %cst_3 = arith.constant 1.280000e+02 : f32
    %11 = vector.broadcast %cst_3 : f32 to vector<130x1xf32>
    %12 = arith.divf %10, %11 : vector<130x1xf32>
    %13 = vector.broadcast %5 : vector<130x1xf32> to vector<130x128xf32>
    %14 = arith.subf %1, %13 : vector<130x128xf32>
    %cst_4 = arith.constant 9.99999997E-7 : f32
    %15 = vector.broadcast %cst_4 : f32 to vector<130x1xf32>
    %16 = arith.addf %12, %15 : vector<130x1xf32>
    %17 = math.rsqrt %16 : vector<130x1xf32>
    %18 = vector.broadcast %17 : vector<130x1xf32> to vector<130x128xf32>
    %19 = arith.mulf %14, %18 : vector<130x128xf32>
    %c0_5 = arith.constant 0 : index
    %c0_6 = arith.constant 0 : index
    %20 = vector.load %arg3[%c0_5, %c0_6] : memref<1x128xf32, #tpu.memory_space<vmem>>, vector<1x128xf32>
    %21 = vector.broadcast %20 : vector<1x128xf32> to vector<130x128xf32>
    %22 = arith.mulf %19, %21 : vector<130x128xf32>
    %c0_7 = arith.constant 0 : index
    %c0_8 = arith.constant 0 : index
    %23 = vector.load %arg4[%c0_7, %c0_8] : memref<1x128xf32, #tpu.memory_space<vmem>>, vector<1x128xf32>
    %24 = vector.broadcast %23 : vector<1x128xf32> to vector<130x128xf32>
    %25 = arith.addf %22, %24 : vector<130x128xf32>
    %26 = arith.truncf %25 : vector<130x128xf32> to vector<130x128xbf16>
    %c0_9 = arith.constant 0 : index
    %c0_10 = arith.constant 0 : index
    %27 = vector.load %arg5[%c0_9, %c0_10] : memref<128x384xbf16, #tpu.memory_space<vmem>>, vector<128x384xbf16>
    %cst_11 = arith.constant dense<0.000000e+00> : vector<130x384xf32>
    %28 = tpu.matmul %26, %27, %cst_11 {dimension_numbers = #tpu.dot_dimension_numbers<[1], [0], [0], [1], [0, 0, 1, 1], [], []>} : vector<130x128xbf16>, vector<128x384xbf16>, vector<130x384xf32> -> vector<130x384xf32>
    %c0_12 = arith.constant 0 : index
    %c0_13 = arith.constant 0 : index
    %29 = vector.load %arg6[%c0_12, %c0_13] : memref<1x384xf32, #tpu.memory_space<vmem>>, vector<1x384xf32>
    %30 = vector.broadcast %29 : vector<1x384xf32> to vector<130x384xf32>
    %31 = arith.addf %28, %30 : vector<130x384xf32>
    %32 = arith.truncf %31 : vector<130x384xf32> to vector<130x384xbf16>
    %c0_14 = arith.constant 0 : index
    %c0_15 = arith.constant 0 : index
    %33 = vector.load %arg7[%c0_14, %c0_15] : memref<130x384xbf16, #tpu.memory_space<vmem>>, vector<130x384xbf16>
    tpu.vector_store %arg7[%c0_14, %c0_15], %32 {strides = array<i32>} : memref<130x384xbf16, #tpu.memory_space<vmem>>, vector<130x384xbf16>,
    return
  }
  func.func @transform_0(%arg0: i32, %arg1: i32) -> (i32, i32) {
    %c0_i32 = arith.constant 0 : i32
    %c0_i32_0 = arith.constant 0 : i32
    return %arg0, %c0_i32 : i32, i32
  }
  func.func @transform_1(%arg0: i32, %arg1: i32) -> (i32, i32) {
    %c0_i32 = arith.constant 0 : i32
    %c0_i32_0 = arith.constant 0 : i32
    %c0_i32_1 = arith.constant 0 : i32
    return %c0_i32, %c0_i32_0 : i32, i32
  }
  func.func @transform_2(%arg0: i32, %arg1: i32) -> (i32, i32) {
    %c0_i32 = arith.constant 0 : i32
    %c0_i32_0 = arith.constant 0 : i32
    %c0_i32_1 = arith.constant 0 : i32
    return %c0_i32, %c0_i32_0 : i32, i32
  }
  func.func @transform_3(%arg0: i32, %arg1: i32) -> (i32, i32) {
    %c0_i32 = arith.constant 0 : i32
    %c0_i32_0 = arith.constant 0 : i32
    return %c0_i32, %arg1 : i32, i32
  }
  func.func @transform_4(%arg0: i32, %arg1: i32) -> (i32, i32) {
    %c0_i32 = arith.constant 0 : i32
    %c0_i32_0 = arith.constant 0 : i32
    return %c0_i32, %arg1 : i32, i32
  }
  func.func @transform_5(%arg0: i32, %arg1: i32) -> (i32, i32) {
    %c0_i32 = arith.constant 0 : i32
    return %arg0, %arg1 : i32, i32
  }
}

module attributes {stable_mosaic.version = 11 : i64} {
  func.func @_fused_linear_kernel(%arg0: i32, %arg1: i32, %arg2: memref<130x128xbf16, #tpu.memory_space<vmem>>, %arg3: memref<128x128xbf16, #tpu.memory_space<vmem>>, %arg4: memref<1x128xf32, #tpu.memory_space<vmem>>, %arg5: memref<130x128xbf16, #tpu.memory_space<vmem>>, %arg6: memref<130x128xbf16, #tpu.memory_space<vmem>>) attributes {dimension_semantics = [#tpu.dimension_semantics<parallel>, #tpu.dimension_semantics<parallel>], iteration_bounds = array<i64: 1, 1>, scalar_prefetch = 0 : i64, scratch_operands = 0 : i64, tpu.core_type = #tpu.core_type<tc>, window_params = [{transform_indices = @transform_0, window_bounds = array<i64: 130, 128>}, {transform_indices = @transform_1, window_bounds = array<i64: 128, 128>}, {transform_indices = @transform_2, window_bounds = array<i64: 1, 128>}, {transform_indices = @transform_3, window_bounds = array<i64: 130, 128>}, {transform_indices = @transform_4, window_bounds = array<i64: 130, 128>}]} {
    %c0 = arith.constant 0 : index
    %c0_0 = arith.constant 0 : index
    %0 = vector.load %arg2[%c0, %c0_0] : memref<130x128xbf16, #tpu.memory_space<vmem>>, vector<130x128xbf16>
    %c0_1 = arith.constant 0 : index
    %c0_2 = arith.constant 0 : index
    %1 = vector.load %arg3[%c0_1, %c0_2] : memref<128x128xbf16, #tpu.memory_space<vmem>>, vector<128x128xbf16>
    %cst = arith.constant dense<0.000000e+00> : vector<130x128xf32>
    %2 = tpu.matmul %0, %1, %cst {dimension_numbers = #tpu.dot_dimension_numbers<[1], [0], [0], [1], [0, 0, 1, 1], [], []>} : vector<130x128xbf16>, vector<128x128xbf16>, vector<130x128xf32> -> vector<130x128xf32>
    %c0_3 = arith.constant 0 : index
    %c0_4 = arith.constant 0 : index
    %3 = vector.load %arg4[%c0_3, %c0_4] : memref<1x128xf32, #tpu.memory_space<vmem>>, vector<1x128xf32>
    %4 = vector.broadcast %3 : vector<1x128xf32> to vector<130x128xf32>
    %5 = arith.addf %2, %4 : vector<130x128xf32>
    %c0_5 = arith.constant 0 : index
    %c0_6 = arith.constant 0 : index
    %6 = vector.load %arg5[%c0_5, %c0_6] : memref<130x128xbf16, #tpu.memory_space<vmem>>, vector<130x128xbf16>
    %7 = arith.extf %6 : vector<130x128xbf16> to vector<130x128xf32>
    %8 = arith.addf %5, %7 : vector<130x128xf32>
    %9 = arith.truncf %8 : vector<130x128xf32> to vector<130x128xbf16>
    %c0_7 = arith.constant 0 : index
    %c0_8 = arith.constant 0 : index
    %10 = vector.load %arg6[%c0_7, %c0_8] : memref<130x128xbf16, #tpu.memory_space<vmem>>, vector<130x128xbf16>
    tpu.vector_store %arg6[%c0_7, %c0_8], %9 {strides = array<i32>} : memref<130x128xbf16, #tpu.memory_space<vmem>>, vector<130x128xbf16>,
    return
  }
  func.func @transform_0(%arg0: i32, %arg1: i32) -> (i32, i32) {
    %c0_i32 = arith.constant 0 : i32
    %c0_i32_0 = arith.constant 0 : i32
    return %arg0, %c0_i32 : i32, i32
  }
  func.func @transform_1(%arg0: i32, %arg1: i32) -> (i32, i32) {
    %c0_i32 = arith.constant 0 : i32
    %c0_i32_0 = arith.constant 0 : i32
    return %c0_i32, %arg1 : i32, i32
  }
  func.func @transform_2(%arg0: i32, %arg1: i32) -> (i32, i32) {
    %c0_i32 = arith.constant 0 : i32
    %c0_i32_0 = arith.constant 0 : i32
    return %c0_i32, %arg1 : i32, i32
  }
  func.func @transform_3(%arg0: i32, %arg1: i32) -> (i32, i32) {
    %c0_i32 = arith.constant 0 : i32
    return %arg0, %arg1 : i32, i32
  }
  func.func @transform_4(%arg0: i32, %arg1: i32) -> (i32, i32) {
    %c0_i32 = arith.constant 0 : i32
    return %arg0, %arg1 : i32, i32
  }
}

module attributes {stable_mosaic.version = 11 : i64} {
  func.func @_attn_kernel(%arg0: i32, %arg1: memref<1x65x384xbf16, #tpu.memory_space<vmem>>, %arg2: memref<1x65x128xbf16, #tpu.memory_space<vmem>>) attributes {dimension_semantics = [#tpu.dimension_semantics<parallel>], iteration_bounds = array<i64: 2>, scalar_prefetch = 0 : i64, scratch_operands = 0 : i64, tpu.core_type = #tpu.core_type<tc>, window_params = [{transform_indices = @transform_0, window_bounds = array<i64: 1, 65, 384>}, {transform_indices = @transform_1, window_bounds = array<i64: 1, 65, 128>}]} {
    %c0 = arith.constant 0 : index
    %c0_0 = arith.constant 0 : index
    %c0_1 = arith.constant 0 : index
    %0 = vector.load %arg1[%c0, %c0_0, %c0_1] : memref<1x65x384xbf16, #tpu.memory_space<vmem>>, vector<1x65x384xbf16>
    %1 = vector.shape_cast %0 : vector<1x65x384xbf16> to vector<65x384xbf16>
    %2 = vector.extract_strided_slice %1 {offsets = [0, 0], sizes = [65, 32], strides = [1, 1]} : vector<65x384xbf16> to vector<65x32xbf16>
    %3 = vector.extract_strided_slice %1 {offsets = [0, 128], sizes = [65, 32], strides = [1, 1]} : vector<65x384xbf16> to vector<65x32xbf16>
    %4 = vector.extract_strided_slice %1 {offsets = [0, 256], sizes = [65, 32], strides = [1, 1]} : vector<65x384xbf16> to vector<65x32xbf16>
    %cst = arith.constant dense<0.000000e+00> : vector<65x65xf32>
    %5 = tpu.matmul %2, %3, %cst {dimension_numbers = #tpu.dot_dimension_numbers<[1], [1], [0], [0], [0, 0, 1, 0], [], []>} : vector<65x32xbf16>, vector<65x32xbf16>, vector<65x65xf32> -> vector<65x65xf32>
    %cst_2 = arith.constant 0.176776692 : f32
    %6 = vector.broadcast %cst_2 : f32 to vector<65x65xf32>
    %7 = arith.mulf %5, %6 : vector<65x65xf32>
    %cst_3 = arith.constant dense<0xFF800000> : vector<65xf32>
    %8 = vector.multi_reduction <maximumf>, %7, %cst_3 [1] : vector<65x65xf32> to vector<65xf32>
    %9 = vector.shape_cast %8 : vector<65xf32> to vector<65x1xf32>
    %10 = vector.broadcast %9 : vector<65x1xf32> to vector<65x65xf32>
    %11 = arith.subf %7, %10 : vector<65x65xf32>
    %12 = math.exp %11 : vector<65x65xf32>
    %cst_4 = arith.constant dense<0.000000e+00> : vector<65xf32>
    %13 = vector.multi_reduction <add>, %12, %cst_4 [1] : vector<65x65xf32> to vector<65xf32>
    %14 = vector.shape_cast %13 : vector<65xf32> to vector<65x1xf32>
    %15 = tpu.reciprocal %14 {approx = true} : vector<65x1xf32> -> vector<65x1xf32>
    %16 = vector.broadcast %15 : vector<65x1xf32> to vector<65x65xf32>
    %17 = arith.mulf %12, %16 : vector<65x65xf32>
    %18 = arith.truncf %17 : vector<65x65xf32> to vector<65x65xbf16>
    %cst_5 = arith.constant dense<0.000000e+00> : vector<65x32xf32>
    %19 = tpu.matmul %18, %4, %cst_5 {dimension_numbers = #tpu.dot_dimension_numbers<[1], [0], [0], [1], [0, 0, 1, 1], [], []>} : vector<65x65xbf16>, vector<65x32xbf16>, vector<65x32xf32> -> vector<65x32xf32>
    %20 = vector.extract_strided_slice %1 {offsets = [0, 32], sizes = [65, 32], strides = [1, 1]} : vector<65x384xbf16> to vector<65x32xbf16>
    %21 = vector.extract_strided_slice %1 {offsets = [0, 160], sizes = [65, 32], strides = [1, 1]} : vector<65x384xbf16> to vector<65x32xbf16>
    %22 = vector.extract_strided_slice %1 {offsets = [0, 288], sizes = [65, 32], strides = [1, 1]} : vector<65x384xbf16> to vector<65x32xbf16>
    %cst_6 = arith.constant dense<0.000000e+00> : vector<65x65xf32>
    %23 = tpu.matmul %20, %21, %cst_6 {dimension_numbers = #tpu.dot_dimension_numbers<[1], [1], [0], [0], [0, 0, 1, 0], [], []>} : vector<65x32xbf16>, vector<65x32xbf16>, vector<65x65xf32> -> vector<65x65xf32>
    %cst_7 = arith.constant 0.176776692 : f32
    %24 = vector.broadcast %cst_7 : f32 to vector<65x65xf32>
    %25 = arith.mulf %23, %24 : vector<65x65xf32>
    %cst_8 = arith.constant dense<0xFF800000> : vector<65xf32>
    %26 = vector.multi_reduction <maximumf>, %25, %cst_8 [1] : vector<65x65xf32> to vector<65xf32>
    %27 = vector.shape_cast %26 : vector<65xf32> to vector<65x1xf32>
    %28 = vector.broadcast %27 : vector<65x1xf32> to vector<65x65xf32>
    %29 = arith.subf %25, %28 : vector<65x65xf32>
    %30 = math.exp %29 : vector<65x65xf32>
    %cst_9 = arith.constant dense<0.000000e+00> : vector<65xf32>
    %31 = vector.multi_reduction <add>, %30, %cst_9 [1] : vector<65x65xf32> to vector<65xf32>
    %32 = vector.shape_cast %31 : vector<65xf32> to vector<65x1xf32>
    %33 = tpu.reciprocal %32 {approx = true} : vector<65x1xf32> -> vector<65x1xf32>
    %34 = vector.broadcast %33 : vector<65x1xf32> to vector<65x65xf32>
    %35 = arith.mulf %30, %34 : vector<65x65xf32>
    %36 = arith.truncf %35 : vector<65x65xf32> to vector<65x65xbf16>
    %cst_10 = arith.constant dense<0.000000e+00> : vector<65x32xf32>
    %37 = tpu.matmul %36, %22, %cst_10 {dimension_numbers = #tpu.dot_dimension_numbers<[1], [0], [0], [1], [0, 0, 1, 1], [], []>} : vector<65x65xbf16>, vector<65x32xbf16>, vector<65x32xf32> -> vector<65x32xf32>
    %38 = vector.extract_strided_slice %1 {offsets = [0, 64], sizes = [65, 32], strides = [1, 1]} : vector<65x384xbf16> to vector<65x32xbf16>
    %39 = vector.extract_strided_slice %1 {offsets = [0, 192], sizes = [65, 32], strides = [1, 1]} : vector<65x384xbf16> to vector<65x32xbf16>
    %40 = vector.extract_strided_slice %1 {offsets = [0, 320], sizes = [65, 32], strides = [1, 1]} : vector<65x384xbf16> to vector<65x32xbf16>
    %cst_11 = arith.constant dense<0.000000e+00> : vector<65x65xf32>
    %41 = tpu.matmul %38, %39, %cst_11 {dimension_numbers = #tpu.dot_dimension_numbers<[1], [1], [0], [0], [0, 0, 1, 0], [], []>} : vector<65x32xbf16>, vector<65x32xbf16>, vector<65x65xf32> -> vector<65x65xf32>
    %cst_12 = arith.constant 0.176776692 : f32
    %42 = vector.broadcast %cst_12 : f32 to vector<65x65xf32>
    %43 = arith.mulf %41, %42 : vector<65x65xf32>
    %cst_13 = arith.constant dense<0xFF800000> : vector<65xf32>
    %44 = vector.multi_reduction <maximumf>, %43, %cst_13 [1] : vector<65x65xf32> to vector<65xf32>
    %45 = vector.shape_cast %44 : vector<65xf32> to vector<65x1xf32>
    %46 = vector.broadcast %45 : vector<65x1xf32> to vector<65x65xf32>
    %47 = arith.subf %43, %46 : vector<65x65xf32>
    %48 = math.exp %47 : vector<65x65xf32>
    %cst_14 = arith.constant dense<0.000000e+00> : vector<65xf32>
    %49 = vector.multi_reduction <add>, %48, %cst_14 [1] : vector<65x65xf32> to vector<65xf32>
    %50 = vector.shape_cast %49 : vector<65xf32> to vector<65x1xf32>
    %51 = tpu.reciprocal %50 {approx = true} : vector<65x1xf32> -> vector<65x1xf32>
    %52 = vector.broadcast %51 : vector<65x1xf32> to vector<65x65xf32>
    %53 = arith.mulf %48, %52 : vector<65x65xf32>
    %54 = arith.truncf %53 : vector<65x65xf32> to vector<65x65xbf16>
    %cst_15 = arith.constant dense<0.000000e+00> : vector<65x32xf32>
    %55 = tpu.matmul %54, %40, %cst_15 {dimension_numbers = #tpu.dot_dimension_numbers<[1], [0], [0], [1], [0, 0, 1, 1], [], []>} : vector<65x65xbf16>, vector<65x32xbf16>, vector<65x32xf32> -> vector<65x32xf32>
    %56 = vector.extract_strided_slice %1 {offsets = [0, 96], sizes = [65, 32], strides = [1, 1]} : vector<65x384xbf16> to vector<65x32xbf16>
    %57 = vector.extract_strided_slice %1 {offsets = [0, 224], sizes = [65, 32], strides = [1, 1]} : vector<65x384xbf16> to vector<65x32xbf16>
    %58 = vector.extract_strided_slice %1 {offsets = [0, 352], sizes = [65, 32], strides = [1, 1]} : vector<65x384xbf16> to vector<65x32xbf16>
    %cst_16 = arith.constant dense<0.000000e+00> : vector<65x65xf32>
    %59 = tpu.matmul %56, %57, %cst_16 {dimension_numbers = #tpu.dot_dimension_numbers<[1], [1], [0], [0], [0, 0, 1, 0], [], []>} : vector<65x32xbf16>, vector<65x32xbf16>, vector<65x65xf32> -> vector<65x65xf32>
    %cst_17 = arith.constant 0.176776692 : f32
    %60 = vector.broadcast %cst_17 : f32 to vector<65x65xf32>
    %61 = arith.mulf %59, %60 : vector<65x65xf32>
    %cst_18 = arith.constant dense<0xFF800000> : vector<65xf32>
    %62 = vector.multi_reduction <maximumf>, %61, %cst_18 [1] : vector<65x65xf32> to vector<65xf32>
    %63 = vector.shape_cast %62 : vector<65xf32> to vector<65x1xf32>
    %64 = vector.broadcast %63 : vector<65x1xf32> to vector<65x65xf32>
    %65 = arith.subf %61, %64 : vector<65x65xf32>
    %66 = math.exp %65 : vector<65x65xf32>
    %cst_19 = arith.constant dense<0.000000e+00> : vector<65xf32>
    %67 = vector.multi_reduction <add>, %66, %cst_19 [1] : vector<65x65xf32> to vector<65xf32>
    %68 = vector.shape_cast %67 : vector<65xf32> to vector<65x1xf32>
    %69 = tpu.reciprocal %68 {approx = true} : vector<65x1xf32> -> vector<65x1xf32>
    %70 = vector.broadcast %69 : vector<65x1xf32> to vector<65x65xf32>
    %71 = arith.mulf %66, %70 : vector<65x65xf32>
    %72 = arith.truncf %71 : vector<65x65xf32> to vector<65x65xbf16>
    %cst_20 = arith.constant dense<0.000000e+00> : vector<65x32xf32>
    %73 = tpu.matmul %72, %58, %cst_20 {dimension_numbers = #tpu.dot_dimension_numbers<[1], [0], [0], [1], [0, 0, 1, 1], [], []>} : vector<65x65xbf16>, vector<65x32xbf16>, vector<65x32xf32> -> vector<65x32xf32>
    %74 = tpu.concatenate %19, %37, %55, %73 in 1 : vector<65x32xf32>, vector<65x32xf32>, vector<65x32xf32>, vector<65x32xf32> -> vector<65x128xf32>
    %75 = arith.truncf %74 : vector<65x128xf32> to vector<65x128xbf16>
    %c0_21 = arith.constant 0 : index
    %c0_22 = arith.constant 0 : index
    %c0_23 = arith.constant 0 : index
    %76 = vector.load %arg2[%c0_21, %c0_22, %c0_23] : memref<1x65x128xbf16, #tpu.memory_space<vmem>>, vector<1x65x128xbf16>
    %77 = vector.shape_cast %76 : vector<1x65x128xbf16> to vector<65x128xbf16>
    %78 = vector.shape_cast %75 : vector<65x128xbf16> to vector<1x65x128xbf16>
    tpu.vector_store %arg2[%c0_21, %c0_22, %c0_23], %78 {strides = array<i32>} : memref<1x65x128xbf16, #tpu.memory_space<vmem>>, vector<1x65x128xbf16>,
    return
  }
  func.func @transform_0(%arg0: i32) -> (i32, i32, i32) {
    %c0_i32 = arith.constant 0 : i32
    %c0_i32_0 = arith.constant 0 : i32
    %c0_i32_1 = arith.constant 0 : i32
    return %arg0, %c0_i32, %c0_i32_0 : i32, i32, i32
  }
  func.func @transform_1(%arg0: i32) -> (i32, i32, i32) {
    %c0_i32 = arith.constant 0 : i32
    %c0_i32_0 = arith.constant 0 : i32
    %c0_i32_1 = arith.constant 0 : i32
    return %arg0, %c0_i32, %c0_i32_0 : i32, i32, i32
  }
}

module attributes {stable_mosaic.version = 11 : i64} {
  func.func @_mlp_block_kernel(%arg0: i32, %arg1: memref<130x128xbf16, #tpu.memory_space<vmem>>, %arg2: memref<1x128xf32, #tpu.memory_space<vmem>>, %arg3: memref<1x128xf32, #tpu.memory_space<vmem>>, %arg4: memref<128x512xbf16, #tpu.memory_space<vmem>>, %arg5: memref<1x512xf32, #tpu.memory_space<vmem>>, %arg6: memref<512x128xbf16, #tpu.memory_space<vmem>>, %arg7: memref<1x128xf32, #tpu.memory_space<vmem>>, %arg8: memref<130x128xbf16, #tpu.memory_space<vmem>>) attributes {dimension_semantics = [#tpu.dimension_semantics<parallel>], iteration_bounds = array<i64: 1>, scalar_prefetch = 0 : i64, scratch_operands = 0 : i64, tpu.core_type = #tpu.core_type<tc>, window_params = [{transform_indices = @transform_0, window_bounds = array<i64: 130, 128>}, {pipeline_mode = #tpu.pipeline_mode<synchronous>, transform_indices = @transform_1, window_bounds = array<i64: 1, 128>}, {pipeline_mode = #tpu.pipeline_mode<synchronous>, transform_indices = @transform_2, window_bounds = array<i64: 1, 128>}, {pipeline_mode = #tpu.pipeline_mode<synchronous>, transform_indices = @transform_3, window_bounds = array<i64: 128, 512>}, {pipeline_mode = #tpu.pipeline_mode<synchronous>, transform_indices = @transform_4, window_bounds = array<i64: 1, 512>}, {pipeline_mode = #tpu.pipeline_mode<synchronous>, transform_indices = @transform_5, window_bounds = array<i64: 512, 128>}, {pipeline_mode = #tpu.pipeline_mode<synchronous>, transform_indices = @transform_6, window_bounds = array<i64: 1, 128>}, {transform_indices = @transform_7, window_bounds = array<i64: 130, 128>}]} {
    %c0 = arith.constant 0 : index
    %c0_0 = arith.constant 0 : index
    %0 = vector.load %arg1[%c0, %c0_0] : memref<130x128xbf16, #tpu.memory_space<vmem>>, vector<130x128xbf16>
    %1 = arith.extf %0 : vector<130x128xbf16> to vector<130x128xf32>
    %cst = arith.constant dense<0.000000e+00> : vector<130xf32>
    %2 = vector.multi_reduction <add>, %1, %cst [1] : vector<130x128xf32> to vector<130xf32>
    %3 = vector.shape_cast %2 : vector<130xf32> to vector<130x1xf32>
    %cst_1 = arith.constant 1.280000e+02 : f32
    %4 = vector.broadcast %cst_1 : f32 to vector<130x1xf32>
    %5 = arith.divf %3, %4 : vector<130x1xf32>
    %6 = vector.broadcast %5 : vector<130x1xf32> to vector<130x128xf32>
    %7 = arith.subf %1, %6 : vector<130x128xf32>
    %8 = arith.mulf %7, %7 : vector<130x128xf32>
    %cst_2 = arith.constant dense<0.000000e+00> : vector<130xf32>
    %9 = vector.multi_reduction <add>, %8, %cst_2 [1] : vector<130x128xf32> to vector<130xf32>
    %10 = vector.shape_cast %9 : vector<130xf32> to vector<130x1xf32>
    %cst_3 = arith.constant 1.280000e+02 : f32
    %11 = vector.broadcast %cst_3 : f32 to vector<130x1xf32>
    %12 = arith.divf %10, %11 : vector<130x1xf32>
    %13 = vector.broadcast %5 : vector<130x1xf32> to vector<130x128xf32>
    %14 = arith.subf %1, %13 : vector<130x128xf32>
    %cst_4 = arith.constant 9.99999997E-7 : f32
    %15 = vector.broadcast %cst_4 : f32 to vector<130x1xf32>
    %16 = arith.addf %12, %15 : vector<130x1xf32>
    %17 = math.rsqrt %16 : vector<130x1xf32>
    %18 = vector.broadcast %17 : vector<130x1xf32> to vector<130x128xf32>
    %19 = arith.mulf %14, %18 : vector<130x128xf32>
    %c0_5 = arith.constant 0 : index
    %c0_6 = arith.constant 0 : index
    %20 = vector.load %arg2[%c0_5, %c0_6] : memref<1x128xf32, #tpu.memory_space<vmem>>, vector<1x128xf32>
    %21 = vector.broadcast %20 : vector<1x128xf32> to vector<130x128xf32>
    %22 = arith.mulf %19, %21 : vector<130x128xf32>
    %c0_7 = arith.constant 0 : index
    %c0_8 = arith.constant 0 : index
    %23 = vector.load %arg3[%c0_7, %c0_8] : memref<1x128xf32, #tpu.memory_space<vmem>>, vector<1x128xf32>
    %24 = vector.broadcast %23 : vector<1x128xf32> to vector<130x128xf32>
    %25 = arith.addf %22, %24 : vector<130x128xf32>
    %26 = arith.truncf %25 : vector<130x128xf32> to vector<130x128xbf16>
    %c0_9 = arith.constant 0 : index
    %c0_10 = arith.constant 0 : index
    %27 = vector.load %arg4[%c0_9, %c0_10] : memref<128x512xbf16, #tpu.memory_space<vmem>>, vector<128x512xbf16>
    %cst_11 = arith.constant dense<0.000000e+00> : vector<130x512xf32>
    %28 = tpu.matmul %26, %27, %cst_11 {dimension_numbers = #tpu.dot_dimension_numbers<[1], [0], [0], [1], [0, 0, 1, 1], [], []>} : vector<130x128xbf16>, vector<128x512xbf16>, vector<130x512xf32> -> vector<130x512xf32>
    %c0_12 = arith.constant 0 : index
    %c0_13 = arith.constant 0 : index
    %29 = vector.load %arg5[%c0_12, %c0_13] : memref<1x512xf32, #tpu.memory_space<vmem>>, vector<1x512xf32>
    %30 = vector.broadcast %29 : vector<1x512xf32> to vector<130x512xf32>
    %31 = arith.addf %28, %30 : vector<130x512xf32>
    %cst_14 = arith.constant 5.000000e-01 : f32
    %32 = vector.broadcast %cst_14 : f32 to vector<130x512xf32>
    %33 = arith.mulf %32, %31 : vector<130x512xf32>
    %cst_15 = arith.constant 4.471500e-02 : f32
    %34 = vector.broadcast %cst_15 : f32 to vector<130x512xf32>
    %35 = arith.mulf %34, %31 : vector<130x512xf32>
    %36 = arith.mulf %35, %31 : vector<130x512xf32>
    %37 = arith.mulf %36, %31 : vector<130x512xf32>
    %38 = arith.addf %31, %37 : vector<130x512xf32>
    %cst_16 = arith.constant 0.797884583 : f32
    %39 = vector.broadcast %cst_16 : f32 to vector<130x512xf32>
    %40 = arith.mulf %39, %38 : vector<130x512xf32>
    %41 = math.tanh %40 : vector<130x512xf32>
    %cst_17 = arith.constant 1.000000e+00 : f32
    %42 = vector.broadcast %cst_17 : f32 to vector<130x512xf32>
    %43 = arith.addf %42, %41 : vector<130x512xf32>
    %44 = arith.mulf %33, %43 : vector<130x512xf32>
    %45 = arith.truncf %44 : vector<130x512xf32> to vector<130x512xbf16>
    %c0_18 = arith.constant 0 : index
    %c0_19 = arith.constant 0 : index
    %46 = vector.load %arg6[%c0_18, %c0_19] : memref<512x128xbf16, #tpu.memory_space<vmem>>, vector<512x128xbf16>
    %cst_20 = arith.constant dense<0.000000e+00> : vector<130x128xf32>
    %47 = tpu.matmul %45, %46, %cst_20 {dimension_numbers = #tpu.dot_dimension_numbers<[1], [0], [0], [1], [0, 0, 1, 1], [], []>} : vector<130x512xbf16>, vector<512x128xbf16>, vector<130x128xf32> -> vector<130x128xf32>
    %c0_21 = arith.constant 0 : index
    %c0_22 = arith.constant 0 : index
    %48 = vector.load %arg7[%c0_21, %c0_22] : memref<1x128xf32, #tpu.memory_space<vmem>>, vector<1x128xf32>
    %49 = vector.broadcast %48 : vector<1x128xf32> to vector<130x128xf32>
    %50 = arith.addf %47, %49 : vector<130x128xf32>
    %51 = arith.addf %1, %50 : vector<130x128xf32>
    %52 = arith.truncf %51 : vector<130x128xf32> to vector<130x128xbf16>
    %c0_23 = arith.constant 0 : index
    %c0_24 = arith.constant 0 : index
    %53 = vector.load %arg8[%c0_23, %c0_24] : memref<130x128xbf16, #tpu.memory_space<vmem>>, vector<130x128xbf16>
    tpu.vector_store %arg8[%c0_23, %c0_24], %52 {strides = array<i32>} : memref<130x128xbf16, #tpu.memory_space<vmem>>, vector<130x128xbf16>,
    return
  }
  func.func @transform_0(%arg0: i32) -> (i32, i32) {
    %c0_i32 = arith.constant 0 : i32
    %c0_i32_0 = arith.constant 0 : i32
    return %arg0, %c0_i32 : i32, i32
  }
  func.func @transform_1(%arg0: i32) -> (i32, i32) {
    %c0_i32 = arith.constant 0 : i32
    %c0_i32_0 = arith.constant 0 : i32
    %c0_i32_1 = arith.constant 0 : i32
    return %c0_i32, %c0_i32_0 : i32, i32
  }
  func.func @transform_2(%arg0: i32) -> (i32, i32) {
    %c0_i32 = arith.constant 0 : i32
    %c0_i32_0 = arith.constant 0 : i32
    %c0_i32_1 = arith.constant 0 : i32
    return %c0_i32, %c0_i32_0 : i32, i32
  }
  func.func @transform_3(%arg0: i32) -> (i32, i32) {
    %c0_i32 = arith.constant 0 : i32
    %c0_i32_0 = arith.constant 0 : i32
    %c0_i32_1 = arith.constant 0 : i32
    return %c0_i32, %c0_i32_0 : i32, i32
  }
  func.func @transform_4(%arg0: i32) -> (i32, i32) {
    %c0_i32 = arith.constant 0 : i32
    %c0_i32_0 = arith.constant 0 : i32
    %c0_i32_1 = arith.constant 0 : i32
    return %c0_i32, %c0_i32_0 : i32, i32
  }
  func.func @transform_5(%arg0: i32) -> (i32, i32) {
    %c0_i32 = arith.constant 0 : i32
    %c0_i32_0 = arith.constant 0 : i32
    %c0_i32_1 = arith.constant 0 : i32
    return %c0_i32, %c0_i32_0 : i32, i32
  }
  func.func @transform_6(%arg0: i32) -> (i32, i32) {
    %c0_i32 = arith.constant 0 : i32
    %c0_i32_0 = arith.constant 0 : i32
    %c0_i32_1 = arith.constant 0 : i32
    return %c0_i32, %c0_i32_0 : i32, i32
  }
  func.func @transform_7(%arg0: i32) -> (i32, i32) {
    %c0_i32 = arith.constant 0 : i32
    %c0_i32_0 = arith.constant 0 : i32
    return %arg0, %c0_i32 : i32, i32
  }
}

module attributes {stable_mosaic.version = 11 : i64} {
  func.func @_fused_linear_kernel(%arg0: i32, %arg1: i32, %arg2: memref<130x128xbf16, #tpu.memory_space<vmem>>, %arg3: memref<1x128xf32, #tpu.memory_space<vmem>>, %arg4: memref<1x128xf32, #tpu.memory_space<vmem>>, %arg5: memref<128x48xbf16, #tpu.memory_space<vmem>>, %arg6: memref<1x48xf32, #tpu.memory_space<vmem>>, %arg7: memref<130x48xf32, #tpu.memory_space<vmem>>) attributes {dimension_semantics = [#tpu.dimension_semantics<parallel>, #tpu.dimension_semantics<parallel>], iteration_bounds = array<i64: 1, 1>, scalar_prefetch = 0 : i64, scratch_operands = 0 : i64, tpu.core_type = #tpu.core_type<tc>, window_params = [{transform_indices = @transform_0, window_bounds = array<i64: 130, 128>}, {pipeline_mode = #tpu.pipeline_mode<synchronous>, transform_indices = @transform_1, window_bounds = array<i64: 1, 128>}, {pipeline_mode = #tpu.pipeline_mode<synchronous>, transform_indices = @transform_2, window_bounds = array<i64: 1, 128>}, {transform_indices = @transform_3, window_bounds = array<i64: 128, 48>}, {transform_indices = @transform_4, window_bounds = array<i64: 1, 48>}, {transform_indices = @transform_5, window_bounds = array<i64: 130, 48>}]} {
    %c0 = arith.constant 0 : index
    %c0_0 = arith.constant 0 : index
    %0 = vector.load %arg2[%c0, %c0_0] : memref<130x128xbf16, #tpu.memory_space<vmem>>, vector<130x128xbf16>
    %1 = arith.extf %0 : vector<130x128xbf16> to vector<130x128xf32>
    %cst = arith.constant dense<0.000000e+00> : vector<130xf32>
    %2 = vector.multi_reduction <add>, %1, %cst [1] : vector<130x128xf32> to vector<130xf32>
    %3 = vector.shape_cast %2 : vector<130xf32> to vector<130x1xf32>
    %cst_1 = arith.constant 1.280000e+02 : f32
    %4 = vector.broadcast %cst_1 : f32 to vector<130x1xf32>
    %5 = arith.divf %3, %4 : vector<130x1xf32>
    %6 = vector.broadcast %5 : vector<130x1xf32> to vector<130x128xf32>
    %7 = arith.subf %1, %6 : vector<130x128xf32>
    %8 = arith.mulf %7, %7 : vector<130x128xf32>
    %cst_2 = arith.constant dense<0.000000e+00> : vector<130xf32>
    %9 = vector.multi_reduction <add>, %8, %cst_2 [1] : vector<130x128xf32> to vector<130xf32>
    %10 = vector.shape_cast %9 : vector<130xf32> to vector<130x1xf32>
    %cst_3 = arith.constant 1.280000e+02 : f32
    %11 = vector.broadcast %cst_3 : f32 to vector<130x1xf32>
    %12 = arith.divf %10, %11 : vector<130x1xf32>
    %13 = vector.broadcast %5 : vector<130x1xf32> to vector<130x128xf32>
    %14 = arith.subf %1, %13 : vector<130x128xf32>
    %cst_4 = arith.constant 9.99999997E-7 : f32
    %15 = vector.broadcast %cst_4 : f32 to vector<130x1xf32>
    %16 = arith.addf %12, %15 : vector<130x1xf32>
    %17 = math.rsqrt %16 : vector<130x1xf32>
    %18 = vector.broadcast %17 : vector<130x1xf32> to vector<130x128xf32>
    %19 = arith.mulf %14, %18 : vector<130x128xf32>
    %c0_5 = arith.constant 0 : index
    %c0_6 = arith.constant 0 : index
    %20 = vector.load %arg3[%c0_5, %c0_6] : memref<1x128xf32, #tpu.memory_space<vmem>>, vector<1x128xf32>
    %21 = vector.broadcast %20 : vector<1x128xf32> to vector<130x128xf32>
    %22 = arith.mulf %19, %21 : vector<130x128xf32>
    %c0_7 = arith.constant 0 : index
    %c0_8 = arith.constant 0 : index
    %23 = vector.load %arg4[%c0_7, %c0_8] : memref<1x128xf32, #tpu.memory_space<vmem>>, vector<1x128xf32>
    %24 = vector.broadcast %23 : vector<1x128xf32> to vector<130x128xf32>
    %25 = arith.addf %22, %24 : vector<130x128xf32>
    %26 = arith.truncf %25 : vector<130x128xf32> to vector<130x128xbf16>
    %c0_9 = arith.constant 0 : index
    %c0_10 = arith.constant 0 : index
    %27 = vector.load %arg5[%c0_9, %c0_10] : memref<128x48xbf16, #tpu.memory_space<vmem>>, vector<128x48xbf16>
    %cst_11 = arith.constant dense<0.000000e+00> : vector<130x48xf32>
    %28 = tpu.matmul %26, %27, %cst_11 {dimension_numbers = #tpu.dot_dimension_numbers<[1], [0], [0], [1], [0, 0, 1, 1], [], []>} : vector<130x128xbf16>, vector<128x48xbf16>, vector<130x48xf32> -> vector<130x48xf32>
    %c0_12 = arith.constant 0 : index
    %c0_13 = arith.constant 0 : index
    %29 = vector.load %arg6[%c0_12, %c0_13] : memref<1x48xf32, #tpu.memory_space<vmem>>, vector<1x48xf32>
    %30 = vector.broadcast %29 : vector<1x48xf32> to vector<130x48xf32>
    %31 = arith.addf %28, %30 : vector<130x48xf32>
    %c0_14 = arith.constant 0 : index
    %c0_15 = arith.constant 0 : index
    %32 = vector.load %arg7[%c0_14, %c0_15] : memref<130x48xf32, #tpu.memory_space<vmem>>, vector<130x48xf32>
    tpu.vector_store %arg7[%c0_14, %c0_15], %31 {strides = array<i32>} : memref<130x48xf32, #tpu.memory_space<vmem>>, vector<130x48xf32>,
    return
  }
  func.func @transform_0(%arg0: i32, %arg1: i32) -> (i32, i32) {
    %c0_i32 = arith.constant 0 : i32
    %c0_i32_0 = arith.constant 0 : i32
    return %arg0, %c0_i32 : i32, i32
  }
  func.func @transform_1(%arg0: i32, %arg1: i32) -> (i32, i32) {
    %c0_i32 = arith.constant 0 : i32
    %c0_i32_0 = arith.constant 0 : i32
    %c0_i32_1 = arith.constant 0 : i32
    return %c0_i32, %c0_i32_0 : i32, i32
  }
  func.func @transform_2(%arg0: i32, %arg1: i32) -> (i32, i32) {
    %c0_i32 = arith.constant 0 : i32
    %c0_i32_0 = arith.constant 0 : i32
    %c0_i32_1 = arith.constant 0 : i32
    return %c0_i32, %c0_i32_0 : i32, i32
  }
  func.func @transform_3(%arg0: i32, %arg1: i32) -> (i32, i32) {
    %c0_i32 = arith.constant 0 : i32
    %c0_i32_0 = arith.constant 0 : i32
    return %c0_i32, %arg1 : i32, i32
  }
  func.func @transform_4(%arg0: i32, %arg1: i32) -> (i32, i32) {
    %c0_i32 = arith.constant 0 : i32
    %c0_i32_0 = arith.constant 0 : i32
    return %c0_i32, %arg1 : i32, i32
  }
  func.func @transform_5(%arg0: i32, %arg1: i32) -> (i32, i32) {
    %c0_i32 = arith.constant 0 : i32
    return %arg0, %arg1 : i32, i32
  }
}

</mosaic_0001>

<llo_original>
// kernel: _lambda_.15
$region0: #{_lambda_.15}
  #allocation0 [shape = 'u32[]', space=smem, size = 0x4, offset = 0x4, fixed_abs, tag = 'smem constant byte address 0x4 - core index']
  #allocation1 [shape = 'u32[144,128]{1,0:T(1,128)}', space=vmem, size = 0x12000, scoped, tag = 'internal scratch']
  %s0 = inlined_call_operand.vmem [shape: bf16[128,48], index: 0, kind: input, shape index: {}]
  %s1 = inlined_call_operand.vmem [shape: bf16[48,128], index: 1, kind: input, shape index: {}]
  %s2 = inlined_call_operand.vmem [shape: f32[1,128], index: 2, kind: input, shape index: {}]
  %s3 = inlined_call_operand.vmem [shape: bf16[128,128], index: 3, kind: output, shape index: {}]
  %s4 = sld [smem:[#allocation0]]
  $region22: #{_lambda_.15} parent=0
    _
  %s6 = ssub.s32 1, %s4
  %s7 = scalar_select 0, %s6, %s4
  // Predicated region
  $region2: #{_lambda_.15} parent=0 // pred_check
    _
  $region3: #{_lambda_.15} parent=0 // pred_check_branch
    %9 = sbr.rel (0) target = $region5
  $region4: #{_lambda_.15} parent=0 // pred_region
    _
  $region5: #{_lambda_.15} parent=0 // pred_fallthru
    _
  // Predicated region
  $region6: #{_lambda_.15} parent=0 // pred_check
    _
  $region7: #{_lambda_.15} parent=0 // pred_check_branch
    %11 = sbr.rel (0) target = $region9
  $region8: #{_lambda_.15} parent=0 // pred_region
    _
  $region9: #{_lambda_.15} parent=0 // pred_fallthru
    _
  // Predicated region
  $region10: #{_lambda_.15} parent=0 // pred_check
    _
  $region11: #{_lambda_.15} parent=0 // pred_check_branch
    %13 = sbr.rel (0) target = $region13
  $region12: #{_lambda_.15} parent=0 // pred_region
    _
  $region13: #{_lambda_.15} parent=0 // pred_fallthru
    _
  %v15 = vld [vmem:[%s0] sm:$0xf]
  %v16 = vld [vmem:[%s0 + $0x4] sm:$0xf]
  %v17 = vld [vmem:[%s0 + $0x8] sm:$0xf]
  %v18 = vld [vmem:[%s0 + $0xc] sm:$0xf]
  %v19 = vld [vmem:[%s0 + $0x10] sm:$0xf]
  %v20 = vld [vmem:[%s0 + $0x14] sm:$0xf]
  %v21 = vld [vmem:[%s0 + $0x18] sm:$0xf]
  %v22 = vld [vmem:[%s0 + $0x1c] sm:$0xf]
  %v23 = vld [vmem:[%s0 + $0x20] sm:$0xf]
  %v24 = vld [vmem:[%s0 + $0x24] sm:$0xf]
  %v25 = vld [vmem:[%s0 + $0x28] sm:$0xf]
  %v26 = vld [vmem:[%s0 + $0x2c] sm:$0xf]
  %v27 = vld [vmem:[%s0 + $0x30] sm:$0xf]
  %v28 = vld [vmem:[%s0 + $0x34] sm:$0xf]
  %v29 = vld [vmem:[%s0 + $0x38] sm:$0xf]
  %v30 = vld [vmem:[%s0 + $0x3c] sm:$0xf]
  %v31 = vld [vmem:[%s1] sm:$0xf]
  %v32 = vld [vmem:[%s1 + $0x4] sm:$0xf]
  %v33 = vld [vmem:[%s1 + $0x8] sm:$0xf]
  %v34 = vld [vmem:[%s1 + $0xc] sm:$0xf]
  %v35 = vld [vmem:[%s1 + $0x10] sm:$0xf]
  %v36 = vld [vmem:[%s1 + $0x14] sm:$0xf]
  %v37 = vld [vmem:[%s2] sm:$0x1]
  %v39 = vlaneseq
  %v40 = vshrl.u32 %v39, 7
  %v41 = vsub.s32 0, %v40
  %v42 = vrot.slane %v37, %v41
  %v60 = vunpack.c.l.b16 %v15
  %v61 = vunpack.c.l.b16 %v16
  %v62 = vunpack.c.l.b16 %v17
  %v63 = vunpack.c.l.b16 %v18
  %v64 = vunpack.c.l.b16 %v19
  %v65 = vunpack.c.l.b16 %v20
  %v66 = vunpack.c.l.b16 %v21
  %v67 = vunpack.c.l.b16 %v22
  %v68 = vunpack.c.l.b16 %v23
  %v69 = vunpack.c.l.b16 %v24
  %v70 = vunpack.c.l.b16 %v25
  %v71 = vunpack.c.l.b16 %v26
  %v72 = vunpack.c.l.b16 %v27
  %v73 = vunpack.c.l.b16 %v28
  %v74 = vunpack.c.l.b16 %v29
  %v75 = vunpack.c.l.b16 %v30
  %v76 = vpack.c.b16 %v61, %v60
  %v77 = vpack.c.b16 %v63, %v62
  %v78 = vpack.c.b16 %v65, %v64
  %v79 = vpack.c.b16 %v67, %v66
  %v80 = vpack.c.b16 %v69, %v68
  %v81 = vpack.c.b16 %v71, %v70
  %v82 = vpack.c.b16 %v73, %v72
  %v83 = vpack.c.b16 %v75, %v74
  %v90 = vunpack.c.l.b16 %v31
  %v91 = vunpack.c.l.b16 %v32
  %v92 = vunpack.c.l.b16 %v33
  %v93 = vunpack.c.l.b16 %v34
  %v94 = vunpack.c.l.b16 %v35
  %v95 = vunpack.c.l.b16 %v36
  %v96 = vpack.c.b16 %v91, %v90
  %v97 = vpack.c.b16 %v93, %v92
  %v98 = vpack.c.b16 %v95, %v94
  %vm102 = vcmask 392192
  %v104 = vsel %vm102, %v76, 0
  %v107 = vsel %vm102, %v77, 0
  %v110 = vsel %vm102, %v78, 0
  %v113 = vsel %vm102, %v79, 0
  %v116 = vsel %vm102, %v80, 0
  %v119 = vsel %vm102, %v81, 0
  %v122 = vsel %vm102, %v82, 0
  %v125 = vsel %vm102, %v83, 0
  %127 = vmatprep.subr.bf16.mxu0 0
  %128 = vmatpush1.bf16.msra.mxu0 %v96
  %129 = vmatprep.subr.bf16.mxu0 0
  %130 = vmatpush1.bf16.msra.mxu0 %v97
  %131 = vmatprep.subr.bf16.mxu0 0
  %132 = vmatpush1.bf16.msra.mxu0 %v98
  %133 = vmatprep.subr.bf16.mxu0 0
  %134 = vmatpush1.bf16.msra.mxu0 0
  %135 = vmatprep.subr.bf16.mxu0 0
  %136 = vmatpush1.bf16.msra.mxu0 0
  %137 = vmatprep.subr.bf16.mxu0 0
  %138 = vmatpush1.bf16.msra.mxu0 0
  %139 = vmatprep.subr.bf16.mxu0 0
  %140 = vmatpush1.bf16.msra.mxu0 0
  %141 = vmatprep.subr.bf16.mxu0 0
  %142 = vmatpush1.bf16.msra.mxu0 0
  %143 = vmatprep.subr.bf16.mxu0 0
  %144 = vmatpush1.bf16.msra.mxu0 0
  %145 = vmatprep.subr.bf16.mxu0 0
  %146 = vmatpush1.bf16.msra.mxu0 0
  %147 = vmatprep.subr.bf16.mxu0 0
  %148 = vmatpush1.bf16.msra.mxu0 0
  %149 = vmatprep.subr.bf16.mxu0 0
  %150 = vmatpush1.bf16.msra.mxu0 0
  %151 = vmatprep.subr.bf16.mxu0 0
  %152 = vmatpush1.bf16.msra.mxu0 0
  %153 = vmatprep.subr.bf16.mxu0 0
  %154 = vmatpush1.bf16.msra.mxu0 0
  %155 = vmatprep.subr.bf16.mxu0 0
  %156 = vmatpush1.bf16.msra.mxu0 0
  %157 = vmatprep.subr.bf16.mxu0 0
  %158 = vmatpush1.bf16.msra.mxu0 0
  %159 = vmatprep.mubr.bf16.mxu0 0
  %160 = vmatmul.mubr.bf16.gmra.mrb[0].mxu0 %v104
  %v161 = vpop.f32.mrb[0].mxu0
  %v162 = vadd.f32 %v42, %v161
  %v163 = vpop.f32.mrb[0].mxu0
  %v164 = vpop.f32.mrb[0].mxu0
  %v165 = vadd.f32 %v42, %v164
  %v166 = vpop.f32.mrb[0].mxu0
  %167 = vmatprep.mubr.bf16.mxu0 0
  %168 = vmatmul.mubr.bf16.gmra.mrb[0].mxu0 %v107
  %v169 = vpop.f32.mrb[0].mxu0
  %v170 = vadd.f32 %v42, %v169
  %v171 = vpop.f32.mrb[0].mxu0
  %v172 = vpop.f32.mrb[0].mxu0
  %v173 = vadd.f32 %v42, %v172
  %v174 = vpop.f32.mrb[0].mxu0
  %175 = vmatprep.mubr.bf16.mxu0 0
  %176 = vmatmul.mubr.bf16.gmra.mrb[0].mxu0 %v110
  %v177 = vpop.f32.mrb[0].mxu0
  %v178 = vadd.f32 %v42, %v177
  %v179 = vpop.f32.mrb[0].mxu0
  %v180 = vpop.f32.mrb[0].mxu0
  %v181 = vadd.f32 %v42, %v180
  %v182 = vpop.f32.mrb[0].mxu0
  %183 = vmatprep.mubr.bf16.mxu0 0
  %184 = vmatmul.mubr.bf16.gmra.mrb[0].mxu0 %v113
  %v185 = vpop.f32.mrb[0].mxu0
  %v186 = vadd.f32 %v42, %v185
  %v187 = vpop.f32.mrb[0].mxu0
  %v188 = vpop.f32.mrb[0].mxu0
  %v189 = vadd.f32 %v42, %v188
  %v190 = vpop.f32.mrb[0].mxu0
  %191 = vmatprep.mubr.bf16.mxu0 0
  %192 = vmatmul.mubr.bf16.gmra.mrb[0].mxu0 %v116
  %v193 = vpop.f32.mrb[0].mxu0
  %v194 = vadd.f32 %v42, %v193
  %v195 = vpop.f32.mrb[0].mxu0
  %v196 = vpop.f32.mrb[0].mxu0
  %v197 = vadd.f32 %v42, %v196
  %v198 = vpop.f32.mrb[0].mxu0
  %199 = vmatprep.mubr.bf16.mxu0 0
  %200 = vmatmul.mubr.bf16.gmra.mrb[0].mxu0 %v119
  %v201 = vpop.f32.mrb[0].mxu0
  %v202 = vadd.f32 %v42, %v201
  %v203 = vpop.f32.mrb[0].mxu0
  %v204 = vpop.f32.mrb[0].mxu0
  %v205 = vadd.f32 %v42, %v204
  %v206 = vpop.f32.mrb[0].mxu0
  %207 = vmatprep.mubr.bf16.mxu0 0
  %208 = vmatmul.mubr.bf16.gmra.mrb[0].mxu0 %v122
  %v209 = vpop.f32.mrb[0].mxu0
  %v210 = vadd.f32 %v42, %v209
  %v211 = vpop.f32.mrb[0].mxu0
  %v212 = vpop.f32.mrb[0].mxu0
  %v213 = vadd.f32 %v42, %v212
  %v214 = vpop.f32.mrb[0].mxu0
  %215 = vmatprep.mubr.bf16.mxu0 0
  %216 = vmatmul.mubr.bf16.gmra.mrb[0].mxu0 %v125
  %v217 = vpop.f32.mrb[0].mxu0
  %v218 = vadd.f32 %v42, %v217
  %v219 = vpop.f32.mrb[0].mxu0
  %v220 = vpop.f32.mrb[0].mxu0
  %v221 = vadd.f32 %v42, %v220
  %v222 = vpop.f32.mrb[0].mxu0
  %223 = vdwg.mxu0
  %v224 = vpack.c.bf16 %v165, %v162
  %v225 = vpack.c.bf16 %v173, %v170
  %v226 = vpack.c.bf16 %v181, %v178
  %v227 = vpack.c.bf16 %v189, %v186
  %v228 = vpack.c.bf16 %v197, %v194
  %v229 = vpack.c.bf16 %v205, %v202
  %v230 = vpack.c.bf16 %v213, %v210
  %v231 = vpack.c.bf16 %v221, %v218
  %v240 = vunpack.c.l.b16 %v224
  %v241 = vunpack.c.h.b16 %v224
  %v242 = vunpack.c.l.b16 %v225
  %v243 = vunpack.c.h.b16 %v225
  %v244 = vunpack.c.l.b16 %v226
  %v245 = vunpack.c.h.b16 %v226
  %v246 = vunpack.c.l.b16 %v227
  %v247 = vunpack.c.h.b16 %v227
  %v248 = vunpack.c.l.b16 %v228
  %v249 = vunpack.c.h.b16 %v228
  %v250 = vunpack.c.l.b16 %v229
  %v251 = vunpack.c.h.b16 %v229
  %v252 = vunpack.c.l.b16 %v230
  %v253 = vunpack.c.h.b16 %v230
  %v254 = vunpack.c.l.b16 %v231
  %v255 = vunpack.c.h.b16 %v231
  %v256 = vpack.c.b16 %v240, %v240
  %v257 = vpack.c.b16 %v241, %v241
  %v258 = vpack.c.b16 %v242, %v242
  %v259 = vpack.c.b16 %v243, %v243
  %v260 = vpack.c.b16 %v244, %v244
  %v261 = vpack.c.b16 %v245, %v245
  %v262 = vpack.c.b16 %v246, %v246
  %v263 = vpack.c.b16 %v247, %v247
  %v264 = vpack.c.b16 %v248, %v248
  %v265 = vpack.c.b16 %v249, %v249
  %v266 = vpack.c.b16 %v250, %v250
  %v267 = vpack.c.b16 %v251, %v251
  %v268 = vpack.c.b16 %v252, %v252
  %v269 = vpack.c.b16 %v253, %v253
  %v270 = vpack.c.b16 %v254, %v254
  %v271 = vpack.c.b16 %v255, %v255
  %288 = vst [vmem:[%s3] sm:$0xf] %v256
  %289 = vst [vmem:[%s3 + $0x4] sm:$0xf] %v257
  %290 = vst [vmem:[%s3 + $0x8] sm:$0xf] %v258
  %291 = vst [vmem:[%s3 + $0xc] sm:$0xf] %v259
  %292 = vst [vmem:[%s3 + $0x10] sm:$0xf] %v260
  %293 = vst [vmem:[%s3 + $0x14] sm:$0xf] %v261
  %294 = vst [vmem:[%s3 + $0x18] sm:$0xf] %v262
  %295 = vst [vmem:[%s3 + $0x1c] sm:$0xf] %v263
  %296 = vst [vmem:[%s3 + $0x20] sm:$0xf] %v264
  %297 = vst [vmem:[%s3 + $0x24] sm:$0xf] %v265
  %298 = vst [vmem:[%s3 + $0x28] sm:$0xf] %v266
  %299 = vst [vmem:[%s3 + $0x2c] sm:$0xf] %v267
  %300 = vst [vmem:[%s3 + $0x30] sm:$0xf] %v268
  %301 = vst [vmem:[%s3 + $0x34] sm:$0xf] %v269
  %302 = vst [vmem:[%s3 + $0x38] sm:$0xf] %v270
  %303 = vst [vmem:[%s3 + $0x3c] sm:$0xf] %v271
  // Predicated region
  $region14: #{_lambda_.15} parent=0 // pred_check
    _
  $region15: #{_lambda_.15} parent=0 // pred_check_branch
    %305 = sbr.rel (0) target = $region17
  $region16: #{_lambda_.15} parent=0 // pred_region
    _
  $region17: #{_lambda_.15} parent=0 // pred_fallthru
    _
  // Predicated region
  $region18: #{_lambda_.15} parent=0 // pred_check
    _
  $region19: #{_lambda_.15} parent=0 // pred_check_branch
    %307 = sbr.rel (0) target = $region21
  $region20: #{_lambda_.15} parent=0 // pred_region
    _
  $region21: #{_lambda_.15} parent=0 // pred_fallthru
    _

// kernel: _lambda_.16
$region0: #{_lambda_.16}
  #allocation0 [shape = 'u32[]', space=smem, size = 0x4, offset = 0x4, fixed_abs, tag = 'smem constant byte address 0x4 - core index']
  #allocation1 [shape = 'u32[144,128]{1,0:T(1,128)}', space=vmem, size = 0x12000, scoped, tag = 'internal scratch']
  %s0 = inlined_call_operand.vmem [shape: bf16[66,128], index: 0, kind: input, shape index: {}]
  %s1 = inlined_call_operand.vmem [shape: f32[1,128], index: 1, kind: input, shape index: {}]
  %s2 = inlined_call_operand.vmem [shape: f32[1,128], index: 2, kind: input, shape index: {}]
  %s3 = inlined_call_operand.vmem [shape: bf16[128,384], index: 3, kind: input, shape index: {}]
  %s4 = inlined_call_operand.vmem [shape: f32[1,384], index: 4, kind: input, shape index: {}]
  %s5 = inlined_call_operand.vmem [shape: bf16[66,384], index: 5, kind: output, shape index: {}]
  %s6 = sld [smem:[#allocation0]]
  $region30: #{_lambda_.16} parent=0
    _
  %s8 = ssub.s32 1, %s6
  %s9 = scalar_select 0, %s8, %s6
  // Predicated region
  $region2: #{_lambda_.16} parent=0 // pred_check
    _
  $region3: #{_lambda_.16} parent=0 // pred_check_branch
    %11 = sbr.rel (0) target = $region5
  $region4: #{_lambda_.16} parent=0 // pred_region
    _
  $region5: #{_lambda_.16} parent=0 // pred_fallthru
    _
  // Predicated region
  $region6: #{_lambda_.16} parent=0 // pred_check
    _
  $region7: #{_lambda_.16} parent=0 // pred_check_branch
    %13 = sbr.rel (0) target = $region9
  $region8: #{_lambda_.16} parent=0 // pred_region
    _
  $region9: #{_lambda_.16} parent=0 // pred_fallthru
    _
  // Predicated region
  $region10: #{_lambda_.16} parent=0 // pred_check
    _
  $region11: #{_lambda_.16} parent=0 // pred_check_branch
    %15 = sbr.rel (0) target = $region13
  $region12: #{_lambda_.16} parent=0 // pred_region
    _
  $region13: #{_lambda_.16} parent=0 // pred_fallthru
    _
  // Predicated region
  $region14: #{_lambda_.16} parent=0 // pred_check
    _
  $region15: #{_lambda_.16} parent=0 // pred_check_branch
    %17 = sbr.rel (0) target = $region17
  $region16: #{_lambda_.16} parent=0 // pred_region
    _
  $region17: #{_lambda_.16} parent=0 // pred_fallthru
    _
  // Predicated region
  $region18: #{_lambda_.16} parent=0 // pred_check
    _
  $region19: #{_lambda_.16} parent=0 // pred_check_branch
    %19 = sbr.rel (0) target = $region21
  $region20: #{_lambda_.16} parent=0 // pred_region
    _
  $region21: #{_lambda_.16} parent=0 // pred_fallthru
    _
  %v21 = vld [vmem:[%s0] sm:$0xf]
  %v22 = vld [vmem:[%s0 + $0x4] sm:$0xf]
  %v23 = vld [vmem:[%s0 + $0x8] sm:$0xf]
  %v24 = vld [vmem:[%s0 + $0xc] sm:$0xf]
  %v25 = vld [vmem:[%s0 + $0x10] sm:$0xf]
  %v26 = vld [vmem:[%s0 + $0x14] sm:$0xf]
  %v27 = vld [vmem:[%s0 + $0x18] sm:$0xf]
  %v28 = vld [vmem:[%s0 + $0x1c] sm:$0xf]
  %v29 = vld [vmem:[%s0 + $0x20] sm:$0x1]
  %v30 = vunpack.c.l.bf16 %v21
  %v31 = vunpack.c.l.bf16 %v22
  %v32 = vunpack.c.l.bf16 %v23
  %v33 = vunpack.c.l.bf16 %v24
  %v34 = vunpack.c.l.bf16 %v25
  %v35 = vunpack.c.l.bf16 %v26
  %v36 = vunpack.c.l.bf16 %v27
  %v37 = vunpack.c.l.bf16 %v28
  %v38 = vunpack.c.l.bf16 %v29
  %39 = vadd.xlane.f32.xlu0 %v30
  %v40 = vpop.xlane.xlu0 %39
  %41 = vadd.xlane.f32.xlu0 %v31
  %v42 = vpop.xlane.xlu0 %41
  %43 = vadd.xlane.f32.xlu0 %v32
  %v44 = vpop.xlane.xlu0 %43
  %45 = vadd.xlane.f32.xlu0 %v33
  %v46 = vpop.xlane.xlu0 %45
  %47 = vadd.xlane.f32.xlu0 %v34
  %v48 = vpop.xlane.xlu0 %47
  %49 = vadd.xlane.f32.xlu0 %v35
  %v50 = vpop.xlane.xlu0 %49
  %51 = vadd.xlane.f32.xlu0 %v36
  %v52 = vpop.xlane.xlu0 %51
  %53 = vadd.xlane.f32.xlu0 %v37
  %v54 = vpop.xlane.xlu0 %53
  %vm55 = vcmask 1041408
  %v56 = vsel %vm55, %v38, 0.0
  %57 = vadd.xlane.f32.xlu0 %v56
  %v58 = vpop.xlane.xlu0 %57
  %v59 = vrcp.pop 128.0
  %v60 = vmul.f32 %v40, %v59
  %v61 = vmul.f32 %v42, %v59
  %v62 = vmul.f32 %v44, %v59
  %v63 = vmul.f32 %v46, %v59
  %v64 = vmul.f32 %v48, %v59
  %v65 = vmul.f32 %v50, %v59
  %v66 = vmul.f32 %v52, %v59
  %v67 = vmul.f32 %v54, %v59
  %v68 = vmul.f32 %v58, %v59
  %v69 = vsub.f32 %v30, %v60
  %v70 = vsub.f32 %v31, %v61
  %v71 = vsub.f32 %v32, %v62
  %v72 = vsub.f32 %v33, %v63
  %v73 = vsub.f32 %v34, %v64
  %v74 = vsub.f32 %v35, %v65
  %v75 = vsub.f32 %v36, %v66
  %v76 = vsub.f32 %v37, %v67
  %v77 = vsub.f32 %v38, %v68
  %v78 = vmul.f32 %v69, %v69
  %v79 = vmul.f32 %v70, %v70
  %v80 = vmul.f32 %v71, %v71
  %v81 = vmul.f32 %v72, %v72
  %v82 = vmul.f32 %v73, %v73
  %v83 = vmul.f32 %v74, %v74
  %v84 = vmul.f32 %v75, %v75
  %v85 = vmul.f32 %v76, %v76
  %v86 = vmul.f32 %v77, %v77
  %87 = vadd.xlane.f32.xlu0 %v78
  %v88 = vpop.xlane.xlu0 %87
  %89 = vadd.xlane.f32.xlu0 %v79
  %v90 = vpop.xlane.xlu0 %89
  %91 = vadd.xlane.f32.xlu0 %v80
  %v92 = vpop.xlane.xlu0 %91
  %93 = vadd.xlane.f32.xlu0 %v81
  %v94 = vpop.xlane.xlu0 %93
  %95 = vadd.xlane.f32.xlu0 %v82
  %v96 = vpop.xlane.xlu0 %95
  %97 = vadd.xlane.f32.xlu0 %v83
  %v98 = vpop.xlane.xlu0 %97
  %99 = vadd.xlane.f32.xlu0 %v84
  %v100 = vpop.xlane.xlu0 %99
  %101 = vadd.xlane.f32.xlu0 %v85
  %v102 = vpop.xlane.xlu0 %101
  %v103 = vsel %vm55, %v86, 0.0
  %104 = vadd.xlane.f32.xlu0 %v103
  %v105 = vpop.xlane.xlu0 %104
  %v106 = vmul.f32 %v88, %v59
  %v107 = vmul.f32 %v90, %v59
  %v108 = vmul.f32 %v92, %v59
  %v109 = vmul.f32 %v94, %v59
  %v110 = vmul.f32 %v96, %v59
  %v111 = vmul.f32 %v98, %v59
  %v112 = vmul.f32 %v100, %v59
  %v113 = vmul.f32 %v102, %v59
  %v114 = vmul.f32 %v105, %v59
  %v115 = vadd.f32 %v106, 1e-06
  %v116 = vadd.f32 %v107, 1e-06
  %v117 = vadd.f32 %v108, 1e-06
  %v118 = vadd.f32 %v109, 1e-06
  %v119 = vadd.f32 %v110, 1e-06
  %v120 = vadd.f32 %v111, 1e-06
  %v121 = vadd.f32 %v112, 1e-06
  %v122 = vadd.f32 %v113, 1e-06
  %v123 = vadd.f32 %v114, 1e-06
  %v124 = vrsqrt.pop %v115
  %v125 = vrsqrt.pop %v116
  %v126 = vrsqrt.pop %v117
  %v127 = vrsqrt.pop %v118
  %v128 = vrsqrt.pop %v119
  %v129 = vrsqrt.pop %v120
  %v130 = vrsqrt.pop %v121
  %v131 = vrsqrt.pop %v122
  %v132 = vrsqrt.pop %v123
  %v133 = vmul.f32 %v69, %v124
  %v134 = vmul.f32 %v70, %v125
  %v135 = vmul.f32 %v71, %v126
  %v136 = vmul.f32 %v72, %v127
  %v137 = vmul.f32 %v73, %v128
  %v138 = vmul.f32 %v74, %v129
  %v139 = vmul.f32 %v75, %v130
  %v140 = vmul.f32 %v76, %v131
  %v141 = vmul.f32 %v77, %v132
  %v142 = vld [vmem:[%s1] sm:$0x1]
  %v144 = vlaneseq
  %v145 = vshrl.u32 %v144, 7
  %v146 = vsub.s32 0, %v145
  %v147 = vrot.slane %v142, %v146
  %v149 = vmul.f32 %v133, %v147
  %v150 = vmul.f32 %v134, %v147
  %v151 = vmul.f32 %v135, %v147
  %v152 = vmul.f32 %v136, %v147
  %v153 = vmul.f32 %v137, %v147
  %v154 = vmul.f32 %v138, %v147
  %v155 = vmul.f32 %v139, %v147
  %v156 = vmul.f32 %v140, %v147
  %v157 = vmul.f32 %v141, %v147
  %v158 = vld [vmem:[%s2] sm:$0x1]
  %v160 = vlaneseq
  %v161 = vshrl.u32 %v160, 7
  %v162 = vsub.s32 0, %v161
  %v163 = vrot.slane %v158, %v162
  %v165 = vadd.f32 %v149, %v163
  %v166 = vadd.f32 %v150, %v163
  %v167 = vadd.f32 %v151, %v163
  %v168 = vadd.f32 %v152, %v163
  %v169 = vadd.f32 %v153, %v163
  %v170 = vadd.f32 %v154, %v163
  %v171 = vadd.f32 %v155, %v163
  %v172 = vadd.f32 %v156, %v163
  %v173 = vadd.f32 %v157, %v163
  %v174 = vpack.c.bf16 %v166, %v165
  %v175 = vpack.c.bf16 %v168, %v167
  %v176 = vpack.c.bf16 %v170, %v169
  %v177 = vpack.c.bf16 %v172, %v171
  %v178 = vpack.c.bf16 %v173, %v173
  %v179 = vld [vmem:[%s3] sm:$0xff]
  %v180 = vld [vmem:[%s3 + $0x8] sm:$0xf]
  %v181 = vld [vmem:[%s3 + $0xc] sm:$0xff]
  %v182 = vld [vmem:[%s3 + $0x14] sm:$0xf]
  %v183 = vld [vmem:[%s3 + $0x18] sm:$0xff]
  %v184 = vld [vmem:[%s3 + $0x20] sm:$0xf]
  %v185 = vld [vmem:[%s3 + $0x24] sm:$0xff]
  %v186 = vld [vmem:[%s3 + $0x2c] sm:$0xf]
  %v187 = vld [vmem:[%s3 + $0x30] sm:$0xff]
  %v188 = vld [vmem:[%s3 + $0x38] sm:$0xf]
  %v189 = vld [vmem:[%s3 + $0x3c] sm:$0xff]
  %v190 = vld [vmem:[%s3 + $0x44] sm:$0xf]
  %v191 = vld [vmem:[%s3 + $0x48] sm:$0xff]
  %v192 = vld [vmem:[%s3 + $0x50] sm:$0xf]
  %v193 = vld [vmem:[%s3 + $0x54] sm:$0xff]
  %v194 = vld [vmem:[%s3 + $0x5c] sm:$0xf]
  %v195 = vld [vmem:[%s3 + $0x60] sm:$0xff]
  %v196 = vld [vmem:[%s3 + $0x68] sm:$0xf]
  %v197 = vld [vmem:[%s3 + $0x6c] sm:$0xff]
  %v198 = vld [vmem:[%s3 + $0x74] sm:$0xf]
  %v199 = vld [vmem:[%s3 + $0x78] sm:$0xff]
  %v200 = vld [vmem:[%s3 + $0x80] sm:$0xf]
  %v201 = vld [vmem:[%s3 + $0x84] sm:$0xff]
  %v202 = vld [vmem:[%s3 + $0x8c] sm:$0xf]
  %v203 = vld [vmem:[%s3 + $0x90] sm:$0xff]
  %v204 = vld [vmem:[%s3 + $0x98] sm:$0xf]
  %v205 = vld [vmem:[%s3 + $0x9c] sm:$0xff]
  %v206 = vld [vmem:[%s3 + $0xa4] sm:$0xf]
  %v207 = vld [vmem:[%s3 + $0xa8] sm:$0xff]
  %v208 = vld [vmem:[%s3 + $0xb0] sm:$0xf]
  %v209 = vld [vmem:[%s3 + $0xb4] sm:$0xff]
  %v210 = vld [vmem:[%s3 + $0xbc] sm:$0xf]
  %v211 = vld [vmem:[%s4] sm:$0x7]
  %v213 = vlaneseq
  %v214 = vshrl.u32 %v213, 7
  %v215 = vsub.s32 0, %v214
  %v216 = vrot.slane %v211, %v215
  %v217 = vlaneseq
  %v218 = vshrl.u32 %v217, 7
  %v219 = vsub.s32 1, %v218
  %v220 = vrot.slane %v211, %v219
  %v221 = vlaneseq
  %v222 = vshrl.u32 %v221, 7
  %v223 = vsub.s32 2, %v222
  %v224 = vrot.slane %v211, %v223
  %v260 = vunpack.c.l.b16 %v179
  %v261 = vunpack.c.h.b16 %v179
  %v262 = vunpack.c.l.b16 %v180
  %v263 = vunpack.c.l.b16 %v181
  %v264 = vunpack.c.h.b16 %v181
  %v265 = vunpack.c.l.b16 %v182
  %v266 = vunpack.c.l.b16 %v183
  %v267 = vunpack.c.h.b16 %v183
  %v268 = vunpack.c.l.b16 %v184
  %v269 = vunpack.c.l.b16 %v185
  %v270 = vunpack.c.h.b16 %v185
  %v271 = vunpack.c.l.b16 %v186
  %v272 = vunpack.c.l.b16 %v187
  %v273 = vunpack.c.h.b16 %v187
  %v274 = vunpack.c.l.b16 %v188
  %v275 = vunpack.c.l.b16 %v189
  %v276 = vunpack.c.h.b16 %v189
  %v277 = vunpack.c.l.b16 %v190
  %v278 = vunpack.c.l.b16 %v191
  %v279 = vunpack.c.h.b16 %v191
  %v280 = vunpack.c.l.b16 %v192
  %v281 = vunpack.c.l.b16 %v193
  %v282 = vunpack.c.h.b16 %v193
  %v283 = vunpack.c.l.b16 %v194
  %v284 = vunpack.c.l.b16 %v195
  %v285 = vunpack.c.h.b16 %v195
  %v286 = vunpack.c.l.b16 %v196
  %v287 = vunpack.c.l.b16 %v197
  %v288 = vunpack.c.h.b16 %v197
  %v289 = vunpack.c.l.b16 %v198
  %v290 = vunpack.c.l.b16 %v199
  %v291 = vunpack.c.h.b16 %v199
  %v292 = vunpack.c.l.b16 %v200
  %v293 = vunpack.c.l.b16 %v201
  %v294 = vunpack.c.h.b16 %v201
  %v295 = vunpack.c.l.b16 %v202
  %v296 = vunpack.c.l.b16 %v203
  %v297 = vunpack.c.h.b16 %v203
  %v298 = vunpack.c.l.b16 %v204
  %v299 = vunpack.c.l.b16 %v205
  %v300 = vunpack.c.h.b16 %v205
  %v301 = vunpack.c.l.b16 %v206
  %v302 = vunpack.c.l.b16 %v207
  %v303 = vunpack.c.h.b16 %v207
  %v304 = vunpack.c.l.b16 %v208
  %v305 = vunpack.c.l.b16 %v209
  %v306 = vunpack.c.h.b16 %v209
  %v307 = vunpack.c.l.b16 %v210
  %v308 = vpack.c.b16 %v263, %v260
  %v309 = vpack.c.b16 %v264, %v261
  %v310 = vpack.c.b16 %v265, %v262
  %v311 = vpack.c.b16 %v269, %v266
  %v312 = vpack.c.b16 %v270, %v267
  %v313 = vpack.c.b16 %v271, %v268
  %v314 = vpack.c.b16 %v275, %v272
  %v315 = vpack.c.b16 %v276, %v273
  %v316 = vpack.c.b16 %v277, %v274
  %v317 = vpack.c.b16 %v281, %v278
  %v318 = vpack.c.b16 %v282, %v279
  %v319 = vpack.c.b16 %v283, %v280
  %v320 = vpack.c.b16 %v287, %v284
  %v321 = vpack.c.b16 %v288, %v285
  %v322 = vpack.c.b16 %v289, %v286
  %v323 = vpack.c.b16 %v293, %v290
  %v324 = vpack.c.b16 %v294, %v291
  %v325 = vpack.c.b16 %v295, %v292
  %v326 = vpack.c.b16 %v299, %v296
  %v327 = vpack.c.b16 %v300, %v297
  %v328 = vpack.c.b16 %v301, %v298
  %v329 = vpack.c.b16 %v305, %v302
  %v330 = vpack.c.b16 %v306, %v303
  %v331 = vpack.c.b16 %v307, %v304
  %356 = vmatprep.subr.bf16.mxu0 %v309
  %357 = vmatpush1.bf16.msra.mxu0 %v308
  %358 = vmatprep.subr.bf16.mxu0 %v312
  %359 = vmatpush1.bf16.msra.mxu0 %v311
  %360 = vmatprep.subr.bf16.mxu0 %v315
  %361 = vmatpush1.bf16.msra.mxu0 %v314
  %362 = vmatprep.subr.bf16.mxu0 %v318
  %363 = vmatpush1.bf16.msra.mxu0 %v317
  %364 = vmatprep.subr.bf16.mxu0 %v321
  %365 = vmatpush1.bf16.msra.mxu0 %v320
  %366 = vmatprep.subr.bf16.mxu0 %v324
  %367 = vmatpush1.bf16.msra.mxu0 %v323
  %368 = vmatprep.subr.bf16.mxu0 %v327
  %369 = vmatpush1.bf16.msra.mxu0 %v326
  %370 = vmatprep.subr.bf16.mxu0 %v330
  %371 = vmatpush1.bf16.msra.mxu0 %v329
  %372 = vmatprep.subr.bf16.mxu0 0
  %373 = vmatpush1.bf16.msra.mxu0 0
  %374 = vmatprep.subr.bf16.mxu0 0
  %375 = vmatpush1.bf16.msra.mxu0 0
  %376 = vmatprep.subr.bf16.mxu0 0
  %377 = vmatpush1.bf16.msra.mxu0 0
  %378 = vmatprep.subr.bf16.mxu0 0
  %379 = vmatpush1.bf16.msra.mxu0 0
  %380 = vmatprep.subr.bf16.mxu0 0
  %381 = vmatpush1.bf16.msra.mxu0 0
  %382 = vmatprep.subr.bf16.mxu0 0
  %383 = vmatpush1.bf16.msra.mxu0 0
  %384 = vmatprep.subr.bf16.mxu0 0
  %385 = vmatpush1.bf16.msra.mxu0 0
  %386 = vmatprep.subr.bf16.mxu0 0
  %387 = vmatpush1.bf16.msra.mxu0 0
  %388 = vmatprep.mubr.bf16.mxu0 0
  %389 = vmatmul.mubr.bf16.gmra.mrb[0].mxu0 %v174
  %v390 = vpop.f32.mrb[0].mxu0
  %v391 = vadd.f32 %v216, %v390
  %v392 = vpop.f32.mrb[0].mxu0
  %v393 = vadd.f32 %v220, %v392
  %v394 = vpop.f32.mrb[0].mxu0
  %v395 = vadd.f32 %v216, %v394
  %v396 = vpop.f32.mrb[0].mxu0
  %v397 = vadd.f32 %v220, %v396
  %398 = vmatprep.mubr.bf16.mxu0 0
  %399 = vmatmul.mubr.bf16.gmra.mrb[0].mxu0 %v175
  %v400 = vpop.f32.mrb[0].mxu0
  %v401 = vadd.f32 %v216, %v400
  %v402 = vpop.f32.mrb[0].mxu0
  %v403 = vadd.f32 %v220, %v402
  %v404 = vpop.f32.mrb[0].mxu0
  %v405 = vadd.f32 %v216, %v404
  %v406 = vpop.f32.mrb[0].mxu0
  %v407 = vadd.f32 %v220, %v406
  %408 = vmatprep.mubr.bf16.mxu0 0
  %409 = vmatmul.mubr.bf16.gmra.mrb[0].mxu0 %v176
  %v410 = vpop.f32.mrb[0].mxu0
  %v411 = vadd.f32 %v216, %v410
  %v412 = vpop.f32.mrb[0].mxu0
  %v413 = vadd.f32 %v220, %v412
  %v414 = vpop.f32.mrb[0].mxu0
  %v415 = vadd.f32 %v216, %v414
  %v416 = vpop.f32.mrb[0].mxu0
  %v417 = vadd.f32 %v220, %v416
  %418 = vmatprep.mubr.bf16.mxu0 0
  %419 = vmatmul.mubr.bf16.gmra.mrb[0].mxu0 %v177
  %v420 = vpop.f32.mrb[0].mxu0
  %v421 = vadd.f32 %v216, %v420
  %v422 = vpop.f32.mrb[0].mxu0
  %v423 = vadd.f32 %v220, %v422
  %v424 = vpop.f32.mrb[0].mxu0
  %v425 = vadd.f32 %v216, %v424
  %v426 = vpop.f32.mrb[0].mxu0
  %v427 = vadd.f32 %v220, %v426
  %428 = vmatprep.mubr.bf16.mxu0 0
  %429 = vmatmul.mubr.bf16.gmra.mrb[0].mxu0 %v178
  %v430 = vpop.f32.mrb[0].mxu0
  %v431 = vadd.f32 %v216, %v430
  %v432 = vpop.f32.mrb[0].mxu0
  %v433 = vadd.f32 %v220, %v432
  %v434 = vpop.f32.mrb[0].mxu0
  %v435 = vpop.f32.mrb[0].mxu0
  %436 = vdwg.mxu0
  %437 = vmatprep.subr.bf16.mxu0 0
  %438 = vmatpush1.bf16.msra.mxu0 %v310
  %439 = vmatprep.subr.bf16.mxu0 0
  %440 = vmatpush1.bf16.msra.mxu0 %v313
  %441 = vmatprep.subr.bf16.mxu0 0
  %442 = vmatpush1.bf16.msra.mxu0 %v316
  %443 = vmatprep.subr.bf16.mxu0 0
  %444 = vmatpush1.bf16.msra.mxu0 %v319
  %445 = vmatprep.subr.bf16.mxu0 0
  %446 = vmatpush1.bf16.msra.mxu0 %v322
  %447 = vmatprep.subr.bf16.mxu0 0
  %448 = vmatpush1.bf16.msra.mxu0 %v325
  %449 = vmatprep.subr.bf16.mxu0 0
  %450 = vmatpush1.bf16.msra.mxu0 %v328
  %451 = vmatprep.subr.bf16.mxu0 0
  %452 = vmatpush1.bf16.msra.mxu0 %v331
  %453 = vmatprep.subr.bf16.mxu0 0
  %454 = vmatpush1.bf16.msra.mxu0 0
  %455 = vmatprep.subr.bf16.mxu0 0
  %456 = vmatpush1.bf16.msra.mxu0 0
  %457 = vmatprep.subr.bf16.mxu0 0
  %458 = vmatpush1.bf16.msra.mxu0 0
  %459 = vmatprep.subr.bf16.mxu0 0
  %460 = vmatpush1.bf16.msra.mxu0 0
  %461 = vmatprep.subr.bf16.mxu0 0
  %462 = vmatpush1.bf16.msra.mxu0 0
  %463 = vmatprep.subr.bf16.mxu0 0
  %464 = vmatpush1.bf16.msra.mxu0 0
  %465 = vmatprep.subr.bf16.mxu0 0
  %466 = vmatpush1.bf16.msra.mxu0 0
  %467 = vmatprep.subr.bf16.mxu0 0
  %468 = vmatpush1.bf16.msra.mxu0 0
  %469 = vmatprep.mubr.bf16.mxu0 0
  %470 = vmatmul.mubr.bf16.gmra.mrb[0].mxu0 %v174
  %v471 = vpop.f32.mrb[0].mxu0
  %v472 = vadd.f32 %v224, %v471
  %v473 = vpop.f32.mrb[0].mxu0
  %v474 = vpop.f32.mrb[0].mxu0
  %v475 = vadd.f32 %v224, %v474
  %v476 = vpop.f32.mrb[0].mxu0
  %477 = vmatprep.mubr.bf16.mxu0 0
  %478 = vmatmul.mubr.bf16.gmra.mrb[0].mxu0 %v175
  %v479 = vpop.f32.mrb[0].mxu0
  %v480 = vadd.f32 %v224, %v479
  %v481 = vpop.f32.mrb[0].mxu0
  %v482 = vpop.f32.mrb[0].mxu0
  %v483 = vadd.f32 %v224, %v482
  %v484 = vpop.f32.mrb[0].mxu0
  %485 = vmatprep.mubr.bf16.mxu0 0
  %486 = vmatmul.mubr.bf16.gmra.mrb[0].mxu0 %v176
  %v487 = vpop.f32.mrb[0].mxu0
  %v488 = vadd.f32 %v224, %v487
  %v489 = vpop.f32.mrb[0].mxu0
  %v490 = vpop.f32.mrb[0].mxu0
  %v491 = vadd.f32 %v224, %v490
  %v492 = vpop.f32.mrb[0].mxu0
  %493 = vmatprep.mubr.bf16.mxu0 0
  %494 = vmatmul.mubr.bf16.gmra.mrb[0].mxu0 %v177
  %v495 = vpop.f32.mrb[0].mxu0
  %v496 = vadd.f32 %v224, %v495
  %v497 = vpop.f32.mrb[0].mxu0
  %v498 = vpop.f32.mrb[0].mxu0
  %v499 = vadd.f32 %v224, %v498
  %v500 = vpop.f32.mrb[0].mxu0
  %501 = vmatprep.mubr.bf16.mxu0 0
  %502 = vmatmul.mubr.bf16.gmra.mrb[0].mxu0 %v178
  %v503 = vpop.f32.mrb[0].mxu0
  %v504 = vadd.f32 %v224, %v503
  %v505 = vpop.f32.mrb[0].mxu0
  %v506 = vpop.f32.mrb[0].mxu0
  %v507 = vpop.f32.mrb[0].mxu0
  %508 = vdwg.mxu0
  %v509 = vpack.c.bf16 %v395, %v391
  %v510 = vpack.c.bf16 %v397, %v393
  %v511 = vpack.c.bf16 %v475, %v472
  %v512 = vpack.c.bf16 %v405, %v401
  %v513 = vpack.c.bf16 %v407, %v403
  %v514 = vpack.c.bf16 %v483, %v480
  %v515 = vpack.c.bf16 %v415, %v411
  %v516 = vpack.c.bf16 %v417, %v413
  %v517 = vpack.c.bf16 %v491, %v488
  %v518 = vpack.c.bf16 %v425, %v421
  %v519 = vpack.c.bf16 %v427, %v423
  %v520 = vpack.c.bf16 %v499, %v496
  %v521 = vpack.c.bf16 %v431, %v431
  %v522 = vpack.c.bf16 %v433, %v433
  %v523 = vpack.c.bf16 %v504, %v504
  %v539 = vunpack.c.l.b16 %v509
  %v540 = vunpack.c.l.b16 %v510
  %v541 = vunpack.c.l.b16 %v511
  %v542 = vunpack.c.h.b16 %v509
  %v543 = vunpack.c.h.b16 %v510
  %v544 = vunpack.c.h.b16 %v511
  %v545 = vunpack.c.l.b16 %v512
  %v546 = vunpack.c.l.b16 %v513
  %v547 = vunpack.c.l.b16 %v514
  %v548 = vunpack.c.h.b16 %v512
  %v549 = vunpack.c.h.b16 %v513
  %v550 = vunpack.c.h.b16 %v514
  %v551 = vunpack.c.l.b16 %v515
  %v552 = vunpack.c.l.b16 %v516
  %v553 = vunpack.c.l.b16 %v517
  %v554 = vunpack.c.h.b16 %v515
  %v555 = vunpack.c.h.b16 %v516
  %v556 = vunpack.c.h.b16 %v517
  %v557 = vunpack.c.l.b16 %v518
  %v558 = vunpack.c.l.b16 %v519
  %v559 = vunpack.c.l.b16 %v520
  %v560 = vunpack.c.h.b16 %v518
  %v561 = vunpack.c.h.b16 %v519
  %v562 = vunpack.c.h.b16 %v520
  %v563 = vunpack.c.l.b16 %v521
  %v564 = vunpack.c.l.b16 %v522
  %v565 = vunpack.c.l.b16 %v523
  %v566 = vpack.c.b16 %v540, %v539
  %v567 = vpack.c.b16 %v541, %v541
  %v568 = vpack.c.b16 %v543, %v542
  %v569 = vpack.c.b16 %v544, %v544
  %v570 = vpack.c.b16 %v546, %v545
  %v571 = vpack.c.b16 %v547, %v547
  %v572 = vpack.c.b16 %v549, %v548
  %v573 = vpack.c.b16 %v550, %v550
  %v574 = vpack.c.b16 %v552, %v551
  %v575 = vpack.c.b16 %v553, %v553
  %v576 = vpack.c.b16 %v555, %v554
  %v577 = vpack.c.b16 %v556, %v556
  %v578 = vpack.c.b16 %v558, %v557
  %v579 = vpack.c.b16 %v559, %v559
  %v580 = vpack.c.b16 %v561, %v560
  %v581 = vpack.c.b16 %v562, %v562
  %v582 = vpack.c.b16 %v564, %v563
  %v583 = vpack.c.b16 %v565, %v565
  %602 = vst [vmem:[%s5] sm:$0xff] %v566
  %603 = vst [vmem:[%s5 + $0x8] sm:$0xf] %v567
  %604 = vst [vmem:[%s5 + $0xc] sm:$0xff] %v568
  %605 = vst [vmem:[%s5 + $0x14] sm:$0xf] %v569
  %606 = vst [vmem:[%s5 + $0x18] sm:$0xff] %v570
  %607 = vst [vmem:[%s5 + $0x20] sm:$0xf] %v571
  %608 = vst [vmem:[%s5 + $0x24] sm:$0xff] %v572
  %609 = vst [vmem:[%s5 + $0x2c] sm:$0xf] %v573
  %610 = vst [vmem:[%s5 + $0x30] sm:$0xff] %v574
  %611 = vst [vmem:[%s5 + $0x38] sm:$0xf] %v575
  %612 = vst [vmem:[%s5 + $0x3c] sm:$0xff] %v576
  %613 = vst [vmem:[%s5 + $0x44] sm:$0xf] %v577
  %614 = vst [vmem:[%s5 + $0x48] sm:$0xff] %v578
  %615 = vst [vmem:[%s5 + $0x50] sm:$0xf] %v579
  %616 = vst [vmem:[%s5 + $0x54] sm:$0xff] %v580
  %617 = vst [vmem:[%s5 + $0x5c] sm:$0xf] %v581
  %618 = vst [vmem:[%s5 + $0x60] sm:$0x11] %v582
  %619 = vst [vmem:[%s5 + $0x68] sm:$0x1] %v583
  // Predicated region
  $region22: #{_lambda_.16} parent=0 // pred_check
    _
  $region23: #{_lambda_.16} parent=0 // pred_check_branch
    %621 = sbr.rel (0) target = $region25
  $region24: #{_lambda_.16} parent=0 // pred_region
    _
  $region25: #{_lambda_.16} parent=0 // pred_fallthru
    _
  // Predicated region
  $region26: #{_lambda_.16} parent=0 // pred_check
    _
  $region27: #{_lambda_.16} parent=0 // pred_check_branch
    %623 = sbr.rel (0) target = $region29
  $region28: #{_lambda_.16} parent=0 // pred_region
    _
  $region29: #{_lambda_.16} parent=0 // pred_fallthru
    _

// kernel: _lambda_.18
$region0: #{_lambda_.18}
  #allocation0 [shape = 'u32[]', space=smem, size = 0x4, offset = 0x4, fixed_abs, tag = 'smem constant byte address 0x4 - core index']
  #allocation1 [shape = 'u32[144,128]{1,0:T(1,128)}', space=vmem, size = 0x12000, scoped, tag = 'internal scratch']
  %s0 = inlined_call_operand.vmem [shape: bf16[66,128], index: 0, kind: input, shape index: {}]
  %s1 = inlined_call_operand.vmem [shape: bf16[128,128], index: 1, kind: input, shape index: {}]
  %s2 = inlined_call_operand.vmem [shape: f32[1,128], index: 2, kind: input, shape index: {}]
  %s3 = inlined_call_operand.vmem [shape: bf16[66,128], index: 3, kind: input, shape index: {}]
  %s4 = inlined_call_operand.vmem [shape: bf16[66,128], index: 4, kind: output, shape index: {}]
  %s5 = sld [smem:[#allocation0]]
  $region26: #{_lambda_.18} parent=0
    _
  %s7 = ssub.s32 1, %s5
  %s8 = scalar_select 0, %s7, %s5
  // Predicated region
  $region2: #{_lambda_.18} parent=0 // pred_check
    _
  $region3: #{_lambda_.18} parent=0 // pred_check_branch
    %10 = sbr.rel (0) target = $region5
  $region4: #{_lambda_.18} parent=0 // pred_region
    _
  $region5: #{_lambda_.18} parent=0 // pred_fallthru
    _
  // Predicated region
  $region6: #{_lambda_.18} parent=0 // pred_check
    _
  $region7: #{_lambda_.18} parent=0 // pred_check_branch
    %12 = sbr.rel (0) target = $region9
  $region8: #{_lambda_.18} parent=0 // pred_region
    _
  $region9: #{_lambda_.18} parent=0 // pred_fallthru
    _
  // Predicated region
  $region10: #{_lambda_.18} parent=0 // pred_check
    _
  $region11: #{_lambda_.18} parent=0 // pred_check_branch
    %14 = sbr.rel (0) target = $region13
  $region12: #{_lambda_.18} parent=0 // pred_region
    _
  $region13: #{_lambda_.18} parent=0 // pred_fallthru
    _
  // Predicated region
  $region14: #{_lambda_.18} parent=0 // pred_check
    _
  $region15: #{_lambda_.18} parent=0 // pred_check_branch
    %16 = sbr.rel (0) target = $region17
  $region16: #{_lambda_.18} parent=0 // pred_region
    _
  $region17: #{_lambda_.18} parent=0 // pred_fallthru
    _
  %v18 = vld [vmem:[%s0] sm:$0xf]
  %v19 = vld [vmem:[%s0 + $0x4] sm:$0xf]
  %v20 = vld [vmem:[%s0 + $0x8] sm:$0xf]
  %v21 = vld [vmem:[%s0 + $0xc] sm:$0xf]
  %v22 = vld [vmem:[%s0 + $0x10] sm:$0xf]
  %v23 = vld [vmem:[%s0 + $0x14] sm:$0xf]
  %v24 = vld [vmem:[%s0 + $0x18] sm:$0xf]
  %v25 = vld [vmem:[%s0 + $0x1c] sm:$0xf]
  %v26 = vld [vmem:[%s0 + $0x20] sm:$0x1]
  %v27 = vld [vmem:[%s1] sm:$0xf]
  %v28 = vld [vmem:[%s1 + $0x4] sm:$0xf]
  %v29 = vld [vmem:[%s1 + $0x8] sm:$0xf]
  %v30 = vld [vmem:[%s1 + $0xc] sm:$0xf]
  %v31 = vld [vmem:[%s1 + $0x10] sm:$0xf]
  %v32 = vld [vmem:[%s1 + $0x14] sm:$0xf]
  %v33 = vld [vmem:[%s1 + $0x18] sm:$0xf]
  %v34 = vld [vmem:[%s1 + $0x1c] sm:$0xf]
  %v35 = vld [vmem:[%s1 + $0x20] sm:$0xf]
  %v36 = vld [vmem:[%s1 + $0x24] sm:$0xf]
  %v37 = vld [vmem:[%s1 + $0x28] sm:$0xf]
  %v38 = vld [vmem:[%s1 + $0x2c] sm:$0xf]
  %v39 = vld [vmem:[%s1 + $0x30] sm:$0xf]
  %v40 = vld [vmem:[%s1 + $0x34] sm:$0xf]
  %v41 = vld [vmem:[%s1 + $0x38] sm:$0xf]
  %v42 = vld [vmem:[%s1 + $0x3c] sm:$0xf]
  %v43 = vld [vmem:[%s2] sm:$0x1]
  %v45 = vlaneseq
  %v46 = vshrl.u32 %v45, 7
  %v47 = vsub.s32 0, %v46
  %v48 = vrot.slane %v43, %v47
  %v59 = vunpack.c.l.b16 %v18
  %v60 = vunpack.c.l.b16 %v19
  %v61 = vunpack.c.l.b16 %v20
  %v62 = vunpack.c.l.b16 %v21
  %v63 = vunpack.c.l.b16 %v22
  %v64 = vunpack.c.l.b16 %v23
  %v65 = vunpack.c.l.b16 %v24
  %v66 = vunpack.c.l.b16 %v25
  %v67 = vunpack.c.l.b16 %v26
  %v68 = vpack.c.b16 %v60, %v59
  %v69 = vpack.c.b16 %v62, %v61
  %v70 = vpack.c.b16 %v64, %v63
  %v71 = vpack.c.b16 %v66, %v65
  %v72 = vpack.c.b16 %v67, %v67
  %v94 = vunpack.c.l.b16 %v27
  %v95 = vunpack.c.l.b16 %v28
  %v96 = vunpack.c.l.b16 %v29
  %v97 = vunpack.c.l.b16 %v30
  %v98 = vunpack.c.l.b16 %v31
  %v99 = vunpack.c.l.b16 %v32
  %v100 = vunpack.c.l.b16 %v33
  %v101 = vunpack.c.l.b16 %v34
  %v102 = vunpack.c.l.b16 %v35
  %v103 = vunpack.c.l.b16 %v36
  %v104 = vunpack.c.l.b16 %v37
  %v105 = vunpack.c.l.b16 %v38
  %v106 = vunpack.c.l.b16 %v39
  %v107 = vunpack.c.l.b16 %v40
  %v108 = vunpack.c.l.b16 %v41
  %v109 = vunpack.c.l.b16 %v42
  %v110 = vpack.c.b16 %v95, %v94
  %v111 = vpack.c.b16 %v97, %v96
  %v112 = vpack.c.b16 %v99, %v98
  %v113 = vpack.c.b16 %v101, %v100
  %v114 = vpack.c.b16 %v103, %v102
  %v115 = vpack.c.b16 %v105, %v104
  %v116 = vpack.c.b16 %v107, %v106
  %v117 = vpack.c.b16 %v109, %v108
  %126 = vmatprep.subr.bf16.mxu0 0
  %127 = vmatpush1.bf16.msra.mxu0 %v110
  %128 = vmatprep.subr.bf16.mxu0 0
  %129 = vmatpush1.bf16.msra.mxu0 %v111
  %130 = vmatprep.subr.bf16.mxu0 0
  %131 = vmatpush1.bf16.msra.mxu0 %v112
  %132 = vmatprep.subr.bf16.mxu0 0
  %133 = vmatpush1.bf16.msra.mxu0 %v113
  %134 = vmatprep.subr.bf16.mxu0 0
  %135 = vmatpush1.bf16.msra.mxu0 %v114
  %136 = vmatprep.subr.bf16.mxu0 0
  %137 = vmatpush1.bf16.msra.mxu0 %v115
  %138 = vmatprep.subr.bf16.mxu0 0
  %139 = vmatpush1.bf16.msra.mxu0 %v116
  %140 = vmatprep.subr.bf16.mxu0 0
  %141 = vmatpush1.bf16.msra.mxu0 %v117
  %142 = vmatprep.subr.bf16.mxu0 0
  %143 = vmatpush1.bf16.msra.mxu0 0
  %144 = vmatprep.subr.bf16.mxu0 0
  %145 = vmatpush1.bf16.msra.mxu0 0
  %146 = vmatprep.subr.bf16.mxu0 0
  %147 = vmatpush1.bf16.msra.mxu0 0
  %148 = vmatprep.subr.bf16.mxu0 0
  %149 = vmatpush1.bf16.msra.mxu0 0
  %150 = vmatprep.subr.bf16.mxu0 0
  %151 = vmatpush1.bf16.msra.mxu0 0
  %152 = vmatprep.subr.bf16.mxu0 0
  %153 = vmatpush1.bf16.msra.mxu0 0
  %154 = vmatprep.subr.bf16.mxu0 0
  %155 = vmatpush1.bf16.msra.mxu0 0
  %156 = vmatprep.subr.bf16.mxu0 0
  %157 = vmatpush1.bf16.msra.mxu0 0
  %158 = vmatprep.mubr.bf16.mxu0 0
  %159 = vmatmul.mubr.bf16.gmra.mrb[0].mxu0 %v68
  %v160 = vpop.f32.mrb[0].mxu0
  %v161 = vadd.f32 %v48, %v160
  %v162 = vpop.f32.mrb[0].mxu0
  %v163 = vpop.f32.mrb[0].mxu0
  %v164 = vadd.f32 %v48, %v163
  %v165 = vpop.f32.mrb[0].mxu0
  %166 = vmatprep.mubr.bf16.mxu0 0
  %167 = vmatmul.mubr.bf16.gmra.mrb[0].mxu0 %v69
  %v168 = vpop.f32.mrb[0].mxu0
  %v169 = vadd.f32 %v48, %v168
  %v170 = vpop.f32.mrb[0].mxu0
  %v171 = vpop.f32.mrb[0].mxu0
  %v172 = vadd.f32 %v48, %v171
  %v173 = vpop.f32.mrb[0].mxu0
  %174 = vmatprep.mubr.bf16.mxu0 0
  %175 = vmatmul.mubr.bf16.gmra.mrb[0].mxu0 %v70
  %v176 = vpop.f32.mrb[0].mxu0
  %v177 = vadd.f32 %v48, %v176
  %v178 = vpop.f32.mrb[0].mxu0
  %v179 = vpop.f32.mrb[0].mxu0
  %v180 = vadd.f32 %v48, %v179
  %v181 = vpop.f32.mrb[0].mxu0
  %182 = vmatprep.mubr.bf16.mxu0 0
  %183 = vmatmul.mubr.bf16.gmra.mrb[0].mxu0 %v71
  %v184 = vpop.f32.mrb[0].mxu0
  %v185 = vadd.f32 %v48, %v184
  %v186 = vpop.f32.mrb[0].mxu0
  %v187 = vpop.f32.mrb[0].mxu0
  %v188 = vadd.f32 %v48, %v187
  %v189 = vpop.f32.mrb[0].mxu0
  %190 = vmatprep.mubr.bf16.mxu0 0
  %191 = vmatmul.mubr.bf16.gmra.mrb[0].mxu0 %v72
  %v192 = vpop.f32.mrb[0].mxu0
  %v193 = vadd.f32 %v48, %v192
  %v194 = vpop.f32.mrb[0].mxu0
  %v195 = vpop.f32.mrb[0].mxu0
  %v196 = vpop.f32.mrb[0].mxu0
  %197 = vdwg.mxu0
  %v198 = vld [vmem:[%s3] sm:$0xf]
  %v199 = vld [vmem:[%s3 + $0x4] sm:$0xf]
  %v200 = vld [vmem:[%s3 + $0x8] sm:$0xf]
  %v201 = vld [vmem:[%s3 + $0xc] sm:$0xf]
  %v202 = vld [vmem:[%s3 + $0x10] sm:$0xf]
  %v203 = vld [vmem:[%s3 + $0x14] sm:$0xf]
  %v204 = vld [vmem:[%s3 + $0x18] sm:$0xf]
  %v205 = vld [vmem:[%s3 + $0x1c] sm:$0xf]
  %v206 = vld [vmem:[%s3 + $0x20] sm:$0x1]
  %v207 = vunpack.c.l.bf16 %v198
  %v208 = vunpack.c.l.bf16 %v199
  %v209 = vunpack.c.l.bf16 %v200
  %v210 = vunpack.c.l.bf16 %v201
  %v211 = vunpack.c.l.bf16 %v202
  %v212 = vunpack.c.l.bf16 %v203
  %v213 = vunpack.c.l.bf16 %v204
  %v214 = vunpack.c.l.bf16 %v205
  %v215 = vunpack.c.l.bf16 %v206
  %v216 = vadd.f32 %v161, %v207
  %v217 = vadd.f32 %v164, %v208
  %v218 = vadd.f32 %v169, %v209
  %v219 = vadd.f32 %v172, %v210
  %v220 = vadd.f32 %v177, %v211
  %v221 = vadd.f32 %v180, %v212
  %v222 = vadd.f32 %v185, %v213
  %v223 = vadd.f32 %v188, %v214
  %v224 = vadd.f32 %v193, %v215
  %v225 = vpack.c.bf16 %v217, %v216
  %v226 = vpack.c.bf16 %v219, %v218
  %v227 = vpack.c.bf16 %v221, %v220
  %v228 = vpack.c.bf16 %v223, %v222
  %v229 = vpack.c.bf16 %v224, %v224
  %v235 = vunpack.c.l.b16 %v225
  %v236 = vunpack.c.h.b16 %v225
  %v237 = vunpack.c.l.b16 %v226
  %v238 = vunpack.c.h.b16 %v226
  %v239 = vunpack.c.l.b16 %v227
  %v240 = vunpack.c.h.b16 %v227
  %v241 = vunpack.c.l.b16 %v228
  %v242 = vunpack.c.h.b16 %v228
  %v243 = vunpack.c.l.b16 %v229
  %v244 = vpack.c.b16 %v235, %v235
  %v245 = vpack.c.b16 %v236, %v236
  %v246 = vpack.c.b16 %v237, %v237
  %v247 = vpack.c.b16 %v238, %v238
  %v248 = vpack.c.b16 %v239, %v239
  %v249 = vpack.c.b16 %v240, %v240
  %v250 = vpack.c.b16 %v241, %v241
  %v251 = vpack.c.b16 %v242, %v242
  %v252 = vpack.c.b16 %v243, %v243
  %262 = vst [vmem:[%s4] sm:$0xf] %v244
  %263 = vst [vmem:[%s4 + $0x4] sm:$0xf] %v245
  %264 = vst [vmem:[%s4 + $0x8] sm:$0xf] %v246
  %265 = vst [vmem:[%s4 + $0xc] sm:$0xf] %v247
  %266 = vst [vmem:[%s4 + $0x10] sm:$0xf] %v248
  %267 = vst [vmem:[%s4 + $0x14] sm:$0xf] %v249
  %268 = vst [vmem:[%s4 + $0x18] sm:$0xf] %v250
  %269 = vst [vmem:[%s4 + $0x1c] sm:$0xf] %v251
  %270 = vst [vmem:[%s4 + $0x20] sm:$0x1] %v252
  // Predicated region
  $region18: #{_lambda_.18} parent=0 // pred_check
    _
  $region19: #{_lambda_.18} parent=0 // pred_check_branch
    %272 = sbr.rel (0) target = $region21
  $region20: #{_lambda_.18} parent=0 // pred_region
    _
  $region21: #{_lambda_.18} parent=0 // pred_fallthru
    _
  // Predicated region
  $region22: #{_lambda_.18} parent=0 // pred_check
    _
  $region23: #{_lambda_.18} parent=0 // pred_check_branch
    %274 = sbr.rel (0) target = $region25
  $region24: #{_lambda_.18} parent=0 // pred_region
    _
  $region25: #{_lambda_.18} parent=0 // pred_fallthru
    _

// kernel: _lambda_.17
$region0: #{_lambda_.17}
  #allocation0 [shape = 'u32[]', space=smem, size = 0x4, offset = 0x4, fixed_abs, tag = 'smem constant byte address 0x4 - core index']
  #allocation1 [shape = 'u32[144,128]{1,0:T(1,128)}', space=vmem, size = 0x12000, scoped, tag = 'internal scratch']
  %s0 = inlined_call_operand.vmem [shape: bf16[2,33,384], index: 0, kind: input, shape index: {}]
  %s1 = inlined_call_operand.vmem [shape: bf16[2,33,128], index: 1, kind: output, shape index: {}]
  %s2 = sld [smem:[#allocation0]]
  $region37: #{_lambda_.17} parent=0
    _
  %s4 = ssub.s32 1, %s2
  %s5 = scalar_select 0, %s4, %s2
  loop: start=0, step=1, limit=4
  $region2: #{_lambda_.17} parent=0 // loop_pre_header
    _
  $region3: #{_lambda_.17} parent=0 // loop_header
    %s7 = sphi 0, %s11
    %p8 = scmp.ge.s32.totalorder %s7, 4
    %s17 = sphi 0, %s19
    %s20 = sphi 0, %s17
    %s21 = sphi 0, %s20
    %s37 = sphi 0, %s21
    %s43 = sphi 0, %s45
    %s46 = sphi 0, %s43
    %s47 = sphi 0, %s46
    %s63 = sphi 0, %s47
  $region4: #{_lambda_.17} parent=0 // loop_header_branch
    %10 = sbr.rel (%p8) target = $region8
  $region5: #{_lambda_.17} parent=0 // loop_body
    %s12 = ssub.s32 %s7, 1
    %s13 = ssub.s32 %s7, 2
    %s14 = sadd.s32 %s7, 1
    %s15 = ssub.s32 %s7, %s14
    %p16 = scmp.eq.s32.totalorder %s15, 0
    %s18 = sadd.s32 %s17, 1
    %s19 = scalar_select %p16, %s17, %s18
    %p22 = pneg %p16
    %p23 = scmp.eq.s32.totalorder %s7, 1
    %p24 = por %p22, %p23
    %p25 = scmp.ne.s32.totalorder %s17, %s20
    %p26 = scmp.eq.s32.totalorder %s7, 0
    %p27 = por %p25, %p26
    %p28 = scmp.ne.s32.totalorder %s17, %s20
    %p29 = scmp.eq.s32.totalorder %s12, 1
    %p30 = por %p28, %p29
    %p31 = scmp.ne.s32.totalorder %s20, %s21
    %p32 = scmp.eq.s32.totalorder %s12, 0
    %p33 = por %p31, %p32
    %p34 = scmp.ne.s32.totalorder %s20, %s21
    %p35 = scmp.eq.s32.totalorder %s13, 1
    %p36 = por %p34, %p35
    %p38 = scmp.ne.s32.totalorder %s21, %s37
    %p39 = scmp.eq.s32.totalorder %s13, 0
    %p40 = por %p38, %p39
    %s41 = ssub.s32 %s7, %s14
    %p42 = scmp.eq.s32.totalorder %s41, 0
    %s44 = sadd.s32 %s43, 1
    %s45 = scalar_select %p42, %s43, %s44
    %p48 = pneg %p42
    %p49 = scmp.eq.s32.totalorder %s7, 1
    %p50 = por %p48, %p49
    %p51 = scmp.ne.s32.totalorder %s43, %s46
    %p52 = scmp.eq.s32.totalorder %s7, 0
    %p53 = por %p51, %p52
    %p54 = scmp.ne.s32.totalorder %s43, %s46
    %p55 = scmp.eq.s32.totalorder %s12, 1
    %p56 = por %p54, %p55
    %p57 = scmp.ne.s32.totalorder %s46, %s47
    %p58 = scmp.eq.s32.totalorder %s12, 0
    %p59 = por %p57, %p58
    %p60 = scmp.ne.s32.totalorder %s46, %s47
    %p61 = scmp.eq.s32.totalorder %s13, 1
    %p62 = por %p60, %p61
    %p64 = scmp.ne.s32.totalorder %s47, %s63
    %p65 = scmp.eq.s32.totalorder %s13, 0
    %p66 = por %p64, %p65
    %p67 = scmp.le.s32.totalorder 1, %s7
    %p68 = scmp.lt.s32.totalorder %s7, 3
    %p69 = pnand %p67, %p68
    %p70 = pneg %p69
    // Predicated region
    $region9: #{_lambda_.17} parent=5 // pred_check
      _
    $region10: #{_lambda_.17} parent=5 // pred_check_branch
      %72 = sbr.rel (%p69) target = $region12
    $region11: #{_lambda_.17} parent=5 // pred_region
      %s73 = ssub.s32 %s7, 1
    $region12: #{_lambda_.17} parent=5 // pred_fallthru
      _
    %p74 = scmp.lt.s32.totalorder %s7, 2
    // Predicated region
    $region13: #{_lambda_.17} parent=5 // pred_check
      %p75 = pneg %p74
    $region14: #{_lambda_.17} parent=5 // pred_check_branch
      %77 = sbr.rel (%p75) target = $region16
    $region15: #{_lambda_.17} parent=5 // pred_region
      // Predicated region
      $region17: #{_lambda_.17} parent=15 // pred_check
        %p78 = pneg %p27
      $region18: #{_lambda_.17} parent=15 // pred_check_branch
        %80 = sbr.rel (%p78) target = $region20
      $region19: #{_lambda_.17} parent=15 // pred_region
        %p81 = scmp.lt.s32.totalorder %s7, 1
        %s82 = scalar_select %p81, %s7, 1
        %s83 = smul.addr %s82, 15
        %s84 = smul.addr %s83, 4
        %s85 = scalar_lea.vmem %s0, %s84
      $region20: #{_lambda_.17} parent=15 // pred_fallthru
        _
    $region16: #{_lambda_.17} parent=5 // pred_fallthru
      _
    %p86 = scmp.le.s32.totalorder 1, %s7
    %p87 = scmp.lt.s32.totalorder %s7, 3
    %p88 = pnand %p86, %p87
    %p89 = pneg %p88
    // Predicated region
    $region21: #{_lambda_.17} parent=5 // pred_check
      _
    $region22: #{_lambda_.17} parent=5 // pred_check_branch
      %91 = sbr.rel (%p88) target = $region24
    $region23: #{_lambda_.17} parent=5 // pred_region
      %s92 = ssub.s32 %s7, 1
      %p93 = scmp.lt.s32.totalorder %s12, 1
      %s94 = scalar_select %p93, %s12, 1
      %s95 = smul.addr %s94, 15
      %s96 = smul.addr %s95, 4
      %s97 = scalar_lea.vmem %s0, %s96
      %p98 = pneg %p33
      %p99 = pneg %p30
      %p100 = pneg %p59
      %p101 = pneg %p56
      %p102 = scmp.lt.s32.totalorder %s12, 1
      %s103 = scalar_select %p102, %s12, 1
      %s104 = smul.addr %s103, 5
      %s105 = smul.addr %s104, 4
      %s106 = scalar_lea.vmem %s1, %s105
      %p107 = scmp.lt.s32.totalorder %s12, 1
      %s108 = scalar_select %p107, %s12, 1
      %s109 = smul.addr %s108, 15
      %s110 = smul.addr %s109, 4
      %s111 = scalar_lea.vmem %s0, %s110
      %p112 = scmp.lt.s32.totalorder %s12, 1
      %s113 = scalar_select %p112, %s12, 1
      %s114 = smul.addr %s113, 5
      %s115 = smul.addr %s114, 4
      %s116 = scalar_lea.vmem %s1, %s115
      %v118 = vld [vmem:[%s111] sm:$0xff]
      %v119 = vld [vmem:[%s111 + $0x8] sm:$0xf]
      %v120 = vld [vmem:[%s111 + $0xc] sm:$0xff]
      %v121 = vld [vmem:[%s111 + $0x14] sm:$0xf]
      %v122 = vld [vmem:[%s111 + $0x18] sm:$0xff]
      %v123 = vld [vmem:[%s111 + $0x20] sm:$0xf]
      %v124 = vld [vmem:[%s111 + $0x24] sm:$0xff]
      %v125 = vld [vmem:[%s111 + $0x2c] sm:$0xf]
      %v126 = vld [vmem:[%s111 + $0x30] sm:$0x11]
      %v127 = vld [vmem:[%s111 + $0x38] sm:$0x1]
      %v133 = vunpack.c.l.b16 %v118
      %v134 = vunpack.c.l.b16 %v120
      %v135 = vunpack.c.l.b16 %v122
      %v136 = vunpack.c.l.b16 %v124
      %v137 = vunpack.c.l.b16 %v126
      %v138 = vpack.c.b16 %v134, %v133
      %v139 = vpack.c.b16 %v136, %v135
      %v140 = vpack.c.b16 %v137, %v137
      %v141 = vunpack.c.h.b16 %v118
      %v142 = vunpack.c.h.b16 %v120
      %v143 = vunpack.c.h.b16 %v122
      %v144 = vunpack.c.h.b16 %v124
      %v145 = vunpack.c.h.b16 %v126
      %v146 = vpack.c.b16 %v142, %v141
      %v147 = vpack.c.b16 %v144, %v143
      %v148 = vpack.c.b16 %v145, %v145
      %vm149 = vcmask 261120
      %v151 = vsel %vm149, %v138, 0
      %v154 = vsel %vm149, %v139, 0
      %v157 = vsel %vm149, %v140, 0
      %v160 = vsel %vm149, %v146, 0
      %v163 = vsel %vm149, %v147, 0
      %v166 = vsel %vm149, %v148, 0
      %168 = vmatprep.subr.bf16.mxu0 0
      %169 = vmatpush1.bf16.xpose.msra.mxu0 %v160
      %170 = vmatprep.subr.bf16.mxu0 0
      %171 = vmatpush1.bf16.xpose.msra.mxu0 %v163
      %172 = vmatprep.subr.bf16.mxu0 0
      %173 = vmatpush1.bf16.xpose.msra.mxu0 %v166
      %174 = vmatprep.subr.bf16.mxu0 0
      %175 = vmatpush1.bf16.xpose.msra.mxu0 0
      %176 = vmatprep.subr.bf16.mxu0 0
      %177 = vmatpush1.bf16.xpose.msra.mxu0 0
      %178 = vmatprep.subr.bf16.mxu0 0
      %179 = vmatpush1.bf16.xpose.msra.mxu0 0
      %180 = vmatprep.subr.bf16.mxu0 0
      %181 = vmatpush1.bf16.xpose.msra.mxu0 0
      %182 = vmatprep.subr.bf16.mxu0 0
      %183 = vmatpush1.bf16.xpose.msra.mxu0 0
      %184 = vmatprep.subr.bf16.mxu0 0
      %185 = vmatpush1.bf16.xpose.msra.mxu0 0
      %186 = vmatprep.subr.bf16.mxu0 0
      %187 = vmatpush1.bf16.xpose.msra.mxu0 0
      %188 = vmatprep.subr.bf16.mxu0 0
      %189 = vmatpush1.bf16.xpose.msra.mxu0 0
      %190 = vmatprep.subr.bf16.mxu0 0
      %191 = vmatpush1.bf16.xpose.msra.mxu0 0
      %192 = vmatprep.subr.bf16.mxu0 0
      %193 = vmatpush1.bf16.xpose.msra.mxu0 0
      %194 = vmatprep.subr.bf16.mxu0 0
      %195 = vmatpush1.bf16.xpose.msra.mxu0 0
      %196 = vmatprep.subr.bf16.mxu0 0
      %197 = vmatpush1.bf16.xpose.msra.mxu0 0
      %198 = vmatprep.subr.bf16.mxu0 0
      %199 = vmatpush1.bf16.xpose.msra.mxu0 0
      %200 = vmatprep.mubr.bf16.mxu0 0
      %201 = vmatmul.mubr.bf16.gmra.mrb[0].mxu0 %v151
      %v202 = vpop.f32.mrb[0].mxu0
      %v203 = vadd.f32 0.0, %v202
      %v204 = vpop.f32.mrb[0].mxu0
      %v205 = vpop.f32.mrb[0].mxu0
      %v206 = vadd.f32 0.0, %v205
      %v207 = vpop.f32.mrb[0].mxu0
      %208 = vmatprep.mubr.bf16.mxu0 0
      %209 = vmatmul.mubr.bf16.gmra.mrb[0].mxu0 %v154
      %v210 = vpop.f32.mrb[0].mxu0
      %v211 = vadd.f32 0.0, %v210
      %v212 = vpop.f32.mrb[0].mxu0
      %v213 = vpop.f32.mrb[0].mxu0
      %v214 = vadd.f32 0.0, %v213
      %v215 = vpop.f32.mrb[0].mxu0
      %216 = vmatprep.mubr.bf16.mxu0 0
      %217 = vmatmul.mubr.bf16.gmra.mrb[0].mxu0 %v157
      %v218 = vpop.f32.mrb[0].mxu0
      %v219 = vadd.f32 0.0, %v218
      %v220 = vpop.f32.mrb[0].mxu0
      %v221 = vpop.f32.mrb[0].mxu0
      %v222 = vpop.f32.mrb[0].mxu0
      %223 = vdwg.mxu0
      %v224 = vmul.f32 %v203, 0.17677669
      %v225 = vmul.f32 %v206, 0.17677669
      %v226 = vmul.f32 %v211, 0.17677669
      %v227 = vmul.f32 %v214, 0.17677669
      %v228 = vmul.f32 %v219, 0.17677669
      %vm229 = vcmask 269312
      %v230 = vsel %vm229, %v224, -inf
      %231 = vmax.xlane.f32.xlu0 %v230
      %v232 = vpop.xlane.xlu0 %231
      %v233 = vsel %vm229, %v225, -inf
      %234 = vmax.xlane.f32.xlu0 %v233
      %v235 = vpop.xlane.xlu0 %234
      %v236 = vsel %vm229, %v226, -inf
      %237 = vmax.xlane.f32.xlu0 %v236
      %v238 = vpop.xlane.xlu0 %237
      %v239 = vsel %vm229, %v227, -inf
      %240 = vmax.xlane.f32.xlu0 %v239
      %v241 = vpop.xlane.xlu0 %240
      %vm242 = vcmask 262144
      %v243 = vsel %vm242, %v228, -inf
      %244 = vmax.xlane.f32.xlu0 %v243
      %v245 = vpop.xlane.xlu0 %244
      %v246 = vsub.f32 %v224, %v232
      %v247 = vsub.f32 %v225, %v235
      %v248 = vsub.f32 %v226, %v238
      %v249 = vsub.f32 %v227, %v241
      %v250 = vsub.f32 %v228, %v245
      %v251 = vmul.f32 %v246, 1.442695
      %v252 = vpow.pop %v251
      %v253 = vmul.f32 %v247, 1.442695
      %v254 = vpow.pop %v253
      %v255 = vmul.f32 %v248, 1.442695
      %v256 = vpow.pop %v255
      %v257 = vmul.f32 %v249, 1.442695
      %v258 = vpow.pop %v257
      %v259 = vmul.f32 %v250, 1.442695
      %v260 = vpow.pop %v259
      %v261 = vsel %vm229, %v252, 0.0
      %262 = vadd.xlane.f32.xlu0 %v261
      %v263 = vpop.xlane.xlu0 %262
      %v264 = vsel %vm229, %v254, 0.0
      %265 = vadd.xlane.f32.xlu0 %v264
      %v266 = vpop.xlane.xlu0 %265
      %v267 = vsel %vm229, %v256, 0.0
      %268 = vadd.xlane.f32.xlu0 %v267
      %v269 = vpop.xlane.xlu0 %268
      %v270 = vsel %vm229, %v258, 0.0
      %271 = vadd.xlane.f32.xlu0 %v270
      %v272 = vpop.xlane.xlu0 %271
      %v273 = vsel %vm242, %v260, 0.0
      %274 = vadd.xlane.f32.xlu0 %v273
      %v275 = vpop.xlane.xlu0 %274
      %v276 = vrcp.pop %v263
      %v277 = vrcp.pop %v266
      %v278 = vrcp.pop %v269
      %v279 = vrcp.pop %v272
      %v280 = vrcp.pop %v275
      %v281 = vmul.f32 %v252, %v276
      %v282 = vmul.f32 %v254, %v277
      %v283 = vmul.f32 %v256, %v278
      %v284 = vmul.f32 %v258, %v279
      %v285 = vmul.f32 %v260, %v280
      %v286 = vpack.c.bf16 %v282, %v281
      %v287 = vpack.c.bf16 %v284, %v283
      %v288 = vpack.c.bf16 %v285, %v285
      %v294 = vunpack.c.l.b16 %v119
      %v295 = vunpack.c.l.b16 %v121
      %v296 = vunpack.c.l.b16 %v123
      %v297 = vunpack.c.l.b16 %v125
      %v298 = vunpack.c.l.b16 %v127
      %v299 = vpack.c.b16 %v295, %v294
      %v300 = vpack.c.b16 %v297, %v296
      %v301 = vpack.c.b16 %v298, %v298
      %v305 = vsel %vm229, %v286, 0
      %v308 = vsel %vm229, %v287, 0
      %v311 = vsel %vm229, %v288, 0
      %vm313 = vcmask 1040384
      %v314 = vsel 0, 4294967295, 65535
      %v315 = vsel %vm313, %v314, 0
      %v317 = vand.u32 %v301, %v315
      %319 = vmatprep.subr.bf16.mxu0 0
      %320 = vmatpush1.bf16.msra.mxu0 %v299
      %321 = vmatprep.subr.bf16.mxu0 0
      %322 = vmatpush1.bf16.msra.mxu0 %v300
      %323 = vmatprep.subr.bf16.mxu0 0
      %324 = vmatpush1.bf16.msra.mxu0 %v317
      %325 = vmatprep.subr.bf16.mxu0 0
      %326 = vmatpush1.bf16.msra.mxu0 0
      %327 = vmatprep.subr.bf16.mxu0 0
      %328 = vmatpush1.bf16.msra.mxu0 0
      %329 = vmatprep.subr.bf16.mxu0 0
      %330 = vmatpush1.bf16.msra.mxu0 0
      %331 = vmatprep.subr.bf16.mxu0 0
      %332 = vmatpush1.bf16.msra.mxu0 0
      %333 = vmatprep.subr.bf16.mxu0 0
      %334 = vmatpush1.bf16.msra.mxu0 0
      %335 = vmatprep.subr.bf16.mxu0 0
      %336 = vmatpush1.bf16.msra.mxu0 0
      %337 = vmatprep.subr.bf16.mxu0 0
      %338 = vmatpush1.bf16.msra.mxu0 0
      %339 = vmatprep.subr.bf16.mxu0 0
      %340 = vmatpush1.bf16.msra.mxu0 0
      %341 = vmatprep.subr.bf16.mxu0 0
      %342 = vmatpush1.bf16.msra.mxu0 0
      %343 = vmatprep.subr.bf16.mxu0 0
      %344 = vmatpush1.bf16.msra.mxu0 0
      %345 = vmatprep.subr.bf16.mxu0 0
      %346 = vmatpush1.bf16.msra.mxu0 0
      %347 = vmatprep.subr.bf16.mxu0 0
      %348 = vmatpush1.bf16.msra.mxu0 0
      %349 = vmatprep.subr.bf16.mxu0 0
      %350 = vmatpush1.bf16.msra.mxu0 0
      %351 = vmatprep.mubr.bf16.mxu0 0
      %352 = vmatmul.mubr.bf16.gmra.mrb[0].mxu0 %v305
      %v353 = vpop.f32.mrb[0].mxu0
      %v354 = vadd.f32 0.0, %v353
      %v355 = vpop.f32.mrb[0].mxu0
      %v356 = vpop.f32.mrb[0].mxu0
      %v357 = vadd.f32 0.0, %v356
      %v358 = vpop.f32.mrb[0].mxu0
      %359 = vmatprep.mubr.bf16.mxu0 0
      %360 = vmatmul.mubr.bf16.gmra.mrb[0].mxu0 %v308
      %v361 = vpop.f32.mrb[0].mxu0
      %v362 = vadd.f32 0.0, %v361
      %v363 = vpop.f32.mrb[0].mxu0
      %v364 = vpop.f32.mrb[0].mxu0
      %v365 = vadd.f32 0.0, %v364
      %v366 = vpop.f32.mrb[0].mxu0
      %367 = vmatprep.mubr.bf16.mxu0 0
      %368 = vmatmul.mubr.bf16.gmra.mrb[0].mxu0 %v311
      %v369 = vpop.f32.mrb[0].mxu0
      %v370 = vadd.f32 0.0, %v369
      %v371 = vpop.f32.mrb[0].mxu0
      %v372 = vpop.f32.mrb[0].mxu0
      %v373 = vpop.f32.mrb[0].mxu0
      %374 = vdwg.mxu0
      %375 = vrot.lane.b32.xlu0 %v138, 96
      %v376 = vpop.permute.xlu0 %375
      %377 = vrot.lane.b32.xlu0 %v139, 96
      %v378 = vpop.permute.xlu0 %377
      %379 = vrot.lane.b32.xlu0 %v140, 96
      %v380 = vpop.permute.xlu0 %379
      %381 = vrot.lane.b32.xlu0 %v146, 96
      %v382 = vpop.permute.xlu0 %381
      %383 = vrot.lane.b32.xlu0 %v147, 96
      %v384 = vpop.permute.xlu0 %383
      %385 = vrot.lane.b32.xlu0 %v148, 96
      %v386 = vpop.permute.xlu0 %385
      %v388 = vsel %vm149, %v376, 0
      %v391 = vsel %vm149, %v378, 0
      %v394 = vsel %vm149, %v380, 0
      %v397 = vsel %vm149, %v382, 0
      %v400 = vsel %vm149, %v384, 0
      %v403 = vsel %vm149, %v386, 0
      %405 = vmatprep.subr.bf16.mxu0 0
      %406 = vmatpush1.bf16.xpose.msra.mxu0 %v397
      %407 = vmatprep.subr.bf16.mxu0 0
      %408 = vmatpush1.bf16.xpose.msra.mxu0 %v400
      %409 = vmatprep.subr.bf16.mxu0 0
      %410 = vmatpush1.bf16.xpose.msra.mxu0 %v403
      %411 = vmatprep.subr.bf16.mxu0 0
      %412 = vmatpush1.bf16.xpose.msra.mxu0 0
      %413 = vmatprep.subr.bf16.mxu0 0
      %414 = vmatpush1.bf16.xpose.msra.mxu0 0
      %415 = vmatprep.subr.bf16.mxu0 0
      %416 = vmatpush1.bf16.xpose.msra.mxu0 0
      %417 = vmatprep.subr.bf16.mxu0 0
      %418 = vmatpush1.bf16.xpose.msra.mxu0 0
      %419 = vmatprep.subr.bf16.mxu0 0
      %420 = vmatpush1.bf16.xpose.msra.mxu0 0
      %421 = vmatprep.subr.bf16.mxu0 0
      %422 = vmatpush1.bf16.xpose.msra.mxu0 0
      %423 = vmatprep.subr.bf16.mxu0 0
      %424 = vmatpush1.bf16.xpose.msra.mxu0 0
      %425 = vmatprep.subr.bf16.mxu0 0
      %426 = vmatpush1.bf16.xpose.msra.mxu0 0
      %427 = vmatprep.subr.bf16.mxu0 0
      %428 = vmatpush1.bf16.xpose.msra.mxu0 0
      %429 = vmatprep.subr.bf16.mxu0 0
      %430 = vmatpush1.bf16.xpose.msra.mxu0 0
      %431 = vmatprep.subr.bf16.mxu0 0
      %432 = vmatpush1.bf16.xpose.msra.mxu0 0
      %433 = vmatprep.subr.bf16.mxu0 0
      %434 = vmatpush1.bf16.xpose.msra.mxu0 0
      %435 = vmatprep.subr.bf16.mxu0 0
      %436 = vmatpush1.bf16.xpose.msra.mxu0 0
      %437 = vmatprep.mubr.bf16.mxu0 0
      %438 = vmatmul.mubr.bf16.gmra.mrb[0].mxu0 %v388
      %v439 = vpop.f32.mrb[0].mxu0
      %v440 = vadd.f32 0.0, %v439
      %v441 = vpop.f32.mrb[0].mxu0
      %v442 = vpop.f32.mrb[0].mxu0
      %v443 = vadd.f32 0.0, %v442
      %v444 = vpop.f32.mrb[0].mxu0
      %445 = vmatprep.mubr.bf16.mxu0 0
      %446 = vmatmul.mubr.bf16.gmra.mrb[0].mxu0 %v391
      %v447 = vpop.f32.mrb[0].mxu0
      %v448 = vadd.f32 0.0, %v447
      %v449 = vpop.f32.mrb[0].mxu0
      %v450 = vpop.f32.mrb[0].mxu0
      %v451 = vadd.f32 0.0, %v450
      %v452 = vpop.f32.mrb[0].mxu0
      %453 = vmatprep.mubr.bf16.mxu0 0
      %454 = vmatmul.mubr.bf16.gmra.mrb[0].mxu0 %v394
      %v455 = vpop.f32.mrb[0].mxu0
      %v456 = vadd.f32 0.0, %v455
      %v457 = vpop.f32.mrb[0].mxu0
      %v458 = vpop.f32.mrb[0].mxu0
      %v459 = vpop.f32.mrb[0].mxu0
      %460 = vdwg.mxu0
      %v461 = vmul.f32 %v440, 0.17677669
      %v462 = vmul.f32 %v443, 0.17677669
      %v463 = vmul.f32 %v448, 0.17677669
      %v464 = vmul.f32 %v451, 0.17677669
      %v465 = vmul.f32 %v456, 0.17677669
      %v466 = vsel %vm229, %v461, -inf
      %467 = vmax.xlane.f32.xlu0 %v466
      %v468 = vpop.xlane.xlu0 %467
      %v469 = vsel %vm229, %v462, -inf
      %470 = vmax.xlane.f32.xlu0 %v469
      %v471 = vpop.xlane.xlu0 %470
      %v472 = vsel %vm229, %v463, -inf
      %473 = vmax.xlane.f32.xlu0 %v472
      %v474 = vpop.xlane.xlu0 %473
      %v475 = vsel %vm229, %v464, -inf
      %476 = vmax.xlane.f32.xlu0 %v475
      %v477 = vpop.xlane.xlu0 %476
      %v478 = vsel %vm242, %v465, -inf
      %479 = vmax.xlane.f32.xlu0 %v478
      %v480 = vpop.xlane.xlu0 %479
      %v481 = vsub.f32 %v461, %v468
      %v482 = vsub.f32 %v462, %v471
      %v483 = vsub.f32 %v463, %v474
      %v484 = vsub.f32 %v464, %v477
      %v485 = vsub.f32 %v465, %v480
      %v486 = vmul.f32 %v481, 1.442695
      %v487 = vpow.pop %v486
      %v488 = vmul.f32 %v482, 1.442695
      %v489 = vpow.pop %v488
      %v490 = vmul.f32 %v483, 1.442695
      %v491 = vpow.pop %v490
      %v492 = vmul.f32 %v484, 1.442695
      %v493 = vpow.pop %v492
      %v494 = vmul.f32 %v485, 1.442695
      %v495 = vpow.pop %v494
      %v496 = vsel %vm229, %v487, 0.0
      %497 = vadd.xlane.f32.xlu0 %v496
      %v498 = vpop.xlane.xlu0 %497
      %v499 = vsel %vm229, %v489, 0.0
      %500 = vadd.xlane.f32.xlu0 %v499
      %v501 = vpop.xlane.xlu0 %500
      %v502 = vsel %vm229, %v491, 0.0
      %503 = vadd.xlane.f32.xlu0 %v502
      %v504 = vpop.xlane.xlu0 %503
      %v505 = vsel %vm229, %v493, 0.0
      %506 = vadd.xlane.f32.xlu0 %v505
      %v507 = vpop.xlane.xlu0 %506
      %v508 = vsel %vm242, %v495, 0.0
      %509 = vadd.xlane.f32.xlu0 %v508
      %v510 = vpop.xlane.xlu0 %509
      %v511 = vrcp.pop %v498
      %v512 = vrcp.pop %v501
      %v513 = vrcp.pop %v504
      %v514 = vrcp.pop %v507
      %v515 = vrcp.pop %v510
      %v516 = vmul.f32 %v487, %v511
      %v517 = vmul.f32 %v489, %v512
      %v518 = vmul.f32 %v491, %v513
      %v519 = vmul.f32 %v493, %v514
      %v520 = vmul.f32 %v495, %v515
      %v521 = vpack.c.bf16 %v517, %v516
      %v522 = vpack.c.bf16 %v519, %v518
      %v523 = vpack.c.bf16 %v520, %v520
      %524 = vrot.lane.b32.xlu0 %v299, 96
      %v525 = vpop.permute.xlu0 %524
      %526 = vrot.lane.b32.xlu0 %v300, 96
      %v527 = vpop.permute.xlu0 %526
      %528 = vrot.lane.b32.xlu0 %v301, 96
      %v529 = vpop.permute.xlu0 %528
      %v533 = vsel %vm229, %v521, 0
      %v536 = vsel %vm229, %v522, 0
      %v539 = vsel %vm229, %v523, 0
      %v542 = vand.u32 %v529, %v315
      %544 = vmatprep.subr.bf16.mxu0 0
      %545 = vmatpush1.bf16.msra.mxu0 %v525
      %546 = vmatprep.subr.bf16.mxu0 0
      %547 = vmatpush1.bf16.msra.mxu0 %v527
      %548 = vmatprep.subr.bf16.mxu0 0
      %549 = vmatpush1.bf16.msra.mxu0 %v542
      %550 = vmatprep.subr.bf16.mxu0 0
      %551 = vmatpush1.bf16.msra.mxu0 0
      %552 = vmatprep.subr.bf16.mxu0 0
      %553 = vmatpush1.bf16.msra.mxu0 0
      %554 = vmatprep.subr.bf16.mxu0 0
      %555 = vmatpush1.bf16.msra.mxu0 0
      %556 = vmatprep.subr.bf16.mxu0 0
      %557 = vmatpush1.bf16.msra.mxu0 0
      %558 = vmatprep.subr.bf16.mxu0 0
      %559 = vmatpush1.bf16.msra.mxu0 0
      %560 = vmatprep.subr.bf16.mxu0 0
      %561 = vmatpush1.bf16.msra.mxu0 0
      %562 = vmatprep.subr.bf16.mxu0 0
      %563 = vmatpush1.bf16.msra.mxu0 0
      %564 = vmatprep.subr.bf16.mxu0 0
      %565 = vmatpush1.bf16.msra.mxu0 0
      %566 = vmatprep.subr.bf16.mxu0 0
      %567 = vmatpush1.bf16.msra.mxu0 0
      %568 = vmatprep.subr.bf16.mxu0 0
      %569 = vmatpush1.bf16.msra.mxu0 0
      %570 = vmatprep.subr.bf16.mxu0 0
      %571 = vmatpush1.bf16.msra.mxu0 0
      %572 = vmatprep.subr.bf16.mxu0 0
      %573 = vmatpush1.bf16.msra.mxu0 0
      %574 = vmatprep.subr.bf16.mxu0 0
      %575 = vmatpush1.bf16.msra.mxu0 0
      %576 = vmatprep.mubr.bf16.mxu0 0
      %577 = vmatmul.mubr.bf16.gmra.mrb[0].mxu0 %v533
      %v578 = vpop.f32.mrb[0].mxu0
      %v579 = vadd.f32 0.0, %v578
      %v580 = vpop.f32.mrb[0].mxu0
      %v581 = vpop.f32.mrb[0].mxu0
      %v582 = vadd.f32 0.0, %v581
      %v583 = vpop.f32.mrb[0].mxu0
      %584 = vmatprep.mubr.bf16.mxu0 0
      %585 = vmatmul.mubr.bf16.gmra.mrb[0].mxu0 %v536
      %v586 = vpop.f32.mrb[0].mxu0
      %v587 = vadd.f32 0.0, %v586
      %v588 = vpop.f32.mrb[0].mxu0
      %v589 = vpop.f32.mrb[0].mxu0
      %v590 = vadd.f32 0.0, %v589
      %v591 = vpop.f32.mrb[0].mxu0
      %592 = vmatprep.mubr.bf16.mxu0 0
      %593 = vmatmul.mubr.bf16.gmra.mrb[0].mxu0 %v539
      %v594 = vpop.f32.mrb[0].mxu0
      %v595 = vadd.f32 0.0, %v594
      %v596 = vpop.f32.mrb[0].mxu0
      %v597 = vpop.f32.mrb[0].mxu0
      %v598 = vpop.f32.mrb[0].mxu0
      %599 = vdwg.mxu0
      %600 = vrot.lane.b32.xlu0 %v138, 64
      %v601 = vpop.permute.xlu0 %600
      %602 = vrot.lane.b32.xlu0 %v139, 64
      %v603 = vpop.permute.xlu0 %602
      %604 = vrot.lane.b32.xlu0 %v140, 64
      %v605 = vpop.permute.xlu0 %604
      %606 = vrot.lane.b32.xlu0 %v146, 64
      %v607 = vpop.permute.xlu0 %606
      %608 = vrot.lane.b32.xlu0 %v147, 64
      %v609 = vpop.permute.xlu0 %608
      %610 = vrot.lane.b32.xlu0 %v148, 64
      %v611 = vpop.permute.xlu0 %610
      %v613 = vsel %vm149, %v601, 0
      %v616 = vsel %vm149, %v603, 0
      %v619 = vsel %vm149, %v605, 0
      %v622 = vsel %vm149, %v607, 0
      %v625 = vsel %vm149, %v609, 0
      %v628 = vsel %vm149, %v611, 0
      %630 = vmatprep.subr.bf16.mxu0 0
      %631 = vmatpush1.bf16.xpose.msra.mxu0 %v622
      %632 = vmatprep.subr.bf16.mxu0 0
      %633 = vmatpush1.bf16.xpose.msra.mxu0 %v625
      %634 = vmatprep.subr.bf16.mxu0 0
      %635 = vmatpush1.bf16.xpose.msra.mxu0 %v628
      %636 = vmatprep.subr.bf16.mxu0 0
      %637 = vmatpush1.bf16.xpose.msra.mxu0 0
      %638 = vmatprep.subr.bf16.mxu0 0
      %639 = vmatpush1.bf16.xpose.msra.mxu0 0
      %640 = vmatprep.subr.bf16.mxu0 0
      %641 = vmatpush1.bf16.xpose.msra.mxu0 0
      %642 = vmatprep.subr.bf16.mxu0 0
      %643 = vmatpush1.bf16.xpose.msra.mxu0 0
      %644 = vmatprep.subr.bf16.mxu0 0
      %645 = vmatpush1.bf16.xpose.msra.mxu0 0
      %646 = vmatprep.subr.bf16.mxu0 0
      %647 = vmatpush1.bf16.xpose.msra.mxu0 0
      %648 = vmatprep.subr.bf16.mxu0 0
      %649 = vmatpush1.bf16.xpose.msra.mxu0 0
      %650 = vmatprep.subr.bf16.mxu0 0
      %651 = vmatpush1.bf16.xpose.msra.mxu0 0
      %652 = vmatprep.subr.bf16.mxu0 0
      %653 = vmatpush1.bf16.xpose.msra.mxu0 0
      %654 = vmatprep.subr.bf16.mxu0 0
      %655 = vmatpush1.bf16.xpose.msra.mxu0 0
      %656 = vmatprep.subr.bf16.mxu0 0
      %657 = vmatpush1.bf16.xpose.msra.mxu0 0
      %658 = vmatprep.subr.bf16.mxu0 0
      %659 = vmatpush1.bf16.xpose.msra.mxu0 0
      %660 = vmatprep.subr.bf16.mxu0 0
      %661 = vmatpush1.bf16.xpose.msra.mxu0 0
      %662 = vmatprep.mubr.bf16.mxu0 0
      %663 = vmatmul.mubr.bf16.gmra.mrb[0].mxu0 %v613
      %v664 = vpop.f32.mrb[0].mxu0
      %v665 = vadd.f32 0.0, %v664
      %v666 = vpop.f32.mrb[0].mxu0
      %v667 = vpop.f32.mrb[0].mxu0
      %v668 = vadd.f32 0.0, %v667
      %v669 = vpop.f32.mrb[0].mxu0
      %670 = vmatprep.mubr.bf16.mxu0 0
      %671 = vmatmul.mubr.bf16.gmra.mrb[0].mxu0 %v616
      %v672 = vpop.f32.mrb[0].mxu0
      %v673 = vadd.f32 0.0, %v672
      %v674 = vpop.f32.mrb[0].mxu0
      %v675 = vpop.f32.mrb[0].mxu0
      %v676 = vadd.f32 0.0, %v675
      %v677 = vpop.f32.mrb[0].mxu0
      %678 = vmatprep.mubr.bf16.mxu0 0
      %679 = vmatmul.mubr.bf16.gmra.mrb[0].mxu0 %v619
      %v680 = vpop.f32.mrb[0].mxu0
      %v681 = vadd.f32 0.0, %v680
      %v682 = vpop.f32.mrb[0].mxu0
      %v683 = vpop.f32.mrb[0].mxu0
      %v684 = vpop.f32.mrb[0].mxu0
      %685 = vdwg.mxu0
      %v686 = vmul.f32 %v665, 0.17677669
      %v687 = vmul.f32 %v668, 0.17677669
      %v688 = vmul.f32 %v673, 0.17677669
      %v689 = vmul.f32 %v676, 0.17677669
      %v690 = vmul.f32 %v681, 0.17677669
      %v691 = vsel %vm229, %v686, -inf
      %692 = vmax.xlane.f32.xlu0 %v691
      %v693 = vpop.xlane.xlu0 %692
      %v694 = vsel %vm229, %v687, -inf
      %695 = vmax.xlane.f32.xlu0 %v694
      %v696 = vpop.xlane.xlu0 %695
      %v697 = vsel %vm229, %v688, -inf
      %698 = vmax.xlane.f32.xlu0 %v697
      %v699 = vpop.xlane.xlu0 %698
      %v700 = vsel %vm229, %v689, -inf
      %701 = vmax.xlane.f32.xlu0 %v700
      %v702 = vpop.xlane.xlu0 %701
      %v703 = vsel %vm242, %v690, -inf
      %704 = vmax.xlane.f32.xlu0 %v703
      %v705 = vpop.xlane.xlu0 %704
      %v706 = vsub.f32 %v686, %v693
      %v707 = vsub.f32 %v687, %v696
      %v708 = vsub.f32 %v688, %v699
      %v709 = vsub.f32 %v689, %v702
      %v710 = vsub.f32 %v690, %v705
      %v711 = vmul.f32 %v706, 1.442695
      %v712 = vpow.pop %v711
      %v713 = vmul.f32 %v707, 1.442695
      %v714 = vpow.pop %v713
      %v715 = vmul.f32 %v708, 1.442695
      %v716 = vpow.pop %v715
      %v717 = vmul.f32 %v709, 1.442695
      %v718 = vpow.pop %v717
      %v719 = vmul.f32 %v710, 1.442695
      %v720 = vpow.pop %v719
      %v721 = vsel %vm229, %v712, 0.0
      %722 = vadd.xlane.f32.xlu0 %v721
      %v723 = vpop.xlane.xlu0 %722
      %v724 = vsel %vm229, %v714, 0.0
      %725 = vadd.xlane.f32.xlu0 %v724
      %v726 = vpop.xlane.xlu0 %725
      %v727 = vsel %vm229, %v716, 0.0
      %728 = vadd.xlane.f32.xlu0 %v727
      %v729 = vpop.xlane.xlu0 %728
      %v730 = vsel %vm229, %v718, 0.0
      %731 = vadd.xlane.f32.xlu0 %v730
      %v732 = vpop.xlane.xlu0 %731
      %v733 = vsel %vm242, %v720, 0.0
      %734 = vadd.xlane.f32.xlu0 %v733
      %v735 = vpop.xlane.xlu0 %734
      %v736 = vrcp.pop %v723
      %v737 = vrcp.pop %v726
      %v738 = vrcp.pop %v729
      %v739 = vrcp.pop %v732
      %v740 = vrcp.pop %v735
      %v741 = vmul.f32 %v712, %v736
      %v742 = vmul.f32 %v714, %v737
      %v743 = vmul.f32 %v716, %v738
      %v744 = vmul.f32 %v718, %v739
      %v745 = vmul.f32 %v720, %v740
      %v746 = vpack.c.bf16 %v742, %v741
      %v747 = vpack.c.bf16 %v744, %v743
      %v748 = vpack.c.bf16 %v745, %v745
      %749 = vrot.lane.b32.xlu0 %v299, 64
      %v750 = vpop.permute.xlu0 %749
      %751 = vrot.lane.b32.xlu0 %v300, 64
      %v752 = vpop.permute.xlu0 %751
      %753 = vrot.lane.b32.xlu0 %v301, 64
      %v754 = vpop.permute.xlu0 %753
      %v758 = vsel %vm229, %v746, 0
      %v761 = vsel %vm229, %v747, 0
      %v764 = vsel %vm229, %v748, 0
      %v767 = vand.u32 %v754, %v315
      %769 = vmatprep.subr.bf16.mxu0 0
      %770 = vmatpush1.bf16.msra.mxu0 %v750
      %771 = vmatprep.subr.bf16.mxu0 0
      %772 = vmatpush1.bf16.msra.mxu0 %v752
      %773 = vmatprep.subr.bf16.mxu0 0
      %774 = vmatpush1.bf16.msra.mxu0 %v767
      %775 = vmatprep.subr.bf16.mxu0 0
      %776 = vmatpush1.bf16.msra.mxu0 0
      %777 = vmatprep.subr.bf16.mxu0 0
      %778 = vmatpush1.bf16.msra.mxu0 0
      %779 = vmatprep.subr.bf16.mxu0 0
      %780 = vmatpush1.bf16.msra.mxu0 0
      %781 = vmatprep.subr.bf16.mxu0 0
      %782 = vmatpush1.bf16.msra.mxu0 0
      %783 = vmatprep.subr.bf16.mxu0 0
      %784 = vmatpush1.bf16.msra.mxu0 0
      %785 = vmatprep.subr.bf16.mxu0 0
      %786 = vmatpush1.bf16.msra.mxu0 0
      %787 = vmatprep.subr.bf16.mxu0 0
      %788 = vmatpush1.bf16.msra.mxu0 0
      %789 = vmatprep.subr.bf16.mxu0 0
      %790 = vmatpush1.bf16.msra.mxu0 0
      %791 = vmatprep.subr.bf16.mxu0 0
      %792 = vmatpush1.bf16.msra.mxu0 0
      %793 = vmatprep.subr.bf16.mxu0 0
      %794 = vmatpush1.bf16.msra.mxu0 0
      %795 = vmatprep.subr.bf16.mxu0 0
      %796 = vmatpush1.bf16.msra.mxu0 0
      %797 = vmatprep.subr.bf16.mxu0 0
      %798 = vmatpush1.bf16.msra.mxu0 0
      %799 = vmatprep.subr.bf16.mxu0 0
      %800 = vmatpush1.bf16.msra.mxu0 0
      %801 = vmatprep.mubr.bf16.mxu0 0
      %802 = vmatmul.mubr.bf16.gmra.mrb[0].mxu0 %v758
      %v803 = vpop.f32.mrb[0].mxu0
      %v804 = vadd.f32 0.0, %v803
      %v805 = vpop.f32.mrb[0].mxu0
      %v806 = vpop.f32.mrb[0].mxu0
      %v807 = vadd.f32 0.0, %v806
      %v808 = vpop.f32.mrb[0].mxu0
      %809 = vmatprep.mubr.bf16.mxu0 0
      %810 = vmatmul.mubr.bf16.gmra.mrb[0].mxu0 %v761
      %v811 = vpop.f32.mrb[0].mxu0
      %v812 = vadd.f32 0.0, %v811
      %v813 = vpop.f32.mrb[0].mxu0
      %v814 = vpop.f32.mrb[0].mxu0
      %v815 = vadd.f32 0.0, %v814
      %v816 = vpop.f32.mrb[0].mxu0
      %817 = vmatprep.mubr.bf16.mxu0 0
      %818 = vmatmul.mubr.bf16.gmra.mrb[0].mxu0 %v764
      %v819 = vpop.f32.mrb[0].mxu0
      %v820 = vadd.f32 0.0, %v819
      %v821 = vpop.f32.mrb[0].mxu0
      %v822 = vpop.f32.mrb[0].mxu0
      %v823 = vpop.f32.mrb[0].mxu0
      %824 = vdwg.mxu0
      %825 = vrot.lane.b32.xlu0 %v138, 32
      %v826 = vpop.permute.xlu0 %825
      %827 = vrot.lane.b32.xlu0 %v139, 32
      %v828 = vpop.permute.xlu0 %827
      %829 = vrot.lane.b32.xlu0 %v140, 32
      %v830 = vpop.permute.xlu0 %829
      %831 = vrot.lane.b32.xlu0 %v146, 32
      %v832 = vpop.permute.xlu0 %831
      %833 = vrot.lane.b32.xlu0 %v147, 32
      %v834 = vpop.permute.xlu0 %833
      %835 = vrot.lane.b32.xlu0 %v148, 32
      %v836 = vpop.permute.xlu0 %835
      %v838 = vsel %vm149, %v826, 0
      %v841 = vsel %vm149, %v828, 0
      %v844 = vsel %vm149, %v830, 0
      %v847 = vsel %vm149, %v832, 0
      %v850 = vsel %vm149, %v834, 0
      %v853 = vsel %vm149, %v836, 0
      %855 = vmatprep.subr.bf16.mxu0 0
      %856 = vmatpush1.bf16.xpose.msra.mxu0 %v847
      %857 = vmatprep.subr.bf16.mxu0 0
      %858 = vmatpush1.bf16.xpose.msra.mxu0 %v850
      %859 = vmatprep.subr.bf16.mxu0 0
      %860 = vmatpush1.bf16.xpose.msra.mxu0 %v853
      %861 = vmatprep.subr.bf16.mxu0 0
      %862 = vmatpush1.bf16.xpose.msra.mxu0 0
      %863 = vmatprep.subr.bf16.mxu0 0
      %864 = vmatpush1.bf16.xpose.msra.mxu0 0
      %865 = vmatprep.subr.bf16.mxu0 0
      %866 = vmatpush1.bf16.xpose.msra.mxu0 0
      %867 = vmatprep.subr.bf16.mxu0 0
      %868 = vmatpush1.bf16.xpose.msra.mxu0 0
      %869 = vmatprep.subr.bf16.mxu0 0
      %870 = vmatpush1.bf16.xpose.msra.mxu0 0
      %871 = vmatprep.subr.bf16.mxu0 0
      %872 = vmatpush1.bf16.xpose.msra.mxu0 0
      %873 = vmatprep.subr.bf16.mxu0 0
      %874 = vmatpush1.bf16.xpose.msra.mxu0 0
      %875 = vmatprep.subr.bf16.mxu0 0
      %876 = vmatpush1.bf16.xpose.msra.mxu0 0
      %877 = vmatprep.subr.bf16.mxu0 0
      %878 = vmatpush1.bf16.xpose.msra.mxu0 0
      %879 = vmatprep.subr.bf16.mxu0 0
      %880 = vmatpush1.bf16.xpose.msra.mxu0 0
      %881 = vmatprep.subr.bf16.mxu0 0
      %882 = vmatpush1.bf16.xpose.msra.mxu0 0
      %883 = vmatprep.subr.bf16.mxu0 0
      %884 = vmatpush1.bf16.xpose.msra.mxu0 0
      %885 = vmatprep.subr.bf16.mxu0 0
      %886 = vmatpush1.bf16.xpose.msra.mxu0 0
      %887 = vmatprep.mubr.bf16.mxu0 0
      %888 = vmatmul.mubr.bf16.gmra.mrb[0].mxu0 %v838
      %v889 = vpop.f32.mrb[0].mxu0
      %v890 = vadd.f32 0.0, %v889
      %v891 = vpop.f32.mrb[0].mxu0
      %v892 = vpop.f32.mrb[0].mxu0
      %v893 = vadd.f32 0.0, %v892
      %v894 = vpop.f32.mrb[0].mxu0
      %895 = vmatprep.mubr.bf16.mxu0 0
      %896 = vmatmul.mubr.bf16.gmra.mrb[0].mxu0 %v841
      %v897 = vpop.f32.mrb[0].mxu0
      %v898 = vadd.f32 0.0, %v897
      %v899 = vpop.f32.mrb[0].mxu0
      %v900 = vpop.f32.mrb[0].mxu0
      %v901 = vadd.f32 0.0, %v900
      %v902 = vpop.f32.mrb[0].mxu0
      %903 = vmatprep.mubr.bf16.mxu0 0
      %904 = vmatmul.mubr.bf16.gmra.mrb[0].mxu0 %v844
      %v905 = vpop.f32.mrb[0].mxu0
      %v906 = vadd.f32 0.0, %v905
      %v907 = vpop.f32.mrb[0].mxu0
      %v908 = vpop.f32.mrb[0].mxu0
      %v909 = vpop.f32.mrb[0].mxu0
      %910 = vdwg.mxu0
      %v911 = vmul.f32 %v890, 0.17677669
      %v912 = vmul.f32 %v893, 0.17677669
      %v913 = vmul.f32 %v898, 0.17677669
      %v914 = vmul.f32 %v901, 0.17677669
      %v915 = vmul.f32 %v906, 0.17677669
      %v916 = vsel %vm229, %v911, -inf
      %917 = vmax.xlane.f32.xlu0 %v916
      %v918 = vpop.xlane.xlu0 %917
      %v919 = vsel %vm229, %v912, -inf
      %920 = vmax.xlane.f32.xlu0 %v919
      %v921 = vpop.xlane.xlu0 %920
      %v922 = vsel %vm229, %v913, -inf
      %923 = vmax.xlane.f32.xlu0 %v922
      %v924 = vpop.xlane.xlu0 %923
      %v925 = vsel %vm229, %v914, -inf
      %926 = vmax.xlane.f32.xlu0 %v925
      %v927 = vpop.xlane.xlu0 %926
      %v928 = vsel %vm242, %v915, -inf
      %929 = vmax.xlane.f32.xlu0 %v928
      %v930 = vpop.xlane.xlu0 %929
      %v931 = vsub.f32 %v911, %v918
      %v932 = vsub.f32 %v912, %v921
      %v933 = vsub.f32 %v913, %v924
      %v934 = vsub.f32 %v914, %v927
      %v935 = vsub.f32 %v915, %v930
      %v936 = vmul.f32 %v931, 1.442695
      %v937 = vpow.pop %v936
      %v938 = vmul.f32 %v932, 1.442695
      %v939 = vpow.pop %v938
      %v940 = vmul.f32 %v933, 1.442695
      %v941 = vpow.pop %v940
      %v942 = vmul.f32 %v934, 1.442695
      %v943 = vpow.pop %v942
      %v944 = vmul.f32 %v935, 1.442695
      %v945 = vpow.pop %v944
      %v946 = vsel %vm229, %v937, 0.0
      %947 = vadd.xlane.f32.xlu0 %v946
      %v948 = vpop.xlane.xlu0 %947
      %v949 = vsel %vm229, %v939, 0.0
      %950 = vadd.xlane.f32.xlu0 %v949
      %v951 = vpop.xlane.xlu0 %950
      %v952 = vsel %vm229, %v941, 0.0
      %953 = vadd.xlane.f32.xlu0 %v952
      %v954 = vpop.xlane.xlu0 %953
      %v955 = vsel %vm229, %v943, 0.0
      %956 = vadd.xlane.f32.xlu0 %v955
      %v957 = vpop.xlane.xlu0 %956
      %v958 = vsel %vm242, %v945, 0.0
      %959 = vadd.xlane.f32.xlu0 %v958
      %v960 = vpop.xlane.xlu0 %959
      %v961 = vrcp.pop %v948
      %v962 = vrcp.pop %v951
      %v963 = vrcp.pop %v954
      %v964 = vrcp.pop %v957
      %v965 = vrcp.pop %v960
      %v966 = vmul.f32 %v937, %v961
      %v967 = vmul.f32 %v939, %v962
      %v968 = vmul.f32 %v941, %v963
      %v969 = vmul.f32 %v943, %v964
      %v970 = vmul.f32 %v945, %v965
      %v971 = vpack.c.bf16 %v967, %v966
      %v972 = vpack.c.bf16 %v969, %v968
      %v973 = vpack.c.bf16 %v970, %v970
      %974 = vrot.lane.b32.xlu0 %v299, 32
      %v975 = vpop.permute.xlu0 %974
      %976 = vrot.lane.b32.xlu0 %v300, 32
      %v977 = vpop.permute.xlu0 %976
      %978 = vrot.lane.b32.xlu0 %v301, 32
      %v979 = vpop.permute.xlu0 %978
      %v983 = vsel %vm229, %v971, 0
      %v986 = vsel %vm229, %v972, 0
      %v989 = vsel %vm229, %v973, 0
      %v992 = vand.u32 %v979, %v315
      %994 = vmatprep.subr.bf16.mxu0 0
      %995 = vmatpush1.bf16.msra.mxu0 %v975
      %996 = vmatprep.subr.bf16.mxu0 0
      %997 = vmatpush1.bf16.msra.mxu0 %v977
      %998 = vmatprep.subr.bf16.mxu0 0
      %999 = vmatpush1.bf16.msra.mxu0 %v992
      %1000 = vmatprep.subr.bf16.mxu0 0
      %1001 = vmatpush1.bf16.msra.mxu0 0
      %1002 = vmatprep.subr.bf16.mxu0 0
      %1003 = vmatpush1.bf16.msra.mxu0 0
      %1004 = vmatprep.subr.bf16.mxu0 0
      %1005 = vmatpush1.bf16.msra.mxu0 0
      %1006 = vmatprep.subr.bf16.mxu0 0
      %1007 = vmatpush1.bf16.msra.mxu0 0
      %1008 = vmatprep.subr.bf16.mxu0 0
      %1009 = vmatpush1.bf16.msra.mxu0 0
      %1010 = vmatprep.subr.bf16.mxu0 0
      %1011 = vmatpush1.bf16.msra.mxu0 0
      %1012 = vmatprep.subr.bf16.mxu0 0
      %1013 = vmatpush1.bf16.msra.mxu0 0
      %1014 = vmatprep.subr.bf16.mxu0 0
      %1015 = vmatpush1.bf16.msra.mxu0 0
      %1016 = vmatprep.subr.bf16.mxu0 0
      %1017 = vmatpush1.bf16.msra.mxu0 0
      %1018 = vmatprep.subr.bf16.mxu0 0
      %1019 = vmatpush1.bf16.msra.mxu0 0
      %1020 = vmatprep.subr.bf16.mxu0 0
      %1021 = vmatpush1.bf16.msra.mxu0 0
      %1022 = vmatprep.subr.bf16.mxu0 0
      %1023 = vmatpush1.bf16.msra.mxu0 0
      %1024 = vmatprep.subr.bf16.mxu0 0
      %1025 = vmatpush1.bf16.msra.mxu0 0
      %1026 = vmatprep.mubr.bf16.mxu0 0
      %1027 = vmatmul.mubr.bf16.gmra.mrb[0].mxu0 %v983
      %v1028 = vpop.f32.mrb[0].mxu0
      %v1029 = vadd.f32 0.0, %v1028
      %v1030 = vpop.f32.mrb[0].mxu0
      %v1031 = vpop.f32.mrb[0].mxu0
      %v1032 = vadd.f32 0.0, %v1031
      %v1033 = vpop.f32.mrb[0].mxu0
      %1034 = vmatprep.mubr.bf16.mxu0 0
      %1035 = vmatmul.mubr.bf16.gmra.mrb[0].mxu0 %v986
      %v1036 = vpop.f32.mrb[0].mxu0
      %v1037 = vadd.f32 0.0, %v1036
      %v1038 = vpop.f32.mrb[0].mxu0
      %v1039 = vpop.f32.mrb[0].mxu0
      %v1040 = vadd.f32 0.0, %v1039
      %v1041 = vpop.f32.mrb[0].mxu0
      %1042 = vmatprep.mubr.bf16.mxu0 0
      %1043 = vmatmul.mubr.bf16.gmra.mrb[0].mxu0 %v989
      %v1044 = vpop.f32.mrb[0].mxu0
      %v1045 = vadd.f32 0.0, %v1044
      %v1046 = vpop.f32.mrb[0].mxu0
      %v1047 = vpop.f32.mrb[0].mxu0
      %v1048 = vpop.f32.mrb[0].mxu0
      %1049 = vdwg.mxu0
      %1055 = vrot.lane.b32.xlu0 %v579, 32
      %v1056 = vpop.permute.xlu0 %1055
      %1057 = vrot.lane.b32.xlu0 %v582, 32
      %v1058 = vpop.permute.xlu0 %1057
      %1059 = vrot.lane.b32.xlu0 %v587, 32
      %v1060 = vpop.permute.xlu0 %1059
      %1061 = vrot.lane.b32.xlu0 %v590, 32
      %v1062 = vpop.permute.xlu0 %1061
      %1063 = vrot.lane.b32.xlu0 %v595, 32
      %v1064 = vpop.permute.xlu0 %1063
      %1075 = vrot.lane.b32.xlu0 %v804, 64
      %v1076 = vpop.permute.xlu0 %1075
      %1077 = vrot.lane.b32.xlu0 %v807, 64
      %v1078 = vpop.permute.xlu0 %1077
      %1079 = vrot.lane.b32.xlu0 %v812, 64
      %v1080 = vpop.permute.xlu0 %1079
      %1081 = vrot.lane.b32.xlu0 %v815, 64
      %v1082 = vpop.permute.xlu0 %1081
      %1083 = vrot.lane.b32.xlu0 %v820, 64
      %v1084 = vpop.permute.xlu0 %1083
      %1095 = vrot.lane.b32.xlu0 %v1029, 96
      %v1096 = vpop.permute.xlu0 %1095
      %1097 = vrot.lane.b32.xlu0 %v1032, 96
      %v1098 = vpop.permute.xlu0 %1097
      %1099 = vrot.lane.b32.xlu0 %v1037, 96
      %v1100 = vpop.permute.xlu0 %1099
      %1101 = vrot.lane.b32.xlu0 %v1040, 96
      %v1102 = vpop.permute.xlu0 %1101
      %1103 = vrot.lane.b32.xlu0 %v1045, 96
      %v1104 = vpop.permute.xlu0 %1103
      %v1110 = vsel %vm149, %v354, %v1056
      %v1111 = vsel %vm149, %v357, %v1058
      %v1112 = vsel %vm149, %v362, %v1060
      %v1113 = vsel %vm149, %v365, %v1062
      %v1114 = vsel %vm149, %v370, %v1064
      %vm1115 = vcmask 523264
      %v1116 = vsel %vm1115, %v1110, %v1076
      %v1117 = vsel %vm1115, %v1111, %v1078
      %v1118 = vsel %vm1115, %v1112, %v1080
      %v1119 = vsel %vm1115, %v1113, %v1082
      %v1120 = vsel %vm1115, %v1114, %v1084
      %vm1121 = vcmask 785408
      %v1122 = vsel %vm1121, %v1116, %v1096
      %v1123 = vsel %vm1121, %v1117, %v1098
      %v1124 = vsel %vm1121, %v1118, %v1100
      %v1125 = vsel %vm1121, %v1119, %v1102
      %v1126 = vsel %vm1121, %v1120, %v1104
      %v1127 = vpack.c.bf16 %v1123, %v1122
      %v1128 = vpack.c.bf16 %v1125, %v1124
      %v1129 = vpack.c.bf16 %v1126, %v1126
      %v1133 = vunpack.c.l.b16 %v1127
      %v1134 = vunpack.c.h.b16 %v1127
      %v1135 = vunpack.c.l.b16 %v1128
      %v1136 = vunpack.c.h.b16 %v1128
      %v1137 = vunpack.c.l.b16 %v1129
      %v1138 = vpack.c.b16 %v1133, %v1133
      %v1139 = vpack.c.b16 %v1134, %v1134
      %v1140 = vpack.c.b16 %v1135, %v1135
      %v1141 = vpack.c.b16 %v1136, %v1136
      %v1142 = vpack.c.b16 %v1137, %v1137
      %1148 = vst [vmem:[%s116] sm:$0xf] %v1138
      %1149 = vst [vmem:[%s116 + $0x4] sm:$0xf] %v1139
      %1150 = vst [vmem:[%s116 + $0x8] sm:$0xf] %v1140
      %1151 = vst [vmem:[%s116 + $0xc] sm:$0xf] %v1141
      %vm1152 = vcmask 1040384
      %vm1153 = vsmask.f32 256
      %vm1154 = vmand %vm1152, %vm1153
      %v1155 = vld [vmem:[%s116 + $0x10] sm:$0x1]
      %v1156 = vsel %vm1154, %v1142, %v1155
      %1157 = vst [vmem:[%s116 + $0x10] sm:$0x1] %v1156
      %p1158 = scmp.lt.s32.totalorder %s12, 1
      %s1159 = scalar_select %p1158, %s12, 1
      %s1160 = smul.addr %s1159, 5
      %s1161 = smul.addr %s1160, 4
      %s1162 = scalar_lea.vmem %s1, %s1161
      // Predicated region
      $region25: #{_lambda_.17} parent=23 // pred_check
        %p1163 = pneg %p56
      $region26: #{_lambda_.17} parent=23 // pred_check_branch
        %1165 = sbr.rel (%p1163) target = $region28
      $region27: #{_lambda_.17} parent=23 // pred_region
        _
      $region28: #{_lambda_.17} parent=23 // pred_fallthru
        _
    $region24: #{_lambda_.17} parent=5 // pred_fallthru
      _
    %p1166 = scmp.le.s32.totalorder 2, %s7
    // Predicated region
    $region29: #{_lambda_.17} parent=5 // pred_check
      %p1167 = pneg %p1166
    $region30: #{_lambda_.17} parent=5 // pred_check_branch
      %1169 = sbr.rel (%p1167) target = $region32
    $region31: #{_lambda_.17} parent=5 // pred_region
      %s1170 = ssub.s32 %s7, 2
      // Predicated region
      $region33: #{_lambda_.17} parent=31 // pred_check
        %p1171 = pneg %p62
      $region34: #{_lambda_.17} parent=31 // pred_check_branch
        %1173 = sbr.rel (%p1171) target = $region36
      $region35: #{_lambda_.17} parent=31 // pred_region
        %p1174 = scmp.lt.s32.totalorder %s13, 1
        %s1175 = scalar_select %p1174, %s13, 1
        %s1176 = smul.addr %s1175, 5
        %s1177 = smul.addr %s1176, 4
        %s1178 = scalar_lea.vmem %s1, %s1177
      $region36: #{_lambda_.17} parent=31 // pred_fallthru
        _
    $region32: #{_lambda_.17} parent=5 // pred_fallthru
      _
  $region6: #{_lambda_.17} parent=0 // loop_footer
    %s11 = sadd.s32 1, %s7
  $region7: #{_lambda_.17} parent=0 // loop_footer_branch
    %6 = sbr.rel target = $region3
  $region8: #{_lambda_.17} parent=0 // loop_exit
    _

// kernel: _lambda_.19
$region0: #{_lambda_.19}
  #allocation0 [shape = 'u32[]', space=smem, size = 0x4, offset = 0x4, fixed_abs, tag = 'smem constant byte address 0x4 - core index']
  #allocation1 [shape = 'u32[144,128]{1,0:T(1,128)}', space=vmem, size = 0x12000, scoped, tag = 'internal scratch']
  %s0 = inlined_call_operand.vmem [shape: bf16[66,128], index: 0, kind: input, shape index: {}]
  %s1 = inlined_call_operand.vmem [shape: f32[1,128], index: 1, kind: input, shape index: {}]
  %s2 = inlined_call_operand.vmem [shape: f32[1,128], index: 2, kind: input, shape index: {}]
  %s3 = inlined_call_operand.vmem [shape: bf16[128,512], index: 3, kind: input, shape index: {}]
  %s4 = inlined_call_operand.vmem [shape: f32[1,512], index: 4, kind: input, shape index: {}]
  %s5 = inlined_call_operand.vmem [shape: bf16[512,128], index: 5, kind: input, shape index: {}]
  %s6 = inlined_call_operand.vmem [shape: f32[1,128], index: 6, kind: input, shape index: {}]
  %s7 = inlined_call_operand.vmem [shape: bf16[66,128], index: 7, kind: output, shape index: {}]
  %s8 = sld [smem:[#allocation0]]
  $region38: #{_lambda_.19} parent=0
    _
  %s10 = ssub.s32 1, %s8
  %s11 = scalar_select 0, %s10, %s8
  // Predicated region
  $region2: #{_lambda_.19} parent=0 // pred_check
    _
  $region3: #{_lambda_.19} parent=0 // pred_check_branch
    %13 = sbr.rel (0) target = $region5
  $region4: #{_lambda_.19} parent=0 // pred_region
    _
  $region5: #{_lambda_.19} parent=0 // pred_fallthru
    _
  // Predicated region
  $region6: #{_lambda_.19} parent=0 // pred_check
    _
  $region7: #{_lambda_.19} parent=0 // pred_check_branch
    %15 = sbr.rel (0) target = $region9
  $region8: #{_lambda_.19} parent=0 // pred_region
    _
  $region9: #{_lambda_.19} parent=0 // pred_fallthru
    _
  // Predicated region
  $region10: #{_lambda_.19} parent=0 // pred_check
    _
  $region11: #{_lambda_.19} parent=0 // pred_check_branch
    %17 = sbr.rel (0) target = $region13
  $region12: #{_lambda_.19} parent=0 // pred_region
    _
  $region13: #{_lambda_.19} parent=0 // pred_fallthru
    _
  // Predicated region
  $region14: #{_lambda_.19} parent=0 // pred_check
    _
  $region15: #{_lambda_.19} parent=0 // pred_check_branch
    %19 = sbr.rel (0) target = $region17
  $region16: #{_lambda_.19} parent=0 // pred_region
    _
  $region17: #{_lambda_.19} parent=0 // pred_fallthru
    _
  // Predicated region
  $region18: #{_lambda_.19} parent=0 // pred_check
    _
  $region19: #{_lambda_.19} parent=0 // pred_check_branch
    %21 = sbr.rel (0) target = $region21
  $region20: #{_lambda_.19} parent=0 // pred_region
    _
  $region21: #{_lambda_.19} parent=0 // pred_fallthru
    _
  // Predicated region
  $region22: #{_lambda_.19} parent=0 // pred_check
    _
  $region23: #{_lambda_.19} parent=0 // pred_check_branch
    %23 = sbr.rel (0) target = $region25
  $region24: #{_lambda_.19} parent=0 // pred_region
    _
  $region25: #{_lambda_.19} parent=0 // pred_fallthru
    _
  // Predicated region
  $region26: #{_lambda_.19} parent=0 // pred_check
    _
  $region27: #{_lambda_.19} parent=0 // pred_check_branch
    %25 = sbr.rel (0) target = $region29
  $region28: #{_lambda_.19} parent=0 // pred_region
    _
  $region29: #{_lambda_.19} parent=0 // pred_fallthru
    _
  %v27 = vld [vmem:[%s0] sm:$0xf]
  %v28 = vld [vmem:[%s0 + $0x4] sm:$0xf]
  %v29 = vld [vmem:[%s0 + $0x8] sm:$0xf]
  %v30 = vld [vmem:[%s0 + $0xc] sm:$0xf]
  %v31 = vld [vmem:[%s0 + $0x10] sm:$0xf]
  %v32 = vld [vmem:[%s0 + $0x14] sm:$0xf]
  %v33 = vld [vmem:[%s0 + $0x18] sm:$0xf]
  %v34 = vld [vmem:[%s0 + $0x1c] sm:$0xf]
  %v35 = vld [vmem:[%s0 + $0x20] sm:$0x1]
  %v36 = vunpack.c.l.bf16 %v27
  %v37 = vunpack.c.l.bf16 %v28
  %v38 = vunpack.c.l.bf16 %v29
  %v39 = vunpack.c.l.bf16 %v30
  %v40 = vunpack.c.l.bf16 %v31
  %v41 = vunpack.c.l.bf16 %v32
  %v42 = vunpack.c.l.bf16 %v33
  %v43 = vunpack.c.l.bf16 %v34
  %v44 = vunpack.c.l.bf16 %v35
  %45 = vadd.xlane.f32.xlu0 %v36
  %v46 = vpop.xlane.xlu0 %45
  %47 = vadd.xlane.f32.xlu0 %v37
  %v48 = vpop.xlane.xlu0 %47
  %49 = vadd.xlane.f32.xlu0 %v38
  %v50 = vpop.xlane.xlu0 %49
  %51 = vadd.xlane.f32.xlu0 %v39
  %v52 = vpop.xlane.xlu0 %51
  %53 = vadd.xlane.f32.xlu0 %v40
  %v54 = vpop.xlane.xlu0 %53
  %55 = vadd.xlane.f32.xlu0 %v41
  %v56 = vpop.xlane.xlu0 %55
  %57 = vadd.xlane.f32.xlu0 %v42
  %v58 = vpop.xlane.xlu0 %57
  %59 = vadd.xlane.f32.xlu0 %v43
  %v60 = vpop.xlane.xlu0 %59
  %vm61 = vcmask 1041408
  %v62 = vsel %vm61, %v44, 0.0
  %63 = vadd.xlane.f32.xlu0 %v62
  %v64 = vpop.xlane.xlu0 %63
  %v65 = vrcp.pop 128.0
  %v66 = vmul.f32 %v46, %v65
  %v67 = vmul.f32 %v48, %v65
  %v68 = vmul.f32 %v50, %v65
  %v69 = vmul.f32 %v52, %v65
  %v70 = vmul.f32 %v54, %v65
  %v71 = vmul.f32 %v56, %v65
  %v72 = vmul.f32 %v58, %v65
  %v73 = vmul.f32 %v60, %v65
  %v74 = vmul.f32 %v64, %v65
  %v75 = vsub.f32 %v36, %v66
  %v76 = vsub.f32 %v37, %v67
  %v77 = vsub.f32 %v38, %v68
  %v78 = vsub.f32 %v39, %v69
  %v79 = vsub.f32 %v40, %v70
  %v80 = vsub.f32 %v41, %v71
  %v81 = vsub.f32 %v42, %v72
  %v82 = vsub.f32 %v43, %v73
  %v83 = vsub.f32 %v44, %v74
  %v84 = vmul.f32 %v75, %v75
  %v85 = vmul.f32 %v76, %v76
  %v86 = vmul.f32 %v77, %v77
  %v87 = vmul.f32 %v78, %v78
  %v88 = vmul.f32 %v79, %v79
  %v89 = vmul.f32 %v80, %v80
  %v90 = vmul.f32 %v81, %v81
  %v91 = vmul.f32 %v82, %v82
  %v92 = vmul.f32 %v83, %v83
  %93 = vadd.xlane.f32.xlu0 %v84
  %v94 = vpop.xlane.xlu0 %93
  %95 = vadd.xlane.f32.xlu0 %v85
  %v96 = vpop.xlane.xlu0 %95
  %97 = vadd.xlane.f32.xlu0 %v86
  %v98 = vpop.xlane.xlu0 %97
  %99 = vadd.xlane.f32.xlu0 %v87
  %v100 = vpop.xlane.xlu0 %99
  %101 = vadd.xlane.f32.xlu0 %v88
  %v102 = vpop.xlane.xlu0 %101
  %103 = vadd.xlane.f32.xlu0 %v89
  %v104 = vpop.xlane.xlu0 %103
  %105 = vadd.xlane.f32.xlu0 %v90
  %v106 = vpop.xlane.xlu0 %105
  %107 = vadd.xlane.f32.xlu0 %v91
  %v108 = vpop.xlane.xlu0 %107
  %v109 = vsel %vm61, %v92, 0.0
  %110 = vadd.xlane.f32.xlu0 %v109
  %v111 = vpop.xlane.xlu0 %110
  %v112 = vmul.f32 %v94, %v65
  %v113 = vmul.f32 %v96, %v65
  %v114 = vmul.f32 %v98, %v65
  %v115 = vmul.f32 %v100, %v65
  %v116 = vmul.f32 %v102, %v65
  %v117 = vmul.f32 %v104, %v65
  %v118 = vmul.f32 %v106, %v65
  %v119 = vmul.f32 %v108, %v65
  %v120 = vmul.f32 %v111, %v65
  %v121 = vadd.f32 %v112, 1e-06
  %v122 = vadd.f32 %v113, 1e-06
  %v123 = vadd.f32 %v114, 1e-06
  %v124 = vadd.f32 %v115, 1e-06
  %v125 = vadd.f32 %v116, 1e-06
  %v126 = vadd.f32 %v117, 1e-06
  %v127 = vadd.f32 %v118, 1e-06
  %v128 = vadd.f32 %v119, 1e-06
  %v129 = vadd.f32 %v120, 1e-06
  %v130 = vrsqrt.pop %v121
  %v131 = vrsqrt.pop %v122
  %v132 = vrsqrt.pop %v123
  %v133 = vrsqrt.pop %v124
  %v134 = vrsqrt.pop %v125
  %v135 = vrsqrt.pop %v126
  %v136 = vrsqrt.pop %v127
  %v137 = vrsqrt.pop %v128
  %v138 = vrsqrt.pop %v129
  %v139 = vmul.f32 %v75, %v130
  %v140 = vmul.f32 %v76, %v131
  %v141 = vmul.f32 %v77, %v132
  %v142 = vmul.f32 %v78, %v133
  %v143 = vmul.f32 %v79, %v134
  %v144 = vmul.f32 %v80, %v135
  %v145 = vmul.f32 %v81, %v136
  %v146 = vmul.f32 %v82, %v137
  %v147 = vmul.f32 %v83, %v138
  %v148 = vld [vmem:[%s1] sm:$0x1]
  %v150 = vlaneseq
  %v151 = vshrl.u32 %v150, 7
  %v152 = vsub.s32 0, %v151
  %v153 = vrot.slane %v148, %v152
  %v155 = vmul.f32 %v139, %v153
  %v156 = vmul.f32 %v140, %v153
  %v157 = vmul.f32 %v141, %v153
  %v158 = vmul.f32 %v142, %v153
  %v159 = vmul.f32 %v143, %v153
  %v160 = vmul.f32 %v144, %v153
  %v161 = vmul.f32 %v145, %v153
  %v162 = vmul.f32 %v146, %v153
  %v163 = vmul.f32 %v147, %v153
  %v164 = vld [vmem:[%s2] sm:$0x1]
  %v166 = vlaneseq
  %v167 = vshrl.u32 %v166, 7
  %v168 = vsub.s32 0, %v167
  %v169 = vrot.slane %v164, %v168
  %v171 = vadd.f32 %v155, %v169
  %v172 = vadd.f32 %v156, %v169
  %v173 = vadd.f32 %v157, %v169
  %v174 = vadd.f32 %v158, %v169
  %v175 = vadd.f32 %v159, %v169
  %v176 = vadd.f32 %v160, %v169
  %v177 = vadd.f32 %v161, %v169
  %v178 = vadd.f32 %v162, %v169
  %v179 = vadd.f32 %v163, %v169
  %v180 = vpack.c.bf16 %v172, %v171
  %v181 = vpack.c.bf16 %v174, %v173
  %v182 = vpack.c.bf16 %v176, %v175
  %v183 = vpack.c.bf16 %v178, %v177
  %v184 = vpack.c.bf16 %v179, %v179
  %v185 = vld [vmem:[%s3] sm:$0xff]
  %v186 = vld [vmem:[%s3 + $0x8] sm:$0xff]
  %v187 = vld [vmem:[%s3 + $0x10] sm:$0xff]
  %v188 = vld [vmem:[%s3 + $0x18] sm:$0xff]
  %v189 = vld [vmem:[%s3 + $0x20] sm:$0xff]
  %v190 = vld [vmem:[%s3 + $0x28] sm:$0xff]
  %v191 = vld [vmem:[%s3 + $0x30] sm:$0xff]
  %v192 = vld [vmem:[%s3 + $0x38] sm:$0xff]
  %v193 = vld [vmem:[%s3 + $0x40] sm:$0xff]
  %v194 = vld [vmem:[%s3 + $0x48] sm:$0xff]
  %v195 = vld [vmem:[%s3 + $0x50] sm:$0xff]
  %v196 = vld [vmem:[%s3 + $0x58] sm:$0xff]
  %v197 = vld [vmem:[%s3 + $0x60] sm:$0xff]
  %v198 = vld [vmem:[%s3 + $0x68] sm:$0xff]
  %v199 = vld [vmem:[%s3 + $0x70] sm:$0xff]
  %v200 = vld [vmem:[%s3 + $0x78] sm:$0xff]
  %v201 = vld [vmem:[%s3 + $0x80] sm:$0xff]
  %v202 = vld [vmem:[%s3 + $0x88] sm:$0xff]
  %v203 = vld [vmem:[%s3 + $0x90] sm:$0xff]
  %v204 = vld [vmem:[%s3 + $0x98] sm:$0xff]
  %v205 = vld [vmem:[%s3 + $0xa0] sm:$0xff]
  %v206 = vld [vmem:[%s3 + $0xa8] sm:$0xff]
  %v207 = vld [vmem:[%s3 + $0xb0] sm:$0xff]
  %v208 = vld [vmem:[%s3 + $0xb8] sm:$0xff]
  %v209 = vld [vmem:[%s3 + $0xc0] sm:$0xff]
  %v210 = vld [vmem:[%s3 + $0xc8] sm:$0xff]
  %v211 = vld [vmem:[%s3 + $0xd0] sm:$0xff]
  %v212 = vld [vmem:[%s3 + $0xd8] sm:$0xff]
  %v213 = vld [vmem:[%s3 + $0xe0] sm:$0xff]
  %v214 = vld [vmem:[%s3 + $0xe8] sm:$0xff]
  %v215 = vld [vmem:[%s3 + $0xf0] sm:$0xff]
  %v216 = vld [vmem:[%s3 + $0xf8] sm:$0xff]
  %v217 = vld [vmem:[%s4] sm:$0xf]
  %v219 = vlaneseq
  %v220 = vshrl.u32 %v219, 7
  %v221 = vsub.s32 0, %v220
  %v222 = vrot.slane %v217, %v221
  %v223 = vlaneseq
  %v224 = vshrl.u32 %v223, 7
  %v225 = vsub.s32 1, %v224
  %v226 = vrot.slane %v217, %v225
  %v227 = vlaneseq
  %v228 = vshrl.u32 %v227, 7
  %v229 = vsub.s32 2, %v228
  %v230 = vrot.slane %v217, %v229
  %v231 = vlaneseq
  %v232 = vshrl.u32 %v231, 7
  %v233 = vsub.s32 3, %v232
  %v234 = vrot.slane %v217, %v233
  %v271 = vunpack.c.l.b16 %v185
  %v272 = vunpack.c.h.b16 %v185
  %v273 = vunpack.c.l.b16 %v186
  %v274 = vunpack.c.h.b16 %v186
  %v275 = vunpack.c.l.b16 %v187
  %v276 = vunpack.c.h.b16 %v187
  %v277 = vunpack.c.l.b16 %v188
  %v278 = vunpack.c.h.b16 %v188
  %v279 = vunpack.c.l.b16 %v189
  %v280 = vunpack.c.h.b16 %v189
  %v281 = vunpack.c.l.b16 %v190
  %v282 = vunpack.c.h.b16 %v190
  %v283 = vunpack.c.l.b16 %v191
  %v284 = vunpack.c.h.b16 %v191
  %v285 = vunpack.c.l.b16 %v192
  %v286 = vunpack.c.h.b16 %v192
  %v287 = vunpack.c.l.b16 %v193
  %v288 = vunpack.c.h.b16 %v193
  %v289 = vunpack.c.l.b16 %v194
  %v290 = vunpack.c.h.b16 %v194
  %v291 = vunpack.c.l.b16 %v195
  %v292 = vunpack.c.h.b16 %v195
  %v293 = vunpack.c.l.b16 %v196
  %v294 = vunpack.c.h.b16 %v196
  %v295 = vunpack.c.l.b16 %v197
  %v296 = vunpack.c.h.b16 %v197
  %v297 = vunpack.c.l.b16 %v198
  %v298 = vunpack.c.h.b16 %v198
  %v299 = vunpack.c.l.b16 %v199
  %v300 = vunpack.c.h.b16 %v199
  %v301 = vunpack.c.l.b16 %v200
  %v302 = vunpack.c.h.b16 %v200
  %v303 = vunpack.c.l.b16 %v201
  %v304 = vunpack.c.h.b16 %v201
  %v305 = vunpack.c.l.b16 %v202
  %v306 = vunpack.c.h.b16 %v202
  %v307 = vunpack.c.l.b16 %v203
  %v308 = vunpack.c.h.b16 %v203
  %v309 = vunpack.c.l.b16 %v204
  %v310 = vunpack.c.h.b16 %v204
  %v311 = vunpack.c.l.b16 %v205
  %v312 = vunpack.c.h.b16 %v205
  %v313 = vunpack.c.l.b16 %v206
  %v314 = vunpack.c.h.b16 %v206
  %v315 = vunpack.c.l.b16 %v207
  %v316 = vunpack.c.h.b16 %v207
  %v317 = vunpack.c.l.b16 %v208
  %v318 = vunpack.c.h.b16 %v208
  %v319 = vunpack.c.l.b16 %v209
  %v320 = vunpack.c.h.b16 %v209
  %v321 = vunpack.c.l.b16 %v210
  %v322 = vunpack.c.h.b16 %v210
  %v323 = vunpack.c.l.b16 %v211
  %v324 = vunpack.c.h.b16 %v211
  %v325 = vunpack.c.l.b16 %v212
  %v326 = vunpack.c.h.b16 %v212
  %v327 = vunpack.c.l.b16 %v213
  %v328 = vunpack.c.h.b16 %v213
  %v329 = vunpack.c.l.b16 %v214
  %v330 = vunpack.c.h.b16 %v214
  %v331 = vunpack.c.l.b16 %v215
  %v332 = vunpack.c.h.b16 %v215
  %v333 = vunpack.c.l.b16 %v216
  %v334 = vunpack.c.h.b16 %v216
  %v335 = vpack.c.b16 %v275, %v271
  %v336 = vpack.c.b16 %v276, %v272
  %v337 = vpack.c.b16 %v277, %v273
  %v338 = vpack.c.b16 %v278, %v274
  %v339 = vpack.c.b16 %v283, %v279
  %v340 = vpack.c.b16 %v284, %v280
  %v341 = vpack.c.b16 %v285, %v281
  %v342 = vpack.c.b16 %v286, %v282
  %v343 = vpack.c.b16 %v291, %v287
  %v344 = vpack.c.b16 %v292, %v288
  %v345 = vpack.c.b16 %v293, %v289
  %v346 = vpack.c.b16 %v294, %v290
  %v347 = vpack.c.b16 %v299, %v295
  %v348 = vpack.c.b16 %v300, %v296
  %v349 = vpack.c.b16 %v301, %v297
  %v350 = vpack.c.b16 %v302, %v298
  %v351 = vpack.c.b16 %v307, %v303
  %v352 = vpack.c.b16 %v308, %v304
  %v353 = vpack.c.b16 %v309, %v305
  %v354 = vpack.c.b16 %v310, %v306
  %v355 = vpack.c.b16 %v315, %v311
  %v356 = vpack.c.b16 %v316, %v312
  %v357 = vpack.c.b16 %v317, %v313
  %v358 = vpack.c.b16 %v318, %v314
  %v359 = vpack.c.b16 %v323, %v319
  %v360 = vpack.c.b16 %v324, %v320
  %v361 = vpack.c.b16 %v325, %v321
  %v362 = vpack.c.b16 %v326, %v322
  %v363 = vpack.c.b16 %v331, %v327
  %v364 = vpack.c.b16 %v332, %v328
  %v365 = vpack.c.b16 %v333, %v329
  %v366 = vpack.c.b16 %v334, %v330
  %399 = vmatprep.subr.bf16.mxu0 %v336
  %400 = vmatpush1.bf16.msra.mxu0 %v335
  %401 = vmatprep.subr.bf16.mxu0 %v340
  %402 = vmatpush1.bf16.msra.mxu0 %v339
  %403 = vmatprep.subr.bf16.mxu0 %v344
  %404 = vmatpush1.bf16.msra.mxu0 %v343
  %405 = vmatprep.subr.bf16.mxu0 %v348
  %406 = vmatpush1.bf16.msra.mxu0 %v347
  %407 = vmatprep.subr.bf16.mxu0 %v352
  %408 = vmatpush1.bf16.msra.mxu0 %v351
  %409 = vmatprep.subr.bf16.mxu0 %v356
  %410 = vmatpush1.bf16.msra.mxu0 %v355
  %411 = vmatprep.subr.bf16.mxu0 %v360
  %412 = vmatpush1.bf16.msra.mxu0 %v359
  %413 = vmatprep.subr.bf16.mxu0 %v364
  %414 = vmatpush1.bf16.msra.mxu0 %v363
  %415 = vmatprep.subr.bf16.mxu0 0
  %416 = vmatpush1.bf16.msra.mxu0 0
  %417 = vmatprep.subr.bf16.mxu0 0
  %418 = vmatpush1.bf16.msra.mxu0 0
  %419 = vmatprep.subr.bf16.mxu0 0
  %420 = vmatpush1.bf16.msra.mxu0 0
  %421 = vmatprep.subr.bf16.mxu0 0
  %422 = vmatpush1.bf16.msra.mxu0 0
  %423 = vmatprep.subr.bf16.mxu0 0
  %424 = vmatpush1.bf16.msra.mxu0 0
  %425 = vmatprep.subr.bf16.mxu0 0
  %426 = vmatpush1.bf16.msra.mxu0 0
  %427 = vmatprep.subr.bf16.mxu0 0
  %428 = vmatpush1.bf16.msra.mxu0 0
  %429 = vmatprep.subr.bf16.mxu0 0
  %430 = vmatpush1.bf16.msra.mxu0 0
  %431 = vmatprep.mubr.bf16.mxu0 0
  %432 = vmatmul.mubr.bf16.gmra.mrb[0].mxu0 %v180
  %v433 = vpop.f32.mrb[0].mxu0
  %v434 = vadd.f32 %v222, %v433
  %v435 = vpop.f32.mrb[0].mxu0
  %v436 = vadd.f32 %v226, %v435
  %v437 = vpop.f32.mrb[0].mxu0
  %v438 = vadd.f32 %v222, %v437
  %v439 = vpop.f32.mrb[0].mxu0
  %v440 = vadd.f32 %v226, %v439
  %441 = vmatprep.mubr.bf16.mxu0 0
  %442 = vmatmul.mubr.bf16.gmra.mrb[0].mxu0 %v181
  %v443 = vpop.f32.mrb[0].mxu0
  %v444 = vadd.f32 %v222, %v443
  %v445 = vpop.f32.mrb[0].mxu0
  %v446 = vadd.f32 %v226, %v445
  %v447 = vpop.f32.mrb[0].mxu0
  %v448 = vadd.f32 %v222, %v447
  %v449 = vpop.f32.mrb[0].mxu0
  %v450 = vadd.f32 %v226, %v449
  %451 = vmatprep.mubr.bf16.mxu0 0
  %452 = vmatmul.mubr.bf16.gmra.mrb[0].mxu0 %v182
  %v453 = vpop.f32.mrb[0].mxu0
  %v454 = vadd.f32 %v222, %v453
  %v455 = vpop.f32.mrb[0].mxu0
  %v456 = vadd.f32 %v226, %v455
  %v457 = vpop.f32.mrb[0].mxu0
  %v458 = vadd.f32 %v222, %v457
  %v459 = vpop.f32.mrb[0].mxu0
  %v460 = vadd.f32 %v226, %v459
  %461 = vmatprep.mubr.bf16.mxu0 0
  %462 = vmatmul.mubr.bf16.gmra.mrb[0].mxu0 %v183
  %v463 = vpop.f32.mrb[0].mxu0
  %v464 = vadd.f32 %v222, %v463
  %v465 = vpop.f32.mrb[0].mxu0
  %v466 = vadd.f32 %v226, %v465
  %v467 = vpop.f32.mrb[0].mxu0
  %v468 = vadd.f32 %v222, %v467
  %v469 = vpop.f32.mrb[0].mxu0
  %v470 = vadd.f32 %v226, %v469
  %471 = vmatprep.mubr.bf16.mxu0 0
  %472 = vmatmul.mubr.bf16.gmra.mrb[0].mxu0 %v184
  %v473 = vpop.f32.mrb[0].mxu0
  %v474 = vadd.f32 %v222, %v473
  %v475 = vpop.f32.mrb[0].mxu0
  %v476 = vadd.f32 %v226, %v475
  %v477 = vpop.f32.mrb[0].mxu0
  %v478 = vpop.f32.mrb[0].mxu0
  %479 = vdwg.mxu0
  %480 = vmatprep.subr.bf16.mxu0 %v338
  %481 = vmatpush1.bf16.msra.mxu0 %v337
  %482 = vmatprep.subr.bf16.mxu0 %v342
  %483 = vmatpush1.bf16.msra.mxu0 %v341
  %484 = vmatprep.subr.bf16.mxu0 %v346
  %485 = vmatpush1.bf16.msra.mxu0 %v345
  %486 = vmatprep.subr.bf16.mxu0 %v350
  %487 = vmatpush1.bf16.msra.mxu0 %v349
  %488 = vmatprep.subr.bf16.mxu0 %v354
  %489 = vmatpush1.bf16.msra.mxu0 %v353
  %490 = vmatprep.subr.bf16.mxu0 %v358
  %491 = vmatpush1.bf16.msra.mxu0 %v357
  %492 = vmatprep.subr.bf16.mxu0 %v362
  %493 = vmatpush1.bf16.msra.mxu0 %v361
  %494 = vmatprep.subr.bf16.mxu0 %v366
  %495 = vmatpush1.bf16.msra.mxu0 %v365
  %496 = vmatprep.subr.bf16.mxu0 0
  %497 = vmatpush1.bf16.msra.mxu0 0
  %498 = vmatprep.subr.bf16.mxu0 0
  %499 = vmatpush1.bf16.msra.mxu0 0
  %500 = vmatprep.subr.bf16.mxu0 0
  %501 = vmatpush1.bf16.msra.mxu0 0
  %502 = vmatprep.subr.bf16.mxu0 0
  %503 = vmatpush1.bf16.msra.mxu0 0
  %504 = vmatprep.subr.bf16.mxu0 0
  %505 = vmatpush1.bf16.msra.mxu0 0
  %506 = vmatprep.subr.bf16.mxu0 0
  %507 = vmatpush1.bf16.msra.mxu0 0
  %508 = vmatprep.subr.bf16.mxu0 0
  %509 = vmatpush1.bf16.msra.mxu0 0
  %510 = vmatprep.subr.bf16.mxu0 0
  %511 = vmatpush1.bf16.msra.mxu0 0
  %512 = vmatprep.mubr.bf16.mxu0 0
  %513 = vmatmul.mubr.bf16.gmra.mrb[0].mxu0 %v180
  %v514 = vpop.f32.mrb[0].mxu0
  %v515 = vadd.f32 %v230, %v514
  %v516 = vpop.f32.mrb[0].mxu0
  %v517 = vadd.f32 %v234, %v516
  %v518 = vpop.f32.mrb[0].mxu0
  %v519 = vadd.f32 %v230, %v518
  %v520 = vpop.f32.mrb[0].mxu0
  %v521 = vadd.f32 %v234, %v520
  %522 = vmatprep.mubr.bf16.mxu0 0
  %523 = vmatmul.mubr.bf16.gmra.mrb[0].mxu0 %v181
  %v524 = vpop.f32.mrb[0].mxu0
  %v525 = vadd.f32 %v230, %v524
  %v526 = vpop.f32.mrb[0].mxu0
  %v527 = vadd.f32 %v234, %v526
  %v528 = vpop.f32.mrb[0].mxu0
  %v529 = vadd.f32 %v230, %v528
  %v530 = vpop.f32.mrb[0].mxu0
  %v531 = vadd.f32 %v234, %v530
  %532 = vmatprep.mubr.bf16.mxu0 0
  %533 = vmatmul.mubr.bf16.gmra.mrb[0].mxu0 %v182
  %v534 = vpop.f32.mrb[0].mxu0
  %v535 = vadd.f32 %v230, %v534
  %v536 = vpop.f32.mrb[0].mxu0
  %v537 = vadd.f32 %v234, %v536
  %v538 = vpop.f32.mrb[0].mxu0
  %v539 = vadd.f32 %v230, %v538
  %v540 = vpop.f32.mrb[0].mxu0
  %v541 = vadd.f32 %v234, %v540
  %542 = vmatprep.mubr.bf16.mxu0 0
  %543 = vmatmul.mubr.bf16.gmra.mrb[0].mxu0 %v183
  %v544 = vpop.f32.mrb[0].mxu0
  %v545 = vadd.f32 %v230, %v544
  %v546 = vpop.f32.mrb[0].mxu0
  %v547 = vadd.f32 %v234, %v546
  %v548 = vpop.f32.mrb[0].mxu0
  %v549 = vadd.f32 %v230, %v548
  %v550 = vpop.f32.mrb[0].mxu0
  %v551 = vadd.f32 %v234, %v550
  %552 = vmatprep.mubr.bf16.mxu0 0
  %553 = vmatmul.mubr.bf16.gmra.mrb[0].mxu0 %v184
  %v554 = vpop.f32.mrb[0].mxu0
  %v555 = vadd.f32 %v230, %v554
  %v556 = vpop.f32.mrb[0].mxu0
  %v557 = vadd.f32 %v234, %v556
  %v558 = vpop.f32.mrb[0].mxu0
  %v559 = vpop.f32.mrb[0].mxu0
  %560 = vdwg.mxu0
  %v561 = vmul.f32 %v434, 0.5
  %v562 = vmul.f32 %v436, 0.5
  %v563 = vmul.f32 %v515, 0.5
  %v564 = vmul.f32 %v517, 0.5
  %v565 = vmul.f32 %v438, 0.5
  %v566 = vmul.f32 %v440, 0.5
  %v567 = vmul.f32 %v519, 0.5
  %v568 = vmul.f32 %v521, 0.5
  %v569 = vmul.f32 %v444, 0.5
  %v570 = vmul.f32 %v446, 0.5
  %v571 = vmul.f32 %v525, 0.5
  %v572 = vmul.f32 %v527, 0.5
  %v573 = vmul.f32 %v448, 0.5
  %v574 = vmul.f32 %v450, 0.5
  %v575 = vmul.f32 %v529, 0.5
  %v576 = vmul.f32 %v531, 0.5
  %v577 = vmul.f32 %v454, 0.5
  %v578 = vmul.f32 %v456, 0.5
  %v579 = vmul.f32 %v535, 0.5
  %v580 = vmul.f32 %v537, 0.5
  %v581 = vmul.f32 %v458, 0.5
  %v582 = vmul.f32 %v460, 0.5
  %v583 = vmul.f32 %v539, 0.5
  %v584 = vmul.f32 %v541, 0.5
  %v585 = vmul.f32 %v464, 0.5
  %v586 = vmul.f32 %v466, 0.5
  %v587 = vmul.f32 %v545, 0.5
  %v588 = vmul.f32 %v547, 0.5
  %v589 = vmul.f32 %v468, 0.5
  %v590 = vmul.f32 %v470, 0.5
  %v591 = vmul.f32 %v549, 0.5
  %v592 = vmul.f32 %v551, 0.5
  %v593 = vmul.f32 %v474, 0.5
  %v594 = vmul.f32 %v476, 0.5
  %v595 = vmul.f32 %v555, 0.5
  %v596 = vmul.f32 %v557, 0.5
  %v597 = vmul.f32 %v434, 0.044715
  %v598 = vmul.f32 %v436, 0.044715
  %v599 = vmul.f32 %v515, 0.044715
  %v600 = vmul.f32 %v517, 0.044715
  %v601 = vmul.f32 %v438, 0.044715
  %v602 = vmul.f32 %v440, 0.044715
  %v603 = vmul.f32 %v519, 0.044715
  %v604 = vmul.f32 %v521, 0.044715
  %v605 = vmul.f32 %v444, 0.044715
  %v606 = vmul.f32 %v446, 0.044715
  %v607 = vmul.f32 %v525, 0.044715
  %v608 = vmul.f32 %v527, 0.044715
  %v609 = vmul.f32 %v448, 0.044715
  %v610 = vmul.f32 %v450, 0.044715
  %v611 = vmul.f32 %v529, 0.044715
  %v612 = vmul.f32 %v531, 0.044715
  %v613 = vmul.f32 %v454, 0.044715
  %v614 = vmul.f32 %v456, 0.044715
  %v615 = vmul.f32 %v535, 0.044715
  %v616 = vmul.f32 %v537, 0.044715
  %v617 = vmul.f32 %v458, 0.044715
  %v618 = vmul.f32 %v460, 0.044715
  %v619 = vmul.f32 %v539, 0.044715
  %v620 = vmul.f32 %v541, 0.044715
  %v621 = vmul.f32 %v464, 0.044715
  %v622 = vmul.f32 %v466, 0.044715
  %v623 = vmul.f32 %v545, 0.044715
  %v624 = vmul.f32 %v547, 0.044715
  %v625 = vmul.f32 %v468, 0.044715
  %v626 = vmul.f32 %v470, 0.044715
  %v627 = vmul.f32 %v549, 0.044715
  %v628 = vmul.f32 %v551, 0.044715
  %v629 = vmul.f32 %v474, 0.044715
  %v630 = vmul.f32 %v476, 0.044715
  %v631 = vmul.f32 %v555, 0.044715
  %v632 = vmul.f32 %v557, 0.044715
  %v633 = vmul.f32 %v597, %v434
  %v634 = vmul.f32 %v598, %v436
  %v635 = vmul.f32 %v599, %v515
  %v636 = vmul.f32 %v600, %v517
  %v637 = vmul.f32 %v601, %v438
  %v638 = vmul.f32 %v602, %v440
  %v639 = vmul.f32 %v603, %v519
  %v640 = vmul.f32 %v604, %v521
  %v641 = vmul.f32 %v605, %v444
  %v642 = vmul.f32 %v606, %v446
  %v643 = vmul.f32 %v607, %v525
  %v644 = vmul.f32 %v608, %v527
  %v645 = vmul.f32 %v609, %v448
  %v646 = vmul.f32 %v610, %v450
  %v647 = vmul.f32 %v611, %v529
  %v648 = vmul.f32 %v612, %v531
  %v649 = vmul.f32 %v613, %v454
  %v650 = vmul.f32 %v614, %v456
  %v651 = vmul.f32 %v615, %v535
  %v652 = vmul.f32 %v616, %v537
  %v653 = vmul.f32 %v617, %v458
  %v654 = vmul.f32 %v618, %v460
  %v655 = vmul.f32 %v619, %v539
  %v656 = vmul.f32 %v620, %v541
  %v657 = vmul.f32 %v621, %v464
  %v658 = vmul.f32 %v622, %v466
  %v659 = vmul.f32 %v623, %v545
  %v660 = vmul.f32 %v624, %v547
  %v661 = vmul.f32 %v625, %v468
  %v662 = vmul.f32 %v626, %v470
  %v663 = vmul.f32 %v627, %v549
  %v664 = vmul.f32 %v628, %v551
  %v665 = vmul.f32 %v629, %v474
  %v666 = vmul.f32 %v630, %v476
  %v667 = vmul.f32 %v631, %v555
  %v668 = vmul.f32 %v632, %v557
  %v669 = vmul.f32 %v633, %v434
  %v670 = vmul.f32 %v634, %v436
  %v671 = vmul.f32 %v635, %v515
  %v672 = vmul.f32 %v636, %v517
  %v673 = vmul.f32 %v637, %v438
  %v674 = vmul.f32 %v638, %v440
  %v675 = vmul.f32 %v639, %v519
  %v676 = vmul.f32 %v640, %v521
  %v677 = vmul.f32 %v641, %v444
  %v678 = vmul.f32 %v642, %v446
  %v679 = vmul.f32 %v643, %v525
  %v680 = vmul.f32 %v644, %v527
  %v681 = vmul.f32 %v645, %v448
  %v682 = vmul.f32 %v646, %v450
  %v683 = vmul.f32 %v647, %v529
  %v684 = vmul.f32 %v648, %v531
  %v685 = vmul.f32 %v649, %v454
  %v686 = vmul.f32 %v650, %v456
  %v687 = vmul.f32 %v651, %v535
  %v688 = vmul.f32 %v652, %v537
  %v689 = vmul.f32 %v653, %v458
  %v690 = vmul.f32 %v654, %v460
  %v691 = vmul.f32 %v655, %v539
  %v692 = vmul.f32 %v656, %v541
  %v693 = vmul.f32 %v657, %v464
  %v694 = vmul.f32 %v658, %v466
  %v695 = vmul.f32 %v659, %v545
  %v696 = vmul.f32 %v660, %v547
  %v697 = vmul.f32 %v661, %v468
  %v698 = vmul.f32 %v662, %v470
  %v699 = vmul.f32 %v663, %v549
  %v700 = vmul.f32 %v664, %v551
  %v701 = vmul.f32 %v665, %v474
  %v702 = vmul.f32 %v666, %v476
  %v703 = vmul.f32 %v667, %v555
  %v704 = vmul.f32 %v668, %v557
  %v705 = vadd.f32 %v434, %v669
  %v706 = vadd.f32 %v436, %v670
  %v707 = vadd.f32 %v515, %v671
  %v708 = vadd.f32 %v517, %v672
  %v709 = vadd.f32 %v438, %v673
  %v710 = vadd.f32 %v440, %v674
  %v711 = vadd.f32 %v519, %v675
  %v712 = vadd.f32 %v521, %v676
  %v713 = vadd.f32 %v444, %v677
  %v714 = vadd.f32 %v446, %v678
  %v715 = vadd.f32 %v525, %v679
  %v716 = vadd.f32 %v527, %v680
  %v717 = vadd.f32 %v448, %v681
  %v718 = vadd.f32 %v450, %v682
  %v719 = vadd.f32 %v529, %v683
  %v720 = vadd.f32 %v531, %v684
  %v721 = vadd.f32 %v454, %v685
  %v722 = vadd.f32 %v456, %v686
  %v723 = vadd.f32 %v535, %v687
  %v724 = vadd.f32 %v537, %v688
  %v725 = vadd.f32 %v458, %v689
  %v726 = vadd.f32 %v460, %v690
  %v727 = vadd.f32 %v539, %v691
  %v728 = vadd.f32 %v541, %v692
  %v729 = vadd.f32 %v464, %v693
  %v730 = vadd.f32 %v466, %v694
  %v731 = vadd.f32 %v545, %v695
  %v732 = vadd.f32 %v547, %v696
  %v733 = vadd.f32 %v468, %v697
  %v734 = vadd.f32 %v470, %v698
  %v735 = vadd.f32 %v549, %v699
  %v736 = vadd.f32 %v551, %v700
  %v737 = vadd.f32 %v474, %v701
  %v738 = vadd.f32 %v476, %v702
  %v739 = vadd.f32 %v555, %v703
  %v740 = vadd.f32 %v557, %v704
  %v741 = vmul.f32 %v705, 0.7978846
  %v742 = vmul.f32 %v706, 0.7978846
  %v743 = vmul.f32 %v707, 0.7978846
  %v744 = vmul.f32 %v708, 0.7978846
  %v745 = vmul.f32 %v709, 0.7978846
  %v746 = vmul.f32 %v710, 0.7978846
  %v747 = vmul.f32 %v711, 0.7978846
  %v748 = vmul.f32 %v712, 0.7978846
  %v749 = vmul.f32 %v713, 0.7978846
  %v750 = vmul.f32 %v714, 0.7978846
  %v751 = vmul.f32 %v715, 0.7978846
  %v752 = vmul.f32 %v716, 0.7978846
  %v753 = vmul.f32 %v717, 0.7978846
  %v754 = vmul.f32 %v718, 0.7978846
  %v755 = vmul.f32 %v719, 0.7978846
  %v756 = vmul.f32 %v720, 0.7978846
  %v757 = vmul.f32 %v721, 0.7978846
  %v758 = vmul.f32 %v722, 0.7978846
  %v759 = vmul.f32 %v723, 0.7978846
  %v760 = vmul.f32 %v724, 0.7978846
  %v761 = vmul.f32 %v725, 0.7978846
  %v762 = vmul.f32 %v726, 0.7978846
  %v763 = vmul.f32 %v727, 0.7978846
  %v764 = vmul.f32 %v728, 0.7978846
  %v765 = vmul.f32 %v729, 0.7978846
  %v766 = vmul.f32 %v730, 0.7978846
  %v767 = vmul.f32 %v731, 0.7978846
  %v768 = vmul.f32 %v732, 0.7978846
  %v769 = vmul.f32 %v733, 0.7978846
  %v770 = vmul.f32 %v734, 0.7978846
  %v771 = vmul.f32 %v735, 0.7978846
  %v772 = vmul.f32 %v736, 0.7978846
  %v773 = vmul.f32 %v737, 0.7978846
  %v774 = vmul.f32 %v738, 0.7978846
  %v775 = vmul.f32 %v739, 0.7978846
  %v776 = vmul.f32 %v740, 0.7978846
  %v777 = vtanh.pop %v741
  %v778 = vtanh.pop %v742
  %v779 = vtanh.pop %v743
  %v780 = vtanh.pop %v744
  %v781 = vtanh.pop %v745
  %v782 = vtanh.pop %v746
  %v783 = vtanh.pop %v747
  %v784 = vtanh.pop %v748
  %v785 = vtanh.pop %v749
  %v786 = vtanh.pop %v750
  %v787 = vtanh.pop %v751
  %v788 = vtanh.pop %v752
  %v789 = vtanh.pop %v753
  %v790 = vtanh.pop %v754
  %v791 = vtanh.pop %v755
  %v792 = vtanh.pop %v756
  %v793 = vtanh.pop %v757
  %v794 = vtanh.pop %v758
  %v795 = vtanh.pop %v759
  %v796 = vtanh.pop %v760
  %v797 = vtanh.pop %v761
  %v798 = vtanh.pop %v762
  %v799 = vtanh.pop %v763
  %v800 = vtanh.pop %v764
  %v801 = vtanh.pop %v765
  %v802 = vtanh.pop %v766
  %v803 = vtanh.pop %v767
  %v804 = vtanh.pop %v768
  %v805 = vtanh.pop %v769
  %v806 = vtanh.pop %v770
  %v807 = vtanh.pop %v771
  %v808 = vtanh.pop %v772
  %v809 = vtanh.pop %v773
  %v810 = vtanh.pop %v774
  %v811 = vtanh.pop %v775
  %v812 = vtanh.pop %v776
  %v813 = vadd.f32 %v777, 1.0
  %v814 = vadd.f32 %v778, 1.0
  %v815 = vadd.f32 %v779, 1.0
  %v816 = vadd.f32 %v780, 1.0
  %v817 = vadd.f32 %v781, 1.0
  %v818 = vadd.f32 %v782, 1.0
  %v819 = vadd.f32 %v783, 1.0
  %v820 = vadd.f32 %v784, 1.0
  %v821 = vadd.f32 %v785, 1.0
  %v822 = vadd.f32 %v786, 1.0
  %v823 = vadd.f32 %v787, 1.0
  %v824 = vadd.f32 %v788, 1.0
  %v825 = vadd.f32 %v789, 1.0
  %v826 = vadd.f32 %v790, 1.0
  %v827 = vadd.f32 %v791, 1.0
  %v828 = vadd.f32 %v792, 1.0
  %v829 = vadd.f32 %v793, 1.0
  %v830 = vadd.f32 %v794, 1.0
  %v831 = vadd.f32 %v795, 1.0
  %v832 = vadd.f32 %v796, 1.0
  %v833 = vadd.f32 %v797, 1.0
  %v834 = vadd.f32 %v798, 1.0
  %v835 = vadd.f32 %v799, 1.0
  %v836 = vadd.f32 %v800, 1.0
  %v837 = vadd.f32 %v801, 1.0
  %v838 = vadd.f32 %v802, 1.0
  %v839 = vadd.f32 %v803, 1.0
  %v840 = vadd.f32 %v804, 1.0
  %v841 = vadd.f32 %v805, 1.0
  %v842 = vadd.f32 %v806, 1.0
  %v843 = vadd.f32 %v807, 1.0
  %v844 = vadd.f32 %v808, 1.0
  %v845 = vadd.f32 %v809, 1.0
  %v846 = vadd.f32 %v810, 1.0
  %v847 = vadd.f32 %v811, 1.0
  %v848 = vadd.f32 %v812, 1.0
  %v849 = vmul.f32 %v561, %v813
  %v850 = vmul.f32 %v562, %v814
  %v851 = vmul.f32 %v563, %v815
  %v852 = vmul.f32 %v564, %v816
  %v853 = vmul.f32 %v565, %v817
  %v854 = vmul.f32 %v566, %v818
  %v855 = vmul.f32 %v567, %v819
  %v856 = vmul.f32 %v568, %v820
  %v857 = vmul.f32 %v569, %v821
  %v858 = vmul.f32 %v570, %v822
  %v859 = vmul.f32 %v571, %v823
  %v860 = vmul.f32 %v572, %v824
  %v861 = vmul.f32 %v573, %v825
  %v862 = vmul.f32 %v574, %v826
  %v863 = vmul.f32 %v575, %v827
  %v864 = vmul.f32 %v576, %v828
  %v865 = vmul.f32 %v577, %v829
  %v866 = vmul.f32 %v578, %v830
  %v867 = vmul.f32 %v579, %v831
  %v868 = vmul.f32 %v580, %v832
  %v869 = vmul.f32 %v581, %v833
  %v870 = vmul.f32 %v582, %v834
  %v871 = vmul.f32 %v583, %v835
  %v872 = vmul.f32 %v584, %v836
  %v873 = vmul.f32 %v585, %v837
  %v874 = vmul.f32 %v586, %v838
  %v875 = vmul.f32 %v587, %v839
  %v876 = vmul.f32 %v588, %v840
  %v877 = vmul.f32 %v589, %v841
  %v878 = vmul.f32 %v590, %v842
  %v879 = vmul.f32 %v591, %v843
  %v880 = vmul.f32 %v592, %v844
  %v881 = vmul.f32 %v593, %v845
  %v882 = vmul.f32 %v594, %v846
  %v883 = vmul.f32 %v595, %v847
  %v884 = vmul.f32 %v596, %v848
  %v885 = vpack.c.bf16 %v853, %v849
  %v886 = vpack.c.bf16 %v854, %v850
  %v887 = vpack.c.bf16 %v855, %v851
  %v888 = vpack.c.bf16 %v856, %v852
  %v889 = vpack.c.bf16 %v861, %v857
  %v890 = vpack.c.bf16 %v862, %v858
  %v891 = vpack.c.bf16 %v863, %v859
  %v892 = vpack.c.bf16 %v864, %v860
  %v893 = vpack.c.bf16 %v869, %v865
  %v894 = vpack.c.bf16 %v870, %v866
  %v895 = vpack.c.bf16 %v871, %v867
  %v896 = vpack.c.bf16 %v872, %v868
  %v897 = vpack.c.bf16 %v877, %v873
  %v898 = vpack.c.bf16 %v878, %v874
  %v899 = vpack.c.bf16 %v879, %v875
  %v900 = vpack.c.bf16 %v880, %v876
  %v901 = vpack.c.bf16 %v881, %v881
  %v902 = vpack.c.bf16 %v882, %v882
  %v903 = vpack.c.bf16 %v883, %v883
  %v904 = vpack.c.bf16 %v884, %v884
  %v905 = vld [vmem:[%s5] sm:$0xf]
  %v906 = vld [vmem:[%s5 + $0x4] sm:$0xf]
  %v907 = vld [vmem:[%s5 + $0x8] sm:$0xf]
  %v908 = vld [vmem:[%s5 + $0xc] sm:$0xf]
  %v909 = vld [vmem:[%s5 + $0x10] sm:$0xf]
  %v910 = vld [vmem:[%s5 + $0x14] sm:$0xf]
  %v911 = vld [vmem:[%s5 + $0x18] sm:$0xf]
  %v912 = vld [vmem:[%s5 + $0x1c] sm:$0xf]
  %v913 = vld [vmem:[%s5 + $0x20] sm:$0xf]
  %v914 = vld [vmem:[%s5 + $0x24] sm:$0xf]
  %v915 = vld [vmem:[%s5 + $0x28] sm:$0xf]
  %v916 = vld [vmem:[%s5 + $0x2c] sm:$0xf]
  %v917 = vld [vmem:[%s5 + $0x30] sm:$0xf]
  %v918 = vld [vmem:[%s5 + $0x34] sm:$0xf]
  %v919 = vld [vmem:[%s5 + $0x38] sm:$0xf]
  %v920 = vld [vmem:[%s5 + $0x3c] sm:$0xf]
  %v921 = vld [vmem:[%s5 + $0x40] sm:$0xf]
  %v922 = vld [vmem:[%s5 + $0x44] sm:$0xf]
  %v923 = vld [vmem:[%s5 + $0x48] sm:$0xf]
  %v924 = vld [vmem:[%s5 + $0x4c] sm:$0xf]
  %v925 = vld [vmem:[%s5 + $0x50] sm:$0xf]
  %v926 = vld [vmem:[%s5 + $0x54] sm:$0xf]
  %v927 = vld [vmem:[%s5 + $0x58] sm:$0xf]
  %v928 = vld [vmem:[%s5 + $0x5c] sm:$0xf]
  %v929 = vld [vmem:[%s5 + $0x60] sm:$0xf]
  %v930 = vld [vmem:[%s5 + $0x64] sm:$0xf]
  %v931 = vld [vmem:[%s5 + $0x68] sm:$0xf]
  %v932 = vld [vmem:[%s5 + $0x6c] sm:$0xf]
  %v933 = vld [vmem:[%s5 + $0x70] sm:$0xf]
  %v934 = vld [vmem:[%s5 + $0x74] sm:$0xf]
  %v935 = vld [vmem:[%s5 + $0x78] sm:$0xf]
  %v936 = vld [vmem:[%s5 + $0x7c] sm:$0xf]
  %v937 = vld [vmem:[%s5 + $0x80] sm:$0xf]
  %v938 = vld [vmem:[%s5 + $0x84] sm:$0xf]
  %v939 = vld [vmem:[%s5 + $0x88] sm:$0xf]
  %v940 = vld [vmem:[%s5 + $0x8c] sm:$0xf]
  %v941 = vld [vmem:[%s5 + $0x90] sm:$0xf]
  %v942 = vld [vmem:[%s5 + $0x94] sm:$0xf]
  %v943 = vld [vmem:[%s5 + $0x98] sm:$0xf]
  %v944 = vld [vmem:[%s5 + $0x9c] sm:$0xf]
  %v945 = vld [vmem:[%s5 + $0xa0] sm:$0xf]
  %v946 = vld [vmem:[%s5 + $0xa4] sm:$0xf]
  %v947 = vld [vmem:[%s5 + $0xa8] sm:$0xf]
  %v948 = vld [vmem:[%s5 + $0xac] sm:$0xf]
  %v949 = vld [vmem:[%s5 + $0xb0] sm:$0xf]
  %v950 = vld [vmem:[%s5 + $0xb4] sm:$0xf]
  %v951 = vld [vmem:[%s5 + $0xb8] sm:$0xf]
  %v952 = vld [vmem:[%s5 + $0xbc] sm:$0xf]
  %v953 = vld [vmem:[%s5 + $0xc0] sm:$0xf]
  %v954 = vld [vmem:[%s5 + $0xc4] sm:$0xf]
  %v955 = vld [vmem:[%s5 + $0xc8] sm:$0xf]
  %v956 = vld [vmem:[%s5 + $0xcc] sm:$0xf]
  %v957 = vld [vmem:[%s5 + $0xd0] sm:$0xf]
  %v958 = vld [vmem:[%s5 + $0xd4] sm:$0xf]
  %v959 = vld [vmem:[%s5 + $0xd8] sm:$0xf]
  %v960 = vld [vmem:[%s5 + $0xdc] sm:$0xf]
  %v961 = vld [vmem:[%s5 + $0xe0] sm:$0xf]
  %v962 = vld [vmem:[%s5 + $0xe4] sm:$0xf]
  %v963 = vld [vmem:[%s5 + $0xe8] sm:$0xf]
  %v964 = vld [vmem:[%s5 + $0xec] sm:$0xf]
  %v965 = vld [vmem:[%s5 + $0xf0] sm:$0xf]
  %v966 = vld [vmem:[%s5 + $0xf4] sm:$0xf]
  %v967 = vld [vmem:[%s5 + $0xf8] sm:$0xf]
  %v968 = vld [vmem:[%s5 + $0xfc] sm:$0xf]
  %v969 = vld [vmem:[%s6] sm:$0x1]
  %v971 = vlaneseq
  %v972 = vshrl.u32 %v971, 7
  %v973 = vsub.s32 0, %v972
  %v974 = vrot.slane %v969, %v973
  %v1040 = vunpack.c.l.b16 %v905
  %v1041 = vunpack.c.l.b16 %v906
  %v1042 = vunpack.c.l.b16 %v907
  %v1043 = vunpack.c.l.b16 %v908
  %v1044 = vunpack.c.l.b16 %v909
  %v1045 = vunpack.c.l.b16 %v910
  %v1046 = vunpack.c.l.b16 %v911
  %v1047 = vunpack.c.l.b16 %v912
  %v1048 = vunpack.c.l.b16 %v913
  %v1049 = vunpack.c.l.b16 %v914
  %v1050 = vunpack.c.l.b16 %v915
  %v1051 = vunpack.c.l.b16 %v916
  %v1052 = vunpack.c.l.b16 %v917
  %v1053 = vunpack.c.l.b16 %v918
  %v1054 = vunpack.c.l.b16 %v919
  %v1055 = vunpack.c.l.b16 %v920
  %v1056 = vunpack.c.l.b16 %v921
  %v1057 = vunpack.c.l.b16 %v922
  %v1058 = vunpack.c.l.b16 %v923
  %v1059 = vunpack.c.l.b16 %v924
  %v1060 = vunpack.c.l.b16 %v925
  %v1061 = vunpack.c.l.b16 %v926
  %v1062 = vunpack.c.l.b16 %v927
  %v1063 = vunpack.c.l.b16 %v928
  %v1064 = vunpack.c.l.b16 %v929
  %v1065 = vunpack.c.l.b16 %v930
  %v1066 = vunpack.c.l.b16 %v931
  %v1067 = vunpack.c.l.b16 %v932
  %v1068 = vunpack.c.l.b16 %v933
  %v1069 = vunpack.c.l.b16 %v934
  %v1070 = vunpack.c.l.b16 %v935
  %v1071 = vunpack.c.l.b16 %v936
  %v1072 = vunpack.c.l.b16 %v937
  %v1073 = vunpack.c.l.b16 %v938
  %v1074 = vunpack.c.l.b16 %v939
  %v1075 = vunpack.c.l.b16 %v940
  %v1076 = vunpack.c.l.b16 %v941
  %v1077 = vunpack.c.l.b16 %v942
  %v1078 = vunpack.c.l.b16 %v943
  %v1079 = vunpack.c.l.b16 %v944
  %v1080 = vunpack.c.l.b16 %v945
  %v1081 = vunpack.c.l.b16 %v946
  %v1082 = vunpack.c.l.b16 %v947
  %v1083 = vunpack.c.l.b16 %v948
  %v1084 = vunpack.c.l.b16 %v949
  %v1085 = vunpack.c.l.b16 %v950
  %v1086 = vunpack.c.l.b16 %v951
  %v1087 = vunpack.c.l.b16 %v952
  %v1088 = vunpack.c.l.b16 %v953
  %v1089 = vunpack.c.l.b16 %v954
  %v1090 = vunpack.c.l.b16 %v955
  %v1091 = vunpack.c.l.b16 %v956
  %v1092 = vunpack.c.l.b16 %v957
  %v1093 = vunpack.c.l.b16 %v958
  %v1094 = vunpack.c.l.b16 %v959
  %v1095 = vunpack.c.l.b16 %v960
  %v1096 = vunpack.c.l.b16 %v961
  %v1097 = vunpack.c.l.b16 %v962
  %v1098 = vunpack.c.l.b16 %v963
  %v1099 = vunpack.c.l.b16 %v964
  %v1100 = vunpack.c.l.b16 %v965
  %v1101 = vunpack.c.l.b16 %v966
  %v1102 = vunpack.c.l.b16 %v967
  %v1103 = vunpack.c.l.b16 %v968
  %v1104 = vpack.c.b16 %v1041, %v1040
  %v1105 = vpack.c.b16 %v1043, %v1042
  %v1106 = vpack.c.b16 %v1045, %v1044
  %v1107 = vpack.c.b16 %v1047, %v1046
  %v1108 = vpack.c.b16 %v1049, %v1048
  %v1109 = vpack.c.b16 %v1051, %v1050
  %v1110 = vpack.c.b16 %v1053, %v1052
  %v1111 = vpack.c.b16 %v1055, %v1054
  %v1112 = vpack.c.b16 %v1057, %v1056
  %v1113 = vpack.c.b16 %v1059, %v1058
  %v1114 = vpack.c.b16 %v1061, %v1060
  %v1115 = vpack.c.b16 %v1063, %v1062
  %v1116 = vpack.c.b16 %v1065, %v1064
  %v1117 = vpack.c.b16 %v1067, %v1066
  %v1118 = vpack.c.b16 %v1069, %v1068
  %v1119 = vpack.c.b16 %v1071, %v1070
  %v1120 = vpack.c.b16 %v1073, %v1072
  %v1121 = vpack.c.b16 %v1075, %v1074
  %v1122 = vpack.c.b16 %v1077, %v1076
  %v1123 = vpack.c.b16 %v1079, %v1078
  %v1124 = vpack.c.b16 %v1081, %v1080
  %v1125 = vpack.c.b16 %v1083, %v1082
  %v1126 = vpack.c.b16 %v1085, %v1084
  %v1127 = vpack.c.b16 %v1087, %v1086
  %v1128 = vpack.c.b16 %v1089, %v1088
  %v1129 = vpack.c.b16 %v1091, %v1090
  %v1130 = vpack.c.b16 %v1093, %v1092
  %v1131 = vpack.c.b16 %v1095, %v1094
  %v1132 = vpack.c.b16 %v1097, %v1096
  %v1133 = vpack.c.b16 %v1099, %v1098
  %v1134 = vpack.c.b16 %v1101, %v1100
  %v1135 = vpack.c.b16 %v1103, %v1102
  %1168 = vmatprep.subr.bf16.mxu0 0
  %1169 = vmatpush1.bf16.msra.mxu0 %v1104
  %1170 = vmatprep.subr.bf16.mxu0 0
  %1171 = vmatpush1.bf16.msra.mxu0 %v1105
  %1172 = vmatprep.subr.bf16.mxu0 0
  %1173 = vmatpush1.bf16.msra.mxu0 %v1106
  %1174 = vmatprep.subr.bf16.mxu0 0
  %1175 = vmatpush1.bf16.msra.mxu0 %v1107
  %1176 = vmatprep.subr.bf16.mxu0 0
  %1177 = vmatpush1.bf16.msra.mxu0 %v1108
  %1178 = vmatprep.subr.bf16.mxu0 0
  %1179 = vmatpush1.bf16.msra.mxu0 %v1109
  %1180 = vmatprep.subr.bf16.mxu0 0
  %1181 = vmatpush1.bf16.msra.mxu0 %v1110
  %1182 = vmatprep.subr.bf16.mxu0 0
  %1183 = vmatpush1.bf16.msra.mxu0 %v1111
  %1184 = vmatprep.subr.bf16.mxu0 0
  %1185 = vmatpush1.bf16.msra.mxu0 %v1112
  %1186 = vmatprep.subr.bf16.mxu0 0
  %1187 = vmatpush1.bf16.msra.mxu0 %v1113
  %1188 = vmatprep.subr.bf16.mxu0 0
  %1189 = vmatpush1.bf16.msra.mxu0 %v1114
  %1190 = vmatprep.subr.bf16.mxu0 0
  %1191 = vmatpush1.bf16.msra.mxu0 %v1115
  %1192 = vmatprep.subr.bf16.mxu0 0
  %1193 = vmatpush1.bf16.msra.mxu0 %v1116
  %1194 = vmatprep.subr.bf16.mxu0 0
  %1195 = vmatpush1.bf16.msra.mxu0 %v1117
  %1196 = vmatprep.subr.bf16.mxu0 0
  %1197 = vmatpush1.bf16.msra.mxu0 %v1118
  %1198 = vmatprep.subr.bf16.mxu0 0
  %1199 = vmatpush1.bf16.msra.mxu0 %v1119
  %1200 = vmatprep.mubr.bf16.mxu0 %v886
  %1201 = vmatmul.mubr.bf16.gmra.mrb[0].mxu0 %v885
  %v1202 = vpop.f32.mrb[0].mxu0
  %v1203 = vadd.f32 %v974, %v1202
  %v1204 = vpop.f32.mrb[0].mxu0
  %v1205 = vpop.f32.mrb[0].mxu0
  %v1206 = vadd.f32 %v974, %v1205
  %v1207 = vpop.f32.mrb[0].mxu0
  %1208 = vmatprep.mubr.bf16.mxu0 %v890
  %1209 = vmatmul.mubr.bf16.gmra.mrb[0].mxu0 %v889
  %v1210 = vpop.f32.mrb[0].mxu0
  %v1211 = vadd.f32 %v974, %v1210
  %v1212 = vpop.f32.mrb[0].mxu0
  %v1213 = vpop.f32.mrb[0].mxu0
  %v1214 = vadd.f32 %v974, %v1213
  %v1215 = vpop.f32.mrb[0].mxu0
  %1216 = vmatprep.mubr.bf16.mxu0 %v894
  %1217 = vmatmul.mubr.bf16.gmra.mrb[0].mxu0 %v893
  %v1218 = vpop.f32.mrb[0].mxu0
  %v1219 = vadd.f32 %v974, %v1218
  %v1220 = vpop.f32.mrb[0].mxu0
  %v1221 = vpop.f32.mrb[0].mxu0
  %v1222 = vadd.f32 %v974, %v1221
  %v1223 = vpop.f32.mrb[0].mxu0
  %1224 = vmatprep.mubr.bf16.mxu0 %v898
  %1225 = vmatmul.mubr.bf16.gmra.mrb[0].mxu0 %v897
  %v1226 = vpop.f32.mrb[0].mxu0
  %v1227 = vadd.f32 %v974, %v1226
  %v1228 = vpop.f32.mrb[0].mxu0
  %v1229 = vpop.f32.mrb[0].mxu0
  %v1230 = vadd.f32 %v974, %v1229
  %v1231 = vpop.f32.mrb[0].mxu0
  %1232 = vmatprep.mubr.bf16.mxu0 %v902
  %1233 = vmatmul.mubr.bf16.gmra.mrb[0].mxu0 %v901
  %v1234 = vpop.f32.mrb[0].mxu0
  %v1235 = vadd.f32 %v974, %v1234
  %v1236 = vpop.f32.mrb[0].mxu0
  %v1237 = vpop.f32.mrb[0].mxu0
  %v1238 = vpop.f32.mrb[0].mxu0
  %1239 = vdwg.mxu0
  %1240 = vmatprep.subr.bf16.mxu0 0
  %1241 = vmatpush1.bf16.msra.mxu0 %v1120
  %1242 = vmatprep.subr.bf16.mxu0 0
  %1243 = vmatpush1.bf16.msra.mxu0 %v1121
  %1244 = vmatprep.subr.bf16.mxu0 0
  %1245 = vmatpush1.bf16.msra.mxu0 %v1122
  %1246 = vmatprep.subr.bf16.mxu0 0
  %1247 = vmatpush1.bf16.msra.mxu0 %v1123
  %1248 = vmatprep.subr.bf16.mxu0 0
  %1249 = vmatpush1.bf16.msra.mxu0 %v1124
  %1250 = vmatprep.subr.bf16.mxu0 0
  %1251 = vmatpush1.bf16.msra.mxu0 %v1125
  %1252 = vmatprep.subr.bf16.mxu0 0
  %1253 = vmatpush1.bf16.msra.mxu0 %v1126
  %1254 = vmatprep.subr.bf16.mxu0 0
  %1255 = vmatpush1.bf16.msra.mxu0 %v1127
  %1256 = vmatprep.subr.bf16.mxu0 0
  %1257 = vmatpush1.bf16.msra.mxu0 %v1128
  %1258 = vmatprep.subr.bf16.mxu0 0
  %1259 = vmatpush1.bf16.msra.mxu0 %v1129
  %1260 = vmatprep.subr.bf16.mxu0 0
  %1261 = vmatpush1.bf16.msra.mxu0 %v1130
  %1262 = vmatprep.subr.bf16.mxu0 0
  %1263 = vmatpush1.bf16.msra.mxu0 %v1131
  %1264 = vmatprep.subr.bf16.mxu0 0
  %1265 = vmatpush1.bf16.msra.mxu0 %v1132
  %1266 = vmatprep.subr.bf16.mxu0 0
  %1267 = vmatpush1.bf16.msra.mxu0 %v1133
  %1268 = vmatprep.subr.bf16.mxu0 0
  %1269 = vmatpush1.bf16.msra.mxu0 %v1134
  %1270 = vmatprep.subr.bf16.mxu0 0
  %1271 = vmatpush1.bf16.msra.mxu0 %v1135
  %1272 = vmatprep.mubr.bf16.mxu0 %v888
  %1273 = vmatmul.mubr.bf16.gmra.mrb[0].mxu0 %v887
  %v1274 = vpop.f32.mrb[0].mxu0
  %v1275 = vadd.f32 %v1203, %v1274
  %v1276 = vpop.f32.mrb[0].mxu0
  %v1277 = vpop.f32.mrb[0].mxu0
  %v1278 = vadd.f32 %v1206, %v1277
  %v1279 = vpop.f32.mrb[0].mxu0
  %1280 = vmatprep.mubr.bf16.mxu0 %v892
  %1281 = vmatmul.mubr.bf16.gmra.mrb[0].mxu0 %v891
  %v1282 = vpop.f32.mrb[0].mxu0
  %v1283 = vadd.f32 %v1211, %v1282
  %v1284 = vpop.f32.mrb[0].mxu0
  %v1285 = vpop.f32.mrb[0].mxu0
  %v1286 = vadd.f32 %v1214, %v1285
  %v1287 = vpop.f32.mrb[0].mxu0
  %1288 = vmatprep.mubr.bf16.mxu0 %v896
  %1289 = vmatmul.mubr.bf16.gmra.mrb[0].mxu0 %v895
  %v1290 = vpop.f32.mrb[0].mxu0
  %v1291 = vadd.f32 %v1219, %v1290
  %v1292 = vpop.f32.mrb[0].mxu0
  %v1293 = vpop.f32.mrb[0].mxu0
  %v1294 = vadd.f32 %v1222, %v1293
  %v1295 = vpop.f32.mrb[0].mxu0
  %1296 = vmatprep.mubr.bf16.mxu0 %v900
  %1297 = vmatmul.mubr.bf16.gmra.mrb[0].mxu0 %v899
  %v1298 = vpop.f32.mrb[0].mxu0
  %v1299 = vadd.f32 %v1227, %v1298
  %v1300 = vpop.f32.mrb[0].mxu0
  %v1301 = vpop.f32.mrb[0].mxu0
  %v1302 = vadd.f32 %v1230, %v1301
  %v1303 = vpop.f32.mrb[0].mxu0
  %1304 = vmatprep.mubr.bf16.mxu0 %v904
  %1305 = vmatmul.mubr.bf16.gmra.mrb[0].mxu0 %v903
  %v1306 = vpop.f32.mrb[0].mxu0
  %v1307 = vadd.f32 %v1235, %v1306
  %v1308 = vpop.f32.mrb[0].mxu0
  %v1309 = vpop.f32.mrb[0].mxu0
  %v1310 = vpop.f32.mrb[0].mxu0
  %1311 = vdwg.mxu0
  %v1312 = vadd.f32 %v36, %v1275
  %v1313 = vadd.f32 %v37, %v1278
  %v1314 = vadd.f32 %v38, %v1283
  %v1315 = vadd.f32 %v39, %v1286
  %v1316 = vadd.f32 %v40, %v1291
  %v1317 = vadd.f32 %v41, %v1294
  %v1318 = vadd.f32 %v42, %v1299
  %v1319 = vadd.f32 %v43, %v1302
  %v1320 = vadd.f32 %v44, %v1307
  %v1321 = vpack.c.bf16 %v1313, %v1312
  %v1322 = vpack.c.bf16 %v1315, %v1314
  %v1323 = vpack.c.bf16 %v1317, %v1316
  %v1324 = vpack.c.bf16 %v1319, %v1318
  %v1325 = vpack.c.bf16 %v1320, %v1320
  %v1331 = vunpack.c.l.b16 %v1321
  %v1332 = vunpack.c.h.b16 %v1321
  %v1333 = vunpack.c.l.b16 %v1322
  %v1334 = vunpack.c.h.b16 %v1322
  %v1335 = vunpack.c.l.b16 %v1323
  %v1336 = vunpack.c.h.b16 %v1323
  %v1337 = vunpack.c.l.b16 %v1324
  %v1338 = vunpack.c.h.b16 %v1324
  %v1339 = vunpack.c.l.b16 %v1325
  %v1340 = vpack.c.b16 %v1331, %v1331
  %v1341 = vpack.c.b16 %v1332, %v1332
  %v1342 = vpack.c.b16 %v1333, %v1333
  %v1343 = vpack.c.b16 %v1334, %v1334
  %v1344 = vpack.c.b16 %v1335, %v1335
  %v1345 = vpack.c.b16 %v1336, %v1336
  %v1346 = vpack.c.b16 %v1337, %v1337
  %v1347 = vpack.c.b16 %v1338, %v1338
  %v1348 = vpack.c.b16 %v1339, %v1339
  %1358 = vst [vmem:[%s7] sm:$0xf] %v1340
  %1359 = vst [vmem:[%s7 + $0x4] sm:$0xf] %v1341
  %1360 = vst [vmem:[%s7 + $0x8] sm:$0xf] %v1342
  %1361 = vst [vmem:[%s7 + $0xc] sm:$0xf] %v1343
  %1362 = vst [vmem:[%s7 + $0x10] sm:$0xf] %v1344
  %1363 = vst [vmem:[%s7 + $0x14] sm:$0xf] %v1345
  %1364 = vst [vmem:[%s7 + $0x18] sm:$0xf] %v1346
  %1365 = vst [vmem:[%s7 + $0x1c] sm:$0xf] %v1347
  %1366 = vst [vmem:[%s7 + $0x20] sm:$0x1] %v1348
  // Predicated region
  $region30: #{_lambda_.19} parent=0 // pred_check
    _
  $region31: #{_lambda_.19} parent=0 // pred_check_branch
    %1368 = sbr.rel (0) target = $region33
  $region32: #{_lambda_.19} parent=0 // pred_region
    _
  $region33: #{_lambda_.19} parent=0 // pred_fallthru
    _
  // Predicated region
  $region34: #{_lambda_.19} parent=0 // pred_check
    _
  $region35: #{_lambda_.19} parent=0 // pred_check_branch
    %1370 = sbr.rel (0) target = $region37
  $region36: #{_lambda_.19} parent=0 // pred_region
    _
  $region37: #{_lambda_.19} parent=0 // pred_fallthru
    _

// kernel: _lambda_.24
$region0: #{_lambda_.24}
  #allocation0 [shape = 'u32[]', space=smem, size = 0x4, offset = 0x4, fixed_abs, tag = 'smem constant byte address 0x4 - core index']
  #allocation1 [shape = 'u32[144,128]{1,0:T(1,128)}', space=vmem, size = 0x12000, scoped, tag = 'internal scratch']
  %s0 = inlined_call_operand.vmem [shape: bf16[66,128], index: 0, kind: input, shape index: {}]
  %s1 = inlined_call_operand.vmem [shape: f32[1,128], index: 1, kind: input, shape index: {}]
  %s2 = inlined_call_operand.vmem [shape: f32[1,128], index: 2, kind: input, shape index: {}]
  %s3 = inlined_call_operand.vmem [shape: bf16[128,128], index: 3, kind: input, shape index: {}]
  %s4 = inlined_call_operand.vmem [shape: f32[1,128], index: 4, kind: input, shape index: {}]
  %s5 = inlined_call_operand.vmem [shape: bf16[66,128], index: 5, kind: output, shape index: {}]
  %s6 = sld [smem:[#allocation0]]
  $region30: #{_lambda_.24} parent=0
    _
  %s8 = ssub.s32 1, %s6
  %s9 = scalar_select 0, %s8, %s6
  // Predicated region
  $region2: #{_lambda_.24} parent=0 // pred_check
    _
  $region3: #{_lambda_.24} parent=0 // pred_check_branch
    %11 = sbr.rel (0) target = $region5
  $region4: #{_lambda_.24} parent=0 // pred_region
    _
  $region5: #{_lambda_.24} parent=0 // pred_fallthru
    _
  // Predicated region
  $region6: #{_lambda_.24} parent=0 // pred_check
    _
  $region7: #{_lambda_.24} parent=0 // pred_check_branch
    %13 = sbr.rel (0) target = $region9
  $region8: #{_lambda_.24} parent=0 // pred_region
    _
  $region9: #{_lambda_.24} parent=0 // pred_fallthru
    _
  // Predicated region
  $region10: #{_lambda_.24} parent=0 // pred_check
    _
  $region11: #{_lambda_.24} parent=0 // pred_check_branch
    %15 = sbr.rel (0) target = $region13
  $region12: #{_lambda_.24} parent=0 // pred_region
    _
  $region13: #{_lambda_.24} parent=0 // pred_fallthru
    _
  // Predicated region
  $region14: #{_lambda_.24} parent=0 // pred_check
    _
  $region15: #{_lambda_.24} parent=0 // pred_check_branch
    %17 = sbr.rel (0) target = $region17
  $region16: #{_lambda_.24} parent=0 // pred_region
    _
  $region17: #{_lambda_.24} parent=0 // pred_fallthru
    _
  // Predicated region
  $region18: #{_lambda_.24} parent=0 // pred_check
    _
  $region19: #{_lambda_.24} parent=0 // pred_check_branch
    %19 = sbr.rel (0) target = $region21
  $region20: #{_lambda_.24} parent=0 // pred_region
    _
  $region21: #{_lambda_.24} parent=0 // pred_fallthru
    _
  %v21 = vld [vmem:[%s0] sm:$0xf]
  %v22 = vld [vmem:[%s0 + $0x4] sm:$0xf]
  %v23 = vld [vmem:[%s0 + $0x8] sm:$0xf]
  %v24 = vld [vmem:[%s0 + $0xc] sm:$0xf]
  %v25 = vld [vmem:[%s0 + $0x10] sm:$0xf]
  %v26 = vld [vmem:[%s0 + $0x14] sm:$0xf]
  %v27 = vld [vmem:[%s0 + $0x18] sm:$0xf]
  %v28 = vld [vmem:[%s0 + $0x1c] sm:$0xf]
  %v29 = vld [vmem:[%s0 + $0x20] sm:$0x1]
  %v30 = vunpack.c.l.bf16 %v21
  %v31 = vunpack.c.l.bf16 %v22
  %v32 = vunpack.c.l.bf16 %v23
  %v33 = vunpack.c.l.bf16 %v24
  %v34 = vunpack.c.l.bf16 %v25
  %v35 = vunpack.c.l.bf16 %v26
  %v36 = vunpack.c.l.bf16 %v27
  %v37 = vunpack.c.l.bf16 %v28
  %v38 = vunpack.c.l.bf16 %v29
  %39 = vadd.xlane.f32.xlu0 %v30
  %v40 = vpop.xlane.xlu0 %39
  %41 = vadd.xlane.f32.xlu0 %v31
  %v42 = vpop.xlane.xlu0 %41
  %43 = vadd.xlane.f32.xlu0 %v32
  %v44 = vpop.xlane.xlu0 %43
  %45 = vadd.xlane.f32.xlu0 %v33
  %v46 = vpop.xlane.xlu0 %45
  %47 = vadd.xlane.f32.xlu0 %v34
  %v48 = vpop.xlane.xlu0 %47
  %49 = vadd.xlane.f32.xlu0 %v35
  %v50 = vpop.xlane.xlu0 %49
  %51 = vadd.xlane.f32.xlu0 %v36
  %v52 = vpop.xlane.xlu0 %51
  %53 = vadd.xlane.f32.xlu0 %v37
  %v54 = vpop.xlane.xlu0 %53
  %vm55 = vcmask 1041408
  %v56 = vsel %vm55, %v38, 0.0
  %57 = vadd.xlane.f32.xlu0 %v56
  %v58 = vpop.xlane.xlu0 %57
  %v59 = vrcp.pop 128.0
  %v60 = vmul.f32 %v40, %v59
  %v61 = vmul.f32 %v42, %v59
  %v62 = vmul.f32 %v44, %v59
  %v63 = vmul.f32 %v46, %v59
  %v64 = vmul.f32 %v48, %v59
  %v65 = vmul.f32 %v50, %v59
  %v66 = vmul.f32 %v52, %v59
  %v67 = vmul.f32 %v54, %v59
  %v68 = vmul.f32 %v58, %v59
  %v69 = vsub.f32 %v30, %v60
  %v70 = vsub.f32 %v31, %v61
  %v71 = vsub.f32 %v32, %v62
  %v72 = vsub.f32 %v33, %v63
  %v73 = vsub.f32 %v34, %v64
  %v74 = vsub.f32 %v35, %v65
  %v75 = vsub.f32 %v36, %v66
  %v76 = vsub.f32 %v37, %v67
  %v77 = vsub.f32 %v38, %v68
  %v78 = vmul.f32 %v69, %v69
  %v79 = vmul.f32 %v70, %v70
  %v80 = vmul.f32 %v71, %v71
  %v81 = vmul.f32 %v72, %v72
  %v82 = vmul.f32 %v73, %v73
  %v83 = vmul.f32 %v74, %v74
  %v84 = vmul.f32 %v75, %v75
  %v85 = vmul.f32 %v76, %v76
  %v86 = vmul.f32 %v77, %v77
  %87 = vadd.xlane.f32.xlu0 %v78
  %v88 = vpop.xlane.xlu0 %87
  %89 = vadd.xlane.f32.xlu0 %v79
  %v90 = vpop.xlane.xlu0 %89
  %91 = vadd.xlane.f32.xlu0 %v80
  %v92 = vpop.xlane.xlu0 %91
  %93 = vadd.xlane.f32.xlu0 %v81
  %v94 = vpop.xlane.xlu0 %93
  %95 = vadd.xlane.f32.xlu0 %v82
  %v96 = vpop.xlane.xlu0 %95
  %97 = vadd.xlane.f32.xlu0 %v83
  %v98 = vpop.xlane.xlu0 %97
  %99 = vadd.xlane.f32.xlu0 %v84
  %v100 = vpop.xlane.xlu0 %99
  %101 = vadd.xlane.f32.xlu0 %v85
  %v102 = vpop.xlane.xlu0 %101
  %v103 = vsel %vm55, %v86, 0.0
  %104 = vadd.xlane.f32.xlu0 %v103
  %v105 = vpop.xlane.xlu0 %104
  %v106 = vmul.f32 %v88, %v59
  %v107 = vmul.f32 %v90, %v59
  %v108 = vmul.f32 %v92, %v59
  %v109 = vmul.f32 %v94, %v59
  %v110 = vmul.f32 %v96, %v59
  %v111 = vmul.f32 %v98, %v59
  %v112 = vmul.f32 %v100, %v59
  %v113 = vmul.f32 %v102, %v59
  %v114 = vmul.f32 %v105, %v59
  %v115 = vadd.f32 %v106, 1e-06
  %v116 = vadd.f32 %v107, 1e-06
  %v117 = vadd.f32 %v108, 1e-06
  %v118 = vadd.f32 %v109, 1e-06
  %v119 = vadd.f32 %v110, 1e-06
  %v120 = vadd.f32 %v111, 1e-06
  %v121 = vadd.f32 %v112, 1e-06
  %v122 = vadd.f32 %v113, 1e-06
  %v123 = vadd.f32 %v114, 1e-06
  %v124 = vrsqrt.pop %v115
  %v125 = vrsqrt.pop %v116
  %v126 = vrsqrt.pop %v117
  %v127 = vrsqrt.pop %v118
  %v128 = vrsqrt.pop %v119
  %v129 = vrsqrt.pop %v120
  %v130 = vrsqrt.pop %v121
  %v131 = vrsqrt.pop %v122
  %v132 = vrsqrt.pop %v123
  %v133 = vmul.f32 %v69, %v124
  %v134 = vmul.f32 %v70, %v125
  %v135 = vmul.f32 %v71, %v126
  %v136 = vmul.f32 %v72, %v127
  %v137 = vmul.f32 %v73, %v128
  %v138 = vmul.f32 %v74, %v129
  %v139 = vmul.f32 %v75, %v130
  %v140 = vmul.f32 %v76, %v131
  %v141 = vmul.f32 %v77, %v132
  %v142 = vld [vmem:[%s1] sm:$0x1]
  %v144 = vlaneseq
  %v145 = vshrl.u32 %v144, 7
  %v146 = vsub.s32 0, %v145
  %v147 = vrot.slane %v142, %v146
  %v149 = vmul.f32 %v133, %v147
  %v150 = vmul.f32 %v134, %v147
  %v151 = vmul.f32 %v135, %v147
  %v152 = vmul.f32 %v136, %v147
  %v153 = vmul.f32 %v137, %v147
  %v154 = vmul.f32 %v138, %v147
  %v155 = vmul.f32 %v139, %v147
  %v156 = vmul.f32 %v140, %v147
  %v157 = vmul.f32 %v141, %v147
  %v158 = vld [vmem:[%s2] sm:$0x1]
  %v160 = vlaneseq
  %v161 = vshrl.u32 %v160, 7
  %v162 = vsub.s32 0, %v161
  %v163 = vrot.slane %v158, %v162
  %v165 = vadd.f32 %v149, %v163
  %v166 = vadd.f32 %v150, %v163
  %v167 = vadd.f32 %v151, %v163
  %v168 = vadd.f32 %v152, %v163
  %v169 = vadd.f32 %v153, %v163
  %v170 = vadd.f32 %v154, %v163
  %v171 = vadd.f32 %v155, %v163
  %v172 = vadd.f32 %v156, %v163
  %v173 = vadd.f32 %v157, %v163
  %v174 = vpack.c.bf16 %v166, %v165
  %v175 = vpack.c.bf16 %v168, %v167
  %v176 = vpack.c.bf16 %v170, %v169
  %v177 = vpack.c.bf16 %v172, %v171
  %v178 = vpack.c.bf16 %v173, %v173
  %v179 = vld [vmem:[%s3] sm:$0xf]
  %v180 = vld [vmem:[%s3 + $0x4] sm:$0xf]
  %v181 = vld [vmem:[%s3 + $0x8] sm:$0xf]
  %v182 = vld [vmem:[%s3 + $0xc] sm:$0xf]
  %v183 = vld [vmem:[%s3 + $0x10] sm:$0xf]
  %v184 = vld [vmem:[%s3 + $0x14] sm:$0xf]
  %v185 = vld [vmem:[%s3 + $0x18] sm:$0xf]
  %v186 = vld [vmem:[%s3 + $0x1c] sm:$0xf]
  %v187 = vld [vmem:[%s3 + $0x20] sm:$0xf]
  %v188 = vld [vmem:[%s3 + $0x24] sm:$0xf]
  %v189 = vld [vmem:[%s3 + $0x28] sm:$0xf]
  %v190 = vld [vmem:[%s3 + $0x2c] sm:$0xf]
  %v191 = vld [vmem:[%s3 + $0x30] sm:$0xf]
  %v192 = vld [vmem:[%s3 + $0x34] sm:$0xf]
  %v193 = vld [vmem:[%s3 + $0x38] sm:$0xf]
  %v194 = vld [vmem:[%s3 + $0x3c] sm:$0xf]
  %v195 = vld [vmem:[%s4] sm:$0x1]
  %v197 = vlaneseq
  %v198 = vshrl.u32 %v197, 7
  %v199 = vsub.s32 0, %v198
  %v200 = vrot.slane %v195, %v199
  %v218 = vunpack.c.l.b16 %v179
  %v219 = vunpack.c.l.b16 %v180
  %v220 = vunpack.c.l.b16 %v181
  %v221 = vunpack.c.l.b16 %v182
  %v222 = vunpack.c.l.b16 %v183
  %v223 = vunpack.c.l.b16 %v184
  %v224 = vunpack.c.l.b16 %v185
  %v225 = vunpack.c.l.b16 %v186
  %v226 = vunpack.c.l.b16 %v187
  %v227 = vunpack.c.l.b16 %v188
  %v228 = vunpack.c.l.b16 %v189
  %v229 = vunpack.c.l.b16 %v190
  %v230 = vunpack.c.l.b16 %v191
  %v231 = vunpack.c.l.b16 %v192
  %v232 = vunpack.c.l.b16 %v193
  %v233 = vunpack.c.l.b16 %v194
  %v234 = vpack.c.b16 %v219, %v218
  %v235 = vpack.c.b16 %v221, %v220
  %v236 = vpack.c.b16 %v223, %v222
  %v237 = vpack.c.b16 %v225, %v224
  %v238 = vpack.c.b16 %v227, %v226
  %v239 = vpack.c.b16 %v229, %v228
  %v240 = vpack.c.b16 %v231, %v230
  %v241 = vpack.c.b16 %v233, %v232
  %250 = vmatprep.subr.bf16.mxu0 0
  %251 = vmatpush1.bf16.msra.mxu0 %v234
  %252 = vmatprep.subr.bf16.mxu0 0
  %253 = vmatpush1.bf16.msra.mxu0 %v235
  %254 = vmatprep.subr.bf16.mxu0 0
  %255 = vmatpush1.bf16.msra.mxu0 %v236
  %256 = vmatprep.subr.bf16.mxu0 0
  %257 = vmatpush1.bf16.msra.mxu0 %v237
  %258 = vmatprep.subr.bf16.mxu0 0
  %259 = vmatpush1.bf16.msra.mxu0 %v238
  %260 = vmatprep.subr.bf16.mxu0 0
  %261 = vmatpush1.bf16.msra.mxu0 %v239
  %262 = vmatprep.subr.bf16.mxu0 0
  %263 = vmatpush1.bf16.msra.mxu0 %v240
  %264 = vmatprep.subr.bf16.mxu0 0
  %265 = vmatpush1.bf16.msra.mxu0 %v241
  %266 = vmatprep.subr.bf16.mxu0 0
  %267 = vmatpush1.bf16.msra.mxu0 0
  %268 = vmatprep.subr.bf16.mxu0 0
  %269 = vmatpush1.bf16.msra.mxu0 0
  %270 = vmatprep.subr.bf16.mxu0 0
  %271 = vmatpush1.bf16.msra.mxu0 0
  %272 = vmatprep.subr.bf16.mxu0 0
  %273 = vmatpush1.bf16.msra.mxu0 0
  %274 = vmatprep.subr.bf16.mxu0 0
  %275 = vmatpush1.bf16.msra.mxu0 0
  %276 = vmatprep.subr.bf16.mxu0 0
  %277 = vmatpush1.bf16.msra.mxu0 0
  %278 = vmatprep.subr.bf16.mxu0 0
  %279 = vmatpush1.bf16.msra.mxu0 0
  %280 = vmatprep.subr.bf16.mxu0 0
  %281 = vmatpush1.bf16.msra.mxu0 0
  %282 = vmatprep.mubr.bf16.mxu0 0
  %283 = vmatmul.mubr.bf16.gmra.mrb[0].mxu0 %v174
  %v284 = vpop.f32.mrb[0].mxu0
  %v285 = vadd.f32 %v200, %v284
  %v286 = vpop.f32.mrb[0].mxu0
  %v287 = vpop.f32.mrb[0].mxu0
  %v288 = vadd.f32 %v200, %v287
  %v289 = vpop.f32.mrb[0].mxu0
  %290 = vmatprep.mubr.bf16.mxu0 0
  %291 = vmatmul.mubr.bf16.gmra.mrb[0].mxu0 %v175
  %v292 = vpop.f32.mrb[0].mxu0
  %v293 = vadd.f32 %v200, %v292
  %v294 = vpop.f32.mrb[0].mxu0
  %v295 = vpop.f32.mrb[0].mxu0
  %v296 = vadd.f32 %v200, %v295
  %v297 = vpop.f32.mrb[0].mxu0
  %298 = vmatprep.mubr.bf16.mxu0 0
  %299 = vmatmul.mubr.bf16.gmra.mrb[0].mxu0 %v176
  %v300 = vpop.f32.mrb[0].mxu0
  %v301 = vadd.f32 %v200, %v300
  %v302 = vpop.f32.mrb[0].mxu0
  %v303 = vpop.f32.mrb[0].mxu0
  %v304 = vadd.f32 %v200, %v303
  %v305 = vpop.f32.mrb[0].mxu0
  %306 = vmatprep.mubr.bf16.mxu0 0
  %307 = vmatmul.mubr.bf16.gmra.mrb[0].mxu0 %v177
  %v308 = vpop.f32.mrb[0].mxu0
  %v309 = vadd.f32 %v200, %v308
  %v310 = vpop.f32.mrb[0].mxu0
  %v311 = vpop.f32.mrb[0].mxu0
  %v312 = vadd.f32 %v200, %v311
  %v313 = vpop.f32.mrb[0].mxu0
  %314 = vmatprep.mubr.bf16.mxu0 0
  %315 = vmatmul.mubr.bf16.gmra.mrb[0].mxu0 %v178
  %v316 = vpop.f32.mrb[0].mxu0
  %v317 = vadd.f32 %v200, %v316
  %v318 = vpop.f32.mrb[0].mxu0
  %v319 = vpop.f32.mrb[0].mxu0
  %v320 = vpop.f32.mrb[0].mxu0
  %321 = vdwg.mxu0
  %v322 = vpack.c.bf16 %v288, %v285
  %v323 = vpack.c.bf16 %v296, %v293
  %v324 = vpack.c.bf16 %v304, %v301
  %v325 = vpack.c.bf16 %v312, %v309
  %v326 = vpack.c.bf16 %v317, %v317
  %v332 = vunpack.c.l.b16 %v322
  %v333 = vunpack.c.h.b16 %v322
  %v334 = vunpack.c.l.b16 %v323
  %v335 = vunpack.c.h.b16 %v323
  %v336 = vunpack.c.l.b16 %v324
  %v337 = vunpack.c.h.b16 %v324
  %v338 = vunpack.c.l.b16 %v325
  %v339 = vunpack.c.h.b16 %v325
  %v340 = vunpack.c.l.b16 %v326
  %v341 = vpack.c.b16 %v332, %v332
  %v342 = vpack.c.b16 %v333, %v333
  %v343 = vpack.c.b16 %v334, %v334
  %v344 = vpack.c.b16 %v335, %v335
  %v345 = vpack.c.b16 %v336, %v336
  %v346 = vpack.c.b16 %v337, %v337
  %v347 = vpack.c.b16 %v338, %v338
  %v348 = vpack.c.b16 %v339, %v339
  %v349 = vpack.c.b16 %v340, %v340
  %359 = vst [vmem:[%s5] sm:$0xf] %v341
  %360 = vst [vmem:[%s5 + $0x4] sm:$0xf] %v342
  %361 = vst [vmem:[%s5 + $0x8] sm:$0xf] %v343
  %362 = vst [vmem:[%s5 + $0xc] sm:$0xf] %v344
  %363 = vst [vmem:[%s5 + $0x10] sm:$0xf] %v345
  %364 = vst [vmem:[%s5 + $0x14] sm:$0xf] %v346
  %365 = vst [vmem:[%s5 + $0x18] sm:$0xf] %v347
  %366 = vst [vmem:[%s5 + $0x1c] sm:$0xf] %v348
  %367 = vst [vmem:[%s5 + $0x20] sm:$0x1] %v349
  // Predicated region
  $region22: #{_lambda_.24} parent=0 // pred_check
    _
  $region23: #{_lambda_.24} parent=0 // pred_check_branch
    %369 = sbr.rel (0) target = $region25
  $region24: #{_lambda_.24} parent=0 // pred_region
    _
  $region25: #{_lambda_.24} parent=0 // pred_fallthru
    _
  // Predicated region
  $region26: #{_lambda_.24} parent=0 // pred_check
    _
  $region27: #{_lambda_.24} parent=0 // pred_check_branch
    %371 = sbr.rel (0) target = $region29
  $region28: #{_lambda_.24} parent=0 // pred_region
    _
  $region29: #{_lambda_.24} parent=0 // pred_fallthru
    _

// kernel: _lambda_.25
$region0: #{_lambda_.25}
  #allocation0 [shape = 'u32[]', space=smem, size = 0x4, offset = 0x4, fixed_abs, tag = 'smem constant byte address 0x4 - core index']
  #allocation1 [shape = 'u32[144,128]{1,0:T(1,128)}', space=vmem, size = 0x12000, scoped, tag = 'internal scratch']
  %s0 = inlined_call_operand.vmem [shape: bf16[130,128], index: 0, kind: input, shape index: {}]
  %s1 = inlined_call_operand.vmem [shape: f32[1,128], index: 1, kind: input, shape index: {}]
  %s2 = inlined_call_operand.vmem [shape: f32[1,128], index: 2, kind: input, shape index: {}]
  %s3 = inlined_call_operand.vmem [shape: bf16[128,384], index: 3, kind: input, shape index: {}]
  %s4 = inlined_call_operand.vmem [shape: f32[1,384], index: 4, kind: input, shape index: {}]
  %s5 = inlined_call_operand.vmem [shape: bf16[130,384], index: 5, kind: output, shape index: {}]
  %s6 = sld [smem:[#allocation0]]
  $region30: #{_lambda_.25} parent=0
    _
  %s8 = ssub.s32 1, %s6
  %s9 = scalar_select 0, %s8, %s6
  // Predicated region
  $region2: #{_lambda_.25} parent=0 // pred_check
    _
  $region3: #{_lambda_.25} parent=0 // pred_check_branch
    %11 = sbr.rel (0) target = $region5
  $region4: #{_lambda_.25} parent=0 // pred_region
    _
  $region5: #{_lambda_.25} parent=0 // pred_fallthru
    _
  // Predicated region
  $region6: #{_lambda_.25} parent=0 // pred_check
    _
  $region7: #{_lambda_.25} parent=0 // pred_check_branch
    %13 = sbr.rel (0) target = $region9
  $region8: #{_lambda_.25} parent=0 // pred_region
    _
  $region9: #{_lambda_.25} parent=0 // pred_fallthru
    _
  // Predicated region
  $region10: #{_lambda_.25} parent=0 // pred_check
    _
  $region11: #{_lambda_.25} parent=0 // pred_check_branch
    %15 = sbr.rel (0) target = $region13
  $region12: #{_lambda_.25} parent=0 // pred_region
    _
  $region13: #{_lambda_.25} parent=0 // pred_fallthru
    _
  // Predicated region
  $region14: #{_lambda_.25} parent=0 // pred_check
    _
  $region15: #{_lambda_.25} parent=0 // pred_check_branch
    %17 = sbr.rel (0) target = $region17
  $region16: #{_lambda_.25} parent=0 // pred_region
    _
  $region17: #{_lambda_.25} parent=0 // pred_fallthru
    _
  // Predicated region
  $region18: #{_lambda_.25} parent=0 // pred_check
    _
  $region19: #{_lambda_.25} parent=0 // pred_check_branch
    %19 = sbr.rel (0) target = $region21
  $region20: #{_lambda_.25} parent=0 // pred_region
    _
  $region21: #{_lambda_.25} parent=0 // pred_fallthru
    _
  %v21 = vld [vmem:[%s0] sm:$0xf]
  %v22 = vld [vmem:[%s0 + $0x4] sm:$0xf]
  %v23 = vld [vmem:[%s0 + $0x8] sm:$0xf]
  %v24 = vld [vmem:[%s0 + $0xc] sm:$0xf]
  %v25 = vld [vmem:[%s0 + $0x10] sm:$0xf]
  %v26 = vld [vmem:[%s0 + $0x14] sm:$0xf]
  %v27 = vld [vmem:[%s0 + $0x18] sm:$0xf]
  %v28 = vld [vmem:[%s0 + $0x1c] sm:$0xf]
  %v29 = vld [vmem:[%s0 + $0x20] sm:$0xf]
  %v30 = vld [vmem:[%s0 + $0x24] sm:$0xf]
  %v31 = vld [vmem:[%s0 + $0x28] sm:$0xf]
  %v32 = vld [vmem:[%s0 + $0x2c] sm:$0xf]
  %v33 = vld [vmem:[%s0 + $0x30] sm:$0xf]
  %v34 = vld [vmem:[%s0 + $0x34] sm:$0xf]
  %v35 = vld [vmem:[%s0 + $0x38] sm:$0xf]
  %v36 = vld [vmem:[%s0 + $0x3c] sm:$0xf]
  %v37 = vld [vmem:[%s0 + $0x40] sm:$0x1]
  %v38 = vunpack.c.l.bf16 %v21
  %v39 = vunpack.c.l.bf16 %v22
  %v40 = vunpack.c.l.bf16 %v23
  %v41 = vunpack.c.l.bf16 %v24
  %v42 = vunpack.c.l.bf16 %v25
  %v43 = vunpack.c.l.bf16 %v26
  %v44 = vunpack.c.l.bf16 %v27
  %v45 = vunpack.c.l.bf16 %v28
  %v46 = vunpack.c.l.bf16 %v29
  %v47 = vunpack.c.l.bf16 %v30
  %v48 = vunpack.c.l.bf16 %v31
  %v49 = vunpack.c.l.bf16 %v32
  %v50 = vunpack.c.l.bf16 %v33
  %v51 = vunpack.c.l.bf16 %v34
  %v52 = vunpack.c.l.bf16 %v35
  %v53 = vunpack.c.l.bf16 %v36
  %v54 = vunpack.c.l.bf16 %v37
  %55 = vadd.xlane.f32.xlu0 %v38
  %v56 = vpop.xlane.xlu0 %55
  %57 = vadd.xlane.f32.xlu0 %v39
  %v58 = vpop.xlane.xlu0 %57
  %59 = vadd.xlane.f32.xlu0 %v40
  %v60 = vpop.xlane.xlu0 %59
  %61 = vadd.xlane.f32.xlu0 %v41
  %v62 = vpop.xlane.xlu0 %61
  %63 = vadd.xlane.f32.xlu0 %v42
  %v64 = vpop.xlane.xlu0 %63
  %65 = vadd.xlane.f32.xlu0 %v43
  %v66 = vpop.xlane.xlu0 %65
  %67 = vadd.xlane.f32.xlu0 %v44
  %v68 = vpop.xlane.xlu0 %67
  %69 = vadd.xlane.f32.xlu0 %v45
  %v70 = vpop.xlane.xlu0 %69
  %71 = vadd.xlane.f32.xlu0 %v46
  %v72 = vpop.xlane.xlu0 %71
  %73 = vadd.xlane.f32.xlu0 %v47
  %v74 = vpop.xlane.xlu0 %73
  %75 = vadd.xlane.f32.xlu0 %v48
  %v76 = vpop.xlane.xlu0 %75
  %77 = vadd.xlane.f32.xlu0 %v49
  %v78 = vpop.xlane.xlu0 %77
  %79 = vadd.xlane.f32.xlu0 %v50
  %v80 = vpop.xlane.xlu0 %79
  %81 = vadd.xlane.f32.xlu0 %v51
  %v82 = vpop.xlane.xlu0 %81
  %83 = vadd.xlane.f32.xlu0 %v52
  %v84 = vpop.xlane.xlu0 %83
  %85 = vadd.xlane.f32.xlu0 %v53
  %v86 = vpop.xlane.xlu0 %85
  %vm87 = vcmask 1041408
  %v88 = vsel %vm87, %v54, 0.0
  %89 = vadd.xlane.f32.xlu0 %v88
  %v90 = vpop.xlane.xlu0 %89
  %v91 = vrcp.pop 128.0
  %v92 = vmul.f32 %v56, %v91
  %v93 = vmul.f32 %v58, %v91
  %v94 = vmul.f32 %v60, %v91
  %v95 = vmul.f32 %v62, %v91
  %v96 = vmul.f32 %v64, %v91
  %v97 = vmul.f32 %v66, %v91
  %v98 = vmul.f32 %v68, %v91
  %v99 = vmul.f32 %v70, %v91
  %v100 = vmul.f32 %v72, %v91
  %v101 = vmul.f32 %v74, %v91
  %v102 = vmul.f32 %v76, %v91
  %v103 = vmul.f32 %v78, %v91
  %v104 = vmul.f32 %v80, %v91
  %v105 = vmul.f32 %v82, %v91
  %v106 = vmul.f32 %v84, %v91
  %v107 = vmul.f32 %v86, %v91
  %v108 = vmul.f32 %v90, %v91
  %v109 = vsub.f32 %v38, %v92
  %v110 = vsub.f32 %v39, %v93
  %v111 = vsub.f32 %v40, %v94
  %v112 = vsub.f32 %v41, %v95
  %v113 = vsub.f32 %v42, %v96
  %v114 = vsub.f32 %v43, %v97
  %v115 = vsub.f32 %v44, %v98
  %v116 = vsub.f32 %v45, %v99
  %v117 = vsub.f32 %v46, %v100
  %v118 = vsub.f32 %v47, %v101
  %v119 = vsub.f32 %v48, %v102
  %v120 = vsub.f32 %v49, %v103
  %v121 = vsub.f32 %v50, %v104
  %v122 = vsub.f32 %v51, %v105
  %v123 = vsub.f32 %v52, %v106
  %v124 = vsub.f32 %v53, %v107
  %v125 = vsub.f32 %v54, %v108
  %v126 = vmul.f32 %v109, %v109
  %v127 = vmul.f32 %v110, %v110
  %v128 = vmul.f32 %v111, %v111
  %v129 = vmul.f32 %v112, %v112
  %v130 = vmul.f32 %v113, %v113
  %v131 = vmul.f32 %v114, %v114
  %v132 = vmul.f32 %v115, %v115
  %v133 = vmul.f32 %v116, %v116
  %v134 = vmul.f32 %v117, %v117
  %v135 = vmul.f32 %v118, %v118
  %v136 = vmul.f32 %v119, %v119
  %v137 = vmul.f32 %v120, %v120
  %v138 = vmul.f32 %v121, %v121
  %v139 = vmul.f32 %v122, %v122
  %v140 = vmul.f32 %v123, %v123
  %v141 = vmul.f32 %v124, %v124
  %v142 = vmul.f32 %v125, %v125
  %143 = vadd.xlane.f32.xlu0 %v126
  %v144 = vpop.xlane.xlu0 %143
  %145 = vadd.xlane.f32.xlu0 %v127
  %v146 = vpop.xlane.xlu0 %145
  %147 = vadd.xlane.f32.xlu0 %v128
  %v148 = vpop.xlane.xlu0 %147
  %149 = vadd.xlane.f32.xlu0 %v129
  %v150 = vpop.xlane.xlu0 %149
  %151 = vadd.xlane.f32.xlu0 %v130
  %v152 = vpop.xlane.xlu0 %151
  %153 = vadd.xlane.f32.xlu0 %v131
  %v154 = vpop.xlane.xlu0 %153
  %155 = vadd.xlane.f32.xlu0 %v132
  %v156 = vpop.xlane.xlu0 %155
  %157 = vadd.xlane.f32.xlu0 %v133
  %v158 = vpop.xlane.xlu0 %157
  %159 = vadd.xlane.f32.xlu0 %v134
  %v160 = vpop.xlane.xlu0 %159
  %161 = vadd.xlane.f32.xlu0 %v135
  %v162 = vpop.xlane.xlu0 %161
  %163 = vadd.xlane.f32.xlu0 %v136
  %v164 = vpop.xlane.xlu0 %163
  %165 = vadd.xlane.f32.xlu0 %v137
  %v166 = vpop.xlane.xlu0 %165
  %167 = vadd.xlane.f32.xlu0 %v138
  %v168 = vpop.xlane.xlu0 %167
  %169 = vadd.xlane.f32.xlu0 %v139
  %v170 = vpop.xlane.xlu0 %169
  %171 = vadd.xlane.f32.xlu0 %v140
  %v172 = vpop.xlane.xlu0 %171
  %173 = vadd.xlane.f32.xlu0 %v141
  %v174 = vpop.xlane.xlu0 %173
  %v175 = vsel %vm87, %v142, 0.0
  %176 = vadd.xlane.f32.xlu0 %v175
  %v177 = vpop.xlane.xlu0 %176
  %v178 = vmul.f32 %v144, %v91
  %v179 = vmul.f32 %v146, %v91
  %v180 = vmul.f32 %v148, %v91
  %v181 = vmul.f32 %v150, %v91
  %v182 = vmul.f32 %v152, %v91
  %v183 = vmul.f32 %v154, %v91
  %v184 = vmul.f32 %v156, %v91
  %v185 = vmul.f32 %v158, %v91
  %v186 = vmul.f32 %v160, %v91
  %v187 = vmul.f32 %v162, %v91
  %v188 = vmul.f32 %v164, %v91
  %v189 = vmul.f32 %v166, %v91
  %v190 = vmul.f32 %v168, %v91
  %v191 = vmul.f32 %v170, %v91
  %v192 = vmul.f32 %v172, %v91
  %v193 = vmul.f32 %v174, %v91
  %v194 = vmul.f32 %v177, %v91
  %v195 = vadd.f32 %v178, 1e-06
  %v196 = vadd.f32 %v179, 1e-06
  %v197 = vadd.f32 %v180, 1e-06
  %v198 = vadd.f32 %v181, 1e-06
  %v199 = vadd.f32 %v182, 1e-06
  %v200 = vadd.f32 %v183, 1e-06
  %v201 = vadd.f32 %v184, 1e-06
  %v202 = vadd.f32 %v185, 1e-06
  %v203 = vadd.f32 %v186, 1e-06
  %v204 = vadd.f32 %v187, 1e-06
  %v205 = vadd.f32 %v188, 1e-06
  %v206 = vadd.f32 %v189, 1e-06
  %v207 = vadd.f32 %v190, 1e-06
  %v208 = vadd.f32 %v191, 1e-06
  %v209 = vadd.f32 %v192, 1e-06
  %v210 = vadd.f32 %v193, 1e-06
  %v211 = vadd.f32 %v194, 1e-06
  %v212 = vrsqrt.pop %v195
  %v213 = vrsqrt.pop %v196
  %v214 = vrsqrt.pop %v197
  %v215 = vrsqrt.pop %v198
  %v216 = vrsqrt.pop %v199
  %v217 = vrsqrt.pop %v200
  %v218 = vrsqrt.pop %v201
  %v219 = vrsqrt.pop %v202
  %v220 = vrsqrt.pop %v203
  %v221 = vrsqrt.pop %v204
  %v222 = vrsqrt.pop %v205
  %v223 = vrsqrt.pop %v206
  %v224 = vrsqrt.pop %v207
  %v225 = vrsqrt.pop %v208
  %v226 = vrsqrt.pop %v209
  %v227 = vrsqrt.pop %v210
  %v228 = vrsqrt.pop %v211
  %v229 = vmul.f32 %v109, %v212
  %v230 = vmul.f32 %v110, %v213
  %v231 = vmul.f32 %v111, %v214
  %v232 = vmul.f32 %v112, %v215
  %v233 = vmul.f32 %v113, %v216
  %v234 = vmul.f32 %v114, %v217
  %v235 = vmul.f32 %v115, %v218
  %v236 = vmul.f32 %v116, %v219
  %v237 = vmul.f32 %v117, %v220
  %v238 = vmul.f32 %v118, %v221
  %v239 = vmul.f32 %v119, %v222
  %v240 = vmul.f32 %v120, %v223
  %v241 = vmul.f32 %v121, %v224
  %v242 = vmul.f32 %v122, %v225
  %v243 = vmul.f32 %v123, %v226
  %v244 = vmul.f32 %v124, %v227
  %v245 = vmul.f32 %v125, %v228
  %v246 = vld [vmem:[%s1] sm:$0x1]
  %v248 = vlaneseq
  %v249 = vshrl.u32 %v248, 7
  %v250 = vsub.s32 0, %v249
  %v251 = vrot.slane %v246, %v250
  %v253 = vmul.f32 %v229, %v251
  %v254 = vmul.f32 %v230, %v251
  %v255 = vmul.f32 %v231, %v251
  %v256 = vmul.f32 %v232, %v251
  %v257 = vmul.f32 %v233, %v251
  %v258 = vmul.f32 %v234, %v251
  %v259 = vmul.f32 %v235, %v251
  %v260 = vmul.f32 %v236, %v251
  %v261 = vmul.f32 %v237, %v251
  %v262 = vmul.f32 %v238, %v251
  %v263 = vmul.f32 %v239, %v251
  %v264 = vmul.f32 %v240, %v251
  %v265 = vmul.f32 %v241, %v251
  %v266 = vmul.f32 %v242, %v251
  %v267 = vmul.f32 %v243, %v251
  %v268 = vmul.f32 %v244, %v251
  %v269 = vmul.f32 %v245, %v251
  %v270 = vld [vmem:[%s2] sm:$0x1]
  %v272 = vlaneseq
  %v273 = vshrl.u32 %v272, 7
  %v274 = vsub.s32 0, %v273
  %v275 = vrot.slane %v270, %v274
  %v277 = vadd.f32 %v253, %v275
  %v278 = vadd.f32 %v254, %v275
  %v279 = vadd.f32 %v255, %v275
  %v280 = vadd.f32 %v256, %v275
  %v281 = vadd.f32 %v257, %v275
  %v282 = vadd.f32 %v258, %v275
  %v283 = vadd.f32 %v259, %v275
  %v284 = vadd.f32 %v260, %v275
  %v285 = vadd.f32 %v261, %v275
  %v286 = vadd.f32 %v262, %v275
  %v287 = vadd.f32 %v263, %v275
  %v288 = vadd.f32 %v264, %v275
  %v289 = vadd.f32 %v265, %v275
  %v290 = vadd.f32 %v266, %v275
  %v291 = vadd.f32 %v267, %v275
  %v292 = vadd.f32 %v268, %v275
  %v293 = vadd.f32 %v269, %v275
  %v294 = vpack.c.bf16 %v278, %v277
  %v295 = vpack.c.bf16 %v280, %v279
  %v296 = vpack.c.bf16 %v282, %v281
  %v297 = vpack.c.bf16 %v284, %v283
  %v298 = vpack.c.bf16 %v286, %v285
  %v299 = vpack.c.bf16 %v288, %v287
  %v300 = vpack.c.bf16 %v290, %v289
  %v301 = vpack.c.bf16 %v292, %v291
  %v302 = vpack.c.bf16 %v293, %v293
  %v303 = vld [vmem:[%s3] sm:$0xff]
  %v304 = vld [vmem:[%s3 + $0x8] sm:$0xf]
  %v305 = vld [vmem:[%s3 + $0xc] sm:$0xff]
  %v306 = vld [vmem:[%s3 + $0x14] sm:$0xf]
  %v307 = vld [vmem:[%s3 + $0x18] sm:$0xff]
  %v308 = vld [vmem:[%s3 + $0x20] sm:$0xf]
  %v309 = vld [vmem:[%s3 + $0x24] sm:$0xff]
  %v310 = vld [vmem:[%s3 + $0x2c] sm:$0xf]
  %v311 = vld [vmem:[%s3 + $0x30] sm:$0xff]
  %v312 = vld [vmem:[%s3 + $0x38] sm:$0xf]
  %v313 = vld [vmem:[%s3 + $0x3c] sm:$0xff]
  %v314 = vld [vmem:[%s3 + $0x44] sm:$0xf]
  %v315 = vld [vmem:[%s3 + $0x48] sm:$0xff]
  %v316 = vld [vmem:[%s3 + $0x50] sm:$0xf]
  %v317 = vld [vmem:[%s3 + $0x54] sm:$0xff]
  %v318 = vld [vmem:[%s3 + $0x5c] sm:$0xf]
  %v319 = vld [vmem:[%s3 + $0x60] sm:$0xff]
  %v320 = vld [vmem:[%s3 + $0x68] sm:$0xf]
  %v321 = vld [vmem:[%s3 + $0x6c] sm:$0xff]
  %v322 = vld [vmem:[%s3 + $0x74] sm:$0xf]
  %v323 = vld [vmem:[%s3 + $0x78] sm:$0xff]
  %v324 = vld [vmem:[%s3 + $0x80] sm:$0xf]
  %v325 = vld [vmem:[%s3 + $0x84] sm:$0xff]
  %v326 = vld [vmem:[%s3 + $0x8c] sm:$0xf]
  %v327 = vld [vmem:[%s3 + $0x90] sm:$0xff]
  %v328 = vld [vmem:[%s3 + $0x98] sm:$0xf]
  %v329 = vld [vmem:[%s3 + $0x9c] sm:$0xff]
  %v330 = vld [vmem:[%s3 + $0xa4] sm:$0xf]
  %v331 = vld [vmem:[%s3 + $0xa8] sm:$0xff]
  %v332 = vld [vmem:[%s3 + $0xb0] sm:$0xf]
  %v333 = vld [vmem:[%s3 + $0xb4] sm:$0xff]
  %v334 = vld [vmem:[%s3 + $0xbc] sm:$0xf]
  %v335 = vld [vmem:[%s4] sm:$0x7]
  %v337 = vlaneseq
  %v338 = vshrl.u32 %v337, 7
  %v339 = vsub.s32 0, %v338
  %v340 = vrot.slane %v335, %v339
  %v341 = vlaneseq
  %v342 = vshrl.u32 %v341, 7
  %v343 = vsub.s32 1, %v342
  %v344 = vrot.slane %v335, %v343
  %v345 = vlaneseq
  %v346 = vshrl.u32 %v345, 7
  %v347 = vsub.s32 2, %v346
  %v348 = vrot.slane %v335, %v347
  %v384 = vunpack.c.l.b16 %v303
  %v385 = vunpack.c.h.b16 %v303
  %v386 = vunpack.c.l.b16 %v304
  %v387 = vunpack.c.l.b16 %v305
  %v388 = vunpack.c.h.b16 %v305
  %v389 = vunpack.c.l.b16 %v306
  %v390 = vunpack.c.l.b16 %v307
  %v391 = vunpack.c.h.b16 %v307
  %v392 = vunpack.c.l.b16 %v308
  %v393 = vunpack.c.l.b16 %v309
  %v394 = vunpack.c.h.b16 %v309
  %v395 = vunpack.c.l.b16 %v310
  %v396 = vunpack.c.l.b16 %v311
  %v397 = vunpack.c.h.b16 %v311
  %v398 = vunpack.c.l.b16 %v312
  %v399 = vunpack.c.l.b16 %v313
  %v400 = vunpack.c.h.b16 %v313
  %v401 = vunpack.c.l.b16 %v314
  %v402 = vunpack.c.l.b16 %v315
  %v403 = vunpack.c.h.b16 %v315
  %v404 = vunpack.c.l.b16 %v316
  %v405 = vunpack.c.l.b16 %v317
  %v406 = vunpack.c.h.b16 %v317
  %v407 = vunpack.c.l.b16 %v318
  %v408 = vunpack.c.l.b16 %v319
  %v409 = vunpack.c.h.b16 %v319
  %v410 = vunpack.c.l.b16 %v320
  %v411 = vunpack.c.l.b16 %v321
  %v412 = vunpack.c.h.b16 %v321
  %v413 = vunpack.c.l.b16 %v322
  %v414 = vunpack.c.l.b16 %v323
  %v415 = vunpack.c.h.b16 %v323
  %v416 = vunpack.c.l.b16 %v324
  %v417 = vunpack.c.l.b16 %v325
  %v418 = vunpack.c.h.b16 %v325
  %v419 = vunpack.c.l.b16 %v326
  %v420 = vunpack.c.l.b16 %v327
  %v421 = vunpack.c.h.b16 %v327
  %v422 = vunpack.c.l.b16 %v328
  %v423 = vunpack.c.l.b16 %v329
  %v424 = vunpack.c.h.b16 %v329
  %v425 = vunpack.c.l.b16 %v330
  %v426 = vunpack.c.l.b16 %v331
  %v427 = vunpack.c.h.b16 %v331
  %v428 = vunpack.c.l.b16 %v332
  %v429 = vunpack.c.l.b16 %v333
  %v430 = vunpack.c.h.b16 %v333
  %v431 = vunpack.c.l.b16 %v334
  %v432 = vpack.c.b16 %v387, %v384
  %v433 = vpack.c.b16 %v388, %v385
  %v434 = vpack.c.b16 %v389, %v386
  %v435 = vpack.c.b16 %v393, %v390
  %v436 = vpack.c.b16 %v394, %v391
  %v437 = vpack.c.b16 %v395, %v392
  %v438 = vpack.c.b16 %v399, %v396
  %v439 = vpack.c.b16 %v400, %v397
  %v440 = vpack.c.b16 %v401, %v398
  %v441 = vpack.c.b16 %v405, %v402
  %v442 = vpack.c.b16 %v406, %v403
  %v443 = vpack.c.b16 %v407, %v404
  %v444 = vpack.c.b16 %v411, %v408
  %v445 = vpack.c.b16 %v412, %v409
  %v446 = vpack.c.b16 %v413, %v410
  %v447 = vpack.c.b16 %v417, %v414
  %v448 = vpack.c.b16 %v418, %v415
  %v449 = vpack.c.b16 %v419, %v416
  %v450 = vpack.c.b16 %v423, %v420
  %v451 = vpack.c.b16 %v424, %v421
  %v452 = vpack.c.b16 %v425, %v422
  %v453 = vpack.c.b16 %v429, %v426
  %v454 = vpack.c.b16 %v430, %v427
  %v455 = vpack.c.b16 %v431, %v428
  %480 = vmatprep.subr.bf16.mxu0 %v433
  %481 = vmatpush1.bf16.msra.mxu0 %v432
  %482 = vmatprep.subr.bf16.mxu0 %v436
  %483 = vmatpush1.bf16.msra.mxu0 %v435
  %484 = vmatprep.subr.bf16.mxu0 %v439
  %485 = vmatpush1.bf16.msra.mxu0 %v438
  %486 = vmatprep.subr.bf16.mxu0 %v442
  %487 = vmatpush1.bf16.msra.mxu0 %v441
  %488 = vmatprep.subr.bf16.mxu0 %v445
  %489 = vmatpush1.bf16.msra.mxu0 %v444
  %490 = vmatprep.subr.bf16.mxu0 %v448
  %491 = vmatpush1.bf16.msra.mxu0 %v447
  %492 = vmatprep.subr.bf16.mxu0 %v451
  %493 = vmatpush1.bf16.msra.mxu0 %v450
  %494 = vmatprep.subr.bf16.mxu0 %v454
  %495 = vmatpush1.bf16.msra.mxu0 %v453
  %496 = vmatprep.subr.bf16.mxu0 0
  %497 = vmatpush1.bf16.msra.mxu0 0
  %498 = vmatprep.subr.bf16.mxu0 0
  %499 = vmatpush1.bf16.msra.mxu0 0
  %500 = vmatprep.subr.bf16.mxu0 0
  %501 = vmatpush1.bf16.msra.mxu0 0
  %502 = vmatprep.subr.bf16.mxu0 0
  %503 = vmatpush1.bf16.msra.mxu0 0
  %504 = vmatprep.subr.bf16.mxu0 0
  %505 = vmatpush1.bf16.msra.mxu0 0
  %506 = vmatprep.subr.bf16.mxu0 0
  %507 = vmatpush1.bf16.msra.mxu0 0
  %508 = vmatprep.subr.bf16.mxu0 0
  %509 = vmatpush1.bf16.msra.mxu0 0
  %510 = vmatprep.subr.bf16.mxu0 0
  %511 = vmatpush1.bf16.msra.mxu0 0
  %512 = vmatprep.mubr.bf16.mxu0 0
  %513 = vmatmul.mubr.bf16.gmra.mrb[0].mxu0 %v294
  %v514 = vpop.f32.mrb[0].mxu0
  %v515 = vadd.f32 %v340, %v514
  %v516 = vpop.f32.mrb[0].mxu0
  %v517 = vadd.f32 %v344, %v516
  %v518 = vpop.f32.mrb[0].mxu0
  %v519 = vadd.f32 %v340, %v518
  %v520 = vpop.f32.mrb[0].mxu0
  %v521 = vadd.f32 %v344, %v520
  %522 = vmatprep.mubr.bf16.mxu0 0
  %523 = vmatmul.mubr.bf16.gmra.mrb[0].mxu0 %v295
  %v524 = vpop.f32.mrb[0].mxu0
  %v525 = vadd.f32 %v340, %v524
  %v526 = vpop.f32.mrb[0].mxu0
  %v527 = vadd.f32 %v344, %v526
  %v528 = vpop.f32.mrb[0].mxu0
  %v529 = vadd.f32 %v340, %v528
  %v530 = vpop.f32.mrb[0].mxu0
  %v531 = vadd.f32 %v344, %v530
  %532 = vmatprep.mubr.bf16.mxu0 0
  %533 = vmatmul.mubr.bf16.gmra.mrb[0].mxu0 %v296
  %v534 = vpop.f32.mrb[0].mxu0
  %v535 = vadd.f32 %v340, %v534
  %v536 = vpop.f32.mrb[0].mxu0
  %v537 = vadd.f32 %v344, %v536
  %v538 = vpop.f32.mrb[0].mxu0
  %v539 = vadd.f32 %v340, %v538
  %v540 = vpop.f32.mrb[0].mxu0
  %v541 = vadd.f32 %v344, %v540
  %542 = vmatprep.mubr.bf16.mxu0 0
  %543 = vmatmul.mubr.bf16.gmra.mrb[0].mxu0 %v297
  %v544 = vpop.f32.mrb[0].mxu0
  %v545 = vadd.f32 %v340, %v544
  %v546 = vpop.f32.mrb[0].mxu0
  %v547 = vadd.f32 %v344, %v546
  %v548 = vpop.f32.mrb[0].mxu0
  %v549 = vadd.f32 %v340, %v548
  %v550 = vpop.f32.mrb[0].mxu0
  %v551 = vadd.f32 %v344, %v550
  %552 = vmatprep.mubr.bf16.mxu0 0
  %553 = vmatmul.mubr.bf16.gmra.mrb[0].mxu0 %v298
  %v554 = vpop.f32.mrb[0].mxu0
  %v555 = vadd.f32 %v340, %v554
  %v556 = vpop.f32.mrb[0].mxu0
  %v557 = vadd.f32 %v344, %v556
  %v558 = vpop.f32.mrb[0].mxu0
  %v559 = vadd.f32 %v340, %v558
  %v560 = vpop.f32.mrb[0].mxu0
  %v561 = vadd.f32 %v344, %v560
  %562 = vmatprep.mubr.bf16.mxu0 0
  %563 = vmatmul.mubr.bf16.gmra.mrb[0].mxu0 %v299
  %v564 = vpop.f32.mrb[0].mxu0
  %v565 = vadd.f32 %v340, %v564
  %v566 = vpop.f32.mrb[0].mxu0
  %v567 = vadd.f32 %v344, %v566
  %v568 = vpop.f32.mrb[0].mxu0
  %v569 = vadd.f32 %v340, %v568
  %v570 = vpop.f32.mrb[0].mxu0
  %v571 = vadd.f32 %v344, %v570
  %572 = vmatprep.mubr.bf16.mxu0 0
  %573 = vmatmul.mubr.bf16.gmra.mrb[0].mxu0 %v300
  %v574 = vpop.f32.mrb[0].mxu0
  %v575 = vadd.f32 %v340, %v574
  %v576 = vpop.f32.mrb[0].mxu0
  %v577 = vadd.f32 %v344, %v576
  %v578 = vpop.f32.mrb[0].mxu0
  %v579 = vadd.f32 %v340, %v578
  %v580 = vpop.f32.mrb[0].mxu0
  %v581 = vadd.f32 %v344, %v580
  %582 = vmatprep.mubr.bf16.mxu0 0
  %583 = vmatmul.mubr.bf16.gmra.mrb[0].mxu0 %v301
  %v584 = vpop.f32.mrb[0].mxu0
  %v585 = vadd.f32 %v340, %v584
  %v586 = vpop.f32.mrb[0].mxu0
  %v587 = vadd.f32 %v344, %v586
  %v588 = vpop.f32.mrb[0].mxu0
  %v589 = vadd.f32 %v340, %v588
  %v590 = vpop.f32.mrb[0].mxu0
  %v591 = vadd.f32 %v344, %v590
  %592 = vmatprep.mubr.bf16.mxu0 0
  %593 = vmatmul.mubr.bf16.gmra.mrb[0].mxu0 %v302
  %v594 = vpop.f32.mrb[0].mxu0
  %v595 = vadd.f32 %v340, %v594
  %v596 = vpop.f32.mrb[0].mxu0
  %v597 = vadd.f32 %v344, %v596
  %v598 = vpop.f32.mrb[0].mxu0
  %v599 = vpop.f32.mrb[0].mxu0
  %600 = vdwg.mxu0
  %601 = vmatprep.subr.bf16.mxu0 0
  %602 = vmatpush1.bf16.msra.mxu0 %v434
  %603 = vmatprep.subr.bf16.mxu0 0
  %604 = vmatpush1.bf16.msra.mxu0 %v437
  %605 = vmatprep.subr.bf16.mxu0 0
  %606 = vmatpush1.bf16.msra.mxu0 %v440
  %607 = vmatprep.subr.bf16.mxu0 0
  %608 = vmatpush1.bf16.msra.mxu0 %v443
  %609 = vmatprep.subr.bf16.mxu0 0
  %610 = vmatpush1.bf16.msra.mxu0 %v446
  %611 = vmatprep.subr.bf16.mxu0 0
  %612 = vmatpush1.bf16.msra.mxu0 %v449
  %613 = vmatprep.subr.bf16.mxu0 0
  %614 = vmatpush1.bf16.msra.mxu0 %v452
  %615 = vmatprep.subr.bf16.mxu0 0
  %616 = vmatpush1.bf16.msra.mxu0 %v455
  %617 = vmatprep.subr.bf16.mxu0 0
  %618 = vmatpush1.bf16.msra.mxu0 0
  %619 = vmatprep.subr.bf16.mxu0 0
  %620 = vmatpush1.bf16.msra.mxu0 0
  %621 = vmatprep.subr.bf16.mxu0 0
  %622 = vmatpush1.bf16.msra.mxu0 0
  %623 = vmatprep.subr.bf16.mxu0 0
  %624 = vmatpush1.bf16.msra.mxu0 0
  %625 = vmatprep.subr.bf16.mxu0 0
  %626 = vmatpush1.bf16.msra.mxu0 0
  %627 = vmatprep.subr.bf16.mxu0 0
  %628 = vmatpush1.bf16.msra.mxu0 0
  %629 = vmatprep.subr.bf16.mxu0 0
  %630 = vmatpush1.bf16.msra.mxu0 0
  %631 = vmatprep.subr.bf16.mxu0 0
  %632 = vmatpush1.bf16.msra.mxu0 0
  %633 = vmatprep.mubr.bf16.mxu0 0
  %634 = vmatmul.mubr.bf16.gmra.mrb[0].mxu0 %v294
  %v635 = vpop.f32.mrb[0].mxu0
  %v636 = vadd.f32 %v348, %v635
  %v637 = vpop.f32.mrb[0].mxu0
  %v638 = vpop.f32.mrb[0].mxu0
  %v639 = vadd.f32 %v348, %v638
  %v640 = vpop.f32.mrb[0].mxu0
  %641 = vmatprep.mubr.bf16.mxu0 0
  %642 = vmatmul.mubr.bf16.gmra.mrb[0].mxu0 %v295
  %v643 = vpop.f32.mrb[0].mxu0
  %v644 = vadd.f32 %v348, %v643
  %v645 = vpop.f32.mrb[0].mxu0
  %v646 = vpop.f32.mrb[0].mxu0
  %v647 = vadd.f32 %v348, %v646
  %v648 = vpop.f32.mrb[0].mxu0
  %649 = vmatprep.mubr.bf16.mxu0 0
  %650 = vmatmul.mubr.bf16.gmra.mrb[0].mxu0 %v296
  %v651 = vpop.f32.mrb[0].mxu0
  %v652 = vadd.f32 %v348, %v651
  %v653 = vpop.f32.mrb[0].mxu0
  %v654 = vpop.f32.mrb[0].mxu0
  %v655 = vadd.f32 %v348, %v654
  %v656 = vpop.f32.mrb[0].mxu0
  %657 = vmatprep.mubr.bf16.mxu0 0
  %658 = vmatmul.mubr.bf16.gmra.mrb[0].mxu0 %v297
  %v659 = vpop.f32.mrb[0].mxu0
  %v660 = vadd.f32 %v348, %v659
  %v661 = vpop.f32.mrb[0].mxu0
  %v662 = vpop.f32.mrb[0].mxu0
  %v663 = vadd.f32 %v348, %v662
  %v664 = vpop.f32.mrb[0].mxu0
  %665 = vmatprep.mubr.bf16.mxu0 0
  %666 = vmatmul.mubr.bf16.gmra.mrb[0].mxu0 %v298
  %v667 = vpop.f32.mrb[0].mxu0
  %v668 = vadd.f32 %v348, %v667
  %v669 = vpop.f32.mrb[0].mxu0
  %v670 = vpop.f32.mrb[0].mxu0
  %v671 = vadd.f32 %v348, %v670
  %v672 = vpop.f32.mrb[0].mxu0
  %673 = vmatprep.mubr.bf16.mxu0 0
  %674 = vmatmul.mubr.bf16.gmra.mrb[0].mxu0 %v299
  %v675 = vpop.f32.mrb[0].mxu0
  %v676 = vadd.f32 %v348, %v675
  %v677 = vpop.f32.mrb[0].mxu0
  %v678 = vpop.f32.mrb[0].mxu0
  %v679 = vadd.f32 %v348, %v678
  %v680 = vpop.f32.mrb[0].mxu0
  %681 = vmatprep.mubr.bf16.mxu0 0
  %682 = vmatmul.mubr.bf16.gmra.mrb[0].mxu0 %v300
  %v683 = vpop.f32.mrb[0].mxu0
  %v684 = vadd.f32 %v348, %v683
  %v685 = vpop.f32.mrb[0].mxu0
  %v686 = vpop.f32.mrb[0].mxu0
  %v687 = vadd.f32 %v348, %v686
  %v688 = vpop.f32.mrb[0].mxu0
  %689 = vmatprep.mubr.bf16.mxu0 0
  %690 = vmatmul.mubr.bf16.gmra.mrb[0].mxu0 %v301
  %v691 = vpop.f32.mrb[0].mxu0
  %v692 = vadd.f32 %v348, %v691
  %v693 = vpop.f32.mrb[0].mxu0
  %v694 = vpop.f32.mrb[0].mxu0
  %v695 = vadd.f32 %v348, %v694
  %v696 = vpop.f32.mrb[0].mxu0
  %697 = vmatprep.mubr.bf16.mxu0 0
  %698 = vmatmul.mubr.bf16.gmra.mrb[0].mxu0 %v302
  %v699 = vpop.f32.mrb[0].mxu0
  %v700 = vadd.f32 %v348, %v699
  %v701 = vpop.f32.mrb[0].mxu0
  %v702 = vpop.f32.mrb[0].mxu0
  %v703 = vpop.f32.mrb[0].mxu0
  %704 = vdwg.mxu0
  %v705 = vpack.c.bf16 %v519, %v515
  %v706 = vpack.c.bf16 %v521, %v517
  %v707 = vpack.c.bf16 %v639, %v636
  %v708 = vpack.c.bf16 %v529, %v525
  %v709 = vpack.c.bf16 %v531, %v527
  %v710 = vpack.c.bf16 %v647, %v644
  %v711 = vpack.c.bf16 %v539, %v535
  %v712 = vpack.c.bf16 %v541, %v537
  %v713 = vpack.c.bf16 %v655, %v652
  %v714 = vpack.c.bf16 %v549, %v545
  %v715 = vpack.c.bf16 %v551, %v547
  %v716 = vpack.c.bf16 %v663, %v660
  %v717 = vpack.c.bf16 %v559, %v555
  %v718 = vpack.c.bf16 %v561, %v557
  %v719 = vpack.c.bf16 %v671, %v668
  %v720 = vpack.c.bf16 %v569, %v565
  %v721 = vpack.c.bf16 %v571, %v567
  %v722 = vpack.c.bf16 %v679, %v676
  %v723 = vpack.c.bf16 %v579, %v575
  %v724 = vpack.c.bf16 %v581, %v577
  %v725 = vpack.c.bf16 %v687, %v684
  %v726 = vpack.c.bf16 %v589, %v585
  %v727 = vpack.c.bf16 %v591, %v587
  %v728 = vpack.c.bf16 %v695, %v692
  %v729 = vpack.c.bf16 %v595, %v595
  %v730 = vpack.c.bf16 %v597, %v597
  %v731 = vpack.c.bf16 %v700, %v700
  %v759 = vunpack.c.l.b16 %v705
  %v760 = vunpack.c.l.b16 %v706
  %v761 = vunpack.c.l.b16 %v707
  %v762 = vunpack.c.h.b16 %v705
  %v763 = vunpack.c.h.b16 %v706
  %v764 = vunpack.c.h.b16 %v707
  %v765 = vunpack.c.l.b16 %v708
  %v766 = vunpack.c.l.b16 %v709
  %v767 = vunpack.c.l.b16 %v710
  %v768 = vunpack.c.h.b16 %v708
  %v769 = vunpack.c.h.b16 %v709
  %v770 = vunpack.c.h.b16 %v710
  %v771 = vunpack.c.l.b16 %v711
  %v772 = vunpack.c.l.b16 %v712
  %v773 = vunpack.c.l.b16 %v713
  %v774 = vunpack.c.h.b16 %v711
  %v775 = vunpack.c.h.b16 %v712
  %v776 = vunpack.c.h.b16 %v713
  %v777 = vunpack.c.l.b16 %v714
  %v778 = vunpack.c.l.b16 %v715
  %v779 = vunpack.c.l.b16 %v716
  %v780 = vunpack.c.h.b16 %v714
  %v781 = vunpack.c.h.b16 %v715
  %v782 = vunpack.c.h.b16 %v716
  %v783 = vunpack.c.l.b16 %v717
  %v784 = vunpack.c.l.b16 %v718
  %v785 = vunpack.c.l.b16 %v719
  %v786 = vunpack.c.h.b16 %v717
  %v787 = vunpack.c.h.b16 %v718
  %v788 = vunpack.c.h.b16 %v719
  %v789 = vunpack.c.l.b16 %v720
  %v790 = vunpack.c.l.b16 %v721
  %v791 = vunpack.c.l.b16 %v722
  %v792 = vunpack.c.h.b16 %v720
  %v793 = vunpack.c.h.b16 %v721
  %v794 = vunpack.c.h.b16 %v722
  %v795 = vunpack.c.l.b16 %v723
  %v796 = vunpack.c.l.b16 %v724
  %v797 = vunpack.c.l.b16 %v725
  %v798 = vunpack.c.h.b16 %v723
  %v799 = vunpack.c.h.b16 %v724
  %v800 = vunpack.c.h.b16 %v725
  %v801 = vunpack.c.l.b16 %v726
  %v802 = vunpack.c.l.b16 %v727
  %v803 = vunpack.c.l.b16 %v728
  %v804 = vunpack.c.h.b16 %v726
  %v805 = vunpack.c.h.b16 %v727
  %v806 = vunpack.c.h.b16 %v728
  %v807 = vunpack.c.l.b16 %v729
  %v808 = vunpack.c.l.b16 %v730
  %v809 = vunpack.c.l.b16 %v731
  %v810 = vpack.c.b16 %v760, %v759
  %v811 = vpack.c.b16 %v761, %v761
  %v812 = vpack.c.b16 %v763, %v762
  %v813 = vpack.c.b16 %v764, %v764
  %v814 = vpack.c.b16 %v766, %v765
  %v815 = vpack.c.b16 %v767, %v767
  %v816 = vpack.c.b16 %v769, %v768
  %v817 = vpack.c.b16 %v770, %v770
  %v818 = vpack.c.b16 %v772, %v771
  %v819 = vpack.c.b16 %v773, %v773
  %v820 = vpack.c.b16 %v775, %v774
  %v821 = vpack.c.b16 %v776, %v776
  %v822 = vpack.c.b16 %v778, %v777
  %v823 = vpack.c.b16 %v779, %v779
  %v824 = vpack.c.b16 %v781, %v780
  %v825 = vpack.c.b16 %v782, %v782
  %v826 = vpack.c.b16 %v784, %v783
  %v827 = vpack.c.b16 %v785, %v785
  %v828 = vpack.c.b16 %v787, %v786
  %v829 = vpack.c.b16 %v788, %v788
  %v830 = vpack.c.b16 %v790, %v789
  %v831 = vpack.c.b16 %v791, %v791
  %v832 = vpack.c.b16 %v793, %v792
  %v833 = vpack.c.b16 %v794, %v794
  %v834 = vpack.c.b16 %v796, %v795
  %v835 = vpack.c.b16 %v797, %v797
  %v836 = vpack.c.b16 %v799, %v798
  %v837 = vpack.c.b16 %v800, %v800
  %v838 = vpack.c.b16 %v802, %v801
  %v839 = vpack.c.b16 %v803, %v803
  %v840 = vpack.c.b16 %v805, %v804
  %v841 = vpack.c.b16 %v806, %v806
  %v842 = vpack.c.b16 %v808, %v807
  %v843 = vpack.c.b16 %v809, %v809
  %878 = vst [vmem:[%s5] sm:$0xff] %v810
  %879 = vst [vmem:[%s5 + $0x8] sm:$0xf] %v811
  %880 = vst [vmem:[%s5 + $0xc] sm:$0xff] %v812
  %881 = vst [vmem:[%s5 + $0x14] sm:$0xf] %v813
  %882 = vst [vmem:[%s5 + $0x18] sm:$0xff] %v814
  %883 = vst [vmem:[%s5 + $0x20] sm:$0xf] %v815
  %884 = vst [vmem:[%s5 + $0x24] sm:$0xff] %v816
  %885 = vst [vmem:[%s5 + $0x2c] sm:$0xf] %v817
  %886 = vst [vmem:[%s5 + $0x30] sm:$0xff] %v818
  %887 = vst [vmem:[%s5 + $0x38] sm:$0xf] %v819
  %888 = vst [vmem:[%s5 + $0x3c] sm:$0xff] %v820
  %889 = vst [vmem:[%s5 + $0x44] sm:$0xf] %v821
  %890 = vst [vmem:[%s5 + $0x48] sm:$0xff] %v822
  %891 = vst [vmem:[%s5 + $0x50] sm:$0xf] %v823
  %892 = vst [vmem:[%s5 + $0x54] sm:$0xff] %v824
  %893 = vst [vmem:[%s5 + $0x5c] sm:$0xf] %v825
  %894 = vst [vmem:[%s5 + $0x60] sm:$0xff] %v826
  %895 = vst [vmem:[%s5 + $0x68] sm:$0xf] %v827
  %896 = vst [vmem:[%s5 + $0x6c] sm:$0xff] %v828
  %897 = vst [vmem:[%s5 + $0x74] sm:$0xf] %v829
  %898 = vst [vmem:[%s5 + $0x78] sm:$0xff] %v830
  %899 = vst [vmem:[%s5 + $0x80] sm:$0xf] %v831
  %900 = vst [vmem:[%s5 + $0x84] sm:$0xff] %v832
  %901 = vst [vmem:[%s5 + $0x8c] sm:$0xf] %v833
  %902 = vst [vmem:[%s5 + $0x90] sm:$0xff] %v834
  %903 = vst [vmem:[%s5 + $0x98] sm:$0xf] %v835
  %904 = vst [vmem:[%s5 + $0x9c] sm:$0xff] %v836
  %905 = vst [vmem:[%s5 + $0xa4] sm:$0xf] %v837
  %906 = vst [vmem:[%s5 + $0xa8] sm:$0xff] %v838
  %907 = vst [vmem:[%s5 + $0xb0] sm:$0xf] %v839
  %908 = vst [vmem:[%s5 + $0xb4] sm:$0xff] %v840
  %909 = vst [vmem:[%s5 + $0xbc] sm:$0xf] %v841
  %910 = vst [vmem:[%s5 + $0xc0] sm:$0x11] %v842
  %911 = vst [vmem:[%s5 + $0xc8] sm:$0x1] %v843
  // Predicated region
  $region22: #{_lambda_.25} parent=0 // pred_check
    _
  $region23: #{_lambda_.25} parent=0 // pred_check_branch
    %913 = sbr.rel (0) target = $region25
  $region24: #{_lambda_.25} parent=0 // pred_region
    _
  $region25: #{_lambda_.25} parent=0 // pred_fallthru
    _
  // Predicated region
  $region26: #{_lambda_.25} parent=0 // pred_check
    _
  $region27: #{_lambda_.25} parent=0 // pred_check_branch
    %915 = sbr.rel (0) target = $region29
  $region28: #{_lambda_.25} parent=0 // pred_region
    _
  $region29: #{_lambda_.25} parent=0 // pred_fallthru
    _

// kernel: _lambda_.27
$region0: #{_lambda_.27}
  #allocation0 [shape = 'u32[]', space=smem, size = 0x4, offset = 0x4, fixed_abs, tag = 'smem constant byte address 0x4 - core index']
  #allocation1 [shape = 'u32[144,128]{1,0:T(1,128)}', space=vmem, size = 0x12000, scoped, tag = 'internal scratch']
  %s0 = inlined_call_operand.vmem [shape: bf16[130,128], index: 0, kind: input, shape index: {}]
  %s1 = inlined_call_operand.vmem [shape: bf16[128,128], index: 1, kind: input, shape index: {}]
  %s2 = inlined_call_operand.vmem [shape: f32[1,128], index: 2, kind: input, shape index: {}]
  %s3 = inlined_call_operand.vmem [shape: bf16[130,128], index: 3, kind: input, shape index: {}]
  %s4 = inlined_call_operand.vmem [shape: bf16[130,128], index: 4, kind: output, shape index: {}]
  %s5 = sld [smem:[#allocation0]]
  $region26: #{_lambda_.27} parent=0
    _
  %s7 = ssub.s32 1, %s5
  %s8 = scalar_select 0, %s7, %s5
  // Predicated region
  $region2: #{_lambda_.27} parent=0 // pred_check
    _
  $region3: #{_lambda_.27} parent=0 // pred_check_branch
    %10 = sbr.rel (0) target = $region5
  $region4: #{_lambda_.27} parent=0 // pred_region
    _
  $region5: #{_lambda_.27} parent=0 // pred_fallthru
    _
  // Predicated region
  $region6: #{_lambda_.27} parent=0 // pred_check
    _
  $region7: #{_lambda_.27} parent=0 // pred_check_branch
    %12 = sbr.rel (0) target = $region9
  $region8: #{_lambda_.27} parent=0 // pred_region
    _
  $region9: #{_lambda_.27} parent=0 // pred_fallthru
    _
  // Predicated region
  $region10: #{_lambda_.27} parent=0 // pred_check
    _
  $region11: #{_lambda_.27} parent=0 // pred_check_branch
    %14 = sbr.rel (0) target = $region13
  $region12: #{_lambda_.27} parent=0 // pred_region
    _
  $region13: #{_lambda_.27} parent=0 // pred_fallthru
    _
  // Predicated region
  $region14: #{_lambda_.27} parent=0 // pred_check
    _
  $region15: #{_lambda_.27} parent=0 // pred_check_branch
    %16 = sbr.rel (0) target = $region17
  $region16: #{_lambda_.27} parent=0 // pred_region
    _
  $region17: #{_lambda_.27} parent=0 // pred_fallthru
    _
  %v18 = vld [vmem:[%s0] sm:$0xf]
  %v19 = vld [vmem:[%s0 + $0x4] sm:$0xf]
  %v20 = vld [vmem:[%s0 + $0x8] sm:$0xf]
  %v21 = vld [vmem:[%s0 + $0xc] sm:$0xf]
  %v22 = vld [vmem:[%s0 + $0x10] sm:$0xf]
  %v23 = vld [vmem:[%s0 + $0x14] sm:$0xf]
  %v24 = vld [vmem:[%s0 + $0x18] sm:$0xf]
  %v25 = vld [vmem:[%s0 + $0x1c] sm:$0xf]
  %v26 = vld [vmem:[%s0 + $0x20] sm:$0xf]
  %v27 = vld [vmem:[%s0 + $0x24] sm:$0xf]
  %v28 = vld [vmem:[%s0 + $0x28] sm:$0xf]
  %v29 = vld [vmem:[%s0 + $0x2c] sm:$0xf]
  %v30 = vld [vmem:[%s0 + $0x30] sm:$0xf]
  %v31 = vld [vmem:[%s0 + $0x34] sm:$0xf]
  %v32 = vld [vmem:[%s0 + $0x38] sm:$0xf]
  %v33 = vld [vmem:[%s0 + $0x3c] sm:$0xf]
  %v34 = vld [vmem:[%s0 + $0x40] sm:$0x1]
  %v35 = vld [vmem:[%s1] sm:$0xf]
  %v36 = vld [vmem:[%s1 + $0x4] sm:$0xf]
  %v37 = vld [vmem:[%s1 + $0x8] sm:$0xf]
  %v38 = vld [vmem:[%s1 + $0xc] sm:$0xf]
  %v39 = vld [vmem:[%s1 + $0x10] sm:$0xf]
  %v40 = vld [vmem:[%s1 + $0x14] sm:$0xf]
  %v41 = vld [vmem:[%s1 + $0x18] sm:$0xf]
  %v42 = vld [vmem:[%s1 + $0x1c] sm:$0xf]
  %v43 = vld [vmem:[%s1 + $0x20] sm:$0xf]
  %v44 = vld [vmem:[%s1 + $0x24] sm:$0xf]
  %v45 = vld [vmem:[%s1 + $0x28] sm:$0xf]
  %v46 = vld [vmem:[%s1 + $0x2c] sm:$0xf]
  %v47 = vld [vmem:[%s1 + $0x30] sm:$0xf]
  %v48 = vld [vmem:[%s1 + $0x34] sm:$0xf]
  %v49 = vld [vmem:[%s1 + $0x38] sm:$0xf]
  %v50 = vld [vmem:[%s1 + $0x3c] sm:$0xf]
  %v51 = vld [vmem:[%s2] sm:$0x1]
  %v53 = vlaneseq
  %v54 = vshrl.u32 %v53, 7
  %v55 = vsub.s32 0, %v54
  %v56 = vrot.slane %v51, %v55
  %v75 = vunpack.c.l.b16 %v18
  %v76 = vunpack.c.l.b16 %v19
  %v77 = vunpack.c.l.b16 %v20
  %v78 = vunpack.c.l.b16 %v21
  %v79 = vunpack.c.l.b16 %v22
  %v80 = vunpack.c.l.b16 %v23
  %v81 = vunpack.c.l.b16 %v24
  %v82 = vunpack.c.l.b16 %v25
  %v83 = vunpack.c.l.b16 %v26
  %v84 = vunpack.c.l.b16 %v27
  %v85 = vunpack.c.l.b16 %v28
  %v86 = vunpack.c.l.b16 %v29
  %v87 = vunpack.c.l.b16 %v30
  %v88 = vunpack.c.l.b16 %v31
  %v89 = vunpack.c.l.b16 %v32
  %v90 = vunpack.c.l.b16 %v33
  %v91 = vunpack.c.l.b16 %v34
  %v92 = vpack.c.b16 %v76, %v75
  %v93 = vpack.c.b16 %v78, %v77
  %v94 = vpack.c.b16 %v80, %v79
  %v95 = vpack.c.b16 %v82, %v81
  %v96 = vpack.c.b16 %v84, %v83
  %v97 = vpack.c.b16 %v86, %v85
  %v98 = vpack.c.b16 %v88, %v87
  %v99 = vpack.c.b16 %v90, %v89
  %v100 = vpack.c.b16 %v91, %v91
  %v126 = vunpack.c.l.b16 %v35
  %v127 = vunpack.c.l.b16 %v36
  %v128 = vunpack.c.l.b16 %v37
  %v129 = vunpack.c.l.b16 %v38
  %v130 = vunpack.c.l.b16 %v39
  %v131 = vunpack.c.l.b16 %v40
  %v132 = vunpack.c.l.b16 %v41
  %v133 = vunpack.c.l.b16 %v42
  %v134 = vunpack.c.l.b16 %v43
  %v135 = vunpack.c.l.b16 %v44
  %v136 = vunpack.c.l.b16 %v45
  %v137 = vunpack.c.l.b16 %v46
  %v138 = vunpack.c.l.b16 %v47
  %v139 = vunpack.c.l.b16 %v48
  %v140 = vunpack.c.l.b16 %v49
  %v141 = vunpack.c.l.b16 %v50
  %v142 = vpack.c.b16 %v127, %v126
  %v143 = vpack.c.b16 %v129, %v128
  %v144 = vpack.c.b16 %v131, %v130
  %v145 = vpack.c.b16 %v133, %v132
  %v146 = vpack.c.b16 %v135, %v134
  %v147 = vpack.c.b16 %v137, %v136
  %v148 = vpack.c.b16 %v139, %v138
  %v149 = vpack.c.b16 %v141, %v140
  %158 = vmatprep.subr.bf16.mxu0 0
  %159 = vmatpush1.bf16.msra.mxu0 %v142
  %160 = vmatprep.subr.bf16.mxu0 0
  %161 = vmatpush1.bf16.msra.mxu0 %v143
  %162 = vmatprep.subr.bf16.mxu0 0
  %163 = vmatpush1.bf16.msra.mxu0 %v144
  %164 = vmatprep.subr.bf16.mxu0 0
  %165 = vmatpush1.bf16.msra.mxu0 %v145
  %166 = vmatprep.subr.bf16.mxu0 0
  %167 = vmatpush1.bf16.msra.mxu0 %v146
  %168 = vmatprep.subr.bf16.mxu0 0
  %169 = vmatpush1.bf16.msra.mxu0 %v147
  %170 = vmatprep.subr.bf16.mxu0 0
  %171 = vmatpush1.bf16.msra.mxu0 %v148
  %172 = vmatprep.subr.bf16.mxu0 0
  %173 = vmatpush1.bf16.msra.mxu0 %v149
  %174 = vmatprep.subr.bf16.mxu0 0
  %175 = vmatpush1.bf16.msra.mxu0 0
  %176 = vmatprep.subr.bf16.mxu0 0
  %177 = vmatpush1.bf16.msra.mxu0 0
  %178 = vmatprep.subr.bf16.mxu0 0
  %179 = vmatpush1.bf16.msra.mxu0 0
  %180 = vmatprep.subr.bf16.mxu0 0
  %181 = vmatpush1.bf16.msra.mxu0 0
  %182 = vmatprep.subr.bf16.mxu0 0
  %183 = vmatpush1.bf16.msra.mxu0 0
  %184 = vmatprep.subr.bf16.mxu0 0
  %185 = vmatpush1.bf16.msra.mxu0 0
  %186 = vmatprep.subr.bf16.mxu0 0
  %187 = vmatpush1.bf16.msra.mxu0 0
  %188 = vmatprep.subr.bf16.mxu0 0
  %189 = vmatpush1.bf16.msra.mxu0 0
  %190 = vmatprep.mubr.bf16.mxu0 0
  %191 = vmatmul.mubr.bf16.gmra.mrb[0].mxu0 %v92
  %v192 = vpop.f32.mrb[0].mxu0
  %v193 = vadd.f32 %v56, %v192
  %v194 = vpop.f32.mrb[0].mxu0
  %v195 = vpop.f32.mrb[0].mxu0
  %v196 = vadd.f32 %v56, %v195
  %v197 = vpop.f32.mrb[0].mxu0
  %198 = vmatprep.mubr.bf16.mxu0 0
  %199 = vmatmul.mubr.bf16.gmra.mrb[0].mxu0 %v93
  %v200 = vpop.f32.mrb[0].mxu0
  %v201 = vadd.f32 %v56, %v200
  %v202 = vpop.f32.mrb[0].mxu0
  %v203 = vpop.f32.mrb[0].mxu0
  %v204 = vadd.f32 %v56, %v203
  %v205 = vpop.f32.mrb[0].mxu0
  %206 = vmatprep.mubr.bf16.mxu0 0
  %207 = vmatmul.mubr.bf16.gmra.mrb[0].mxu0 %v94
  %v208 = vpop.f32.mrb[0].mxu0
  %v209 = vadd.f32 %v56, %v208
  %v210 = vpop.f32.mrb[0].mxu0
  %v211 = vpop.f32.mrb[0].mxu0
  %v212 = vadd.f32 %v56, %v211
  %v213 = vpop.f32.mrb[0].mxu0
  %214 = vmatprep.mubr.bf16.mxu0 0
  %215 = vmatmul.mubr.bf16.gmra.mrb[0].mxu0 %v95
  %v216 = vpop.f32.mrb[0].mxu0
  %v217 = vadd.f32 %v56, %v216
  %v218 = vpop.f32.mrb[0].mxu0
  %v219 = vpop.f32.mrb[0].mxu0
  %v220 = vadd.f32 %v56, %v219
  %v221 = vpop.f32.mrb[0].mxu0
  %222 = vmatprep.mubr.bf16.mxu0 0
  %223 = vmatmul.mubr.bf16.gmra.mrb[0].mxu0 %v96
  %v224 = vpop.f32.mrb[0].mxu0
  %v225 = vadd.f32 %v56, %v224
  %v226 = vpop.f32.mrb[0].mxu0
  %v227 = vpop.f32.mrb[0].mxu0
  %v228 = vadd.f32 %v56, %v227
  %v229 = vpop.f32.mrb[0].mxu0
  %230 = vmatprep.mubr.bf16.mxu0 0
  %231 = vmatmul.mubr.bf16.gmra.mrb[0].mxu0 %v97
  %v232 = vpop.f32.mrb[0].mxu0
  %v233 = vadd.f32 %v56, %v232
  %v234 = vpop.f32.mrb[0].mxu0
  %v235 = vpop.f32.mrb[0].mxu0
  %v236 = vadd.f32 %v56, %v235
  %v237 = vpop.f32.mrb[0].mxu0
  %238 = vmatprep.mubr.bf16.mxu0 0
  %239 = vmatmul.mubr.bf16.gmra.mrb[0].mxu0 %v98
  %v240 = vpop.f32.mrb[0].mxu0
  %v241 = vadd.f32 %v56, %v240
  %v242 = vpop.f32.mrb[0].mxu0
  %v243 = vpop.f32.mrb[0].mxu0
  %v244 = vadd.f32 %v56, %v243
  %v245 = vpop.f32.mrb[0].mxu0
  %246 = vmatprep.mubr.bf16.mxu0 0
  %247 = vmatmul.mubr.bf16.gmra.mrb[0].mxu0 %v99
  %v248 = vpop.f32.mrb[0].mxu0
  %v249 = vadd.f32 %v56, %v248
  %v250 = vpop.f32.mrb[0].mxu0
  %v251 = vpop.f32.mrb[0].mxu0
  %v252 = vadd.f32 %v56, %v251
  %v253 = vpop.f32.mrb[0].mxu0
  %254 = vmatprep.mubr.bf16.mxu0 0
  %255 = vmatmul.mubr.bf16.gmra.mrb[0].mxu0 %v100
  %v256 = vpop.f32.mrb[0].mxu0
  %v257 = vadd.f32 %v56, %v256
  %v258 = vpop.f32.mrb[0].mxu0
  %v259 = vpop.f32.mrb[0].mxu0
  %v260 = vpop.f32.mrb[0].mxu0
  %261 = vdwg.mxu0
  %v262 = vld [vmem:[%s3] sm:$0xf]
  %v263 = vld [vmem:[%s3 + $0x4] sm:$0xf]
  %v264 = vld [vmem:[%s3 + $0x8] sm:$0xf]
  %v265 = vld [vmem:[%s3 + $0xc] sm:$0xf]
  %v266 = vld [vmem:[%s3 + $0x10] sm:$0xf]
  %v267 = vld [vmem:[%s3 + $0x14] sm:$0xf]
  %v268 = vld [vmem:[%s3 + $0x18] sm:$0xf]
  %v269 = vld [vmem:[%s3 + $0x1c] sm:$0xf]
  %v270 = vld [vmem:[%s3 + $0x20] sm:$0xf]
  %v271 = vld [vmem:[%s3 + $0x24] sm:$0xf]
  %v272 = vld [vmem:[%s3 + $0x28] sm:$0xf]
  %v273 = vld [vmem:[%s3 + $0x2c] sm:$0xf]
  %v274 = vld [vmem:[%s3 + $0x30] sm:$0xf]
  %v275 = vld [vmem:[%s3 + $0x34] sm:$0xf]
  %v276 = vld [vmem:[%s3 + $0x38] sm:$0xf]
  %v277 = vld [vmem:[%s3 + $0x3c] sm:$0xf]
  %v278 = vld [vmem:[%s3 + $0x40] sm:$0x1]
  %v279 = vunpack.c.l.bf16 %v262
  %v280 = vunpack.c.l.bf16 %v263
  %v281 = vunpack.c.l.bf16 %v264
  %v282 = vunpack.c.l.bf16 %v265
  %v283 = vunpack.c.l.bf16 %v266
  %v284 = vunpack.c.l.bf16 %v267
  %v285 = vunpack.c.l.bf16 %v268
  %v286 = vunpack.c.l.bf16 %v269
  %v287 = vunpack.c.l.bf16 %v270
  %v288 = vunpack.c.l.bf16 %v271
  %v289 = vunpack.c.l.bf16 %v272
  %v290 = vunpack.c.l.bf16 %v273
  %v291 = vunpack.c.l.bf16 %v274
  %v292 = vunpack.c.l.bf16 %v275
  %v293 = vunpack.c.l.bf16 %v276
  %v294 = vunpack.c.l.bf16 %v277
  %v295 = vunpack.c.l.bf16 %v278
  %v296 = vadd.f32 %v193, %v279
  %v297 = vadd.f32 %v196, %v280
  %v298 = vadd.f32 %v201, %v281
  %v299 = vadd.f32 %v204, %v282
  %v300 = vadd.f32 %v209, %v283
  %v301 = vadd.f32 %v212, %v284
  %v302 = vadd.f32 %v217, %v285
  %v303 = vadd.f32 %v220, %v286
  %v304 = vadd.f32 %v225, %v287
  %v305 = vadd.f32 %v228, %v288
  %v306 = vadd.f32 %v233, %v289
  %v307 = vadd.f32 %v236, %v290
  %v308 = vadd.f32 %v241, %v291
  %v309 = vadd.f32 %v244, %v292
  %v310 = vadd.f32 %v249, %v293
  %v311 = vadd.f32 %v252, %v294
  %v312 = vadd.f32 %v257, %v295
  %v313 = vpack.c.bf16 %v297, %v296
  %v314 = vpack.c.bf16 %v299, %v298
  %v315 = vpack.c.bf16 %v301, %v300
  %v316 = vpack.c.bf16 %v303, %v302
  %v317 = vpack.c.bf16 %v305, %v304
  %v318 = vpack.c.bf16 %v307, %v306
  %v319 = vpack.c.bf16 %v309, %v308
  %v320 = vpack.c.bf16 %v311, %v310
  %v321 = vpack.c.bf16 %v312, %v312
  %v331 = vunpack.c.l.b16 %v313
  %v332 = vunpack.c.h.b16 %v313
  %v333 = vunpack.c.l.b16 %v314
  %v334 = vunpack.c.h.b16 %v314
  %v335 = vunpack.c.l.b16 %v315
  %v336 = vunpack.c.h.b16 %v315
  %v337 = vunpack.c.l.b16 %v316
  %v338 = vunpack.c.h.b16 %v316
  %v339 = vunpack.c.l.b16 %v317
  %v340 = vunpack.c.h.b16 %v317
  %v341 = vunpack.c.l.b16 %v318
  %v342 = vunpack.c.h.b16 %v318
  %v343 = vunpack.c.l.b16 %v319
  %v344 = vunpack.c.h.b16 %v319
  %v345 = vunpack.c.l.b16 %v320
  %v346 = vunpack.c.h.b16 %v320
  %v347 = vunpack.c.l.b16 %v321
  %v348 = vpack.c.b16 %v331, %v331
  %v349 = vpack.c.b16 %v332, %v332
  %v350 = vpack.c.b16 %v333, %v333
  %v351 = vpack.c.b16 %v334, %v334
  %v352 = vpack.c.b16 %v335, %v335
  %v353 = vpack.c.b16 %v336, %v336
  %v354 = vpack.c.b16 %v337, %v337
  %v355 = vpack.c.b16 %v338, %v338
  %v356 = vpack.c.b16 %v339, %v339
  %v357 = vpack.c.b16 %v340, %v340
  %v358 = vpack.c.b16 %v341, %v341
  %v359 = vpack.c.b16 %v342, %v342
  %v360 = vpack.c.b16 %v343, %v343
  %v361 = vpack.c.b16 %v344, %v344
  %v362 = vpack.c.b16 %v345, %v345
  %v363 = vpack.c.b16 %v346, %v346
  %v364 = vpack.c.b16 %v347, %v347
  %382 = vst [vmem:[%s4] sm:$0xf] %v348
  %383 = vst [vmem:[%s4 + $0x4] sm:$0xf] %v349
  %384 = vst [vmem:[%s4 + $0x8] sm:$0xf] %v350
  %385 = vst [vmem:[%s4 + $0xc] sm:$0xf] %v351
  %386 = vst [vmem:[%s4 + $0x10] sm:$0xf] %v352
  %387 = vst [vmem:[%s4 + $0x14] sm:$0xf] %v353
  %388 = vst [vmem:[%s4 + $0x18] sm:$0xf] %v354
  %389 = vst [vmem:[%s4 + $0x1c] sm:$0xf] %v355
  %390 = vst [vmem:[%s4 + $0x20] sm:$0xf] %v356
  %391 = vst [vmem:[%s4 + $0x24] sm:$0xf] %v357
  %392 = vst [vmem:[%s4 + $0x28] sm:$0xf] %v358
  %393 = vst [vmem:[%s4 + $0x2c] sm:$0xf] %v359
  %394 = vst [vmem:[%s4 + $0x30] sm:$0xf] %v360
  %395 = vst [vmem:[%s4 + $0x34] sm:$0xf] %v361
  %396 = vst [vmem:[%s4 + $0x38] sm:$0xf] %v362
  %397 = vst [vmem:[%s4 + $0x3c] sm:$0xf] %v363
  %398 = vst [vmem:[%s4 + $0x40] sm:$0x1] %v364
  // Predicated region
  $region18: #{_lambda_.27} parent=0 // pred_check
    _
  $region19: #{_lambda_.27} parent=0 // pred_check_branch
    %400 = sbr.rel (0) target = $region21
  $region20: #{_lambda_.27} parent=0 // pred_region
    _
  $region21: #{_lambda_.27} parent=0 // pred_fallthru
    _
  // Predicated region
  $region22: #{_lambda_.27} parent=0 // pred_check
    _
  $region23: #{_lambda_.27} parent=0 // pred_check_branch
    %402 = sbr.rel (0) target = $region25
  $region24: #{_lambda_.27} parent=0 // pred_region
    _
  $region25: #{_lambda_.27} parent=0 // pred_fallthru
    _

// kernel: _lambda_.26
$region0: #{_lambda_.26}
  #allocation0 [shape = 'u32[]', space=smem, size = 0x4, offset = 0x4, fixed_abs, tag = 'smem constant byte address 0x4 - core index']
  #allocation1 [shape = 'u32[144,128]{1,0:T(1,128)}', space=vmem, size = 0x12000, scoped, tag = 'internal scratch']
  %s0 = inlined_call_operand.vmem [shape: bf16[2,65,384], index: 0, kind: input, shape index: {}]
  %s1 = inlined_call_operand.vmem [shape: bf16[2,65,128], index: 1, kind: output, shape index: {}]
  %s2 = sld [smem:[#allocation0]]
  $region37: #{_lambda_.26} parent=0
    _
  %s4 = ssub.s32 1, %s2
  %s5 = scalar_select 0, %s4, %s2
  loop: start=0, step=1, limit=4
  $region2: #{_lambda_.26} parent=0 // loop_pre_header
    _
  $region3: #{_lambda_.26} parent=0 // loop_header
    %s7 = sphi 0, %s11
    %p8 = scmp.ge.s32.totalorder %s7, 4
    %s17 = sphi 0, %s19
    %s20 = sphi 0, %s17
    %s21 = sphi 0, %s20
    %s37 = sphi 0, %s21
    %s43 = sphi 0, %s45
    %s46 = sphi 0, %s43
    %s47 = sphi 0, %s46
    %s63 = sphi 0, %s47
  $region4: #{_lambda_.26} parent=0 // loop_header_branch
    %10 = sbr.rel (%p8) target = $region8
  $region5: #{_lambda_.26} parent=0 // loop_body
    %s12 = ssub.s32 %s7, 1
    %s13 = ssub.s32 %s7, 2
    %s14 = sadd.s32 %s7, 1
    %s15 = ssub.s32 %s7, %s14
    %p16 = scmp.eq.s32.totalorder %s15, 0
    %s18 = sadd.s32 %s17, 1
    %s19 = scalar_select %p16, %s17, %s18
    %p22 = pneg %p16
    %p23 = scmp.eq.s32.totalorder %s7, 1
    %p24 = por %p22, %p23
    %p25 = scmp.ne.s32.totalorder %s17, %s20
    %p26 = scmp.eq.s32.totalorder %s7, 0
    %p27 = por %p25, %p26
    %p28 = scmp.ne.s32.totalorder %s17, %s20
    %p29 = scmp.eq.s32.totalorder %s12, 1
    %p30 = por %p28, %p29
    %p31 = scmp.ne.s32.totalorder %s20, %s21
    %p32 = scmp.eq.s32.totalorder %s12, 0
    %p33 = por %p31, %p32
    %p34 = scmp.ne.s32.totalorder %s20, %s21
    %p35 = scmp.eq.s32.totalorder %s13, 1
    %p36 = por %p34, %p35
    %p38 = scmp.ne.s32.totalorder %s21, %s37
    %p39 = scmp.eq.s32.totalorder %s13, 0
    %p40 = por %p38, %p39
    %s41 = ssub.s32 %s7, %s14
    %p42 = scmp.eq.s32.totalorder %s41, 0
    %s44 = sadd.s32 %s43, 1
    %s45 = scalar_select %p42, %s43, %s44
    %p48 = pneg %p42
    %p49 = scmp.eq.s32.totalorder %s7, 1
    %p50 = por %p48, %p49
    %p51 = scmp.ne.s32.totalorder %s43, %s46
    %p52 = scmp.eq.s32.totalorder %s7, 0
    %p53 = por %p51, %p52
    %p54 = scmp.ne.s32.totalorder %s43, %s46
    %p55 = scmp.eq.s32.totalorder %s12, 1
    %p56 = por %p54, %p55
    %p57 = scmp.ne.s32.totalorder %s46, %s47
    %p58 = scmp.eq.s32.totalorder %s12, 0
    %p59 = por %p57, %p58
    %p60 = scmp.ne.s32.totalorder %s46, %s47
    %p61 = scmp.eq.s32.totalorder %s13, 1
    %p62 = por %p60, %p61
    %p64 = scmp.ne.s32.totalorder %s47, %s63
    %p65 = scmp.eq.s32.totalorder %s13, 0
    %p66 = por %p64, %p65
    %p67 = scmp.le.s32.totalorder 1, %s7
    %p68 = scmp.lt.s32.totalorder %s7, 3
    %p69 = pnand %p67, %p68
    %p70 = pneg %p69
    // Predicated region
    $region9: #{_lambda_.26} parent=5 // pred_check
      _
    $region10: #{_lambda_.26} parent=5 // pred_check_branch
      %72 = sbr.rel (%p69) target = $region12
    $region11: #{_lambda_.26} parent=5 // pred_region
      %s73 = ssub.s32 %s7, 1
    $region12: #{_lambda_.26} parent=5 // pred_fallthru
      _
    %p74 = scmp.lt.s32.totalorder %s7, 2
    // Predicated region
    $region13: #{_lambda_.26} parent=5 // pred_check
      %p75 = pneg %p74
    $region14: #{_lambda_.26} parent=5 // pred_check_branch
      %77 = sbr.rel (%p75) target = $region16
    $region15: #{_lambda_.26} parent=5 // pred_region
      // Predicated region
      $region17: #{_lambda_.26} parent=15 // pred_check
        %p78 = pneg %p27
      $region18: #{_lambda_.26} parent=15 // pred_check_branch
        %80 = sbr.rel (%p78) target = $region20
      $region19: #{_lambda_.26} parent=15 // pred_region
        %p81 = scmp.lt.s32.totalorder %s7, 1
        %s82 = scalar_select %p81, %s7, 1
        %s83 = smul.addr %s82, 27
        %s84 = smul.addr %s83, 4
        %s85 = scalar_lea.vmem %s0, %s84
      $region20: #{_lambda_.26} parent=15 // pred_fallthru
        _
    $region16: #{_lambda_.26} parent=5 // pred_fallthru
      _
    %p86 = scmp.le.s32.totalorder 1, %s7
    %p87 = scmp.lt.s32.totalorder %s7, 3
    %p88 = pnand %p86, %p87
    %p89 = pneg %p88
    // Predicated region
    $region21: #{_lambda_.26} parent=5 // pred_check
      _
    $region22: #{_lambda_.26} parent=5 // pred_check_branch
      %91 = sbr.rel (%p88) target = $region24
    $region23: #{_lambda_.26} parent=5 // pred_region
      %s92 = ssub.s32 %s7, 1
      %p93 = scmp.lt.s32.totalorder %s12, 1
      %s94 = scalar_select %p93, %s12, 1
      %s95 = smul.addr %s94, 27
      %s96 = smul.addr %s95, 4
      %s97 = scalar_lea.vmem %s0, %s96
      %p98 = pneg %p33
      %p99 = pneg %p30
      %p100 = pneg %p59
      %p101 = pneg %p56
      %p102 = scmp.lt.s32.totalorder %s12, 1
      %s103 = scalar_select %p102, %s12, 1
      %s104 = smul.addr %s103, 9
      %s105 = smul.addr %s104, 4
      %s106 = scalar_lea.vmem %s1, %s105
      %p107 = scmp.lt.s32.totalorder %s12, 1
      %s108 = scalar_select %p107, %s12, 1
      %s109 = smul.addr %s108, 27
      %s110 = smul.addr %s109, 4
      %s111 = scalar_lea.vmem %s0, %s110
      %p112 = scmp.lt.s32.totalorder %s12, 1
      %s113 = scalar_select %p112, %s12, 1
      %s114 = smul.addr %s113, 9
      %s115 = smul.addr %s114, 4
      %s116 = scalar_lea.vmem %s1, %s115
      %v118 = vld [vmem:[%s111] sm:$0xff]
      %v119 = vld [vmem:[%s111 + $0x8] sm:$0xf]
      %v120 = vld [vmem:[%s111 + $0xc] sm:$0xff]
      %v121 = vld [vmem:[%s111 + $0x14] sm:$0xf]
      %v122 = vld [vmem:[%s111 + $0x18] sm:$0xff]
      %v123 = vld [vmem:[%s111 + $0x20] sm:$0xf]
      %v124 = vld [vmem:[%s111 + $0x24] sm:$0xff]
      %v125 = vld [vmem:[%s111 + $0x2c] sm:$0xf]
      %v126 = vld [vmem:[%s111 + $0x30] sm:$0xff]
      %v127 = vld [vmem:[%s111 + $0x38] sm:$0xf]
      %v128 = vld [vmem:[%s111 + $0x3c] sm:$0xff]
      %v129 = vld [vmem:[%s111 + $0x44] sm:$0xf]
      %v130 = vld [vmem:[%s111 + $0x48] sm:$0xff]
      %v131 = vld [vmem:[%s111 + $0x50] sm:$0xf]
      %v132 = vld [vmem:[%s111 + $0x54] sm:$0xff]
      %v133 = vld [vmem:[%s111 + $0x5c] sm:$0xf]
      %v134 = vld [vmem:[%s111 + $0x60] sm:$0x11]
      %v135 = vld [vmem:[%s111 + $0x68] sm:$0x1]
      %v145 = vunpack.c.l.b16 %v118
      %v146 = vunpack.c.l.b16 %v120
      %v147 = vunpack.c.l.b16 %v122
      %v148 = vunpack.c.l.b16 %v124
      %v149 = vunpack.c.l.b16 %v126
      %v150 = vunpack.c.l.b16 %v128
      %v151 = vunpack.c.l.b16 %v130
      %v152 = vunpack.c.l.b16 %v132
      %v153 = vunpack.c.l.b16 %v134
      %v154 = vpack.c.b16 %v146, %v145
      %v155 = vpack.c.b16 %v148, %v147
      %v156 = vpack.c.b16 %v150, %v149
      %v157 = vpack.c.b16 %v152, %v151
      %v158 = vpack.c.b16 %v153, %v153
      %v159 = vunpack.c.h.b16 %v118
      %v160 = vunpack.c.h.b16 %v120
      %v161 = vunpack.c.h.b16 %v122
      %v162 = vunpack.c.h.b16 %v124
      %v163 = vunpack.c.h.b16 %v126
      %v164 = vunpack.c.h.b16 %v128
      %v165 = vunpack.c.h.b16 %v130
      %v166 = vunpack.c.h.b16 %v132
      %v167 = vunpack.c.h.b16 %v134
      %v168 = vpack.c.b16 %v160, %v159
      %v169 = vpack.c.b16 %v162, %v161
      %v170 = vpack.c.b16 %v164, %v163
      %v171 = vpack.c.b16 %v166, %v165
      %v172 = vpack.c.b16 %v167, %v167
      %vm173 = vcmask 261120
      %v175 = vsel %vm173, %v154, 0
      %v178 = vsel %vm173, %v155, 0
      %v181 = vsel %vm173, %v156, 0
      %v184 = vsel %vm173, %v157, 0
      %v187 = vsel %vm173, %v158, 0
      %v190 = vsel %vm173, %v168, 0
      %v193 = vsel %vm173, %v169, 0
      %v196 = vsel %vm173, %v170, 0
      %v199 = vsel %vm173, %v171, 0
      %v202 = vsel %vm173, %v172, 0
      %204 = vmatprep.subr.bf16.mxu0 0
      %205 = vmatpush1.bf16.xpose.msra.mxu0 %v190
      %206 = vmatprep.subr.bf16.mxu0 0
      %207 = vmatpush1.bf16.xpose.msra.mxu0 %v193
      %208 = vmatprep.subr.bf16.mxu0 0
      %209 = vmatpush1.bf16.xpose.msra.mxu0 %v196
      %210 = vmatprep.subr.bf16.mxu0 0
      %211 = vmatpush1.bf16.xpose.msra.mxu0 %v199
      %212 = vmatprep.subr.bf16.mxu0 0
      %213 = vmatpush1.bf16.xpose.msra.mxu0 %v202
      %214 = vmatprep.subr.bf16.mxu0 0
      %215 = vmatpush1.bf16.xpose.msra.mxu0 0
      %216 = vmatprep.subr.bf16.mxu0 0
      %217 = vmatpush1.bf16.xpose.msra.mxu0 0
      %218 = vmatprep.subr.bf16.mxu0 0
      %219 = vmatpush1.bf16.xpose.msra.mxu0 0
      %220 = vmatprep.subr.bf16.mxu0 0
      %221 = vmatpush1.bf16.xpose.msra.mxu0 0
      %222 = vmatprep.subr.bf16.mxu0 0
      %223 = vmatpush1.bf16.xpose.msra.mxu0 0
      %224 = vmatprep.subr.bf16.mxu0 0
      %225 = vmatpush1.bf16.xpose.msra.mxu0 0
      %226 = vmatprep.subr.bf16.mxu0 0
      %227 = vmatpush1.bf16.xpose.msra.mxu0 0
      %228 = vmatprep.subr.bf16.mxu0 0
      %229 = vmatpush1.bf16.xpose.msra.mxu0 0
      %230 = vmatprep.subr.bf16.mxu0 0
      %231 = vmatpush1.bf16.xpose.msra.mxu0 0
      %232 = vmatprep.subr.bf16.mxu0 0
      %233 = vmatpush1.bf16.xpose.msra.mxu0 0
      %234 = vmatprep.subr.bf16.mxu0 0
      %235 = vmatpush1.bf16.xpose.msra.mxu0 0
      %236 = vmatprep.mubr.bf16.mxu0 0
      %237 = vmatmul.mubr.bf16.gmra.mrb[0].mxu0 %v175
      %v238 = vpop.f32.mrb[0].mxu0
      %v239 = vadd.f32 0.0, %v238
      %v240 = vpop.f32.mrb[0].mxu0
      %v241 = vpop.f32.mrb[0].mxu0
      %v242 = vadd.f32 0.0, %v241
      %v243 = vpop.f32.mrb[0].mxu0
      %244 = vmatprep.mubr.bf16.mxu0 0
      %245 = vmatmul.mubr.bf16.gmra.mrb[0].mxu0 %v178
      %v246 = vpop.f32.mrb[0].mxu0
      %v247 = vadd.f32 0.0, %v246
      %v248 = vpop.f32.mrb[0].mxu0
      %v249 = vpop.f32.mrb[0].mxu0
      %v250 = vadd.f32 0.0, %v249
      %v251 = vpop.f32.mrb[0].mxu0
      %252 = vmatprep.mubr.bf16.mxu0 0
      %253 = vmatmul.mubr.bf16.gmra.mrb[0].mxu0 %v181
      %v254 = vpop.f32.mrb[0].mxu0
      %v255 = vadd.f32 0.0, %v254
      %v256 = vpop.f32.mrb[0].mxu0
      %v257 = vpop.f32.mrb[0].mxu0
      %v258 = vadd.f32 0.0, %v257
      %v259 = vpop.f32.mrb[0].mxu0
      %260 = vmatprep.mubr.bf16.mxu0 0
      %261 = vmatmul.mubr.bf16.gmra.mrb[0].mxu0 %v184
      %v262 = vpop.f32.mrb[0].mxu0
      %v263 = vadd.f32 0.0, %v262
      %v264 = vpop.f32.mrb[0].mxu0
      %v265 = vpop.f32.mrb[0].mxu0
      %v266 = vadd.f32 0.0, %v265
      %v267 = vpop.f32.mrb[0].mxu0
      %268 = vmatprep.mubr.bf16.mxu0 0
      %269 = vmatmul.mubr.bf16.gmra.mrb[0].mxu0 %v187
      %v270 = vpop.f32.mrb[0].mxu0
      %v271 = vadd.f32 0.0, %v270
      %v272 = vpop.f32.mrb[0].mxu0
      %v273 = vpop.f32.mrb[0].mxu0
      %v274 = vpop.f32.mrb[0].mxu0
      %275 = vdwg.mxu0
      %v276 = vmul.f32 %v239, 0.17677669
      %v277 = vmul.f32 %v242, 0.17677669
      %v278 = vmul.f32 %v247, 0.17677669
      %v279 = vmul.f32 %v250, 0.17677669
      %v280 = vmul.f32 %v255, 0.17677669
      %v281 = vmul.f32 %v258, 0.17677669
      %v282 = vmul.f32 %v263, 0.17677669
      %v283 = vmul.f32 %v266, 0.17677669
      %v284 = vmul.f32 %v271, 0.17677669
      %vm285 = vcmask 531456
      %v286 = vsel %vm285, %v276, -inf
      %287 = vmax.xlane.f32.xlu0 %v286
      %v288 = vpop.xlane.xlu0 %287
      %v289 = vsel %vm285, %v277, -inf
      %290 = vmax.xlane.f32.xlu0 %v289
      %v291 = vpop.xlane.xlu0 %290
      %v292 = vsel %vm285, %v278, -inf
      %293 = vmax.xlane.f32.xlu0 %v292
      %v294 = vpop.xlane.xlu0 %293
      %v295 = vsel %vm285, %v279, -inf
      %296 = vmax.xlane.f32.xlu0 %v295
      %v297 = vpop.xlane.xlu0 %296
      %v298 = vsel %vm285, %v280, -inf
      %299 = vmax.xlane.f32.xlu0 %v298
      %v300 = vpop.xlane.xlu0 %299
      %v301 = vsel %vm285, %v281, -inf
      %302 = vmax.xlane.f32.xlu0 %v301
      %v303 = vpop.xlane.xlu0 %302
      %v304 = vsel %vm285, %v282, -inf
      %305 = vmax.xlane.f32.xlu0 %v304
      %v306 = vpop.xlane.xlu0 %305
      %v307 = vsel %vm285, %v283, -inf
      %308 = vmax.xlane.f32.xlu0 %v307
      %v309 = vpop.xlane.xlu0 %308
      %vm310 = vcmask 524288
      %v311 = vsel %vm310, %v284, -inf
      %312 = vmax.xlane.f32.xlu0 %v311
      %v313 = vpop.xlane.xlu0 %312
      %v314 = vsub.f32 %v276, %v288
      %v315 = vsub.f32 %v277, %v291
      %v316 = vsub.f32 %v278, %v294
      %v317 = vsub.f32 %v279, %v297
      %v318 = vsub.f32 %v280, %v300
      %v319 = vsub.f32 %v281, %v303
      %v320 = vsub.f32 %v282, %v306
      %v321 = vsub.f32 %v283, %v309
      %v322 = vsub.f32 %v284, %v313
      %v323 = vmul.f32 %v314, 1.442695
      %v324 = vpow.pop %v323
      %v325 = vmul.f32 %v315, 1.442695
      %v326 = vpow.pop %v325
      %v327 = vmul.f32 %v316, 1.442695
      %v328 = vpow.pop %v327
      %v329 = vmul.f32 %v317, 1.442695
      %v330 = vpow.pop %v329
      %v331 = vmul.f32 %v318, 1.442695
      %v332 = vpow.pop %v331
      %v333 = vmul.f32 %v319, 1.442695
      %v334 = vpow.pop %v333
      %v335 = vmul.f32 %v320, 1.442695
      %v336 = vpow.pop %v335
      %v337 = vmul.f32 %v321, 1.442695
      %v338 = vpow.pop %v337
      %v339 = vmul.f32 %v322, 1.442695
      %v340 = vpow.pop %v339
      %v341 = vsel %vm285, %v324, 0.0
      %342 = vadd.xlane.f32.xlu0 %v341
      %v343 = vpop.xlane.xlu0 %342
      %v344 = vsel %vm285, %v326, 0.0
      %345 = vadd.xlane.f32.xlu0 %v344
      %v346 = vpop.xlane.xlu0 %345
      %v347 = vsel %vm285, %v328, 0.0
      %348 = vadd.xlane.f32.xlu0 %v347
      %v349 = vpop.xlane.xlu0 %348
      %v350 = vsel %vm285, %v330, 0.0
      %351 = vadd.xlane.f32.xlu0 %v350
      %v352 = vpop.xlane.xlu0 %351
      %v353 = vsel %vm285, %v332, 0.0
      %354 = vadd.xlane.f32.xlu0 %v353
      %v355 = vpop.xlane.xlu0 %354
      %v356 = vsel %vm285, %v334, 0.0
      %357 = vadd.xlane.f32.xlu0 %v356
      %v358 = vpop.xlane.xlu0 %357
      %v359 = vsel %vm285, %v336, 0.0
      %360 = vadd.xlane.f32.xlu0 %v359
      %v361 = vpop.xlane.xlu0 %360
      %v362 = vsel %vm285, %v338, 0.0
      %363 = vadd.xlane.f32.xlu0 %v362
      %v364 = vpop.xlane.xlu0 %363
      %v365 = vsel %vm310, %v340, 0.0
      %366 = vadd.xlane.f32.xlu0 %v365
      %v367 = vpop.xlane.xlu0 %366
      %v368 = vrcp.pop %v343
      %v369 = vrcp.pop %v346
      %v370 = vrcp.pop %v349
      %v371 = vrcp.pop %v352
      %v372 = vrcp.pop %v355
      %v373 = vrcp.pop %v358
      %v374 = vrcp.pop %v361
      %v375 = vrcp.pop %v364
      %v376 = vrcp.pop %v367
      %v377 = vmul.f32 %v324, %v368
      %v378 = vmul.f32 %v326, %v369
      %v379 = vmul.f32 %v328, %v370
      %v380 = vmul.f32 %v330, %v371
      %v381 = vmul.f32 %v332, %v372
      %v382 = vmul.f32 %v334, %v373
      %v383 = vmul.f32 %v336, %v374
      %v384 = vmul.f32 %v338, %v375
      %v385 = vmul.f32 %v340, %v376
      %v386 = vpack.c.bf16 %v378, %v377
      %v387 = vpack.c.bf16 %v380, %v379
      %v388 = vpack.c.bf16 %v382, %v381
      %v389 = vpack.c.bf16 %v384, %v383
      %v390 = vpack.c.bf16 %v385, %v385
      %v400 = vunpack.c.l.b16 %v119
      %v401 = vunpack.c.l.b16 %v121
      %v402 = vunpack.c.l.b16 %v123
      %v403 = vunpack.c.l.b16 %v125
      %v404 = vunpack.c.l.b16 %v127
      %v405 = vunpack.c.l.b16 %v129
      %v406 = vunpack.c.l.b16 %v131
      %v407 = vunpack.c.l.b16 %v133
      %v408 = vunpack.c.l.b16 %v135
      %v409 = vpack.c.b16 %v401, %v400
      %v410 = vpack.c.b16 %v403, %v402
      %v411 = vpack.c.b16 %v405, %v404
      %v412 = vpack.c.b16 %v407, %v406
      %v413 = vpack.c.b16 %v408, %v408
      %v419 = vsel %vm285, %v386, 0
      %v422 = vsel %vm285, %v387, 0
      %v425 = vsel %vm285, %v388, 0
      %v428 = vsel %vm285, %v389, 0
      %v431 = vsel %vm285, %v390, 0
      %vm433 = vcmask 1040384
      %v434 = vsel 0, 4294967295, 65535
      %v435 = vsel %vm433, %v434, 0
      %v437 = vand.u32 %v413, %v435
      %439 = vmatprep.subr.bf16.mxu0 0
      %440 = vmatpush1.bf16.msra.mxu0 %v409
      %441 = vmatprep.subr.bf16.mxu0 0
      %442 = vmatpush1.bf16.msra.mxu0 %v410
      %443 = vmatprep.subr.bf16.mxu0 0
      %444 = vmatpush1.bf16.msra.mxu0 %v411
      %445 = vmatprep.subr.bf16.mxu0 0
      %446 = vmatpush1.bf16.msra.mxu0 %v412
      %447 = vmatprep.subr.bf16.mxu0 0
      %448 = vmatpush1.bf16.msra.mxu0 %v437
      %449 = vmatprep.subr.bf16.mxu0 0
      %450 = vmatpush1.bf16.msra.mxu0 0
      %451 = vmatprep.subr.bf16.mxu0 0
      %452 = vmatpush1.bf16.msra.mxu0 0
      %453 = vmatprep.subr.bf16.mxu0 0
      %454 = vmatpush1.bf16.msra.mxu0 0
      %455 = vmatprep.subr.bf16.mxu0 0
      %456 = vmatpush1.bf16.msra.mxu0 0
      %457 = vmatprep.subr.bf16.mxu0 0
      %458 = vmatpush1.bf16.msra.mxu0 0
      %459 = vmatprep.subr.bf16.mxu0 0
      %460 = vmatpush1.bf16.msra.mxu0 0
      %461 = vmatprep.subr.bf16.mxu0 0
      %462 = vmatpush1.bf16.msra.mxu0 0
      %463 = vmatprep.subr.bf16.mxu0 0
      %464 = vmatpush1.bf16.msra.mxu0 0
      %465 = vmatprep.subr.bf16.mxu0 0
      %466 = vmatpush1.bf16.msra.mxu0 0
      %467 = vmatprep.subr.bf16.mxu0 0
      %468 = vmatpush1.bf16.msra.mxu0 0
      %469 = vmatprep.subr.bf16.mxu0 0
      %470 = vmatpush1.bf16.msra.mxu0 0
      %471 = vmatprep.mubr.bf16.mxu0 0
      %472 = vmatmul.mubr.bf16.gmra.mrb[0].mxu0 %v419
      %v473 = vpop.f32.mrb[0].mxu0
      %v474 = vadd.f32 0.0, %v473
      %v475 = vpop.f32.mrb[0].mxu0
      %v476 = vpop.f32.mrb[0].mxu0
      %v477 = vadd.f32 0.0, %v476
      %v478 = vpop.f32.mrb[0].mxu0
      %479 = vmatprep.mubr.bf16.mxu0 0
      %480 = vmatmul.mubr.bf16.gmra.mrb[0].mxu0 %v422
      %v481 = vpop.f32.mrb[0].mxu0
      %v482 = vadd.f32 0.0, %v481
      %v483 = vpop.f32.mrb[0].mxu0
      %v484 = vpop.f32.mrb[0].mxu0
      %v485 = vadd.f32 0.0, %v484
      %v486 = vpop.f32.mrb[0].mxu0
      %487 = vmatprep.mubr.bf16.mxu0 0
      %488 = vmatmul.mubr.bf16.gmra.mrb[0].mxu0 %v425
      %v489 = vpop.f32.mrb[0].mxu0
      %v490 = vadd.f32 0.0, %v489
      %v491 = vpop.f32.mrb[0].mxu0
      %v492 = vpop.f32.mrb[0].mxu0
      %v493 = vadd.f32 0.0, %v492
      %v494 = vpop.f32.mrb[0].mxu0
      %495 = vmatprep.mubr.bf16.mxu0 0
      %496 = vmatmul.mubr.bf16.gmra.mrb[0].mxu0 %v428
      %v497 = vpop.f32.mrb[0].mxu0
      %v498 = vadd.f32 0.0, %v497
      %v499 = vpop.f32.mrb[0].mxu0
      %v500 = vpop.f32.mrb[0].mxu0
      %v501 = vadd.f32 0.0, %v500
      %v502 = vpop.f32.mrb[0].mxu0
      %503 = vmatprep.mubr.bf16.mxu0 0
      %504 = vmatmul.mubr.bf16.gmra.mrb[0].mxu0 %v431
      %v505 = vpop.f32.mrb[0].mxu0
      %v506 = vadd.f32 0.0, %v505
      %v507 = vpop.f32.mrb[0].mxu0
      %v508 = vpop.f32.mrb[0].mxu0
      %v509 = vpop.f32.mrb[0].mxu0
      %510 = vdwg.mxu0
      %511 = vrot.lane.b32.xlu0 %v154, 96
      %v512 = vpop.permute.xlu0 %511
      %513 = vrot.lane.b32.xlu0 %v155, 96
      %v514 = vpop.permute.xlu0 %513
      %515 = vrot.lane.b32.xlu0 %v156, 96
      %v516 = vpop.permute.xlu0 %515
      %517 = vrot.lane.b32.xlu0 %v157, 96
      %v518 = vpop.permute.xlu0 %517
      %519 = vrot.lane.b32.xlu0 %v158, 96
      %v520 = vpop.permute.xlu0 %519
      %521 = vrot.lane.b32.xlu0 %v168, 96
      %v522 = vpop.permute.xlu0 %521
      %523 = vrot.lane.b32.xlu0 %v169, 96
      %v524 = vpop.permute.xlu0 %523
      %525 = vrot.lane.b32.xlu0 %v170, 96
      %v526 = vpop.permute.xlu0 %525
      %527 = vrot.lane.b32.xlu0 %v171, 96
      %v528 = vpop.permute.xlu0 %527
      %529 = vrot.lane.b32.xlu0 %v172, 96
      %v530 = vpop.permute.xlu0 %529
      %v532 = vsel %vm173, %v512, 0
      %v535 = vsel %vm173, %v514, 0
      %v538 = vsel %vm173, %v516, 0
      %v541 = vsel %vm173, %v518, 0
      %v544 = vsel %vm173, %v520, 0
      %v547 = vsel %vm173, %v522, 0
      %v550 = vsel %vm173, %v524, 0
      %v553 = vsel %vm173, %v526, 0
      %v556 = vsel %vm173, %v528, 0
      %v559 = vsel %vm173, %v530, 0
      %561 = vmatprep.subr.bf16.mxu0 0
      %562 = vmatpush1.bf16.xpose.msra.mxu0 %v547
      %563 = vmatprep.subr.bf16.mxu0 0
      %564 = vmatpush1.bf16.xpose.msra.mxu0 %v550
      %565 = vmatprep.subr.bf16.mxu0 0
      %566 = vmatpush1.bf16.xpose.msra.mxu0 %v553
      %567 = vmatprep.subr.bf16.mxu0 0
      %568 = vmatpush1.bf16.xpose.msra.mxu0 %v556
      %569 = vmatprep.subr.bf16.mxu0 0
      %570 = vmatpush1.bf16.xpose.msra.mxu0 %v559
      %571 = vmatprep.subr.bf16.mxu0 0
      %572 = vmatpush1.bf16.xpose.msra.mxu0 0
      %573 = vmatprep.subr.bf16.mxu0 0
      %574 = vmatpush1.bf16.xpose.msra.mxu0 0
      %575 = vmatprep.subr.bf16.mxu0 0
      %576 = vmatpush1.bf16.xpose.msra.mxu0 0
      %577 = vmatprep.subr.bf16.mxu0 0
      %578 = vmatpush1.bf16.xpose.msra.mxu0 0
      %579 = vmatprep.subr.bf16.mxu0 0
      %580 = vmatpush1.bf16.xpose.msra.mxu0 0
      %581 = vmatprep.subr.bf16.mxu0 0
      %582 = vmatpush1.bf16.xpose.msra.mxu0 0
      %583 = vmatprep.subr.bf16.mxu0 0
      %584 = vmatpush1.bf16.xpose.msra.mxu0 0
      %585 = vmatprep.subr.bf16.mxu0 0
      %586 = vmatpush1.bf16.xpose.msra.mxu0 0
      %587 = vmatprep.subr.bf16.mxu0 0
      %588 = vmatpush1.bf16.xpose.msra.mxu0 0
      %589 = vmatprep.subr.bf16.mxu0 0
      %590 = vmatpush1.bf16.xpose.msra.mxu0 0
      %591 = vmatprep.subr.bf16.mxu0 0
      %592 = vmatpush1.bf16.xpose.msra.mxu0 0
      %593 = vmatprep.mubr.bf16.mxu0 0
      %594 = vmatmul.mubr.bf16.gmra.mrb[0].mxu0 %v532
      %v595 = vpop.f32.mrb[0].mxu0
      %v596 = vadd.f32 0.0, %v595
      %v597 = vpop.f32.mrb[0].mxu0
      %v598 = vpop.f32.mrb[0].mxu0
      %v599 = vadd.f32 0.0, %v598
      %v600 = vpop.f32.mrb[0].mxu0
      %601 = vmatprep.mubr.bf16.mxu0 0
      %602 = vmatmul.mubr.bf16.gmra.mrb[0].mxu0 %v535
      %v603 = vpop.f32.mrb[0].mxu0
      %v604 = vadd.f32 0.0, %v603
      %v605 = vpop.f32.mrb[0].mxu0
      %v606 = vpop.f32.mrb[0].mxu0
      %v607 = vadd.f32 0.0, %v606
      %v608 = vpop.f32.mrb[0].mxu0
      %609 = vmatprep.mubr.bf16.mxu0 0
      %610 = vmatmul.mubr.bf16.gmra.mrb[0].mxu0 %v538
      %v611 = vpop.f32.mrb[0].mxu0
      %v612 = vadd.f32 0.0, %v611
      %v613 = vpop.f32.mrb[0].mxu0
      %v614 = vpop.f32.mrb[0].mxu0
      %v615 = vadd.f32 0.0, %v614
      %v616 = vpop.f32.mrb[0].mxu0
      %617 = vmatprep.mubr.bf16.mxu0 0
      %618 = vmatmul.mubr.bf16.gmra.mrb[0].mxu0 %v541
      %v619 = vpop.f32.mrb[0].mxu0
      %v620 = vadd.f32 0.0, %v619
      %v621 = vpop.f32.mrb[0].mxu0
      %v622 = vpop.f32.mrb[0].mxu0
      %v623 = vadd.f32 0.0, %v622
      %v624 = vpop.f32.mrb[0].mxu0
      %625 = vmatprep.mubr.bf16.mxu0 0
      %626 = vmatmul.mubr.bf16.gmra.mrb[0].mxu0 %v544
      %v627 = vpop.f32.mrb[0].mxu0
      %v628 = vadd.f32 0.0, %v627
      %v629 = vpop.f32.mrb[0].mxu0
      %v630 = vpop.f32.mrb[0].mxu0
      %v631 = vpop.f32.mrb[0].mxu0
      %632 = vdwg.mxu0
      %v633 = vmul.f32 %v596, 0.17677669
      %v634 = vmul.f32 %v599, 0.17677669
      %v635 = vmul.f32 %v604, 0.17677669
      %v636 = vmul.f32 %v607, 0.17677669
      %v637 = vmul.f32 %v612, 0.17677669
      %v638 = vmul.f32 %v615, 0.17677669
      %v639 = vmul.f32 %v620, 0.17677669
      %v640 = vmul.f32 %v623, 0.17677669
      %v641 = vmul.f32 %v628, 0.17677669
      %v642 = vsel %vm285, %v633, -inf
      %643 = vmax.xlane.f32.xlu0 %v642
      %v644 = vpop.xlane.xlu0 %643
      %v645 = vsel %vm285, %v634, -inf
      %646 = vmax.xlane.f32.xlu0 %v645
      %v647 = vpop.xlane.xlu0 %646
      %v648 = vsel %vm285, %v635, -inf
      %649 = vmax.xlane.f32.xlu0 %v648
      %v650 = vpop.xlane.xlu0 %649
      %v651 = vsel %vm285, %v636, -inf
      %652 = vmax.xlane.f32.xlu0 %v651
      %v653 = vpop.xlane.xlu0 %652
      %v654 = vsel %vm285, %v637, -inf
      %655 = vmax.xlane.f32.xlu0 %v654
      %v656 = vpop.xlane.xlu0 %655
      %v657 = vsel %vm285, %v638, -inf
      %658 = vmax.xlane.f32.xlu0 %v657
      %v659 = vpop.xlane.xlu0 %658
      %v660 = vsel %vm285, %v639, -inf
      %661 = vmax.xlane.f32.xlu0 %v660
      %v662 = vpop.xlane.xlu0 %661
      %v663 = vsel %vm285, %v640, -inf
      %664 = vmax.xlane.f32.xlu0 %v663
      %v665 = vpop.xlane.xlu0 %664
      %v666 = vsel %vm310, %v641, -inf
      %667 = vmax.xlane.f32.xlu0 %v666
      %v668 = vpop.xlane.xlu0 %667
      %v669 = vsub.f32 %v633, %v644
      %v670 = vsub.f32 %v634, %v647
      %v671 = vsub.f32 %v635, %v650
      %v672 = vsub.f32 %v636, %v653
      %v673 = vsub.f32 %v637, %v656
      %v674 = vsub.f32 %v638, %v659
      %v675 = vsub.f32 %v639, %v662
      %v676 = vsub.f32 %v640, %v665
      %v677 = vsub.f32 %v641, %v668
      %v678 = vmul.f32 %v669, 1.442695
      %v679 = vpow.pop %v678
      %v680 = vmul.f32 %v670, 1.442695
      %v681 = vpow.pop %v680
      %v682 = vmul.f32 %v671, 1.442695
      %v683 = vpow.pop %v682
      %v684 = vmul.f32 %v672, 1.442695
      %v685 = vpow.pop %v684
      %v686 = vmul.f32 %v673, 1.442695
      %v687 = vpow.pop %v686
      %v688 = vmul.f32 %v674, 1.442695
      %v689 = vpow.pop %v688
      %v690 = vmul.f32 %v675, 1.442695
      %v691 = vpow.pop %v690
      %v692 = vmul.f32 %v676, 1.442695
      %v693 = vpow.pop %v692
      %v694 = vmul.f32 %v677, 1.442695
      %v695 = vpow.pop %v694
      %v696 = vsel %vm285, %v679, 0.0
      %697 = vadd.xlane.f32.xlu0 %v696
      %v698 = vpop.xlane.xlu0 %697
      %v699 = vsel %vm285, %v681, 0.0
      %700 = vadd.xlane.f32.xlu0 %v699
      %v701 = vpop.xlane.xlu0 %700
      %v702 = vsel %vm285, %v683, 0.0
      %703 = vadd.xlane.f32.xlu0 %v702
      %v704 = vpop.xlane.xlu0 %703
      %v705 = vsel %vm285, %v685, 0.0
      %706 = vadd.xlane.f32.xlu0 %v705
      %v707 = vpop.xlane.xlu0 %706
      %v708 = vsel %vm285, %v687, 0.0
      %709 = vadd.xlane.f32.xlu0 %v708
      %v710 = vpop.xlane.xlu0 %709
      %v711 = vsel %vm285, %v689, 0.0
      %712 = vadd.xlane.f32.xlu0 %v711
      %v713 = vpop.xlane.xlu0 %712
      %v714 = vsel %vm285, %v691, 0.0
      %715 = vadd.xlane.f32.xlu0 %v714
      %v716 = vpop.xlane.xlu0 %715
      %v717 = vsel %vm285, %v693, 0.0
      %718 = vadd.xlane.f32.xlu0 %v717
      %v719 = vpop.xlane.xlu0 %718
      %v720 = vsel %vm310, %v695, 0.0
      %721 = vadd.xlane.f32.xlu0 %v720
      %v722 = vpop.xlane.xlu0 %721
      %v723 = vrcp.pop %v698
      %v724 = vrcp.pop %v701
      %v725 = vrcp.pop %v704
      %v726 = vrcp.pop %v707
      %v727 = vrcp.pop %v710
      %v728 = vrcp.pop %v713
      %v729 = vrcp.pop %v716
      %v730 = vrcp.pop %v719
      %v731 = vrcp.pop %v722
      %v732 = vmul.f32 %v679, %v723
      %v733 = vmul.f32 %v681, %v724
      %v734 = vmul.f32 %v683, %v725
      %v735 = vmul.f32 %v685, %v726
      %v736 = vmul.f32 %v687, %v727
      %v737 = vmul.f32 %v689, %v728
      %v738 = vmul.f32 %v691, %v729
      %v739 = vmul.f32 %v693, %v730
      %v740 = vmul.f32 %v695, %v731
      %v741 = vpack.c.bf16 %v733, %v732
      %v742 = vpack.c.bf16 %v735, %v734
      %v743 = vpack.c.bf16 %v737, %v736
      %v744 = vpack.c.bf16 %v739, %v738
      %v745 = vpack.c.bf16 %v740, %v740
      %746 = vrot.lane.b32.xlu0 %v409, 96
      %v747 = vpop.permute.xlu0 %746
      %748 = vrot.lane.b32.xlu0 %v410, 96
      %v749 = vpop.permute.xlu0 %748
      %750 = vrot.lane.b32.xlu0 %v411, 96
      %v751 = vpop.permute.xlu0 %750
      %752 = vrot.lane.b32.xlu0 %v412, 96
      %v753 = vpop.permute.xlu0 %752
      %754 = vrot.lane.b32.xlu0 %v413, 96
      %v755 = vpop.permute.xlu0 %754
      %v761 = vsel %vm285, %v741, 0
      %v764 = vsel %vm285, %v742, 0
      %v767 = vsel %vm285, %v743, 0
      %v770 = vsel %vm285, %v744, 0
      %v773 = vsel %vm285, %v745, 0
      %v776 = vand.u32 %v755, %v435
      %778 = vmatprep.subr.bf16.mxu0 0
      %779 = vmatpush1.bf16.msra.mxu0 %v747
      %780 = vmatprep.subr.bf16.mxu0 0
      %781 = vmatpush1.bf16.msra.mxu0 %v749
      %782 = vmatprep.subr.bf16.mxu0 0
      %783 = vmatpush1.bf16.msra.mxu0 %v751
      %784 = vmatprep.subr.bf16.mxu0 0
      %785 = vmatpush1.bf16.msra.mxu0 %v753
      %786 = vmatprep.subr.bf16.mxu0 0
      %787 = vmatpush1.bf16.msra.mxu0 %v776
      %788 = vmatprep.subr.bf16.mxu0 0
      %789 = vmatpush1.bf16.msra.mxu0 0
      %790 = vmatprep.subr.bf16.mxu0 0
      %791 = vmatpush1.bf16.msra.mxu0 0
      %792 = vmatprep.subr.bf16.mxu0 0
      %793 = vmatpush1.bf16.msra.mxu0 0
      %794 = vmatprep.subr.bf16.mxu0 0
      %795 = vmatpush1.bf16.msra.mxu0 0
      %796 = vmatprep.subr.bf16.mxu0 0
      %797 = vmatpush1.bf16.msra.mxu0 0
      %798 = vmatprep.subr.bf16.mxu0 0
      %799 = vmatpush1.bf16.msra.mxu0 0
      %800 = vmatprep.subr.bf16.mxu0 0
      %801 = vmatpush1.bf16.msra.mxu0 0
      %802 = vmatprep.subr.bf16.mxu0 0
      %803 = vmatpush1.bf16.msra.mxu0 0
      %804 = vmatprep.subr.bf16.mxu0 0
      %805 = vmatpush1.bf16.msra.mxu0 0
      %806 = vmatprep.subr.bf16.mxu0 0
      %807 = vmatpush1.bf16.msra.mxu0 0
      %808 = vmatprep.subr.bf16.mxu0 0
      %809 = vmatpush1.bf16.msra.mxu0 0
      %810 = vmatprep.mubr.bf16.mxu0 0
      %811 = vmatmul.mubr.bf16.gmra.mrb[0].mxu0 %v761
      %v812 = vpop.f32.mrb[0].mxu0
      %v813 = vadd.f32 0.0, %v812
      %v814 = vpop.f32.mrb[0].mxu0
      %v815 = vpop.f32.mrb[0].mxu0
      %v816 = vadd.f32 0.0, %v815
      %v817 = vpop.f32.mrb[0].mxu0
      %818 = vmatprep.mubr.bf16.mxu0 0
      %819 = vmatmul.mubr.bf16.gmra.mrb[0].mxu0 %v764
      %v820 = vpop.f32.mrb[0].mxu0
      %v821 = vadd.f32 0.0, %v820
      %v822 = vpop.f32.mrb[0].mxu0
      %v823 = vpop.f32.mrb[0].mxu0
      %v824 = vadd.f32 0.0, %v823
      %v825 = vpop.f32.mrb[0].mxu0
      %826 = vmatprep.mubr.bf16.mxu0 0
      %827 = vmatmul.mubr.bf16.gmra.mrb[0].mxu0 %v767
      %v828 = vpop.f32.mrb[0].mxu0
      %v829 = vadd.f32 0.0, %v828
      %v830 = vpop.f32.mrb[0].mxu0
      %v831 = vpop.f32.mrb[0].mxu0
      %v832 = vadd.f32 0.0, %v831
      %v833 = vpop.f32.mrb[0].mxu0
      %834 = vmatprep.mubr.bf16.mxu0 0
      %835 = vmatmul.mubr.bf16.gmra.mrb[0].mxu0 %v770
      %v836 = vpop.f32.mrb[0].mxu0
      %v837 = vadd.f32 0.0, %v836
      %v838 = vpop.f32.mrb[0].mxu0
      %v839 = vpop.f32.mrb[0].mxu0
      %v840 = vadd.f32 0.0, %v839
      %v841 = vpop.f32.mrb[0].mxu0
      %842 = vmatprep.mubr.bf16.mxu0 0
      %843 = vmatmul.mubr.bf16.gmra.mrb[0].mxu0 %v773
      %v844 = vpop.f32.mrb[0].mxu0
      %v845 = vadd.f32 0.0, %v844
      %v846 = vpop.f32.mrb[0].mxu0
      %v847 = vpop.f32.mrb[0].mxu0
      %v848 = vpop.f32.mrb[0].mxu0
      %849 = vdwg.mxu0
      %850 = vrot.lane.b32.xlu0 %v154, 64
      %v851 = vpop.permute.xlu0 %850
      %852 = vrot.lane.b32.xlu0 %v155, 64
      %v853 = vpop.permute.xlu0 %852
      %854 = vrot.lane.b32.xlu0 %v156, 64
      %v855 = vpop.permute.xlu0 %854
      %856 = vrot.lane.b32.xlu0 %v157, 64
      %v857 = vpop.permute.xlu0 %856
      %858 = vrot.lane.b32.xlu0 %v158, 64
      %v859 = vpop.permute.xlu0 %858
      %860 = vrot.lane.b32.xlu0 %v168, 64
      %v861 = vpop.permute.xlu0 %860
      %862 = vrot.lane.b32.xlu0 %v169, 64
      %v863 = vpop.permute.xlu0 %862
      %864 = vrot.lane.b32.xlu0 %v170, 64
      %v865 = vpop.permute.xlu0 %864
      %866 = vrot.lane.b32.xlu0 %v171, 64
      %v867 = vpop.permute.xlu0 %866
      %868 = vrot.lane.b32.xlu0 %v172, 64
      %v869 = vpop.permute.xlu0 %868
      %v871 = vsel %vm173, %v851, 0
      %v874 = vsel %vm173, %v853, 0
      %v877 = vsel %vm173, %v855, 0
      %v880 = vsel %vm173, %v857, 0
      %v883 = vsel %vm173, %v859, 0
      %v886 = vsel %vm173, %v861, 0
      %v889 = vsel %vm173, %v863, 0
      %v892 = vsel %vm173, %v865, 0
      %v895 = vsel %vm173, %v867, 0
      %v898 = vsel %vm173, %v869, 0
      %900 = vmatprep.subr.bf16.mxu0 0
      %901 = vmatpush1.bf16.xpose.msra.mxu0 %v886
      %902 = vmatprep.subr.bf16.mxu0 0
      %903 = vmatpush1.bf16.xpose.msra.mxu0 %v889
      %904 = vmatprep.subr.bf16.mxu0 0
      %905 = vmatpush1.bf16.xpose.msra.mxu0 %v892
      %906 = vmatprep.subr.bf16.mxu0 0
      %907 = vmatpush1.bf16.xpose.msra.mxu0 %v895
      %908 = vmatprep.subr.bf16.mxu0 0
      %909 = vmatpush1.bf16.xpose.msra.mxu0 %v898
      %910 = vmatprep.subr.bf16.mxu0 0
      %911 = vmatpush1.bf16.xpose.msra.mxu0 0
      %912 = vmatprep.subr.bf16.mxu0 0
      %913 = vmatpush1.bf16.xpose.msra.mxu0 0
      %914 = vmatprep.subr.bf16.mxu0 0
      %915 = vmatpush1.bf16.xpose.msra.mxu0 0
      %916 = vmatprep.subr.bf16.mxu0 0
      %917 = vmatpush1.bf16.xpose.msra.mxu0 0
      %918 = vmatprep.subr.bf16.mxu0 0
      %919 = vmatpush1.bf16.xpose.msra.mxu0 0
      %920 = vmatprep.subr.bf16.mxu0 0
      %921 = vmatpush1.bf16.xpose.msra.mxu0 0
      %922 = vmatprep.subr.bf16.mxu0 0
      %923 = vmatpush1.bf16.xpose.msra.mxu0 0
      %924 = vmatprep.subr.bf16.mxu0 0
      %925 = vmatpush1.bf16.xpose.msra.mxu0 0
      %926 = vmatprep.subr.bf16.mxu0 0
      %927 = vmatpush1.bf16.xpose.msra.mxu0 0
      %928 = vmatprep.subr.bf16.mxu0 0
      %929 = vmatpush1.bf16.xpose.msra.mxu0 0
      %930 = vmatprep.subr.bf16.mxu0 0
      %931 = vmatpush1.bf16.xpose.msra.mxu0 0
      %932 = vmatprep.mubr.bf16.mxu0 0
      %933 = vmatmul.mubr.bf16.gmra.mrb[0].mxu0 %v871
      %v934 = vpop.f32.mrb[0].mxu0
      %v935 = vadd.f32 0.0, %v934
      %v936 = vpop.f32.mrb[0].mxu0
      %v937 = vpop.f32.mrb[0].mxu0
      %v938 = vadd.f32 0.0, %v937
      %v939 = vpop.f32.mrb[0].mxu0
      %940 = vmatprep.mubr.bf16.mxu0 0
      %941 = vmatmul.mubr.bf16.gmra.mrb[0].mxu0 %v874
      %v942 = vpop.f32.mrb[0].mxu0
      %v943 = vadd.f32 0.0, %v942
      %v944 = vpop.f32.mrb[0].mxu0
      %v945 = vpop.f32.mrb[0].mxu0
      %v946 = vadd.f32 0.0, %v945
      %v947 = vpop.f32.mrb[0].mxu0
      %948 = vmatprep.mubr.bf16.mxu0 0
      %949 = vmatmul.mubr.bf16.gmra.mrb[0].mxu0 %v877
      %v950 = vpop.f32.mrb[0].mxu0
      %v951 = vadd.f32 0.0, %v950
      %v952 = vpop.f32.mrb[0].mxu0
      %v953 = vpop.f32.mrb[0].mxu0
      %v954 = vadd.f32 0.0, %v953
      %v955 = vpop.f32.mrb[0].mxu0
      %956 = vmatprep.mubr.bf16.mxu0 0
      %957 = vmatmul.mubr.bf16.gmra.mrb[0].mxu0 %v880
      %v958 = vpop.f32.mrb[0].mxu0
      %v959 = vadd.f32 0.0, %v958
      %v960 = vpop.f32.mrb[0].mxu0
      %v961 = vpop.f32.mrb[0].mxu0
      %v962 = vadd.f32 0.0, %v961
      %v963 = vpop.f32.mrb[0].mxu0
      %964 = vmatprep.mubr.bf16.mxu0 0
      %965 = vmatmul.mubr.bf16.gmra.mrb[0].mxu0 %v883
      %v966 = vpop.f32.mrb[0].mxu0
      %v967 = vadd.f32 0.0, %v966
      %v968 = vpop.f32.mrb[0].mxu0
      %v969 = vpop.f32.mrb[0].mxu0
      %v970 = vpop.f32.mrb[0].mxu0
      %971 = vdwg.mxu0
      %v972 = vmul.f32 %v935, 0.17677669
      %v973 = vmul.f32 %v938, 0.17677669
      %v974 = vmul.f32 %v943, 0.17677669
      %v975 = vmul.f32 %v946, 0.17677669
      %v976 = vmul.f32 %v951, 0.17677669
      %v977 = vmul.f32 %v954, 0.17677669
      %v978 = vmul.f32 %v959, 0.17677669
      %v979 = vmul.f32 %v962, 0.17677669
      %v980 = vmul.f32 %v967, 0.17677669
      %v981 = vsel %vm285, %v972, -inf
      %982 = vmax.xlane.f32.xlu0 %v981
      %v983 = vpop.xlane.xlu0 %982
      %v984 = vsel %vm285, %v973, -inf
      %985 = vmax.xlane.f32.xlu0 %v984
      %v986 = vpop.xlane.xlu0 %985
      %v987 = vsel %vm285, %v974, -inf
      %988 = vmax.xlane.f32.xlu0 %v987
      %v989 = vpop.xlane.xlu0 %988
      %v990 = vsel %vm285, %v975, -inf
      %991 = vmax.xlane.f32.xlu0 %v990
      %v992 = vpop.xlane.xlu0 %991
      %v993 = vsel %vm285, %v976, -inf
      %994 = vmax.xlane.f32.xlu0 %v993
      %v995 = vpop.xlane.xlu0 %994
      %v996 = vsel %vm285, %v977, -inf
      %997 = vmax.xlane.f32.xlu0 %v996
      %v998 = vpop.xlane.xlu0 %997
      %v999 = vsel %vm285, %v978, -inf
      %1000 = vmax.xlane.f32.xlu0 %v999
      %v1001 = vpop.xlane.xlu0 %1000
      %v1002 = vsel %vm285, %v979, -inf
      %1003 = vmax.xlane.f32.xlu0 %v1002
      %v1004 = vpop.xlane.xlu0 %1003
      %v1005 = vsel %vm310, %v980, -inf
      %1006 = vmax.xlane.f32.xlu0 %v1005
      %v1007 = vpop.xlane.xlu0 %1006
      %v1008 = vsub.f32 %v972, %v983
      %v1009 = vsub.f32 %v973, %v986
      %v1010 = vsub.f32 %v974, %v989
      %v1011 = vsub.f32 %v975, %v992
      %v1012 = vsub.f32 %v976, %v995
      %v1013 = vsub.f32 %v977, %v998
      %v1014 = vsub.f32 %v978, %v1001
      %v1015 = vsub.f32 %v979, %v1004
      %v1016 = vsub.f32 %v980, %v1007
      %v1017 = vmul.f32 %v1008, 1.442695
      %v1018 = vpow.pop %v1017
      %v1019 = vmul.f32 %v1009, 1.442695
      %v1020 = vpow.pop %v1019
      %v1021 = vmul.f32 %v1010, 1.442695
      %v1022 = vpow.pop %v1021
      %v1023 = vmul.f32 %v1011, 1.442695
      %v1024 = vpow.pop %v1023
      %v1025 = vmul.f32 %v1012, 1.442695
      %v1026 = vpow.pop %v1025
      %v1027 = vmul.f32 %v1013, 1.442695
      %v1028 = vpow.pop %v1027
      %v1029 = vmul.f32 %v1014, 1.442695
      %v1030 = vpow.pop %v1029
      %v1031 = vmul.f32 %v1015, 1.442695
      %v1032 = vpow.pop %v1031
      %v1033 = vmul.f32 %v1016, 1.442695
      %v1034 = vpow.pop %v1033
      %v1035 = vsel %vm285, %v1018, 0.0
      %1036 = vadd.xlane.f32.xlu0 %v1035
      %v1037 = vpop.xlane.xlu0 %1036
      %v1038 = vsel %vm285, %v1020, 0.0
      %1039 = vadd.xlane.f32.xlu0 %v1038
      %v1040 = vpop.xlane.xlu0 %1039
      %v1041 = vsel %vm285, %v1022, 0.0
      %1042 = vadd.xlane.f32.xlu0 %v1041
      %v1043 = vpop.xlane.xlu0 %1042
      %v1044 = vsel %vm285, %v1024, 0.0
      %1045 = vadd.xlane.f32.xlu0 %v1044
      %v1046 = vpop.xlane.xlu0 %1045
      %v1047 = vsel %vm285, %v1026, 0.0
      %1048 = vadd.xlane.f32.xlu0 %v1047
      %v1049 = vpop.xlane.xlu0 %1048
      %v1050 = vsel %vm285, %v1028, 0.0
      %1051 = vadd.xlane.f32.xlu0 %v1050
      %v1052 = vpop.xlane.xlu0 %1051
      %v1053 = vsel %vm285, %v1030, 0.0
      %1054 = vadd.xlane.f32.xlu0 %v1053
      %v1055 = vpop.xlane.xlu0 %1054
      %v1056 = vsel %vm285, %v1032, 0.0
      %1057 = vadd.xlane.f32.xlu0 %v1056
      %v1058 = vpop.xlane.xlu0 %1057
      %v1059 = vsel %vm310, %v1034, 0.0
      %1060 = vadd.xlane.f32.xlu0 %v1059
      %v1061 = vpop.xlane.xlu0 %1060
      %v1062 = vrcp.pop %v1037
      %v1063 = vrcp.pop %v1040
      %v1064 = vrcp.pop %v1043
      %v1065 = vrcp.pop %v1046
      %v1066 = vrcp.pop %v1049
      %v1067 = vrcp.pop %v1052
      %v1068 = vrcp.pop %v1055
      %v1069 = vrcp.pop %v1058
      %v1070 = vrcp.pop %v1061
      %v1071 = vmul.f32 %v1018, %v1062
      %v1072 = vmul.f32 %v1020, %v1063
      %v1073 = vmul.f32 %v1022, %v1064
      %v1074 = vmul.f32 %v1024, %v1065
      %v1075 = vmul.f32 %v1026, %v1066
      %v1076 = vmul.f32 %v1028, %v1067
      %v1077 = vmul.f32 %v1030, %v1068
      %v1078 = vmul.f32 %v1032, %v1069
      %v1079 = vmul.f32 %v1034, %v1070
      %v1080 = vpack.c.bf16 %v1072, %v1071
      %v1081 = vpack.c.bf16 %v1074, %v1073
      %v1082 = vpack.c.bf16 %v1076, %v1075
      %v1083 = vpack.c.bf16 %v1078, %v1077
      %v1084 = vpack.c.bf16 %v1079, %v1079
      %1085 = vrot.lane.b32.xlu0 %v409, 64
      %v1086 = vpop.permute.xlu0 %1085
      %1087 = vrot.lane.b32.xlu0 %v410, 64
      %v1088 = vpop.permute.xlu0 %1087
      %1089 = vrot.lane.b32.xlu0 %v411, 64
      %v1090 = vpop.permute.xlu0 %1089
      %1091 = vrot.lane.b32.xlu0 %v412, 64
      %v1092 = vpop.permute.xlu0 %1091
      %1093 = vrot.lane.b32.xlu0 %v413, 64
      %v1094 = vpop.permute.xlu0 %1093
      %v1100 = vsel %vm285, %v1080, 0
      %v1103 = vsel %vm285, %v1081, 0
      %v1106 = vsel %vm285, %v1082, 0
      %v1109 = vsel %vm285, %v1083, 0
      %v1112 = vsel %vm285, %v1084, 0
      %v1115 = vand.u32 %v1094, %v435
      %1117 = vmatprep.subr.bf16.mxu0 0
      %1118 = vmatpush1.bf16.msra.mxu0 %v1086
      %1119 = vmatprep.subr.bf16.mxu0 0
      %1120 = vmatpush1.bf16.msra.mxu0 %v1088
      %1121 = vmatprep.subr.bf16.mxu0 0
      %1122 = vmatpush1.bf16.msra.mxu0 %v1090
      %1123 = vmatprep.subr.bf16.mxu0 0
      %1124 = vmatpush1.bf16.msra.mxu0 %v1092
      %1125 = vmatprep.subr.bf16.mxu0 0
      %1126 = vmatpush1.bf16.msra.mxu0 %v1115
      %1127 = vmatprep.subr.bf16.mxu0 0
      %1128 = vmatpush1.bf16.msra.mxu0 0
      %1129 = vmatprep.subr.bf16.mxu0 0
      %1130 = vmatpush1.bf16.msra.mxu0 0
      %1131 = vmatprep.subr.bf16.mxu0 0
      %1132 = vmatpush1.bf16.msra.mxu0 0
      %1133 = vmatprep.subr.bf16.mxu0 0
      %1134 = vmatpush1.bf16.msra.mxu0 0
      %1135 = vmatprep.subr.bf16.mxu0 0
      %1136 = vmatpush1.bf16.msra.mxu0 0
      %1137 = vmatprep.subr.bf16.mxu0 0
      %1138 = vmatpush1.bf16.msra.mxu0 0
      %1139 = vmatprep.subr.bf16.mxu0 0
      %1140 = vmatpush1.bf16.msra.mxu0 0
      %1141 = vmatprep.subr.bf16.mxu0 0
      %1142 = vmatpush1.bf16.msra.mxu0 0
      %1143 = vmatprep.subr.bf16.mxu0 0
      %1144 = vmatpush1.bf16.msra.mxu0 0
      %1145 = vmatprep.subr.bf16.mxu0 0
      %1146 = vmatpush1.bf16.msra.mxu0 0
      %1147 = vmatprep.subr.bf16.mxu0 0
      %1148 = vmatpush1.bf16.msra.mxu0 0
      %1149 = vmatprep.mubr.bf16.mxu0 0
      %1150 = vmatmul.mubr.bf16.gmra.mrb[0].mxu0 %v1100
      %v1151 = vpop.f32.mrb[0].mxu0
      %v1152 = vadd.f32 0.0, %v1151
      %v1153 = vpop.f32.mrb[0].mxu0
      %v1154 = vpop.f32.mrb[0].mxu0
      %v1155 = vadd.f32 0.0, %v1154
      %v1156 = vpop.f32.mrb[0].mxu0
      %1157 = vmatprep.mubr.bf16.mxu0 0
      %1158 = vmatmul.mubr.bf16.gmra.mrb[0].mxu0 %v1103
      %v1159 = vpop.f32.mrb[0].mxu0
      %v1160 = vadd.f32 0.0, %v1159
      %v1161 = vpop.f32.mrb[0].mxu0
      %v1162 = vpop.f32.mrb[0].mxu0
      %v1163 = vadd.f32 0.0, %v1162
      %v1164 = vpop.f32.mrb[0].mxu0
      %1165 = vmatprep.mubr.bf16.mxu0 0
      %1166 = vmatmul.mubr.bf16.gmra.mrb[0].mxu0 %v1106
      %v1167 = vpop.f32.mrb[0].mxu0
      %v1168 = vadd.f32 0.0, %v1167
      %v1169 = vpop.f32.mrb[0].mxu0
      %v1170 = vpop.f32.mrb[0].mxu0
      %v1171 = vadd.f32 0.0, %v1170
      %v1172 = vpop.f32.mrb[0].mxu0
      %1173 = vmatprep.mubr.bf16.mxu0 0
      %1174 = vmatmul.mubr.bf16.gmra.mrb[0].mxu0 %v1109
      %v1175 = vpop.f32.mrb[0].mxu0
      %v1176 = vadd.f32 0.0, %v1175
      %v1177 = vpop.f32.mrb[0].mxu0
      %v1178 = vpop.f32.mrb[0].mxu0
      %v1179 = vadd.f32 0.0, %v1178
      %v1180 = vpop.f32.mrb[0].mxu0
      %1181 = vmatprep.mubr.bf16.mxu0 0
      %1182 = vmatmul.mubr.bf16.gmra.mrb[0].mxu0 %v1112
      %v1183 = vpop.f32.mrb[0].mxu0
      %v1184 = vadd.f32 0.0, %v1183
      %v1185 = vpop.f32.mrb[0].mxu0
      %v1186 = vpop.f32.mrb[0].mxu0
      %v1187 = vpop.f32.mrb[0].mxu0
      %1188 = vdwg.mxu0
      %1189 = vrot.lane.b32.xlu0 %v154, 32
      %v1190 = vpop.permute.xlu0 %1189
      %1191 = vrot.lane.b32.xlu0 %v155, 32
      %v1192 = vpop.permute.xlu0 %1191
      %1193 = vrot.lane.b32.xlu0 %v156, 32
      %v1194 = vpop.permute.xlu0 %1193
      %1195 = vrot.lane.b32.xlu0 %v157, 32
      %v1196 = vpop.permute.xlu0 %1195
      %1197 = vrot.lane.b32.xlu0 %v158, 32
      %v1198 = vpop.permute.xlu0 %1197
      %1199 = vrot.lane.b32.xlu0 %v168, 32
      %v1200 = vpop.permute.xlu0 %1199
      %1201 = vrot.lane.b32.xlu0 %v169, 32
      %v1202 = vpop.permute.xlu0 %1201
      %1203 = vrot.lane.b32.xlu0 %v170, 32
      %v1204 = vpop.permute.xlu0 %1203
      %1205 = vrot.lane.b32.xlu0 %v171, 32
      %v1206 = vpop.permute.xlu0 %1205
      %1207 = vrot.lane.b32.xlu0 %v172, 32
      %v1208 = vpop.permute.xlu0 %1207
      %v1210 = vsel %vm173, %v1190, 0
      %v1213 = vsel %vm173, %v1192, 0
      %v1216 = vsel %vm173, %v1194, 0
      %v1219 = vsel %vm173, %v1196, 0
      %v1222 = vsel %vm173, %v1198, 0
      %v1225 = vsel %vm173, %v1200, 0
      %v1228 = vsel %vm173, %v1202, 0
      %v1231 = vsel %vm173, %v1204, 0
      %v1234 = vsel %vm173, %v1206, 0
      %v1237 = vsel %vm173, %v1208, 0
      %1239 = vmatprep.subr.bf16.mxu0 0
      %1240 = vmatpush1.bf16.xpose.msra.mxu0 %v1225
      %1241 = vmatprep.subr.bf16.mxu0 0
      %1242 = vmatpush1.bf16.xpose.msra.mxu0 %v1228
      %1243 = vmatprep.subr.bf16.mxu0 0
      %1244 = vmatpush1.bf16.xpose.msra.mxu0 %v1231
      %1245 = vmatprep.subr.bf16.mxu0 0
      %1246 = vmatpush1.bf16.xpose.msra.mxu0 %v1234
      %1247 = vmatprep.subr.bf16.mxu0 0
      %1248 = vmatpush1.bf16.xpose.msra.mxu0 %v1237
      %1249 = vmatprep.subr.bf16.mxu0 0
      %1250 = vmatpush1.bf16.xpose.msra.mxu0 0
      %1251 = vmatprep.subr.bf16.mxu0 0
      %1252 = vmatpush1.bf16.xpose.msra.mxu0 0
      %1253 = vmatprep.subr.bf16.mxu0 0
      %1254 = vmatpush1.bf16.xpose.msra.mxu0 0
      %1255 = vmatprep.subr.bf16.mxu0 0
      %1256 = vmatpush1.bf16.xpose.msra.mxu0 0
      %1257 = vmatprep.subr.bf16.mxu0 0
      %1258 = vmatpush1.bf16.xpose.msra.mxu0 0
      %1259 = vmatprep.subr.bf16.mxu0 0
      %1260 = vmatpush1.bf16.xpose.msra.mxu0 0
      %1261 = vmatprep.subr.bf16.mxu0 0
      %1262 = vmatpush1.bf16.xpose.msra.mxu0 0
      %1263 = vmatprep.subr.bf16.mxu0 0
      %1264 = vmatpush1.bf16.xpose.msra.mxu0 0
      %1265 = vmatprep.subr.bf16.mxu0 0
      %1266 = vmatpush1.bf16.xpose.msra.mxu0 0
      %1267 = vmatprep.subr.bf16.mxu0 0
      %1268 = vmatpush1.bf16.xpose.msra.mxu0 0
      %1269 = vmatprep.subr.bf16.mxu0 0
      %1270 = vmatpush1.bf16.xpose.msra.mxu0 0
      %1271 = vmatprep.mubr.bf16.mxu0 0
      %1272 = vmatmul.mubr.bf16.gmra.mrb[0].mxu0 %v1210
      %v1273 = vpop.f32.mrb[0].mxu0
      %v1274 = vadd.f32 0.0, %v1273
      %v1275 = vpop.f32.mrb[0].mxu0
      %v1276 = vpop.f32.mrb[0].mxu0
      %v1277 = vadd.f32 0.0, %v1276
      %v1278 = vpop.f32.mrb[0].mxu0
      %1279 = vmatprep.mubr.bf16.mxu0 0
      %1280 = vmatmul.mubr.bf16.gmra.mrb[0].mxu0 %v1213
      %v1281 = vpop.f32.mrb[0].mxu0
      %v1282 = vadd.f32 0.0, %v1281
      %v1283 = vpop.f32.mrb[0].mxu0
      %v1284 = vpop.f32.mrb[0].mxu0
      %v1285 = vadd.f32 0.0, %v1284
      %v1286 = vpop.f32.mrb[0].mxu0
      %1287 = vmatprep.mubr.bf16.mxu0 0
      %1288 = vmatmul.mubr.bf16.gmra.mrb[0].mxu0 %v1216
      %v1289 = vpop.f32.mrb[0].mxu0
      %v1290 = vadd.f32 0.0, %v1289
      %v1291 = vpop.f32.mrb[0].mxu0
      %v1292 = vpop.f32.mrb[0].mxu0
      %v1293 = vadd.f32 0.0, %v1292
      %v1294 = vpop.f32.mrb[0].mxu0
      %1295 = vmatprep.mubr.bf16.mxu0 0
      %1296 = vmatmul.mubr.bf16.gmra.mrb[0].mxu0 %v1219
      %v1297 = vpop.f32.mrb[0].mxu0
      %v1298 = vadd.f32 0.0, %v1297
      %v1299 = vpop.f32.mrb[0].mxu0
      %v1300 = vpop.f32.mrb[0].mxu0
      %v1301 = vadd.f32 0.0, %v1300
      %v1302 = vpop.f32.mrb[0].mxu0
      %1303 = vmatprep.mubr.bf16.mxu0 0
      %1304 = vmatmul.mubr.bf16.gmra.mrb[0].mxu0 %v1222
      %v1305 = vpop.f32.mrb[0].mxu0
      %v1306 = vadd.f32 0.0, %v1305
      %v1307 = vpop.f32.mrb[0].mxu0
      %v1308 = vpop.f32.mrb[0].mxu0
      %v1309 = vpop.f32.mrb[0].mxu0
      %1310 = vdwg.mxu0
      %v1311 = vmul.f32 %v1274, 0.17677669
      %v1312 = vmul.f32 %v1277, 0.17677669
      %v1313 = vmul.f32 %v1282, 0.17677669
      %v1314 = vmul.f32 %v1285, 0.17677669
      %v1315 = vmul.f32 %v1290, 0.17677669
      %v1316 = vmul.f32 %v1293, 0.17677669
      %v1317 = vmul.f32 %v1298, 0.17677669
      %v1318 = vmul.f32 %v1301, 0.17677669
      %v1319 = vmul.f32 %v1306, 0.17677669
      %v1320 = vsel %vm285, %v1311, -inf
      %1321 = vmax.xlane.f32.xlu0 %v1320
      %v1322 = vpop.xlane.xlu0 %1321
      %v1323 = vsel %vm285, %v1312, -inf
      %1324 = vmax.xlane.f32.xlu0 %v1323
      %v1325 = vpop.xlane.xlu0 %1324
      %v1326 = vsel %vm285, %v1313, -inf
      %1327 = vmax.xlane.f32.xlu0 %v1326
      %v1328 = vpop.xlane.xlu0 %1327
      %v1329 = vsel %vm285, %v1314, -inf
      %1330 = vmax.xlane.f32.xlu0 %v1329
      %v1331 = vpop.xlane.xlu0 %1330
      %v1332 = vsel %vm285, %v1315, -inf
      %1333 = vmax.xlane.f32.xlu0 %v1332
      %v1334 = vpop.xlane.xlu0 %1333
      %v1335 = vsel %vm285, %v1316, -inf
      %1336 = vmax.xlane.f32.xlu0 %v1335
      %v1337 = vpop.xlane.xlu0 %1336
      %v1338 = vsel %vm285, %v1317, -inf
      %1339 = vmax.xlane.f32.xlu0 %v1338
      %v1340 = vpop.xlane.xlu0 %1339
      %v1341 = vsel %vm285, %v1318, -inf
      %1342 = vmax.xlane.f32.xlu0 %v1341
      %v1343 = vpop.xlane.xlu0 %1342
      %v1344 = vsel %vm310, %v1319, -inf
      %1345 = vmax.xlane.f32.xlu0 %v1344
      %v1346 = vpop.xlane.xlu0 %1345
      %v1347 = vsub.f32 %v1311, %v1322
      %v1348 = vsub.f32 %v1312, %v1325
      %v1349 = vsub.f32 %v1313, %v1328
      %v1350 = vsub.f32 %v1314, %v1331
      %v1351 = vsub.f32 %v1315, %v1334
      %v1352 = vsub.f32 %v1316, %v1337
      %v1353 = vsub.f32 %v1317, %v1340
      %v1354 = vsub.f32 %v1318, %v1343
      %v1355 = vsub.f32 %v1319, %v1346
      %v1356 = vmul.f32 %v1347, 1.442695
      %v1357 = vpow.pop %v1356
      %v1358 = vmul.f32 %v1348, 1.442695
      %v1359 = vpow.pop %v1358
      %v1360 = vmul.f32 %v1349, 1.442695
      %v1361 = vpow.pop %v1360
      %v1362 = vmul.f32 %v1350, 1.442695
      %v1363 = vpow.pop %v1362
      %v1364 = vmul.f32 %v1351, 1.442695
      %v1365 = vpow.pop %v1364
      %v1366 = vmul.f32 %v1352, 1.442695
      %v1367 = vpow.pop %v1366
      %v1368 = vmul.f32 %v1353, 1.442695
      %v1369 = vpow.pop %v1368
      %v1370 = vmul.f32 %v1354, 1.442695
      %v1371 = vpow.pop %v1370
      %v1372 = vmul.f32 %v1355, 1.442695
      %v1373 = vpow.pop %v1372
      %v1374 = vsel %vm285, %v1357, 0.0
      %1375 = vadd.xlane.f32.xlu0 %v1374
      %v1376 = vpop.xlane.xlu0 %1375
      %v1377 = vsel %vm285, %v1359, 0.0
      %1378 = vadd.xlane.f32.xlu0 %v1377
      %v1379 = vpop.xlane.xlu0 %1378
      %v1380 = vsel %vm285, %v1361, 0.0
      %1381 = vadd.xlane.f32.xlu0 %v1380
      %v1382 = vpop.xlane.xlu0 %1381
      %v1383 = vsel %vm285, %v1363, 0.0
      %1384 = vadd.xlane.f32.xlu0 %v1383
      %v1385 = vpop.xlane.xlu0 %1384
      %v1386 = vsel %vm285, %v1365, 0.0
      %1387 = vadd.xlane.f32.xlu0 %v1386
      %v1388 = vpop.xlane.xlu0 %1387
      %v1389 = vsel %vm285, %v1367, 0.0
      %1390 = vadd.xlane.f32.xlu0 %v1389
      %v1391 = vpop.xlane.xlu0 %1390
      %v1392 = vsel %vm285, %v1369, 0.0
      %1393 = vadd.xlane.f32.xlu0 %v1392
      %v1394 = vpop.xlane.xlu0 %1393
      %v1395 = vsel %vm285, %v1371, 0.0
      %1396 = vadd.xlane.f32.xlu0 %v1395
      %v1397 = vpop.xlane.xlu0 %1396
      %v1398 = vsel %vm310, %v1373, 0.0
      %1399 = vadd.xlane.f32.xlu0 %v1398
      %v1400 = vpop.xlane.xlu0 %1399
      %v1401 = vrcp.pop %v1376
      %v1402 = vrcp.pop %v1379
      %v1403 = vrcp.pop %v1382
      %v1404 = vrcp.pop %v1385
      %v1405 = vrcp.pop %v1388
      %v1406 = vrcp.pop %v1391
      %v1407 = vrcp.pop %v1394
      %v1408 = vrcp.pop %v1397
      %v1409 = vrcp.pop %v1400
      %v1410 = vmul.f32 %v1357, %v1401
      %v1411 = vmul.f32 %v1359, %v1402
      %v1412 = vmul.f32 %v1361, %v1403
      %v1413 = vmul.f32 %v1363, %v1404
      %v1414 = vmul.f32 %v1365, %v1405
      %v1415 = vmul.f32 %v1367, %v1406
      %v1416 = vmul.f32 %v1369, %v1407
      %v1417 = vmul.f32 %v1371, %v1408
      %v1418 = vmul.f32 %v1373, %v1409
      %v1419 = vpack.c.bf16 %v1411, %v1410
      %v1420 = vpack.c.bf16 %v1413, %v1412
      %v1421 = vpack.c.bf16 %v1415, %v1414
      %v1422 = vpack.c.bf16 %v1417, %v1416
      %v1423 = vpack.c.bf16 %v1418, %v1418
      %1424 = vrot.lane.b32.xlu0 %v409, 32
      %v1425 = vpop.permute.xlu0 %1424
      %1426 = vrot.lane.b32.xlu0 %v410, 32
      %v1427 = vpop.permute.xlu0 %1426
      %1428 = vrot.lane.b32.xlu0 %v411, 32
      %v1429 = vpop.permute.xlu0 %1428
      %1430 = vrot.lane.b32.xlu0 %v412, 32
      %v1431 = vpop.permute.xlu0 %1430
      %1432 = vrot.lane.b32.xlu0 %v413, 32
      %v1433 = vpop.permute.xlu0 %1432
      %v1439 = vsel %vm285, %v1419, 0
      %v1442 = vsel %vm285, %v1420, 0
      %v1445 = vsel %vm285, %v1421, 0
      %v1448 = vsel %vm285, %v1422, 0
      %v1451 = vsel %vm285, %v1423, 0
      %v1454 = vand.u32 %v1433, %v435
      %1456 = vmatprep.subr.bf16.mxu0 0
      %1457 = vmatpush1.bf16.msra.mxu0 %v1425
      %1458 = vmatprep.subr.bf16.mxu0 0
      %1459 = vmatpush1.bf16.msra.mxu0 %v1427
      %1460 = vmatprep.subr.bf16.mxu0 0
      %1461 = vmatpush1.bf16.msra.mxu0 %v1429
      %1462 = vmatprep.subr.bf16.mxu0 0
      %1463 = vmatpush1.bf16.msra.mxu0 %v1431
      %1464 = vmatprep.subr.bf16.mxu0 0
      %1465 = vmatpush1.bf16.msra.mxu0 %v1454
      %1466 = vmatprep.subr.bf16.mxu0 0
      %1467 = vmatpush1.bf16.msra.mxu0 0
      %1468 = vmatprep.subr.bf16.mxu0 0
      %1469 = vmatpush1.bf16.msra.mxu0 0
      %1470 = vmatprep.subr.bf16.mxu0 0
      %1471 = vmatpush1.bf16.msra.mxu0 0
      %1472 = vmatprep.subr.bf16.mxu0 0
      %1473 = vmatpush1.bf16.msra.mxu0 0
      %1474 = vmatprep.subr.bf16.mxu0 0
      %1475 = vmatpush1.bf16.msra.mxu0 0
      %1476 = vmatprep.subr.bf16.mxu0 0
      %1477 = vmatpush1.bf16.msra.mxu0 0
      %1478 = vmatprep.subr.bf16.mxu0 0
      %1479 = vmatpush1.bf16.msra.mxu0 0
      %1480 = vmatprep.subr.bf16.mxu0 0
      %1481 = vmatpush1.bf16.msra.mxu0 0
      %1482 = vmatprep.subr.bf16.mxu0 0
      %1483 = vmatpush1.bf16.msra.mxu0 0
      %1484 = vmatprep.subr.bf16.mxu0 0
      %1485 = vmatpush1.bf16.msra.mxu0 0
      %1486 = vmatprep.subr.bf16.mxu0 0
      %1487 = vmatpush1.bf16.msra.mxu0 0
      %1488 = vmatprep.mubr.bf16.mxu0 0
      %1489 = vmatmul.mubr.bf16.gmra.mrb[0].mxu0 %v1439
      %v1490 = vpop.f32.mrb[0].mxu0
      %v1491 = vadd.f32 0.0, %v1490
      %v1492 = vpop.f32.mrb[0].mxu0
      %v1493 = vpop.f32.mrb[0].mxu0
      %v1494 = vadd.f32 0.0, %v1493
      %v1495 = vpop.f32.mrb[0].mxu0
      %1496 = vmatprep.mubr.bf16.mxu0 0
      %1497 = vmatmul.mubr.bf16.gmra.mrb[0].mxu0 %v1442
      %v1498 = vpop.f32.mrb[0].mxu0
      %v1499 = vadd.f32 0.0, %v1498
      %v1500 = vpop.f32.mrb[0].mxu0
      %v1501 = vpop.f32.mrb[0].mxu0
      %v1502 = vadd.f32 0.0, %v1501
      %v1503 = vpop.f32.mrb[0].mxu0
      %1504 = vmatprep.mubr.bf16.mxu0 0
      %1505 = vmatmul.mubr.bf16.gmra.mrb[0].mxu0 %v1445
      %v1506 = vpop.f32.mrb[0].mxu0
      %v1507 = vadd.f32 0.0, %v1506
      %v1508 = vpop.f32.mrb[0].mxu0
      %v1509 = vpop.f32.mrb[0].mxu0
      %v1510 = vadd.f32 0.0, %v1509
      %v1511 = vpop.f32.mrb[0].mxu0
      %1512 = vmatprep.mubr.bf16.mxu0 0
      %1513 = vmatmul.mubr.bf16.gmra.mrb[0].mxu0 %v1448
      %v1514 = vpop.f32.mrb[0].mxu0
      %v1515 = vadd.f32 0.0, %v1514
      %v1516 = vpop.f32.mrb[0].mxu0
      %v1517 = vpop.f32.mrb[0].mxu0
      %v1518 = vadd.f32 0.0, %v1517
      %v1519 = vpop.f32.mrb[0].mxu0
      %1520 = vmatprep.mubr.bf16.mxu0 0
      %1521 = vmatmul.mubr.bf16.gmra.mrb[0].mxu0 %v1451
      %v1522 = vpop.f32.mrb[0].mxu0
      %v1523 = vadd.f32 0.0, %v1522
      %v1524 = vpop.f32.mrb[0].mxu0
      %v1525 = vpop.f32.mrb[0].mxu0
      %v1526 = vpop.f32.mrb[0].mxu0
      %1527 = vdwg.mxu0
      %1537 = vrot.lane.b32.xlu0 %v813, 32
      %v1538 = vpop.permute.xlu0 %1537
      %1539 = vrot.lane.b32.xlu0 %v816, 32
      %v1540 = vpop.permute.xlu0 %1539
      %1541 = vrot.lane.b32.xlu0 %v821, 32
      %v1542 = vpop.permute.xlu0 %1541
      %1543 = vrot.lane.b32.xlu0 %v824, 32
      %v1544 = vpop.permute.xlu0 %1543
      %1545 = vrot.lane.b32.xlu0 %v829, 32
      %v1546 = vpop.permute.xlu0 %1545
      %1547 = vrot.lane.b32.xlu0 %v832, 32
      %v1548 = vpop.permute.xlu0 %1547
      %1549 = vrot.lane.b32.xlu0 %v837, 32
      %v1550 = vpop.permute.xlu0 %1549
      %1551 = vrot.lane.b32.xlu0 %v840, 32
      %v1552 = vpop.permute.xlu0 %1551
      %1553 = vrot.lane.b32.xlu0 %v845, 32
      %v1554 = vpop.permute.xlu0 %1553
      %1573 = vrot.lane.b32.xlu0 %v1152, 64
      %v1574 = vpop.permute.xlu0 %1573
      %1575 = vrot.lane.b32.xlu0 %v1155, 64
      %v1576 = vpop.permute.xlu0 %1575
      %1577 = vrot.lane.b32.xlu0 %v1160, 64
      %v1578 = vpop.permute.xlu0 %1577
      %1579 = vrot.lane.b32.xlu0 %v1163, 64
      %v1580 = vpop.permute.xlu0 %1579
      %1581 = vrot.lane.b32.xlu0 %v1168, 64
      %v1582 = vpop.permute.xlu0 %1581
      %1583 = vrot.lane.b32.xlu0 %v1171, 64
      %v1584 = vpop.permute.xlu0 %1583
      %1585 = vrot.lane.b32.xlu0 %v1176, 64
      %v1586 = vpop.permute.xlu0 %1585
      %1587 = vrot.lane.b32.xlu0 %v1179, 64
      %v1588 = vpop.permute.xlu0 %1587
      %1589 = vrot.lane.b32.xlu0 %v1184, 64
      %v1590 = vpop.permute.xlu0 %1589
      %1609 = vrot.lane.b32.xlu0 %v1491, 96
      %v1610 = vpop.permute.xlu0 %1609
      %1611 = vrot.lane.b32.xlu0 %v1494, 96
      %v1612 = vpop.permute.xlu0 %1611
      %1613 = vrot.lane.b32.xlu0 %v1499, 96
      %v1614 = vpop.permute.xlu0 %1613
      %1615 = vrot.lane.b32.xlu0 %v1502, 96
      %v1616 = vpop.permute.xlu0 %1615
      %1617 = vrot.lane.b32.xlu0 %v1507, 96
      %v1618 = vpop.permute.xlu0 %1617
      %1619 = vrot.lane.b32.xlu0 %v1510, 96
      %v1620 = vpop.permute.xlu0 %1619
      %1621 = vrot.lane.b32.xlu0 %v1515, 96
      %v1622 = vpop.permute.xlu0 %1621
      %1623 = vrot.lane.b32.xlu0 %v1518, 96
      %v1624 = vpop.permute.xlu0 %1623
      %1625 = vrot.lane.b32.xlu0 %v1523, 96
      %v1626 = vpop.permute.xlu0 %1625
      %v1636 = vsel %vm173, %v474, %v1538
      %v1637 = vsel %vm173, %v477, %v1540
      %v1638 = vsel %vm173, %v482, %v1542
      %v1639 = vsel %vm173, %v485, %v1544
      %v1640 = vsel %vm173, %v490, %v1546
      %v1641 = vsel %vm173, %v493, %v1548
      %v1642 = vsel %vm173, %v498, %v1550
      %v1643 = vsel %vm173, %v501, %v1552
      %v1644 = vsel %vm173, %v506, %v1554
      %vm1645 = vcmask 523264
      %v1646 = vsel %vm1645, %v1636, %v1574
      %v1647 = vsel %vm1645, %v1637, %v1576
      %v1648 = vsel %vm1645, %v1638, %v1578
      %v1649 = vsel %vm1645, %v1639, %v1580
      %v1650 = vsel %vm1645, %v1640, %v1582
      %v1651 = vsel %vm1645, %v1641, %v1584
      %v1652 = vsel %vm1645, %v1642, %v1586
      %v1653 = vsel %vm1645, %v1643, %v1588
      %v1654 = vsel %vm1645, %v1644, %v1590
      %vm1655 = vcmask 785408
      %v1656 = vsel %vm1655, %v1646, %v1610
      %v1657 = vsel %vm1655, %v1647, %v1612
      %v1658 = vsel %vm1655, %v1648, %v1614
      %v1659 = vsel %vm1655, %v1649, %v1616
      %v1660 = vsel %vm1655, %v1650, %v1618
      %v1661 = vsel %vm1655, %v1651, %v1620
      %v1662 = vsel %vm1655, %v1652, %v1622
      %v1663 = vsel %vm1655, %v1653, %v1624
      %v1664 = vsel %vm1655, %v1654, %v1626
      %v1665 = vpack.c.bf16 %v1657, %v1656
      %v1666 = vpack.c.bf16 %v1659, %v1658
      %v1667 = vpack.c.bf16 %v1661, %v1660
      %v1668 = vpack.c.bf16 %v1663, %v1662
      %v1669 = vpack.c.bf16 %v1664, %v1664
      %v1675 = vunpack.c.l.b16 %v1665
      %v1676 = vunpack.c.h.b16 %v1665
      %v1677 = vunpack.c.l.b16 %v1666
      %v1678 = vunpack.c.h.b16 %v1666
      %v1679 = vunpack.c.l.b16 %v1667
      %v1680 = vunpack.c.h.b16 %v1667
      %v1681 = vunpack.c.l.b16 %v1668
      %v1682 = vunpack.c.h.b16 %v1668
      %v1683 = vunpack.c.l.b16 %v1669
      %v1684 = vpack.c.b16 %v1675, %v1675
      %v1685 = vpack.c.b16 %v1676, %v1676
      %v1686 = vpack.c.b16 %v1677, %v1677
      %v1687 = vpack.c.b16 %v1678, %v1678
      %v1688 = vpack.c.b16 %v1679, %v1679
      %v1689 = vpack.c.b16 %v1680, %v1680
      %v1690 = vpack.c.b16 %v1681, %v1681
      %v1691 = vpack.c.b16 %v1682, %v1682
      %v1692 = vpack.c.b16 %v1683, %v1683
      %1702 = vst [vmem:[%s116] sm:$0xf] %v1684
      %1703 = vst [vmem:[%s116 + $0x4] sm:$0xf] %v1685
      %1704 = vst [vmem:[%s116 + $0x8] sm:$0xf] %v1686
      %1705 = vst [vmem:[%s116 + $0xc] sm:$0xf] %v1687
      %1706 = vst [vmem:[%s116 + $0x10] sm:$0xf] %v1688
      %1707 = vst [vmem:[%s116 + $0x14] sm:$0xf] %v1689
      %1708 = vst [vmem:[%s116 + $0x18] sm:$0xf] %v1690
      %1709 = vst [vmem:[%s116 + $0x1c] sm:$0xf] %v1691
      %vm1710 = vcmask 1040384
      %vm1711 = vsmask.f32 256
      %vm1712 = vmand %vm1710, %vm1711
      %v1713 = vld [vmem:[%s116 + $0x20] sm:$0x1]
      %v1714 = vsel %vm1712, %v1692, %v1713
      %1715 = vst [vmem:[%s116 + $0x20] sm:$0x1] %v1714
      %p1716 = scmp.lt.s32.totalorder %s12, 1
      %s1717 = scalar_select %p1716, %s12, 1
      %s1718 = smul.addr %s1717, 9
      %s1719 = smul.addr %s1718, 4
      %s1720 = scalar_lea.vmem %s1, %s1719
      // Predicated region
      $region25: #{_lambda_.26} parent=23 // pred_check
        %p1721 = pneg %p56
      $region26: #{_lambda_.26} parent=23 // pred_check_branch
        %1723 = sbr.rel (%p1721) target = $region28
      $region27: #{_lambda_.26} parent=23 // pred_region
        _
      $region28: #{_lambda_.26} parent=23 // pred_fallthru
        _
    $region24: #{_lambda_.26} parent=5 // pred_fallthru
      _
    %p1724 = scmp.le.s32.totalorder 2, %s7
    // Predicated region
    $region29: #{_lambda_.26} parent=5 // pred_check
      %p1725 = pneg %p1724
    $region30: #{_lambda_.26} parent=5 // pred_check_branch
      %1727 = sbr.rel (%p1725) target = $region32
    $region31: #{_lambda_.26} parent=5 // pred_region
      %s1728 = ssub.s32 %s7, 2
      // Predicated region
      $region33: #{_lambda_.26} parent=31 // pred_check
        %p1729 = pneg %p62
      $region34: #{_lambda_.26} parent=31 // pred_check_branch
        %1731 = sbr.rel (%p1729) target = $region36
      $region35: #{_lambda_.26} parent=31 // pred_region
        %p1732 = scmp.lt.s32.totalorder %s13, 1
        %s1733 = scalar_select %p1732, %s13, 1
        %s1734 = smul.addr %s1733, 9
        %s1735 = smul.addr %s1734, 4
        %s1736 = scalar_lea.vmem %s1, %s1735
      $region36: #{_lambda_.26} parent=31 // pred_fallthru
        _
    $region32: #{_lambda_.26} parent=5 // pred_fallthru
      _
  $region6: #{_lambda_.26} parent=0 // loop_footer
    %s11 = sadd.s32 1, %s7
  $region7: #{_lambda_.26} parent=0 // loop_footer_branch
    %6 = sbr.rel target = $region3
  $region8: #{_lambda_.26} parent=0 // loop_exit
    _

// kernel: _lambda_.29
$region0: #{_lambda_.29}
  #allocation0 [shape = 'u32[]', space=smem, size = 0x4, offset = 0x4, fixed_abs, tag = 'smem constant byte address 0x4 - core index']
  #allocation1 [shape = 'u32[144,128]{1,0:T(1,128)}', space=vmem, size = 0x12000, scoped, tag = 'internal scratch']
  %s0 = inlined_call_operand.vmem [shape: bf16[130,128], index: 0, kind: input, shape index: {}]
  %s1 = inlined_call_operand.vmem [shape: f32[1,128], index: 1, kind: input, shape index: {}]
  %s2 = inlined_call_operand.vmem [shape: f32[1,128], index: 2, kind: input, shape index: {}]
  %s3 = inlined_call_operand.vmem [shape: bf16[128,48], index: 3, kind: input, shape index: {}]
  %s4 = inlined_call_operand.vmem [shape: f32[1,48], index: 4, kind: input, shape index: {}]
  %s5 = inlined_call_operand.vmem [shape: f32[130,48], index: 5, kind: output, shape index: {}]
  %s6 = sld [smem:[#allocation0]]
  $region30: #{_lambda_.29} parent=0
    _
  %s8 = ssub.s32 1, %s6
  %s9 = scalar_select 0, %s8, %s6
  // Predicated region
  $region2: #{_lambda_.29} parent=0 // pred_check
    _
  $region3: #{_lambda_.29} parent=0 // pred_check_branch
    %11 = sbr.rel (0) target = $region5
  $region4: #{_lambda_.29} parent=0 // pred_region
    _
  $region5: #{_lambda_.29} parent=0 // pred_fallthru
    _
  // Predicated region
  $region6: #{_lambda_.29} parent=0 // pred_check
    _
  $region7: #{_lambda_.29} parent=0 // pred_check_branch
    %13 = sbr.rel (0) target = $region9
  $region8: #{_lambda_.29} parent=0 // pred_region
    _
  $region9: #{_lambda_.29} parent=0 // pred_fallthru
    _
  // Predicated region
  $region10: #{_lambda_.29} parent=0 // pred_check
    _
  $region11: #{_lambda_.29} parent=0 // pred_check_branch
    %15 = sbr.rel (0) target = $region13
  $region12: #{_lambda_.29} parent=0 // pred_region
    _
  $region13: #{_lambda_.29} parent=0 // pred_fallthru
    _
  // Predicated region
  $region14: #{_lambda_.29} parent=0 // pred_check
    _
  $region15: #{_lambda_.29} parent=0 // pred_check_branch
    %17 = sbr.rel (0) target = $region17
  $region16: #{_lambda_.29} parent=0 // pred_region
    _
  $region17: #{_lambda_.29} parent=0 // pred_fallthru
    _
  // Predicated region
  $region18: #{_lambda_.29} parent=0 // pred_check
    _
  $region19: #{_lambda_.29} parent=0 // pred_check_branch
    %19 = sbr.rel (0) target = $region21
  $region20: #{_lambda_.29} parent=0 // pred_region
    _
  $region21: #{_lambda_.29} parent=0 // pred_fallthru
    _
  %v21 = vld [vmem:[%s0] sm:$0xf]
  %v22 = vld [vmem:[%s0 + $0x4] sm:$0xf]
  %v23 = vld [vmem:[%s0 + $0x8] sm:$0xf]
  %v24 = vld [vmem:[%s0 + $0xc] sm:$0xf]
  %v25 = vld [vmem:[%s0 + $0x10] sm:$0xf]
  %v26 = vld [vmem:[%s0 + $0x14] sm:$0xf]
  %v27 = vld [vmem:[%s0 + $0x18] sm:$0xf]
  %v28 = vld [vmem:[%s0 + $0x1c] sm:$0xf]
  %v29 = vld [vmem:[%s0 + $0x20] sm:$0xf]
  %v30 = vld [vmem:[%s0 + $0x24] sm:$0xf]
  %v31 = vld [vmem:[%s0 + $0x28] sm:$0xf]
  %v32 = vld [vmem:[%s0 + $0x2c] sm:$0xf]
  %v33 = vld [vmem:[%s0 + $0x30] sm:$0xf]
  %v34 = vld [vmem:[%s0 + $0x34] sm:$0xf]
  %v35 = vld [vmem:[%s0 + $0x38] sm:$0xf]
  %v36 = vld [vmem:[%s0 + $0x3c] sm:$0xf]
  %v37 = vld [vmem:[%s0 + $0x40] sm:$0x1]
  %v38 = vunpack.c.l.bf16 %v21
  %v39 = vunpack.c.l.bf16 %v22
  %v40 = vunpack.c.l.bf16 %v23
  %v41 = vunpack.c.l.bf16 %v24
  %v42 = vunpack.c.l.bf16 %v25
  %v43 = vunpack.c.l.bf16 %v26
  %v44 = vunpack.c.l.bf16 %v27
  %v45 = vunpack.c.l.bf16 %v28
  %v46 = vunpack.c.l.bf16 %v29
  %v47 = vunpack.c.l.bf16 %v30
  %v48 = vunpack.c.l.bf16 %v31
  %v49 = vunpack.c.l.bf16 %v32
  %v50 = vunpack.c.l.bf16 %v33
  %v51 = vunpack.c.l.bf16 %v34
  %v52 = vunpack.c.l.bf16 %v35
  %v53 = vunpack.c.l.bf16 %v36
  %v54 = vunpack.c.l.bf16 %v37
  %55 = vadd.xlane.f32.xlu0 %v38
  %v56 = vpop.xlane.xlu0 %55
  %57 = vadd.xlane.f32.xlu0 %v39
  %v58 = vpop.xlane.xlu0 %57
  %59 = vadd.xlane.f32.xlu0 %v40
  %v60 = vpop.xlane.xlu0 %59
  %61 = vadd.xlane.f32.xlu0 %v41
  %v62 = vpop.xlane.xlu0 %61
  %63 = vadd.xlane.f32.xlu0 %v42
  %v64 = vpop.xlane.xlu0 %63
  %65 = vadd.xlane.f32.xlu0 %v43
  %v66 = vpop.xlane.xlu0 %65
  %67 = vadd.xlane.f32.xlu0 %v44
  %v68 = vpop.xlane.xlu0 %67
  %69 = vadd.xlane.f32.xlu0 %v45
  %v70 = vpop.xlane.xlu0 %69
  %71 = vadd.xlane.f32.xlu0 %v46
  %v72 = vpop.xlane.xlu0 %71
  %73 = vadd.xlane.f32.xlu0 %v47
  %v74 = vpop.xlane.xlu0 %73
  %75 = vadd.xlane.f32.xlu0 %v48
  %v76 = vpop.xlane.xlu0 %75
  %77 = vadd.xlane.f32.xlu0 %v49
  %v78 = vpop.xlane.xlu0 %77
  %79 = vadd.xlane.f32.xlu0 %v50
  %v80 = vpop.xlane.xlu0 %79
  %81 = vadd.xlane.f32.xlu0 %v51
  %v82 = vpop.xlane.xlu0 %81
  %83 = vadd.xlane.f32.xlu0 %v52
  %v84 = vpop.xlane.xlu0 %83
  %85 = vadd.xlane.f32.xlu0 %v53
  %v86 = vpop.xlane.xlu0 %85
  %vm87 = vcmask 1041408
  %v88 = vsel %vm87, %v54, 0.0
  %89 = vadd.xlane.f32.xlu0 %v88
  %v90 = vpop.xlane.xlu0 %89
  %v91 = vrcp.pop 128.0
  %v92 = vmul.f32 %v56, %v91
  %v93 = vmul.f32 %v58, %v91
  %v94 = vmul.f32 %v60, %v91
  %v95 = vmul.f32 %v62, %v91
  %v96 = vmul.f32 %v64, %v91
  %v97 = vmul.f32 %v66, %v91
  %v98 = vmul.f32 %v68, %v91
  %v99 = vmul.f32 %v70, %v91
  %v100 = vmul.f32 %v72, %v91
  %v101 = vmul.f32 %v74, %v91
  %v102 = vmul.f32 %v76, %v91
  %v103 = vmul.f32 %v78, %v91
  %v104 = vmul.f32 %v80, %v91
  %v105 = vmul.f32 %v82, %v91
  %v106 = vmul.f32 %v84, %v91
  %v107 = vmul.f32 %v86, %v91
  %v108 = vmul.f32 %v90, %v91
  %v109 = vsub.f32 %v38, %v92
  %v110 = vsub.f32 %v39, %v93
  %v111 = vsub.f32 %v40, %v94
  %v112 = vsub.f32 %v41, %v95
  %v113 = vsub.f32 %v42, %v96
  %v114 = vsub.f32 %v43, %v97
  %v115 = vsub.f32 %v44, %v98
  %v116 = vsub.f32 %v45, %v99
  %v117 = vsub.f32 %v46, %v100
  %v118 = vsub.f32 %v47, %v101
  %v119 = vsub.f32 %v48, %v102
  %v120 = vsub.f32 %v49, %v103
  %v121 = vsub.f32 %v50, %v104
  %v122 = vsub.f32 %v51, %v105
  %v123 = vsub.f32 %v52, %v106
  %v124 = vsub.f32 %v53, %v107
  %v125 = vsub.f32 %v54, %v108
  %v126 = vmul.f32 %v109, %v109
  %v127 = vmul.f32 %v110, %v110
  %v128 = vmul.f32 %v111, %v111
  %v129 = vmul.f32 %v112, %v112
  %v130 = vmul.f32 %v113, %v113
  %v131 = vmul.f32 %v114, %v114
  %v132 = vmul.f32 %v115, %v115
  %v133 = vmul.f32 %v116, %v116
  %v134 = vmul.f32 %v117, %v117
  %v135 = vmul.f32 %v118, %v118
  %v136 = vmul.f32 %v119, %v119
  %v137 = vmul.f32 %v120, %v120
  %v138 = vmul.f32 %v121, %v121
  %v139 = vmul.f32 %v122, %v122
  %v140 = vmul.f32 %v123, %v123
  %v141 = vmul.f32 %v124, %v124
  %v142 = vmul.f32 %v125, %v125
  %143 = vadd.xlane.f32.xlu0 %v126
  %v144 = vpop.xlane.xlu0 %143
  %145 = vadd.xlane.f32.xlu0 %v127
  %v146 = vpop.xlane.xlu0 %145
  %147 = vadd.xlane.f32.xlu0 %v128
  %v148 = vpop.xlane.xlu0 %147
  %149 = vadd.xlane.f32.xlu0 %v129
  %v150 = vpop.xlane.xlu0 %149
  %151 = vadd.xlane.f32.xlu0 %v130
  %v152 = vpop.xlane.xlu0 %151
  %153 = vadd.xlane.f32.xlu0 %v131
  %v154 = vpop.xlane.xlu0 %153
  %155 = vadd.xlane.f32.xlu0 %v132
  %v156 = vpop.xlane.xlu0 %155
  %157 = vadd.xlane.f32.xlu0 %v133
  %v158 = vpop.xlane.xlu0 %157
  %159 = vadd.xlane.f32.xlu0 %v134
  %v160 = vpop.xlane.xlu0 %159
  %161 = vadd.xlane.f32.xlu0 %v135
  %v162 = vpop.xlane.xlu0 %161
  %163 = vadd.xlane.f32.xlu0 %v136
  %v164 = vpop.xlane.xlu0 %163
  %165 = vadd.xlane.f32.xlu0 %v137
  %v166 = vpop.xlane.xlu0 %165
  %167 = vadd.xlane.f32.xlu0 %v138
  %v168 = vpop.xlane.xlu0 %167
  %169 = vadd.xlane.f32.xlu0 %v139
  %v170 = vpop.xlane.xlu0 %169
  %171 = vadd.xlane.f32.xlu0 %v140
  %v172 = vpop.xlane.xlu0 %171
  %173 = vadd.xlane.f32.xlu0 %v141
  %v174 = vpop.xlane.xlu0 %173
  %v175 = vsel %vm87, %v142, 0.0
  %176 = vadd.xlane.f32.xlu0 %v175
  %v177 = vpop.xlane.xlu0 %176
  %v178 = vmul.f32 %v144, %v91
  %v179 = vmul.f32 %v146, %v91
  %v180 = vmul.f32 %v148, %v91
  %v181 = vmul.f32 %v150, %v91
  %v182 = vmul.f32 %v152, %v91
  %v183 = vmul.f32 %v154, %v91
  %v184 = vmul.f32 %v156, %v91
  %v185 = vmul.f32 %v158, %v91
  %v186 = vmul.f32 %v160, %v91
  %v187 = vmul.f32 %v162, %v91
  %v188 = vmul.f32 %v164, %v91
  %v189 = vmul.f32 %v166, %v91
  %v190 = vmul.f32 %v168, %v91
  %v191 = vmul.f32 %v170, %v91
  %v192 = vmul.f32 %v172, %v91
  %v193 = vmul.f32 %v174, %v91
  %v194 = vmul.f32 %v177, %v91
  %v195 = vadd.f32 %v178, 1e-06
  %v196 = vadd.f32 %v179, 1e-06
  %v197 = vadd.f32 %v180, 1e-06
  %v198 = vadd.f32 %v181, 1e-06
  %v199 = vadd.f32 %v182, 1e-06
  %v200 = vadd.f32 %v183, 1e-06
  %v201 = vadd.f32 %v184, 1e-06
  %v202 = vadd.f32 %v185, 1e-06
  %v203 = vadd.f32 %v186, 1e-06
  %v204 = vadd.f32 %v187, 1e-06
  %v205 = vadd.f32 %v188, 1e-06
  %v206 = vadd.f32 %v189, 1e-06
  %v207 = vadd.f32 %v190, 1e-06
  %v208 = vadd.f32 %v191, 1e-06
  %v209 = vadd.f32 %v192, 1e-06
  %v210 = vadd.f32 %v193, 1e-06
  %v211 = vadd.f32 %v194, 1e-06
  %v212 = vrsqrt.pop %v195
  %v213 = vrsqrt.pop %v196
  %v214 = vrsqrt.pop %v197
  %v215 = vrsqrt.pop %v198
  %v216 = vrsqrt.pop %v199
  %v217 = vrsqrt.pop %v200
  %v218 = vrsqrt.pop %v201
  %v219 = vrsqrt.pop %v202
  %v220 = vrsqrt.pop %v203
  %v221 = vrsqrt.pop %v204
  %v222 = vrsqrt.pop %v205
  %v223 = vrsqrt.pop %v206
  %v224 = vrsqrt.pop %v207
  %v225 = vrsqrt.pop %v208
  %v226 = vrsqrt.pop %v209
  %v227 = vrsqrt.pop %v210
  %v228 = vrsqrt.pop %v211
  %v229 = vmul.f32 %v109, %v212
  %v230 = vmul.f32 %v110, %v213
  %v231 = vmul.f32 %v111, %v214
  %v232 = vmul.f32 %v112, %v215
  %v233 = vmul.f32 %v113, %v216
  %v234 = vmul.f32 %v114, %v217
  %v235 = vmul.f32 %v115, %v218
  %v236 = vmul.f32 %v116, %v219
  %v237 = vmul.f32 %v117, %v220
  %v238 = vmul.f32 %v118, %v221
  %v239 = vmul.f32 %v119, %v222
  %v240 = vmul.f32 %v120, %v223
  %v241 = vmul.f32 %v121, %v224
  %v242 = vmul.f32 %v122, %v225
  %v243 = vmul.f32 %v123, %v226
  %v244 = vmul.f32 %v124, %v227
  %v245 = vmul.f32 %v125, %v228
  %v246 = vld [vmem:[%s1] sm:$0x1]
  %v248 = vlaneseq
  %v249 = vshrl.u32 %v248, 7
  %v250 = vsub.s32 0, %v249
  %v251 = vrot.slane %v246, %v250
  %v253 = vmul.f32 %v229, %v251
  %v254 = vmul.f32 %v230, %v251
  %v255 = vmul.f32 %v231, %v251
  %v256 = vmul.f32 %v232, %v251
  %v257 = vmul.f32 %v233, %v251
  %v258 = vmul.f32 %v234, %v251
  %v259 = vmul.f32 %v235, %v251
  %v260 = vmul.f32 %v236, %v251
  %v261 = vmul.f32 %v237, %v251
  %v262 = vmul.f32 %v238, %v251
  %v263 = vmul.f32 %v239, %v251
  %v264 = vmul.f32 %v240, %v251
  %v265 = vmul.f32 %v241, %v251
  %v266 = vmul.f32 %v242, %v251
  %v267 = vmul.f32 %v243, %v251
  %v268 = vmul.f32 %v244, %v251
  %v269 = vmul.f32 %v245, %v251
  %v270 = vld [vmem:[%s2] sm:$0x1]
  %v272 = vlaneseq
  %v273 = vshrl.u32 %v272, 7
  %v274 = vsub.s32 0, %v273
  %v275 = vrot.slane %v270, %v274
  %v277 = vadd.f32 %v253, %v275
  %v278 = vadd.f32 %v254, %v275
  %v279 = vadd.f32 %v255, %v275
  %v280 = vadd.f32 %v256, %v275
  %v281 = vadd.f32 %v257, %v275
  %v282 = vadd.f32 %v258, %v275
  %v283 = vadd.f32 %v259, %v275
  %v284 = vadd.f32 %v260, %v275
  %v285 = vadd.f32 %v261, %v275
  %v286 = vadd.f32 %v262, %v275
  %v287 = vadd.f32 %v263, %v275
  %v288 = vadd.f32 %v264, %v275
  %v289 = vadd.f32 %v265, %v275
  %v290 = vadd.f32 %v266, %v275
  %v291 = vadd.f32 %v267, %v275
  %v292 = vadd.f32 %v268, %v275
  %v293 = vadd.f32 %v269, %v275
  %v294 = vpack.c.bf16 %v278, %v277
  %v295 = vpack.c.bf16 %v280, %v279
  %v296 = vpack.c.bf16 %v282, %v281
  %v297 = vpack.c.bf16 %v284, %v283
  %v298 = vpack.c.bf16 %v286, %v285
  %v299 = vpack.c.bf16 %v288, %v287
  %v300 = vpack.c.bf16 %v290, %v289
  %v301 = vpack.c.bf16 %v292, %v291
  %v302 = vpack.c.bf16 %v293, %v293
  %v303 = vld [vmem:[%s3] sm:$0xf]
  %v304 = vld [vmem:[%s3 + $0x4] sm:$0xf]
  %v305 = vld [vmem:[%s3 + $0x8] sm:$0xf]
  %v306 = vld [vmem:[%s3 + $0xc] sm:$0xf]
  %v307 = vld [vmem:[%s3 + $0x10] sm:$0xf]
  %v308 = vld [vmem:[%s3 + $0x14] sm:$0xf]
  %v309 = vld [vmem:[%s3 + $0x18] sm:$0xf]
  %v310 = vld [vmem:[%s3 + $0x1c] sm:$0xf]
  %v311 = vld [vmem:[%s3 + $0x20] sm:$0xf]
  %v312 = vld [vmem:[%s3 + $0x24] sm:$0xf]
  %v313 = vld [vmem:[%s3 + $0x28] sm:$0xf]
  %v314 = vld [vmem:[%s3 + $0x2c] sm:$0xf]
  %v315 = vld [vmem:[%s3 + $0x30] sm:$0xf]
  %v316 = vld [vmem:[%s3 + $0x34] sm:$0xf]
  %v317 = vld [vmem:[%s3 + $0x38] sm:$0xf]
  %v318 = vld [vmem:[%s3 + $0x3c] sm:$0xf]
  %v319 = vld [vmem:[%s4] sm:$0x1]
  %v321 = vlaneseq
  %v322 = vshrl.u32 %v321, 7
  %v323 = vsub.s32 0, %v322
  %v324 = vrot.slane %v319, %v323
  %v342 = vunpack.c.l.b16 %v303
  %v343 = vunpack.c.l.b16 %v304
  %v344 = vunpack.c.l.b16 %v305
  %v345 = vunpack.c.l.b16 %v306
  %v346 = vunpack.c.l.b16 %v307
  %v347 = vunpack.c.l.b16 %v308
  %v348 = vunpack.c.l.b16 %v309
  %v349 = vunpack.c.l.b16 %v310
  %v350 = vunpack.c.l.b16 %v311
  %v351 = vunpack.c.l.b16 %v312
  %v352 = vunpack.c.l.b16 %v313
  %v353 = vunpack.c.l.b16 %v314
  %v354 = vunpack.c.l.b16 %v315
  %v355 = vunpack.c.l.b16 %v316
  %v356 = vunpack.c.l.b16 %v317
  %v357 = vunpack.c.l.b16 %v318
  %v358 = vpack.c.b16 %v343, %v342
  %v359 = vpack.c.b16 %v345, %v344
  %v360 = vpack.c.b16 %v347, %v346
  %v361 = vpack.c.b16 %v349, %v348
  %v362 = vpack.c.b16 %v351, %v350
  %v363 = vpack.c.b16 %v353, %v352
  %v364 = vpack.c.b16 %v355, %v354
  %v365 = vpack.c.b16 %v357, %v356
  %374 = vmatprep.subr.bf16.mxu0 0
  %375 = vmatpush1.bf16.msra.mxu0 %v358
  %376 = vmatprep.subr.bf16.mxu0 0
  %377 = vmatpush1.bf16.msra.mxu0 %v359
  %378 = vmatprep.subr.bf16.mxu0 0
  %379 = vmatpush1.bf16.msra.mxu0 %v360
  %380 = vmatprep.subr.bf16.mxu0 0
  %381 = vmatpush1.bf16.msra.mxu0 %v361
  %382 = vmatprep.subr.bf16.mxu0 0
  %383 = vmatpush1.bf16.msra.mxu0 %v362
  %384 = vmatprep.subr.bf16.mxu0 0
  %385 = vmatpush1.bf16.msra.mxu0 %v363
  %386 = vmatprep.subr.bf16.mxu0 0
  %387 = vmatpush1.bf16.msra.mxu0 %v364
  %388 = vmatprep.subr.bf16.mxu0 0
  %389 = vmatpush1.bf16.msra.mxu0 %v365
  %390 = vmatprep.subr.bf16.mxu0 0
  %391 = vmatpush1.bf16.msra.mxu0 0
  %392 = vmatprep.subr.bf16.mxu0 0
  %393 = vmatpush1.bf16.msra.mxu0 0
  %394 = vmatprep.subr.bf16.mxu0 0
  %395 = vmatpush1.bf16.msra.mxu0 0
  %396 = vmatprep.subr.bf16.mxu0 0
  %397 = vmatpush1.bf16.msra.mxu0 0
  %398 = vmatprep.subr.bf16.mxu0 0
  %399 = vmatpush1.bf16.msra.mxu0 0
  %400 = vmatprep.subr.bf16.mxu0 0
  %401 = vmatpush1.bf16.msra.mxu0 0
  %402 = vmatprep.subr.bf16.mxu0 0
  %403 = vmatpush1.bf16.msra.mxu0 0
  %404 = vmatprep.subr.bf16.mxu0 0
  %405 = vmatpush1.bf16.msra.mxu0 0
  %406 = vmatprep.mubr.bf16.mxu0 0
  %407 = vmatmul.mubr.bf16.gmra.mrb[0].mxu0 %v294
  %v408 = vpop.f32.mrb[0].mxu0
  %v409 = vadd.f32 %v324, %v408
  %v410 = vpop.f32.mrb[0].mxu0
  %v411 = vpop.f32.mrb[0].mxu0
  %v412 = vadd.f32 %v324, %v411
  %v413 = vpop.f32.mrb[0].mxu0
  %414 = vmatprep.mubr.bf16.mxu0 0
  %415 = vmatmul.mubr.bf16.gmra.mrb[0].mxu0 %v295
  %v416 = vpop.f32.mrb[0].mxu0
  %v417 = vadd.f32 %v324, %v416
  %v418 = vpop.f32.mrb[0].mxu0
  %v419 = vpop.f32.mrb[0].mxu0
  %v420 = vadd.f32 %v324, %v419
  %v421 = vpop.f32.mrb[0].mxu0
  %422 = vmatprep.mubr.bf16.mxu0 0
  %423 = vmatmul.mubr.bf16.gmra.mrb[0].mxu0 %v296
  %v424 = vpop.f32.mrb[0].mxu0
  %v425 = vadd.f32 %v324, %v424
  %v426 = vpop.f32.mrb[0].mxu0
  %v427 = vpop.f32.mrb[0].mxu0
  %v428 = vadd.f32 %v324, %v427
  %v429 = vpop.f32.mrb[0].mxu0
  %430 = vmatprep.mubr.bf16.mxu0 0
  %431 = vmatmul.mubr.bf16.gmra.mrb[0].mxu0 %v297
  %v432 = vpop.f32.mrb[0].mxu0
  %v433 = vadd.f32 %v324, %v432
  %v434 = vpop.f32.mrb[0].mxu0
  %v435 = vpop.f32.mrb[0].mxu0
  %v436 = vadd.f32 %v324, %v435
  %v437 = vpop.f32.mrb[0].mxu0
  %438 = vmatprep.mubr.bf16.mxu0 0
  %439 = vmatmul.mubr.bf16.gmra.mrb[0].mxu0 %v298
  %v440 = vpop.f32.mrb[0].mxu0
  %v441 = vadd.f32 %v324, %v440
  %v442 = vpop.f32.mrb[0].mxu0
  %v443 = vpop.f32.mrb[0].mxu0
  %v444 = vadd.f32 %v324, %v443
  %v445 = vpop.f32.mrb[0].mxu0
  %446 = vmatprep.mubr.bf16.mxu0 0
  %447 = vmatmul.mubr.bf16.gmra.mrb[0].mxu0 %v299
  %v448 = vpop.f32.mrb[0].mxu0
  %v449 = vadd.f32 %v324, %v448
  %v450 = vpop.f32.mrb[0].mxu0
  %v451 = vpop.f32.mrb[0].mxu0
  %v452 = vadd.f32 %v324, %v451
  %v453 = vpop.f32.mrb[0].mxu0
  %454 = vmatprep.mubr.bf16.mxu0 0
  %455 = vmatmul.mubr.bf16.gmra.mrb[0].mxu0 %v300
  %v456 = vpop.f32.mrb[0].mxu0
  %v457 = vadd.f32 %v324, %v456
  %v458 = vpop.f32.mrb[0].mxu0
  %v459 = vpop.f32.mrb[0].mxu0
  %v460 = vadd.f32 %v324, %v459
  %v461 = vpop.f32.mrb[0].mxu0
  %462 = vmatprep.mubr.bf16.mxu0 0
  %463 = vmatmul.mubr.bf16.gmra.mrb[0].mxu0 %v301
  %v464 = vpop.f32.mrb[0].mxu0
  %v465 = vadd.f32 %v324, %v464
  %v466 = vpop.f32.mrb[0].mxu0
  %v467 = vpop.f32.mrb[0].mxu0
  %v468 = vadd.f32 %v324, %v467
  %v469 = vpop.f32.mrb[0].mxu0
  %470 = vmatprep.mubr.bf16.mxu0 0
  %471 = vmatmul.mubr.bf16.gmra.mrb[0].mxu0 %v302
  %v472 = vpop.f32.mrb[0].mxu0
  %v473 = vadd.f32 %v324, %v472
  %v474 = vpop.f32.mrb[0].mxu0
  %v475 = vpop.f32.mrb[0].mxu0
  %v476 = vpop.f32.mrb[0].mxu0
  %477 = vdwg.mxu0
  %vm478 = vcmask 392192
  %479 = vst.msk [vmem:[%s5] sm:$0xff] %vm478, %v409
  %480 = vst.msk [vmem:[%s5 + $0x8] sm:$0xff] %vm478, %v412
  %481 = vst.msk [vmem:[%s5 + $0x10] sm:$0xff] %vm478, %v417
  %482 = vst.msk [vmem:[%s5 + $0x18] sm:$0xff] %vm478, %v420
  %483 = vst.msk [vmem:[%s5 + $0x20] sm:$0xff] %vm478, %v425
  %484 = vst.msk [vmem:[%s5 + $0x28] sm:$0xff] %vm478, %v428
  %485 = vst.msk [vmem:[%s5 + $0x30] sm:$0xff] %vm478, %v433
  %486 = vst.msk [vmem:[%s5 + $0x38] sm:$0xff] %vm478, %v436
  %487 = vst.msk [vmem:[%s5 + $0x40] sm:$0xff] %vm478, %v441
  %488 = vst.msk [vmem:[%s5 + $0x48] sm:$0xff] %vm478, %v444
  %489 = vst.msk [vmem:[%s5 + $0x50] sm:$0xff] %vm478, %v449
  %490 = vst.msk [vmem:[%s5 + $0x58] sm:$0xff] %vm478, %v452
  %491 = vst.msk [vmem:[%s5 + $0x60] sm:$0xff] %vm478, %v457
  %492 = vst.msk [vmem:[%s5 + $0x68] sm:$0xff] %vm478, %v460
  %493 = vst.msk [vmem:[%s5 + $0x70] sm:$0xff] %vm478, %v465
  %494 = vst.msk [vmem:[%s5 + $0x78] sm:$0xff] %vm478, %v468
  %vm495 = vcmask 386048
  %496 = vst.msk [vmem:[%s5 + $0x80] sm:$0x3] %vm495, %v473
  // Predicated region
  $region22: #{_lambda_.29} parent=0 // pred_check
    _
  $region23: #{_lambda_.29} parent=0 // pred_check_branch
    %498 = sbr.rel (0) target = $region25
  $region24: #{_lambda_.29} parent=0 // pred_region
    _
  $region25: #{_lambda_.29} parent=0 // pred_fallthru
    _
  // Predicated region
  $region26: #{_lambda_.29} parent=0 // pred_check
    _
  $region27: #{_lambda_.29} parent=0 // pred_check_branch
    %500 = sbr.rel (0) target = $region29
  $region28: #{_lambda_.29} parent=0 // pred_region
    _
  $region29: #{_lambda_.29} parent=0 // pred_fallthru
    _

// kernel: _lambda_.28
$region0: #{_lambda_.28}
  #allocation0 [shape = 'u32[]', space=smem, size = 0x4, offset = 0x4, fixed_abs, tag = 'smem constant byte address 0x4 - core index']
  #allocation1 [shape = 'u32[144,128]{1,0:T(1,128)}', space=vmem, size = 0x12000, scoped, tag = 'internal scratch']
  %s0 = inlined_call_operand.vmem [shape: bf16[130,128], index: 0, kind: input, shape index: {}]
  %s1 = inlined_call_operand.vmem [shape: f32[1,128], index: 1, kind: input, shape index: {}]
  %s2 = inlined_call_operand.vmem [shape: f32[1,128], index: 2, kind: input, shape index: {}]
  %s3 = inlined_call_operand.vmem [shape: bf16[128,512], index: 3, kind: input, shape index: {}]
  %s4 = inlined_call_operand.vmem [shape: f32[1,512], index: 4, kind: input, shape index: {}]
  %s5 = inlined_call_operand.vmem [shape: bf16[512,128], index: 5, kind: input, shape index: {}]
  %s6 = inlined_call_operand.vmem [shape: f32[1,128], index: 6, kind: input, shape index: {}]
  %s7 = inlined_call_operand.vmem [shape: bf16[130,128], index: 7, kind: output, shape index: {}]
  %s8 = sld [smem:[#allocation0]]
  $region38: #{_lambda_.28} parent=0
    _
  %s10 = ssub.s32 1, %s8
  %s11 = scalar_select 0, %s10, %s8
  // Predicated region
  $region2: #{_lambda_.28} parent=0 // pred_check
    _
  $region3: #{_lambda_.28} parent=0 // pred_check_branch
    %13 = sbr.rel (0) target = $region5
  $region4: #{_lambda_.28} parent=0 // pred_region
    _
  $region5: #{_lambda_.28} parent=0 // pred_fallthru
    _
  // Predicated region
  $region6: #{_lambda_.28} parent=0 // pred_check
    _
  $region7: #{_lambda_.28} parent=0 // pred_check_branch
    %15 = sbr.rel (0) target = $region9
  $region8: #{_lambda_.28} parent=0 // pred_region
    _
  $region9: #{_lambda_.28} parent=0 // pred_fallthru
    _
  // Predicated region
  $region10: #{_lambda_.28} parent=0 // pred_check
    _
  $region11: #{_lambda_.28} parent=0 // pred_check_branch
    %17 = sbr.rel (0) target = $region13
  $region12: #{_lambda_.28} parent=0 // pred_region
    _
  $region13: #{_lambda_.28} parent=0 // pred_fallthru
    _
  // Predicated region
  $region14: #{_lambda_.28} parent=0 // pred_check
    _
  $region15: #{_lambda_.28} parent=0 // pred_check_branch
    %19 = sbr.rel (0) target = $region17
  $region16: #{_lambda_.28} parent=0 // pred_region
    _
  $region17: #{_lambda_.28} parent=0 // pred_fallthru
    _
  // Predicated region
  $region18: #{_lambda_.28} parent=0 // pred_check
    _
  $region19: #{_lambda_.28} parent=0 // pred_check_branch
    %21 = sbr.rel (0) target = $region21
  $region20: #{_lambda_.28} parent=0 // pred_region
    _
  $region21: #{_lambda_.28} parent=0 // pred_fallthru
    _
  // Predicated region
  $region22: #{_lambda_.28} parent=0 // pred_check
    _
  $region23: #{_lambda_.28} parent=0 // pred_check_branch
    %23 = sbr.rel (0) target = $region25
  $region24: #{_lambda_.28} parent=0 // pred_region
    _
  $region25: #{_lambda_.28} parent=0 // pred_fallthru
    _
  // Predicated region
  $region26: #{_lambda_.28} parent=0 // pred_check
    _
  $region27: #{_lambda_.28} parent=0 // pred_check_branch
    %25 = sbr.rel (0) target = $region29
  $region28: #{_lambda_.28} parent=0 // pred_region
    _
  $region29: #{_lambda_.28} parent=0 // pred_fallthru
    _
  %v27 = vld [vmem:[%s0] sm:$0xf]
  %v28 = vld [vmem:[%s0 + $0x4] sm:$0xf]
  %v29 = vld [vmem:[%s0 + $0x8] sm:$0xf]
  %v30 = vld [vmem:[%s0 + $0xc] sm:$0xf]
  %v31 = vld [vmem:[%s0 + $0x10] sm:$0xf]
  %v32 = vld [vmem:[%s0 + $0x14] sm:$0xf]
  %v33 = vld [vmem:[%s0 + $0x18] sm:$0xf]
  %v34 = vld [vmem:[%s0 + $0x1c] sm:$0xf]
  %v35 = vld [vmem:[%s0 + $0x20] sm:$0xf]
  %v36 = vld [vmem:[%s0 + $0x24] sm:$0xf]
  %v37 = vld [vmem:[%s0 + $0x28] sm:$0xf]
  %v38 = vld [vmem:[%s0 + $0x2c] sm:$0xf]
  %v39 = vld [vmem:[%s0 + $0x30] sm:$0xf]
  %v40 = vld [vmem:[%s0 + $0x34] sm:$0xf]
  %v41 = vld [vmem:[%s0 + $0x38] sm:$0xf]
  %v42 = vld [vmem:[%s0 + $0x3c] sm:$0xf]
  %v43 = vld [vmem:[%s0 + $0x40] sm:$0x1]
  %v44 = vunpack.c.l.bf16 %v27
  %v45 = vunpack.c.l.bf16 %v28
  %v46 = vunpack.c.l.bf16 %v29
  %v47 = vunpack.c.l.bf16 %v30
  %v48 = vunpack.c.l.bf16 %v31
  %v49 = vunpack.c.l.bf16 %v32
  %v50 = vunpack.c.l.bf16 %v33
  %v51 = vunpack.c.l.bf16 %v34
  %v52 = vunpack.c.l.bf16 %v35
  %v53 = vunpack.c.l.bf16 %v36
  %v54 = vunpack.c.l.bf16 %v37
  %v55 = vunpack.c.l.bf16 %v38
  %v56 = vunpack.c.l.bf16 %v39
  %v57 = vunpack.c.l.bf16 %v40
  %v58 = vunpack.c.l.bf16 %v41
  %v59 = vunpack.c.l.bf16 %v42
  %v60 = vunpack.c.l.bf16 %v43
  %61 = vadd.xlane.f32.xlu0 %v44
  %v62 = vpop.xlane.xlu0 %61
  %63 = vadd.xlane.f32.xlu0 %v45
  %v64 = vpop.xlane.xlu0 %63
  %65 = vadd.xlane.f32.xlu0 %v46
  %v66 = vpop.xlane.xlu0 %65
  %67 = vadd.xlane.f32.xlu0 %v47
  %v68 = vpop.xlane.xlu0 %67
  %69 = vadd.xlane.f32.xlu0 %v48
  %v70 = vpop.xlane.xlu0 %69
  %71 = vadd.xlane.f32.xlu0 %v49
  %v72 = vpop.xlane.xlu0 %71
  %73 = vadd.xlane.f32.xlu0 %v50
  %v74 = vpop.xlane.xlu0 %73
  %75 = vadd.xlane.f32.xlu0 %v51
  %v76 = vpop.xlane.xlu0 %75
  %77 = vadd.xlane.f32.xlu0 %v52
  %v78 = vpop.xlane.xlu0 %77
  %79 = vadd.xlane.f32.xlu0 %v53
  %v80 = vpop.xlane.xlu0 %79
  %81 = vadd.xlane.f32.xlu0 %v54
  %v82 = vpop.xlane.xlu0 %81
  %83 = vadd.xlane.f32.xlu0 %v55
  %v84 = vpop.xlane.xlu0 %83
  %85 = vadd.xlane.f32.xlu0 %v56
  %v86 = vpop.xlane.xlu0 %85
  %87 = vadd.xlane.f32.xlu0 %v57
  %v88 = vpop.xlane.xlu0 %87
  %89 = vadd.xlane.f32.xlu0 %v58
  %v90 = vpop.xlane.xlu0 %89
  %91 = vadd.xlane.f32.xlu0 %v59
  %v92 = vpop.xlane.xlu0 %91
  %vm93 = vcmask 1041408
  %v94 = vsel %vm93, %v60, 0.0
  %95 = vadd.xlane.f32.xlu0 %v94
  %v96 = vpop.xlane.xlu0 %95
  %v97 = vrcp.pop 128.0
  %v98 = vmul.f32 %v62, %v97
  %v99 = vmul.f32 %v64, %v97
  %v100 = vmul.f32 %v66, %v97
  %v101 = vmul.f32 %v68, %v97
  %v102 = vmul.f32 %v70, %v97
  %v103 = vmul.f32 %v72, %v97
  %v104 = vmul.f32 %v74, %v97
  %v105 = vmul.f32 %v76, %v97
  %v106 = vmul.f32 %v78, %v97
  %v107 = vmul.f32 %v80, %v97
  %v108 = vmul.f32 %v82, %v97
  %v109 = vmul.f32 %v84, %v97
  %v110 = vmul.f32 %v86, %v97
  %v111 = vmul.f32 %v88, %v97
  %v112 = vmul.f32 %v90, %v97
  %v113 = vmul.f32 %v92, %v97
  %v114 = vmul.f32 %v96, %v97
  %v115 = vsub.f32 %v44, %v98
  %v116 = vsub.f32 %v45, %v99
  %v117 = vsub.f32 %v46, %v100
  %v118 = vsub.f32 %v47, %v101
  %v119 = vsub.f32 %v48, %v102
  %v120 = vsub.f32 %v49, %v103
  %v121 = vsub.f32 %v50, %v104
  %v122 = vsub.f32 %v51, %v105
  %v123 = vsub.f32 %v52, %v106
  %v124 = vsub.f32 %v53, %v107
  %v125 = vsub.f32 %v54, %v108
  %v126 = vsub.f32 %v55, %v109
  %v127 = vsub.f32 %v56, %v110
  %v128 = vsub.f32 %v57, %v111
  %v129 = vsub.f32 %v58, %v112
  %v130 = vsub.f32 %v59, %v113
  %v131 = vsub.f32 %v60, %v114
  %v132 = vmul.f32 %v115, %v115
  %v133 = vmul.f32 %v116, %v116
  %v134 = vmul.f32 %v117, %v117
  %v135 = vmul.f32 %v118, %v118
  %v136 = vmul.f32 %v119, %v119
  %v137 = vmul.f32 %v120, %v120
  %v138 = vmul.f32 %v121, %v121
  %v139 = vmul.f32 %v122, %v122
  %v140 = vmul.f32 %v123, %v123
  %v141 = vmul.f32 %v124, %v124
  %v142 = vmul.f32 %v125, %v125
  %v143 = vmul.f32 %v126, %v126
  %v144 = vmul.f32 %v127, %v127
  %v145 = vmul.f32 %v128, %v128
  %v146 = vmul.f32 %v129, %v129
  %v147 = vmul.f32 %v130, %v130
  %v148 = vmul.f32 %v131, %v131
  %149 = vadd.xlane.f32.xlu0 %v132
  %v150 = vpop.xlane.xlu0 %149
  %151 = vadd.xlane.f32.xlu0 %v133
  %v152 = vpop.xlane.xlu0 %151
  %153 = vadd.xlane.f32.xlu0 %v134
  %v154 = vpop.xlane.xlu0 %153
  %155 = vadd.xlane.f32.xlu0 %v135
  %v156 = vpop.xlane.xlu0 %155
  %157 = vadd.xlane.f32.xlu0 %v136
  %v158 = vpop.xlane.xlu0 %157
  %159 = vadd.xlane.f32.xlu0 %v137
  %v160 = vpop.xlane.xlu0 %159
  %161 = vadd.xlane.f32.xlu0 %v138
  %v162 = vpop.xlane.xlu0 %161
  %163 = vadd.xlane.f32.xlu0 %v139
  %v164 = vpop.xlane.xlu0 %163
  %165 = vadd.xlane.f32.xlu0 %v140
  %v166 = vpop.xlane.xlu0 %165
  %167 = vadd.xlane.f32.xlu0 %v141
  %v168 = vpop.xlane.xlu0 %167
  %169 = vadd.xlane.f32.xlu0 %v142
  %v170 = vpop.xlane.xlu0 %169
  %171 = vadd.xlane.f32.xlu0 %v143
  %v172 = vpop.xlane.xlu0 %171
  %173 = vadd.xlane.f32.xlu0 %v144
  %v174 = vpop.xlane.xlu0 %173
  %175 = vadd.xlane.f32.xlu0 %v145
  %v176 = vpop.xlane.xlu0 %175
  %177 = vadd.xlane.f32.xlu0 %v146
  %v178 = vpop.xlane.xlu0 %177
  %179 = vadd.xlane.f32.xlu0 %v147
  %v180 = vpop.xlane.xlu0 %179
  %v181 = vsel %vm93, %v148, 0.0
  %182 = vadd.xlane.f32.xlu0 %v181
  %v183 = vpop.xlane.xlu0 %182
  %v184 = vmul.f32 %v150, %v97
  %v185 = vmul.f32 %v152, %v97
  %v186 = vmul.f32 %v154, %v97
  %v187 = vmul.f32 %v156, %v97
  %v188 = vmul.f32 %v158, %v97
  %v189 = vmul.f32 %v160, %v97
  %v190 = vmul.f32 %v162, %v97
  %v191 = vmul.f32 %v164, %v97
  %v192 = vmul.f32 %v166, %v97
  %v193 = vmul.f32 %v168, %v97
  %v194 = vmul.f32 %v170, %v97
  %v195 = vmul.f32 %v172, %v97
  %v196 = vmul.f32 %v174, %v97
  %v197 = vmul.f32 %v176, %v97
  %v198 = vmul.f32 %v178, %v97
  %v199 = vmul.f32 %v180, %v97
  %v200 = vmul.f32 %v183, %v97
  %v201 = vadd.f32 %v184, 1e-06
  %v202 = vadd.f32 %v185, 1e-06
  %v203 = vadd.f32 %v186, 1e-06
  %v204 = vadd.f32 %v187, 1e-06
  %v205 = vadd.f32 %v188, 1e-06
  %v206 = vadd.f32 %v189, 1e-06
  %v207 = vadd.f32 %v190, 1e-06
  %v208 = vadd.f32 %v191, 1e-06
  %v209 = vadd.f32 %v192, 1e-06
  %v210 = vadd.f32 %v193, 1e-06
  %v211 = vadd.f32 %v194, 1e-06
  %v212 = vadd.f32 %v195, 1e-06
  %v213 = vadd.f32 %v196, 1e-06
  %v214 = vadd.f32 %v197, 1e-06
  %v215 = vadd.f32 %v198, 1e-06
  %v216 = vadd.f32 %v199, 1e-06
  %v217 = vadd.f32 %v200, 1e-06
  %v218 = vrsqrt.pop %v201
  %v219 = vrsqrt.pop %v202
  %v220 = vrsqrt.pop %v203
  %v221 = vrsqrt.pop %v204
  %v222 = vrsqrt.pop %v205
  %v223 = vrsqrt.pop %v206
  %v224 = vrsqrt.pop %v207
  %v225 = vrsqrt.pop %v208
  %v226 = vrsqrt.pop %v209
  %v227 = vrsqrt.pop %v210
  %v228 = vrsqrt.pop %v211
  %v229 = vrsqrt.pop %v212
  %v230 = vrsqrt.pop %v213
  %v231 = vrsqrt.pop %v214
  %v232 = vrsqrt.pop %v215
  %v233 = vrsqrt.pop %v216
  %v234 = vrsqrt.pop %v217
  %v235 = vmul.f32 %v115, %v218
  %v236 = vmul.f32 %v116, %v219
  %v237 = vmul.f32 %v117, %v220
  %v238 = vmul.f32 %v118, %v221
  %v239 = vmul.f32 %v119, %v222
  %v240 = vmul.f32 %v120, %v223
  %v241 = vmul.f32 %v121, %v224
  %v242 = vmul.f32 %v122, %v225
  %v243 = vmul.f32 %v123, %v226
  %v244 = vmul.f32 %v124, %v227
  %v245 = vmul.f32 %v125, %v228
  %v246 = vmul.f32 %v126, %v229
  %v247 = vmul.f32 %v127, %v230
  %v248 = vmul.f32 %v128, %v231
  %v249 = vmul.f32 %v129, %v232
  %v250 = vmul.f32 %v130, %v233
  %v251 = vmul.f32 %v131, %v234
  %v252 = vld [vmem:[%s1] sm:$0x1]
  %v254 = vlaneseq
  %v255 = vshrl.u32 %v254, 7
  %v256 = vsub.s32 0, %v255
  %v257 = vrot.slane %v252, %v256
  %v259 = vmul.f32 %v235, %v257
  %v260 = vmul.f32 %v236, %v257
  %v261 = vmul.f32 %v237, %v257
  %v262 = vmul.f32 %v238, %v257
  %v263 = vmul.f32 %v239, %v257
  %v264 = vmul.f32 %v240, %v257
  %v265 = vmul.f32 %v241, %v257
  %v266 = vmul.f32 %v242, %v257
  %v267 = vmul.f32 %v243, %v257
  %v268 = vmul.f32 %v244, %v257
  %v269 = vmul.f32 %v245, %v257
  %v270 = vmul.f32 %v246, %v257
  %v271 = vmul.f32 %v247, %v257
  %v272 = vmul.f32 %v248, %v257
  %v273 = vmul.f32 %v249, %v257
  %v274 = vmul.f32 %v250, %v257
  %v275 = vmul.f32 %v251, %v257
  %v276 = vld [vmem:[%s2] sm:$0x1]
  %v278 = vlaneseq
  %v279 = vshrl.u32 %v278, 7
  %v280 = vsub.s32 0, %v279
  %v281 = vrot.slane %v276, %v280
  %v283 = vadd.f32 %v259, %v281
  %v284 = vadd.f32 %v260, %v281
  %v285 = vadd.f32 %v261, %v281
  %v286 = vadd.f32 %v262, %v281
  %v287 = vadd.f32 %v263, %v281
  %v288 = vadd.f32 %v264, %v281
  %v289 = vadd.f32 %v265, %v281
  %v290 = vadd.f32 %v266, %v281
  %v291 = vadd.f32 %v267, %v281
  %v292 = vadd.f32 %v268, %v281
  %v293 = vadd.f32 %v269, %v281
  %v294 = vadd.f32 %v270, %v281
  %v295 = vadd.f32 %v271, %v281
  %v296 = vadd.f32 %v272, %v281
  %v297 = vadd.f32 %v273, %v281
  %v298 = vadd.f32 %v274, %v281
  %v299 = vadd.f32 %v275, %v281
  %v300 = vpack.c.bf16 %v284, %v283
  %v301 = vpack.c.bf16 %v286, %v285
  %v302 = vpack.c.bf16 %v288, %v287
  %v303 = vpack.c.bf16 %v290, %v289
  %v304 = vpack.c.bf16 %v292, %v291
  %v305 = vpack.c.bf16 %v294, %v293
  %v306 = vpack.c.bf16 %v296, %v295
  %v307 = vpack.c.bf16 %v298, %v297
  %v308 = vpack.c.bf16 %v299, %v299
  %v309 = vld [vmem:[%s3] sm:$0xff]
  %v310 = vld [vmem:[%s3 + $0x8] sm:$0xff]
  %v311 = vld [vmem:[%s3 + $0x10] sm:$0xff]
  %v312 = vld [vmem:[%s3 + $0x18] sm:$0xff]
  %v313 = vld [vmem:[%s3 + $0x20] sm:$0xff]
  %v314 = vld [vmem:[%s3 + $0x28] sm:$0xff]
  %v315 = vld [vmem:[%s3 + $0x30] sm:$0xff]
  %v316 = vld [vmem:[%s3 + $0x38] sm:$0xff]
  %v317 = vld [vmem:[%s3 + $0x40] sm:$0xff]
  %v318 = vld [vmem:[%s3 + $0x48] sm:$0xff]
  %v319 = vld [vmem:[%s3 + $0x50] sm:$0xff]
  %v320 = vld [vmem:[%s3 + $0x58] sm:$0xff]
  %v321 = vld [vmem:[%s3 + $0x60] sm:$0xff]
  %v322 = vld [vmem:[%s3 + $0x68] sm:$0xff]
  %v323 = vld [vmem:[%s3 + $0x70] sm:$0xff]
  %v324 = vld [vmem:[%s3 + $0x78] sm:$0xff]
  %v325 = vld [vmem:[%s3 + $0x80] sm:$0xff]
  %v326 = vld [vmem:[%s3 + $0x88] sm:$0xff]
  %v327 = vld [vmem:[%s3 + $0x90] sm:$0xff]
  %v328 = vld [vmem:[%s3 + $0x98] sm:$0xff]
  %v329 = vld [vmem:[%s3 + $0xa0] sm:$0xff]
  %v330 = vld [vmem:[%s3 + $0xa8] sm:$0xff]
  %v331 = vld [vmem:[%s3 + $0xb0] sm:$0xff]
  %v332 = vld [vmem:[%s3 + $0xb8] sm:$0xff]
  %v333 = vld [vmem:[%s3 + $0xc0] sm:$0xff]
  %v334 = vld [vmem:[%s3 + $0xc8] sm:$0xff]
  %v335 = vld [vmem:[%s3 + $0xd0] sm:$0xff]
  %v336 = vld [vmem:[%s3 + $0xd8] sm:$0xff]
  %v337 = vld [vmem:[%s3 + $0xe0] sm:$0xff]
  %v338 = vld [vmem:[%s3 + $0xe8] sm:$0xff]
  %v339 = vld [vmem:[%s3 + $0xf0] sm:$0xff]
  %v340 = vld [vmem:[%s3 + $0xf8] sm:$0xff]
  %v341 = vld [vmem:[%s4] sm:$0xf]
  %v343 = vlaneseq
  %v344 = vshrl.u32 %v343, 7
  %v345 = vsub.s32 0, %v344
  %v346 = vrot.slane %v341, %v345
  %v347 = vlaneseq
  %v348 = vshrl.u32 %v347, 7
  %v349 = vsub.s32 1, %v348
  %v350 = vrot.slane %v341, %v349
  %v351 = vlaneseq
  %v352 = vshrl.u32 %v351, 7
  %v353 = vsub.s32 2, %v352
  %v354 = vrot.slane %v341, %v353
  %v355 = vlaneseq
  %v356 = vshrl.u32 %v355, 7
  %v357 = vsub.s32 3, %v356
  %v358 = vrot.slane %v341, %v357
  %v395 = vunpack.c.l.b16 %v309
  %v396 = vunpack.c.h.b16 %v309
  %v397 = vunpack.c.l.b16 %v310
  %v398 = vunpack.c.h.b16 %v310
  %v399 = vunpack.c.l.b16 %v311
  %v400 = vunpack.c.h.b16 %v311
  %v401 = vunpack.c.l.b16 %v312
  %v402 = vunpack.c.h.b16 %v312
  %v403 = vunpack.c.l.b16 %v313
  %v404 = vunpack.c.h.b16 %v313
  %v405 = vunpack.c.l.b16 %v314
  %v406 = vunpack.c.h.b16 %v314
  %v407 = vunpack.c.l.b16 %v315
  %v408 = vunpack.c.h.b16 %v315
  %v409 = vunpack.c.l.b16 %v316
  %v410 = vunpack.c.h.b16 %v316
  %v411 = vunpack.c.l.b16 %v317
  %v412 = vunpack.c.h.b16 %v317
  %v413 = vunpack.c.l.b16 %v318
  %v414 = vunpack.c.h.b16 %v318
  %v415 = vunpack.c.l.b16 %v319
  %v416 = vunpack.c.h.b16 %v319
  %v417 = vunpack.c.l.b16 %v320
  %v418 = vunpack.c.h.b16 %v320
  %v419 = vunpack.c.l.b16 %v321
  %v420 = vunpack.c.h.b16 %v321
  %v421 = vunpack.c.l.b16 %v322
  %v422 = vunpack.c.h.b16 %v322
  %v423 = vunpack.c.l.b16 %v323
  %v424 = vunpack.c.h.b16 %v323
  %v425 = vunpack.c.l.b16 %v324
  %v426 = vunpack.c.h.b16 %v324
  %v427 = vunpack.c.l.b16 %v325
  %v428 = vunpack.c.h.b16 %v325
  %v429 = vunpack.c.l.b16 %v326
  %v430 = vunpack.c.h.b16 %v326
  %v431 = vunpack.c.l.b16 %v327
  %v432 = vunpack.c.h.b16 %v327
  %v433 = vunpack.c.l.b16 %v328
  %v434 = vunpack.c.h.b16 %v328
  %v435 = vunpack.c.l.b16 %v329
  %v436 = vunpack.c.h.b16 %v329
  %v437 = vunpack.c.l.b16 %v330
  %v438 = vunpack.c.h.b16 %v330
  %v439 = vunpack.c.l.b16 %v331
  %v440 = vunpack.c.h.b16 %v331
  %v441 = vunpack.c.l.b16 %v332
  %v442 = vunpack.c.h.b16 %v332
  %v443 = vunpack.c.l.b16 %v333
  %v444 = vunpack.c.h.b16 %v333
  %v445 = vunpack.c.l.b16 %v334
  %v446 = vunpack.c.h.b16 %v334
  %v447 = vunpack.c.l.b16 %v335
  %v448 = vunpack.c.h.b16 %v335
  %v449 = vunpack.c.l.b16 %v336
  %v450 = vunpack.c.h.b16 %v336
  %v451 = vunpack.c.l.b16 %v337
  %v452 = vunpack.c.h.b16 %v337
  %v453 = vunpack.c.l.b16 %v338
  %v454 = vunpack.c.h.b16 %v338
  %v455 = vunpack.c.l.b16 %v339
  %v456 = vunpack.c.h.b16 %v339
  %v457 = vunpack.c.l.b16 %v340
  %v458 = vunpack.c.h.b16 %v340
  %v459 = vpack.c.b16 %v399, %v395
  %v460 = vpack.c.b16 %v400, %v396
  %v461 = vpack.c.b16 %v401, %v397
  %v462 = vpack.c.b16 %v402, %v398
  %v463 = vpack.c.b16 %v407, %v403
  %v464 = vpack.c.b16 %v408, %v404
  %v465 = vpack.c.b16 %v409, %v405
  %v466 = vpack.c.b16 %v410, %v406
  %v467 = vpack.c.b16 %v415, %v411
  %v468 = vpack.c.b16 %v416, %v412
  %v469 = vpack.c.b16 %v417, %v413
  %v470 = vpack.c.b16 %v418, %v414
  %v471 = vpack.c.b16 %v423, %v419
  %v472 = vpack.c.b16 %v424, %v420
  %v473 = vpack.c.b16 %v425, %v421
  %v474 = vpack.c.b16 %v426, %v422
  %v475 = vpack.c.b16 %v431, %v427
  %v476 = vpack.c.b16 %v432, %v428
  %v477 = vpack.c.b16 %v433, %v429
  %v478 = vpack.c.b16 %v434, %v430
  %v479 = vpack.c.b16 %v439, %v435
  %v480 = vpack.c.b16 %v440, %v436
  %v481 = vpack.c.b16 %v441, %v437
  %v482 = vpack.c.b16 %v442, %v438
  %v483 = vpack.c.b16 %v447, %v443
  %v484 = vpack.c.b16 %v448, %v444
  %v485 = vpack.c.b16 %v449, %v445
  %v486 = vpack.c.b16 %v450, %v446
  %v487 = vpack.c.b16 %v455, %v451
  %v488 = vpack.c.b16 %v456, %v452
  %v489 = vpack.c.b16 %v457, %v453
  %v490 = vpack.c.b16 %v458, %v454
  %523 = vmatprep.subr.bf16.mxu0 %v460
  %524 = vmatpush1.bf16.msra.mxu0 %v459
  %525 = vmatprep.subr.bf16.mxu0 %v464
  %526 = vmatpush1.bf16.msra.mxu0 %v463
  %527 = vmatprep.subr.bf16.mxu0 %v468
  %528 = vmatpush1.bf16.msra.mxu0 %v467
  %529 = vmatprep.subr.bf16.mxu0 %v472
  %530 = vmatpush1.bf16.msra.mxu0 %v471
  %531 = vmatprep.subr.bf16.mxu0 %v476
  %532 = vmatpush1.bf16.msra.mxu0 %v475
  %533 = vmatprep.subr.bf16.mxu0 %v480
  %534 = vmatpush1.bf16.msra.mxu0 %v479
  %535 = vmatprep.subr.bf16.mxu0 %v484
  %536 = vmatpush1.bf16.msra.mxu0 %v483
  %537 = vmatprep.subr.bf16.mxu0 %v488
  %538 = vmatpush1.bf16.msra.mxu0 %v487
  %539 = vmatprep.subr.bf16.mxu0 0
  %540 = vmatpush1.bf16.msra.mxu0 0
  %541 = vmatprep.subr.bf16.mxu0 0
  %542 = vmatpush1.bf16.msra.mxu0 0
  %543 = vmatprep.subr.bf16.mxu0 0
  %544 = vmatpush1.bf16.msra.mxu0 0
  %545 = vmatprep.subr.bf16.mxu0 0
  %546 = vmatpush1.bf16.msra.mxu0 0
  %547 = vmatprep.subr.bf16.mxu0 0
  %548 = vmatpush1.bf16.msra.mxu0 0
  %549 = vmatprep.subr.bf16.mxu0 0
  %550 = vmatpush1.bf16.msra.mxu0 0
  %551 = vmatprep.subr.bf16.mxu0 0
  %552 = vmatpush1.bf16.msra.mxu0 0
  %553 = vmatprep.subr.bf16.mxu0 0
  %554 = vmatpush1.bf16.msra.mxu0 0
  %555 = vmatprep.mubr.bf16.mxu0 0
  %556 = vmatmul.mubr.bf16.gmra.mrb[0].mxu0 %v300
  %v557 = vpop.f32.mrb[0].mxu0
  %v558 = vadd.f32 %v346, %v557
  %v559 = vpop.f32.mrb[0].mxu0
  %v560 = vadd.f32 %v350, %v559
  %v561 = vpop.f32.mrb[0].mxu0
  %v562 = vadd.f32 %v346, %v561
  %v563 = vpop.f32.mrb[0].mxu0
  %v564 = vadd.f32 %v350, %v563
  %565 = vmatprep.mubr.bf16.mxu0 0
  %566 = vmatmul.mubr.bf16.gmra.mrb[0].mxu0 %v301
  %v567 = vpop.f32.mrb[0].mxu0
  %v568 = vadd.f32 %v346, %v567
  %v569 = vpop.f32.mrb[0].mxu0
  %v570 = vadd.f32 %v350, %v569
  %v571 = vpop.f32.mrb[0].mxu0
  %v572 = vadd.f32 %v346, %v571
  %v573 = vpop.f32.mrb[0].mxu0
  %v574 = vadd.f32 %v350, %v573
  %575 = vmatprep.mubr.bf16.mxu0 0
  %576 = vmatmul.mubr.bf16.gmra.mrb[0].mxu0 %v302
  %v577 = vpop.f32.mrb[0].mxu0
  %v578 = vadd.f32 %v346, %v577
  %v579 = vpop.f32.mrb[0].mxu0
  %v580 = vadd.f32 %v350, %v579
  %v581 = vpop.f32.mrb[0].mxu0
  %v582 = vadd.f32 %v346, %v581
  %v583 = vpop.f32.mrb[0].mxu0
  %v584 = vadd.f32 %v350, %v583
  %585 = vmatprep.mubr.bf16.mxu0 0
  %586 = vmatmul.mubr.bf16.gmra.mrb[0].mxu0 %v303
  %v587 = vpop.f32.mrb[0].mxu0
  %v588 = vadd.f32 %v346, %v587
  %v589 = vpop.f32.mrb[0].mxu0
  %v590 = vadd.f32 %v350, %v589
  %v591 = vpop.f32.mrb[0].mxu0
  %v592 = vadd.f32 %v346, %v591
  %v593 = vpop.f32.mrb[0].mxu0
  %v594 = vadd.f32 %v350, %v593
  %595 = vmatprep.mubr.bf16.mxu0 0
  %596 = vmatmul.mubr.bf16.gmra.mrb[0].mxu0 %v304
  %v597 = vpop.f32.mrb[0].mxu0
  %v598 = vadd.f32 %v346, %v597
  %v599 = vpop.f32.mrb[0].mxu0
  %v600 = vadd.f32 %v350, %v599
  %v601 = vpop.f32.mrb[0].mxu0
  %v602 = vadd.f32 %v346, %v601
  %v603 = vpop.f32.mrb[0].mxu0
  %v604 = vadd.f32 %v350, %v603
  %605 = vmatprep.mubr.bf16.mxu0 0
  %606 = vmatmul.mubr.bf16.gmra.mrb[0].mxu0 %v305
  %v607 = vpop.f32.mrb[0].mxu0
  %v608 = vadd.f32 %v346, %v607
  %v609 = vpop.f32.mrb[0].mxu0
  %v610 = vadd.f32 %v350, %v609
  %v611 = vpop.f32.mrb[0].mxu0
  %v612 = vadd.f32 %v346, %v611
  %v613 = vpop.f32.mrb[0].mxu0
  %v614 = vadd.f32 %v350, %v613
  %615 = vmatprep.mubr.bf16.mxu0 0
  %616 = vmatmul.mubr.bf16.gmra.mrb[0].mxu0 %v306
  %v617 = vpop.f32.mrb[0].mxu0
  %v618 = vadd.f32 %v346, %v617
  %v619 = vpop.f32.mrb[0].mxu0
  %v620 = vadd.f32 %v350, %v619
  %v621 = vpop.f32.mrb[0].mxu0
  %v622 = vadd.f32 %v346, %v621
  %v623 = vpop.f32.mrb[0].mxu0
  %v624 = vadd.f32 %v350, %v623
  %625 = vmatprep.mubr.bf16.mxu0 0
  %626 = vmatmul.mubr.bf16.gmra.mrb[0].mxu0 %v307
  %v627 = vpop.f32.mrb[0].mxu0
  %v628 = vadd.f32 %v346, %v627
  %v629 = vpop.f32.mrb[0].mxu0
  %v630 = vadd.f32 %v350, %v629
  %v631 = vpop.f32.mrb[0].mxu0
  %v632 = vadd.f32 %v346, %v631
  %v633 = vpop.f32.mrb[0].mxu0
  %v634 = vadd.f32 %v350, %v633
  %635 = vmatprep.mubr.bf16.mxu0 0
  %636 = vmatmul.mubr.bf16.gmra.mrb[0].mxu0 %v308
  %v637 = vpop.f32.mrb[0].mxu0
  %v638 = vadd.f32 %v346, %v637
  %v639 = vpop.f32.mrb[0].mxu0
  %v640 = vadd.f32 %v350, %v639
  %v641 = vpop.f32.mrb[0].mxu0
  %v642 = vpop.f32.mrb[0].mxu0
  %643 = vdwg.mxu0
  %644 = vmatprep.subr.bf16.mxu0 %v462
  %645 = vmatpush1.bf16.msra.mxu0 %v461
  %646 = vmatprep.subr.bf16.mxu0 %v466
  %647 = vmatpush1.bf16.msra.mxu0 %v465
  %648 = vmatprep.subr.bf16.mxu0 %v470
  %649 = vmatpush1.bf16.msra.mxu0 %v469
  %650 = vmatprep.subr.bf16.mxu0 %v474
  %651 = vmatpush1.bf16.msra.mxu0 %v473
  %652 = vmatprep.subr.bf16.mxu0 %v478
  %653 = vmatpush1.bf16.msra.mxu0 %v477
  %654 = vmatprep.subr.bf16.mxu0 %v482
  %655 = vmatpush1.bf16.msra.mxu0 %v481
  %656 = vmatprep.subr.bf16.mxu0 %v486
  %657 = vmatpush1.bf16.msra.mxu0 %v485
  %658 = vmatprep.subr.bf16.mxu0 %v490
  %659 = vmatpush1.bf16.msra.mxu0 %v489
  %660 = vmatprep.subr.bf16.mxu0 0
  %661 = vmatpush1.bf16.msra.mxu0 0
  %662 = vmatprep.subr.bf16.mxu0 0
  %663 = vmatpush1.bf16.msra.mxu0 0
  %664 = vmatprep.subr.bf16.mxu0 0
  %665 = vmatpush1.bf16.msra.mxu0 0
  %666 = vmatprep.subr.bf16.mxu0 0
  %667 = vmatpush1.bf16.msra.mxu0 0
  %668 = vmatprep.subr.bf16.mxu0 0
  %669 = vmatpush1.bf16.msra.mxu0 0
  %670 = vmatprep.subr.bf16.mxu0 0
  %671 = vmatpush1.bf16.msra.mxu0 0
  %672 = vmatprep.subr.bf16.mxu0 0
  %673 = vmatpush1.bf16.msra.mxu0 0
  %674 = vmatprep.subr.bf16.mxu0 0
  %675 = vmatpush1.bf16.msra.mxu0 0
  %676 = vmatprep.mubr.bf16.mxu0 0
  %677 = vmatmul.mubr.bf16.gmra.mrb[0].mxu0 %v300
  %v678 = vpop.f32.mrb[0].mxu0
  %v679 = vadd.f32 %v354, %v678
  %v680 = vpop.f32.mrb[0].mxu0
  %v681 = vadd.f32 %v358, %v680
  %v682 = vpop.f32.mrb[0].mxu0
  %v683 = vadd.f32 %v354, %v682
  %v684 = vpop.f32.mrb[0].mxu0
  %v685 = vadd.f32 %v358, %v684
  %686 = vmatprep.mubr.bf16.mxu0 0
  %687 = vmatmul.mubr.bf16.gmra.mrb[0].mxu0 %v301
  %v688 = vpop.f32.mrb[0].mxu0
  %v689 = vadd.f32 %v354, %v688
  %v690 = vpop.f32.mrb[0].mxu0
  %v691 = vadd.f32 %v358, %v690
  %v692 = vpop.f32.mrb[0].mxu0
  %v693 = vadd.f32 %v354, %v692
  %v694 = vpop.f32.mrb[0].mxu0
  %v695 = vadd.f32 %v358, %v694
  %696 = vmatprep.mubr.bf16.mxu0 0
  %697 = vmatmul.mubr.bf16.gmra.mrb[0].mxu0 %v302
  %v698 = vpop.f32.mrb[0].mxu0
  %v699 = vadd.f32 %v354, %v698
  %v700 = vpop.f32.mrb[0].mxu0
  %v701 = vadd.f32 %v358, %v700
  %v702 = vpop.f32.mrb[0].mxu0
  %v703 = vadd.f32 %v354, %v702
  %v704 = vpop.f32.mrb[0].mxu0
  %v705 = vadd.f32 %v358, %v704
  %706 = vmatprep.mubr.bf16.mxu0 0
  %707 = vmatmul.mubr.bf16.gmra.mrb[0].mxu0 %v303
  %v708 = vpop.f32.mrb[0].mxu0
  %v709 = vadd.f32 %v354, %v708
  %v710 = vpop.f32.mrb[0].mxu0
  %v711 = vadd.f32 %v358, %v710
  %v712 = vpop.f32.mrb[0].mxu0
  %v713 = vadd.f32 %v354, %v712
  %v714 = vpop.f32.mrb[0].mxu0
  %v715 = vadd.f32 %v358, %v714
  %716 = vmatprep.mubr.bf16.mxu0 0
  %717 = vmatmul.mubr.bf16.gmra.mrb[0].mxu0 %v304
  %v718 = vpop.f32.mrb[0].mxu0
  %v719 = vadd.f32 %v354, %v718
  %v720 = vpop.f32.mrb[0].mxu0
  %v721 = vadd.f32 %v358, %v720
  %v722 = vpop.f32.mrb[0].mxu0
  %v723 = vadd.f32 %v354, %v722
  %v724 = vpop.f32.mrb[0].mxu0
  %v725 = vadd.f32 %v358, %v724
  %726 = vmatprep.mubr.bf16.mxu0 0
  %727 = vmatmul.mubr.bf16.gmra.mrb[0].mxu0 %v305
  %v728 = vpop.f32.mrb[0].mxu0
  %v729 = vadd.f32 %v354, %v728
  %v730 = vpop.f32.mrb[0].mxu0
  %v731 = vadd.f32 %v358, %v730
  %v732 = vpop.f32.mrb[0].mxu0
  %v733 = vadd.f32 %v354, %v732
  %v734 = vpop.f32.mrb[0].mxu0
  %v735 = vadd.f32 %v358, %v734
  %736 = vmatprep.mubr.bf16.mxu0 0
  %737 = vmatmul.mubr.bf16.gmra.mrb[0].mxu0 %v306
  %v738 = vpop.f32.mrb[0].mxu0
  %v739 = vadd.f32 %v354, %v738
  %v740 = vpop.f32.mrb[0].mxu0
  %v741 = vadd.f32 %v358, %v740
  %v742 = vpop.f32.mrb[0].mxu0
  %v743 = vadd.f32 %v354, %v742
  %v744 = vpop.f32.mrb[0].mxu0
  %v745 = vadd.f32 %v358, %v744
  %746 = vmatprep.mubr.bf16.mxu0 0
  %747 = vmatmul.mubr.bf16.gmra.mrb[0].mxu0 %v307
  %v748 = vpop.f32.mrb[0].mxu0
  %v749 = vadd.f32 %v354, %v748
  %v750 = vpop.f32.mrb[0].mxu0
  %v751 = vadd.f32 %v358, %v750
  %v752 = vpop.f32.mrb[0].mxu0
  %v753 = vadd.f32 %v354, %v752
  %v754 = vpop.f32.mrb[0].mxu0
  %v755 = vadd.f32 %v358, %v754
  %756 = vmatprep.mubr.bf16.mxu0 0
  %757 = vmatmul.mubr.bf16.gmra.mrb[0].mxu0 %v308
  %v758 = vpop.f32.mrb[0].mxu0
  %v759 = vadd.f32 %v354, %v758
  %v760 = vpop.f32.mrb[0].mxu0
  %v761 = vadd.f32 %v358, %v760
  %v762 = vpop.f32.mrb[0].mxu0
  %v763 = vpop.f32.mrb[0].mxu0
  %764 = vdwg.mxu0
  %v765 = vmul.f32 %v558, 0.5
  %v766 = vmul.f32 %v560, 0.5
  %v767 = vmul.f32 %v679, 0.5
  %v768 = vmul.f32 %v681, 0.5
  %v769 = vmul.f32 %v562, 0.5
  %v770 = vmul.f32 %v564, 0.5
  %v771 = vmul.f32 %v683, 0.5
  %v772 = vmul.f32 %v685, 0.5
  %v773 = vmul.f32 %v568, 0.5
  %v774 = vmul.f32 %v570, 0.5
  %v775 = vmul.f32 %v689, 0.5
  %v776 = vmul.f32 %v691, 0.5
  %v777 = vmul.f32 %v572, 0.5
  %v778 = vmul.f32 %v574, 0.5
  %v779 = vmul.f32 %v693, 0.5
  %v780 = vmul.f32 %v695, 0.5
  %v781 = vmul.f32 %v578, 0.5
  %v782 = vmul.f32 %v580, 0.5
  %v783 = vmul.f32 %v699, 0.5
  %v784 = vmul.f32 %v701, 0.5
  %v785 = vmul.f32 %v582, 0.5
  %v786 = vmul.f32 %v584, 0.5
  %v787 = vmul.f32 %v703, 0.5
  %v788 = vmul.f32 %v705, 0.5
  %v789 = vmul.f32 %v588, 0.5
  %v790 = vmul.f32 %v590, 0.5
  %v791 = vmul.f32 %v709, 0.5
  %v792 = vmul.f32 %v711, 0.5
  %v793 = vmul.f32 %v592, 0.5
  %v794 = vmul.f32 %v594, 0.5
  %v795 = vmul.f32 %v713, 0.5
  %v796 = vmul.f32 %v715, 0.5
  %v797 = vmul.f32 %v598, 0.5
  %v798 = vmul.f32 %v600, 0.5
  %v799 = vmul.f32 %v719, 0.5
  %v800 = vmul.f32 %v721, 0.5
  %v801 = vmul.f32 %v602, 0.5
  %v802 = vmul.f32 %v604, 0.5
  %v803 = vmul.f32 %v723, 0.5
  %v804 = vmul.f32 %v725, 0.5
  %v805 = vmul.f32 %v608, 0.5
  %v806 = vmul.f32 %v610, 0.5
  %v807 = vmul.f32 %v729, 0.5
  %v808 = vmul.f32 %v731, 0.5
  %v809 = vmul.f32 %v612, 0.5
  %v810 = vmul.f32 %v614, 0.5
  %v811 = vmul.f32 %v733, 0.5
  %v812 = vmul.f32 %v735, 0.5
  %v813 = vmul.f32 %v618, 0.5
  %v814 = vmul.f32 %v620, 0.5
  %v815 = vmul.f32 %v739, 0.5
  %v816 = vmul.f32 %v741, 0.5
  %v817 = vmul.f32 %v622, 0.5
  %v818 = vmul.f32 %v624, 0.5
  %v819 = vmul.f32 %v743, 0.5
  %v820 = vmul.f32 %v745, 0.5
  %v821 = vmul.f32 %v628, 0.5
  %v822 = vmul.f32 %v630, 0.5
  %v823 = vmul.f32 %v749, 0.5
  %v824 = vmul.f32 %v751, 0.5
  %v825 = vmul.f32 %v632, 0.5
  %v826 = vmul.f32 %v634, 0.5
  %v827 = vmul.f32 %v753, 0.5
  %v828 = vmul.f32 %v755, 0.5
  %v829 = vmul.f32 %v638, 0.5
  %v830 = vmul.f32 %v640, 0.5
  %v831 = vmul.f32 %v759, 0.5
  %v832 = vmul.f32 %v761, 0.5
  %v833 = vmul.f32 %v558, 0.044715
  %v834 = vmul.f32 %v560, 0.044715
  %v835 = vmul.f32 %v679, 0.044715
  %v836 = vmul.f32 %v681, 0.044715
  %v837 = vmul.f32 %v562, 0.044715
  %v838 = vmul.f32 %v564, 0.044715
  %v839 = vmul.f32 %v683, 0.044715
  %v840 = vmul.f32 %v685, 0.044715
  %v841 = vmul.f32 %v568, 0.044715
  %v842 = vmul.f32 %v570, 0.044715
  %v843 = vmul.f32 %v689, 0.044715
  %v844 = vmul.f32 %v691, 0.044715
  %v845 = vmul.f32 %v572, 0.044715
  %v846 = vmul.f32 %v574, 0.044715
  %v847 = vmul.f32 %v693, 0.044715
  %v848 = vmul.f32 %v695, 0.044715
  %v849 = vmul.f32 %v578, 0.044715
  %v850 = vmul.f32 %v580, 0.044715
  %v851 = vmul.f32 %v699, 0.044715
  %v852 = vmul.f32 %v701, 0.044715
  %v853 = vmul.f32 %v582, 0.044715
  %v854 = vmul.f32 %v584, 0.044715
  %v855 = vmul.f32 %v703, 0.044715
  %v856 = vmul.f32 %v705, 0.044715
  %v857 = vmul.f32 %v588, 0.044715
  %v858 = vmul.f32 %v590, 0.044715
  %v859 = vmul.f32 %v709, 0.044715
  %v860 = vmul.f32 %v711, 0.044715
  %v861 = vmul.f32 %v592, 0.044715
  %v862 = vmul.f32 %v594, 0.044715
  %v863 = vmul.f32 %v713, 0.044715
  %v864 = vmul.f32 %v715, 0.044715
  %v865 = vmul.f32 %v598, 0.044715
  %v866 = vmul.f32 %v600, 0.044715
  %v867 = vmul.f32 %v719, 0.044715
  %v868 = vmul.f32 %v721, 0.044715
  %v869 = vmul.f32 %v602, 0.044715
  %v870 = vmul.f32 %v604, 0.044715
  %v871 = vmul.f32 %v723, 0.044715
  %v872 = vmul.f32 %v725, 0.044715
  %v873 = vmul.f32 %v608, 0.044715
  %v874 = vmul.f32 %v610, 0.044715
  %v875 = vmul.f32 %v729, 0.044715
  %v876 = vmul.f32 %v731, 0.044715
  %v877 = vmul.f32 %v612, 0.044715
  %v878 = vmul.f32 %v614, 0.044715
  %v879 = vmul.f32 %v733, 0.044715
  %v880 = vmul.f32 %v735, 0.044715
  %v881 = vmul.f32 %v618, 0.044715
  %v882 = vmul.f32 %v620, 0.044715
  %v883 = vmul.f32 %v739, 0.044715
  %v884 = vmul.f32 %v741, 0.044715
  %v885 = vmul.f32 %v622, 0.044715
  %v886 = vmul.f32 %v624, 0.044715
  %v887 = vmul.f32 %v743, 0.044715
  %v888 = vmul.f32 %v745, 0.044715
  %v889 = vmul.f32 %v628, 0.044715
  %v890 = vmul.f32 %v630, 0.044715
  %v891 = vmul.f32 %v749, 0.044715
  %v892 = vmul.f32 %v751, 0.044715
  %v893 = vmul.f32 %v632, 0.044715
  %v894 = vmul.f32 %v634, 0.044715
  %v895 = vmul.f32 %v753, 0.044715
  %v896 = vmul.f32 %v755, 0.044715
  %v897 = vmul.f32 %v638, 0.044715
  %v898 = vmul.f32 %v640, 0.044715
  %v899 = vmul.f32 %v759, 0.044715
  %v900 = vmul.f32 %v761, 0.044715
  %v901 = vmul.f32 %v833, %v558
  %v902 = vmul.f32 %v834, %v560
  %v903 = vmul.f32 %v835, %v679
  %v904 = vmul.f32 %v836, %v681
  %v905 = vmul.f32 %v837, %v562
  %v906 = vmul.f32 %v838, %v564
  %v907 = vmul.f32 %v839, %v683
  %v908 = vmul.f32 %v840, %v685
  %v909 = vmul.f32 %v841, %v568
  %v910 = vmul.f32 %v842, %v570
  %v911 = vmul.f32 %v843, %v689
  %v912 = vmul.f32 %v844, %v691
  %v913 = vmul.f32 %v845, %v572
  %v914 = vmul.f32 %v846, %v574
  %v915 = vmul.f32 %v847, %v693
  %v916 = vmul.f32 %v848, %v695
  %v917 = vmul.f32 %v849, %v578
  %v918 = vmul.f32 %v850, %v580
  %v919 = vmul.f32 %v851, %v699
  %v920 = vmul.f32 %v852, %v701
  %v921 = vmul.f32 %v853, %v582
  %v922 = vmul.f32 %v854, %v584
  %v923 = vmul.f32 %v855, %v703
  %v924 = vmul.f32 %v856, %v705
  %v925 = vmul.f32 %v857, %v588
  %v926 = vmul.f32 %v858, %v590
  %v927 = vmul.f32 %v859, %v709
  %v928 = vmul.f32 %v860, %v711
  %v929 = vmul.f32 %v861, %v592
  %v930 = vmul.f32 %v862, %v594
  %v931 = vmul.f32 %v863, %v713
  %v932 = vmul.f32 %v864, %v715
  %v933 = vmul.f32 %v865, %v598
  %v934 = vmul.f32 %v866, %v600
  %v935 = vmul.f32 %v867, %v719
  %v936 = vmul.f32 %v868, %v721
  %v937 = vmul.f32 %v869, %v602
  %v938 = vmul.f32 %v870, %v604
  %v939 = vmul.f32 %v871, %v723
  %v940 = vmul.f32 %v872, %v725
  %v941 = vmul.f32 %v873, %v608
  %v942 = vmul.f32 %v874, %v610
  %v943 = vmul.f32 %v875, %v729
  %v944 = vmul.f32 %v876, %v731
  %v945 = vmul.f32 %v877, %v612
  %v946 = vmul.f32 %v878, %v614
  %v947 = vmul.f32 %v879, %v733
  %v948 = vmul.f32 %v880, %v735
  %v949 = vmul.f32 %v881, %v618
  %v950 = vmul.f32 %v882, %v620
  %v951 = vmul.f32 %v883, %v739
  %v952 = vmul.f32 %v884, %v741
  %v953 = vmul.f32 %v885, %v622
  %v954 = vmul.f32 %v886, %v624
  %v955 = vmul.f32 %v887, %v743
  %v956 = vmul.f32 %v888, %v745
  %v957 = vmul.f32 %v889, %v628
  %v958 = vmul.f32 %v890, %v630
  %v959 = vmul.f32 %v891, %v749
  %v960 = vmul.f32 %v892, %v751
  %v961 = vmul.f32 %v893, %v632
  %v962 = vmul.f32 %v894, %v634
  %v963 = vmul.f32 %v895, %v753
  %v964 = vmul.f32 %v896, %v755
  %v965 = vmul.f32 %v897, %v638
  %v966 = vmul.f32 %v898, %v640
  %v967 = vmul.f32 %v899, %v759
  %v968 = vmul.f32 %v900, %v761
  %v969 = vmul.f32 %v901, %v558
  %v970 = vmul.f32 %v902, %v560
  %v971 = vmul.f32 %v903, %v679
  %v972 = vmul.f32 %v904, %v681
  %v973 = vmul.f32 %v905, %v562
  %v974 = vmul.f32 %v906, %v564
  %v975 = vmul.f32 %v907, %v683
  %v976 = vmul.f32 %v908, %v685
  %v977 = vmul.f32 %v909, %v568
  %v978 = vmul.f32 %v910, %v570
  %v979 = vmul.f32 %v911, %v689
  %v980 = vmul.f32 %v912, %v691
  %v981 = vmul.f32 %v913, %v572
  %v982 = vmul.f32 %v914, %v574
  %v983 = vmul.f32 %v915, %v693
  %v984 = vmul.f32 %v916, %v695
  %v985 = vmul.f32 %v917, %v578
  %v986 = vmul.f32 %v918, %v580
  %v987 = vmul.f32 %v919, %v699
  %v988 = vmul.f32 %v920, %v701
  %v989 = vmul.f32 %v921, %v582
  %v990 = vmul.f32 %v922, %v584
  %v991 = vmul.f32 %v923, %v703
  %v992 = vmul.f32 %v924, %v705
  %v993 = vmul.f32 %v925, %v588
  %v994 = vmul.f32 %v926, %v590
  %v995 = vmul.f32 %v927, %v709
  %v996 = vmul.f32 %v928, %v711
  %v997 = vmul.f32 %v929, %v592
  %v998 = vmul.f32 %v930, %v594
  %v999 = vmul.f32 %v931, %v713
  %v1000 = vmul.f32 %v932, %v715
  %v1001 = vmul.f32 %v933, %v598
  %v1002 = vmul.f32 %v934, %v600
  %v1003 = vmul.f32 %v935, %v719
  %v1004 = vmul.f32 %v936, %v721
  %v1005 = vmul.f32 %v937, %v602
  %v1006 = vmul.f32 %v938, %v604
  %v1007 = vmul.f32 %v939, %v723
  %v1008 = vmul.f32 %v940, %v725
  %v1009 = vmul.f32 %v941, %v608
  %v1010 = vmul.f32 %v942, %v610
  %v1011 = vmul.f32 %v943, %v729
  %v1012 = vmul.f32 %v944, %v731
  %v1013 = vmul.f32 %v945, %v612
  %v1014 = vmul.f32 %v946, %v614
  %v1015 = vmul.f32 %v947, %v733
  %v1016 = vmul.f32 %v948, %v735
  %v1017 = vmul.f32 %v949, %v618
  %v1018 = vmul.f32 %v950, %v620
  %v1019 = vmul.f32 %v951, %v739
  %v1020 = vmul.f32 %v952, %v741
  %v1021 = vmul.f32 %v953, %v622
  %v1022 = vmul.f32 %v954, %v624
  %v1023 = vmul.f32 %v955, %v743
  %v1024 = vmul.f32 %v956, %v745
  %v1025 = vmul.f32 %v957, %v628
  %v1026 = vmul.f32 %v958, %v630
  %v1027 = vmul.f32 %v959, %v749
  %v1028 = vmul.f32 %v960, %v751
  %v1029 = vmul.f32 %v961, %v632
  %v1030 = vmul.f32 %v962, %v634
  %v1031 = vmul.f32 %v963, %v753
  %v1032 = vmul.f32 %v964, %v755
  %v1033 = vmul.f32 %v965, %v638
  %v1034 = vmul.f32 %v966, %v640
  %v1035 = vmul.f32 %v967, %v759
  %v1036 = vmul.f32 %v968, %v761
  %v1037 = vadd.f32 %v558, %v969
  %v1038 = vadd.f32 %v560, %v970
  %v1039 = vadd.f32 %v679, %v971
  %v1040 = vadd.f32 %v681, %v972
  %v1041 = vadd.f32 %v562, %v973
  %v1042 = vadd.f32 %v564, %v974
  %v1043 = vadd.f32 %v683, %v975
  %v1044 = vadd.f32 %v685, %v976
  %v1045 = vadd.f32 %v568, %v977
  %v1046 = vadd.f32 %v570, %v978
  %v1047 = vadd.f32 %v689, %v979
  %v1048 = vadd.f32 %v691, %v980
  %v1049 = vadd.f32 %v572, %v981
  %v1050 = vadd.f32 %v574, %v982
  %v1051 = vadd.f32 %v693, %v983
  %v1052 = vadd.f32 %v695, %v984
  %v1053 = vadd.f32 %v578, %v985
  %v1054 = vadd.f32 %v580, %v986
  %v1055 = vadd.f32 %v699, %v987
  %v1056 = vadd.f32 %v701, %v988
  %v1057 = vadd.f32 %v582, %v989
  %v1058 = vadd.f32 %v584, %v990
  %v1059 = vadd.f32 %v703, %v991
  %v1060 = vadd.f32 %v705, %v992
  %v1061 = vadd.f32 %v588, %v993
  %v1062 = vadd.f32 %v590, %v994
  %v1063 = vadd.f32 %v709, %v995
  %v1064 = vadd.f32 %v711, %v996
  %v1065 = vadd.f32 %v592, %v997
  %v1066 = vadd.f32 %v594, %v998
  %v1067 = vadd.f32 %v713, %v999
  %v1068 = vadd.f32 %v715, %v1000
  %v1069 = vadd.f32 %v598, %v1001
  %v1070 = vadd.f32 %v600, %v1002
  %v1071 = vadd.f32 %v719, %v1003
  %v1072 = vadd.f32 %v721, %v1004
  %v1073 = vadd.f32 %v602, %v1005
  %v1074 = vadd.f32 %v604, %v1006
  %v1075 = vadd.f32 %v723, %v1007
  %v1076 = vadd.f32 %v725, %v1008
  %v1077 = vadd.f32 %v608, %v1009
  %v1078 = vadd.f32 %v610, %v1010
  %v1079 = vadd.f32 %v729, %v1011
  %v1080 = vadd.f32 %v731, %v1012
  %v1081 = vadd.f32 %v612, %v1013
  %v1082 = vadd.f32 %v614, %v1014
  %v1083 = vadd.f32 %v733, %v1015
  %v1084 = vadd.f32 %v735, %v1016
  %v1085 = vadd.f32 %v618, %v1017
  %v1086 = vadd.f32 %v620, %v1018
  %v1087 = vadd.f32 %v739, %v1019
  %v1088 = vadd.f32 %v741, %v1020
  %v1089 = vadd.f32 %v622, %v1021
  %v1090 = vadd.f32 %v624, %v1022
  %v1091 = vadd.f32 %v743, %v1023
  %v1092 = vadd.f32 %v745, %v1024
  %v1093 = vadd.f32 %v628, %v1025
  %v1094 = vadd.f32 %v630, %v1026
  %v1095 = vadd.f32 %v749, %v1027
  %v1096 = vadd.f32 %v751, %v1028
  %v1097 = vadd.f32 %v632, %v1029
  %v1098 = vadd.f32 %v634, %v1030
  %v1099 = vadd.f32 %v753, %v1031
  %v1100 = vadd.f32 %v755, %v1032
  %v1101 = vadd.f32 %v638, %v1033
  %v1102 = vadd.f32 %v640, %v1034
  %v1103 = vadd.f32 %v759, %v1035
  %v1104 = vadd.f32 %v761, %v1036
  %v1105 = vmul.f32 %v1037, 0.7978846
  %v1106 = vmul.f32 %v1038, 0.7978846
  %v1107 = vmul.f32 %v1039, 0.7978846
  %v1108 = vmul.f32 %v1040, 0.7978846
  %v1109 = vmul.f32 %v1041, 0.7978846
  %v1110 = vmul.f32 %v1042, 0.7978846
  %v1111 = vmul.f32 %v1043, 0.7978846
  %v1112 = vmul.f32 %v1044, 0.7978846
  %v1113 = vmul.f32 %v1045, 0.7978846
  %v1114 = vmul.f32 %v1046, 0.7978846
  %v1115 = vmul.f32 %v1047, 0.7978846
  %v1116 = vmul.f32 %v1048, 0.7978846
  %v1117 = vmul.f32 %v1049, 0.7978846
  %v1118 = vmul.f32 %v1050, 0.7978846
  %v1119 = vmul.f32 %v1051, 0.7978846
  %v1120 = vmul.f32 %v1052, 0.7978846
  %v1121 = vmul.f32 %v1053, 0.7978846
  %v1122 = vmul.f32 %v1054, 0.7978846
  %v1123 = vmul.f32 %v1055, 0.7978846
  %v1124 = vmul.f32 %v1056, 0.7978846
  %v1125 = vmul.f32 %v1057, 0.7978846
  %v1126 = vmul.f32 %v1058, 0.7978846
  %v1127 = vmul.f32 %v1059, 0.7978846
  %v1128 = vmul.f32 %v1060, 0.7978846
  %v1129 = vmul.f32 %v1061, 0.7978846
  %v1130 = vmul.f32 %v1062, 0.7978846
  %v1131 = vmul.f32 %v1063, 0.7978846
  %v1132 = vmul.f32 %v1064, 0.7978846
  %v1133 = vmul.f32 %v1065, 0.7978846
  %v1134 = vmul.f32 %v1066, 0.7978846
  %v1135 = vmul.f32 %v1067, 0.7978846
  %v1136 = vmul.f32 %v1068, 0.7978846
  %v1137 = vmul.f32 %v1069, 0.7978846
  %v1138 = vmul.f32 %v1070, 0.7978846
  %v1139 = vmul.f32 %v1071, 0.7978846
  %v1140 = vmul.f32 %v1072, 0.7978846
  %v1141 = vmul.f32 %v1073, 0.7978846
  %v1142 = vmul.f32 %v1074, 0.7978846
  %v1143 = vmul.f32 %v1075, 0.7978846
  %v1144 = vmul.f32 %v1076, 0.7978846
  %v1145 = vmul.f32 %v1077, 0.7978846
  %v1146 = vmul.f32 %v1078, 0.7978846
  %v1147 = vmul.f32 %v1079, 0.7978846
  %v1148 = vmul.f32 %v1080, 0.7978846
  %v1149 = vmul.f32 %v1081, 0.7978846
  %v1150 = vmul.f32 %v1082, 0.7978846
  %v1151 = vmul.f32 %v1083, 0.7978846
  %v1152 = vmul.f32 %v1084, 0.7978846
  %v1153 = vmul.f32 %v1085, 0.7978846
  %v1154 = vmul.f32 %v1086, 0.7978846
  %v1155 = vmul.f32 %v1087, 0.7978846
  %v1156 = vmul.f32 %v1088, 0.7978846
  %v1157 = vmul.f32 %v1089, 0.7978846
  %v1158 = vmul.f32 %v1090, 0.7978846
  %v1159 = vmul.f32 %v1091, 0.7978846
  %v1160 = vmul.f32 %v1092, 0.7978846
  %v1161 = vmul.f32 %v1093, 0.7978846
  %v1162 = vmul.f32 %v1094, 0.7978846
  %v1163 = vmul.f32 %v1095, 0.7978846
  %v1164 = vmul.f32 %v1096, 0.7978846
  %v1165 = vmul.f32 %v1097, 0.7978846
  %v1166 = vmul.f32 %v1098, 0.7978846
  %v1167 = vmul.f32 %v1099, 0.7978846
  %v1168 = vmul.f32 %v1100, 0.7978846
  %v1169 = vmul.f32 %v1101, 0.7978846
  %v1170 = vmul.f32 %v1102, 0.7978846
  %v1171 = vmul.f32 %v1103, 0.7978846
  %v1172 = vmul.f32 %v1104, 0.7978846
  %v1173 = vtanh.pop %v1105
  %v1174 = vtanh.pop %v1106
  %v1175 = vtanh.pop %v1107
  %v1176 = vtanh.pop %v1108
  %v1177 = vtanh.pop %v1109
  %v1178 = vtanh.pop %v1110
  %v1179 = vtanh.pop %v1111
  %v1180 = vtanh.pop %v1112
  %v1181 = vtanh.pop %v1113
  %v1182 = vtanh.pop %v1114
  %v1183 = vtanh.pop %v1115
  %v1184 = vtanh.pop %v1116
  %v1185 = vtanh.pop %v1117
  %v1186 = vtanh.pop %v1118
  %v1187 = vtanh.pop %v1119
  %v1188 = vtanh.pop %v1120
  %v1189 = vtanh.pop %v1121
  %v1190 = vtanh.pop %v1122
  %v1191 = vtanh.pop %v1123
  %v1192 = vtanh.pop %v1124
  %v1193 = vtanh.pop %v1125
  %v1194 = vtanh.pop %v1126
  %v1195 = vtanh.pop %v1127
  %v1196 = vtanh.pop %v1128
  %v1197 = vtanh.pop %v1129
  %v1198 = vtanh.pop %v1130
  %v1199 = vtanh.pop %v1131
  %v1200 = vtanh.pop %v1132
  %v1201 = vtanh.pop %v1133
  %v1202 = vtanh.pop %v1134
  %v1203 = vtanh.pop %v1135
  %v1204 = vtanh.pop %v1136
  %v1205 = vtanh.pop %v1137
  %v1206 = vtanh.pop %v1138
  %v1207 = vtanh.pop %v1139
  %v1208 = vtanh.pop %v1140
  %v1209 = vtanh.pop %v1141
  %v1210 = vtanh.pop %v1142
  %v1211 = vtanh.pop %v1143
  %v1212 = vtanh.pop %v1144
  %v1213 = vtanh.pop %v1145
  %v1214 = vtanh.pop %v1146
  %v1215 = vtanh.pop %v1147
  %v1216 = vtanh.pop %v1148
  %v1217 = vtanh.pop %v1149
  %v1218 = vtanh.pop %v1150
  %v1219 = vtanh.pop %v1151
  %v1220 = vtanh.pop %v1152
  %v1221 = vtanh.pop %v1153
  %v1222 = vtanh.pop %v1154
  %v1223 = vtanh.pop %v1155
  %v1224 = vtanh.pop %v1156
  %v1225 = vtanh.pop %v1157
  %v1226 = vtanh.pop %v1158
  %v1227 = vtanh.pop %v1159
  %v1228 = vtanh.pop %v1160
  %v1229 = vtanh.pop %v1161
  %v1230 = vtanh.pop %v1162
  %v1231 = vtanh.pop %v1163
  %v1232 = vtanh.pop %v1164
  %v1233 = vtanh.pop %v1165
  %v1234 = vtanh.pop %v1166
  %v1235 = vtanh.pop %v1167
  %v1236 = vtanh.pop %v1168
  %v1237 = vtanh.pop %v1169
  %v1238 = vtanh.pop %v1170
  %v1239 = vtanh.pop %v1171
  %v1240 = vtanh.pop %v1172
  %v1241 = vadd.f32 %v1173, 1.0
  %v1242 = vadd.f32 %v1174, 1.0
  %v1243 = vadd.f32 %v1175, 1.0
  %v1244 = vadd.f32 %v1176, 1.0
  %v1245 = vadd.f32 %v1177, 1.0
  %v1246 = vadd.f32 %v1178, 1.0
  %v1247 = vadd.f32 %v1179, 1.0
  %v1248 = vadd.f32 %v1180, 1.0
  %v1249 = vadd.f32 %v1181, 1.0
  %v1250 = vadd.f32 %v1182, 1.0
  %v1251 = vadd.f32 %v1183, 1.0
  %v1252 = vadd.f32 %v1184, 1.0
  %v1253 = vadd.f32 %v1185, 1.0
  %v1254 = vadd.f32 %v1186, 1.0
  %v1255 = vadd.f32 %v1187, 1.0
  %v1256 = vadd.f32 %v1188, 1.0
  %v1257 = vadd.f32 %v1189, 1.0
  %v1258 = vadd.f32 %v1190, 1.0
  %v1259 = vadd.f32 %v1191, 1.0
  %v1260 = vadd.f32 %v1192, 1.0
  %v1261 = vadd.f32 %v1193, 1.0
  %v1262 = vadd.f32 %v1194, 1.0
  %v1263 = vadd.f32 %v1195, 1.0
  %v1264 = vadd.f32 %v1196, 1.0
  %v1265 = vadd.f32 %v1197, 1.0
  %v1266 = vadd.f32 %v1198, 1.0
  %v1267 = vadd.f32 %v1199, 1.0
  %v1268 = vadd.f32 %v1200, 1.0
  %v1269 = vadd.f32 %v1201, 1.0
  %v1270 = vadd.f32 %v1202, 1.0
  %v1271 = vadd.f32 %v1203, 1.0
  %v1272 = vadd.f32 %v1204, 1.0
  %v1273 = vadd.f32 %v1205, 1.0
  %v1274 = vadd.f32 %v1206, 1.0
  %v1275 = vadd.f32 %v1207, 1.0
  %v1276 = vadd.f32 %v1208, 1.0
  %v1277 = vadd.f32 %v1209, 1.0
  %v1278 = vadd.f32 %v1210, 1.0
  %v1279 = vadd.f32 %v1211, 1.0
  %v1280 = vadd.f32 %v1212, 1.0
  %v1281 = vadd.f32 %v1213, 1.0
  %v1282 = vadd.f32 %v1214, 1.0
  %v1283 = vadd.f32 %v1215, 1.0
  %v1284 = vadd.f32 %v1216, 1.0
  %v1285 = vadd.f32 %v1217, 1.0
  %v1286 = vadd.f32 %v1218, 1.0
  %v1287 = vadd.f32 %v1219, 1.0
  %v1288 = vadd.f32 %v1220, 1.0
  %v1289 = vadd.f32 %v1221, 1.0
  %v1290 = vadd.f32 %v1222, 1.0
  %v1291 = vadd.f32 %v1223, 1.0
  %v1292 = vadd.f32 %v1224, 1.0
  %v1293 = vadd.f32 %v1225, 1.0
  %v1294 = vadd.f32 %v1226, 1.0
  %v1295 = vadd.f32 %v1227, 1.0
  %v1296 = vadd.f32 %v1228, 1.0
  %v1297 = vadd.f32 %v1229, 1.0
  %v1298 = vadd.f32 %v1230, 1.0
  %v1299 = vadd.f32 %v1231, 1.0
  %v1300 = vadd.f32 %v1232, 1.0
  %v1301 = vadd.f32 %v1233, 1.0
  %v1302 = vadd.f32 %v1234, 1.0
  %v1303 = vadd.f32 %v1235, 1.0
  %v1304 = vadd.f32 %v1236, 1.0
  %v1305 = vadd.f32 %v1237, 1.0
  %v1306 = vadd.f32 %v1238, 1.0
  %v1307 = vadd.f32 %v1239, 1.0
  %v1308 = vadd.f32 %v1240, 1.0
  %v1309 = vmul.f32 %v765, %v1241
  %v1310 = vmul.f32 %v766, %v1242
  %v1311 = vmul.f32 %v767, %v1243
  %v1312 = vmul.f32 %v768, %v1244
  %v1313 = vmul.f32 %v769, %v1245
  %v1314 = vmul.f32 %v770, %v1246
  %v1315 = vmul.f32 %v771, %v1247
  %v1316 = vmul.f32 %v772, %v1248
  %v1317 = vmul.f32 %v773, %v1249
  %v1318 = vmul.f32 %v774, %v1250
  %v1319 = vmul.f32 %v775, %v1251
  %v1320 = vmul.f32 %v776, %v1252
  %v1321 = vmul.f32 %v777, %v1253
  %v1322 = vmul.f32 %v778, %v1254
  %v1323 = vmul.f32 %v779, %v1255
  %v1324 = vmul.f32 %v780, %v1256
  %v1325 = vmul.f32 %v781, %v1257
  %v1326 = vmul.f32 %v782, %v1258
  %v1327 = vmul.f32 %v783, %v1259
  %v1328 = vmul.f32 %v784, %v1260
  %v1329 = vmul.f32 %v785, %v1261
  %v1330 = vmul.f32 %v786, %v1262
  %v1331 = vmul.f32 %v787, %v1263
  %v1332 = vmul.f32 %v788, %v1264
  %v1333 = vmul.f32 %v789, %v1265
  %v1334 = vmul.f32 %v790, %v1266
  %v1335 = vmul.f32 %v791, %v1267
  %v1336 = vmul.f32 %v792, %v1268
  %v1337 = vmul.f32 %v793, %v1269
  %v1338 = vmul.f32 %v794, %v1270
  %v1339 = vmul.f32 %v795, %v1271
  %v1340 = vmul.f32 %v796, %v1272
  %v1341 = vmul.f32 %v797, %v1273
  %v1342 = vmul.f32 %v798, %v1274
  %v1343 = vmul.f32 %v799, %v1275
  %v1344 = vmul.f32 %v800, %v1276
  %v1345 = vmul.f32 %v801, %v1277
  %v1346 = vmul.f32 %v802, %v1278
  %v1347 = vmul.f32 %v803, %v1279
  %v1348 = vmul.f32 %v804, %v1280
  %v1349 = vmul.f32 %v805, %v1281
  %v1350 = vmul.f32 %v806, %v1282
  %v1351 = vmul.f32 %v807, %v1283
  %v1352 = vmul.f32 %v808, %v1284
  %v1353 = vmul.f32 %v809, %v1285
  %v1354 = vmul.f32 %v810, %v1286
  %v1355 = vmul.f32 %v811, %v1287
  %v1356 = vmul.f32 %v812, %v1288
  %v1357 = vmul.f32 %v813, %v1289
  %v1358 = vmul.f32 %v814, %v1290
  %v1359 = vmul.f32 %v815, %v1291
  %v1360 = vmul.f32 %v816, %v1292
  %v1361 = vmul.f32 %v817, %v1293
  %v1362 = vmul.f32 %v818, %v1294
  %v1363 = vmul.f32 %v819, %v1295
  %v1364 = vmul.f32 %v820, %v1296
  %v1365 = vmul.f32 %v821, %v1297
  %v1366 = vmul.f32 %v822, %v1298
  %v1367 = vmul.f32 %v823, %v1299
  %v1368 = vmul.f32 %v824, %v1300
  %v1369 = vmul.f32 %v825, %v1301
  %v1370 = vmul.f32 %v826, %v1302
  %v1371 = vmul.f32 %v827, %v1303
  %v1372 = vmul.f32 %v828, %v1304
  %v1373 = vmul.f32 %v829, %v1305
  %v1374 = vmul.f32 %v830, %v1306
  %v1375 = vmul.f32 %v831, %v1307
  %v1376 = vmul.f32 %v832, %v1308
  %v1377 = vpack.c.bf16 %v1313, %v1309
  %v1378 = vpack.c.bf16 %v1314, %v1310
  %v1379 = vpack.c.bf16 %v1315, %v1311
  %v1380 = vpack.c.bf16 %v1316, %v1312
  %v1381 = vpack.c.bf16 %v1321, %v1317
  %v1382 = vpack.c.bf16 %v1322, %v1318
  %v1383 = vpack.c.bf16 %v1323, %v1319
  %v1384 = vpack.c.bf16 %v1324, %v1320
  %v1385 = vpack.c.bf16 %v1329, %v1325
  %v1386 = vpack.c.bf16 %v1330, %v1326
  %v1387 = vpack.c.bf16 %v1331, %v1327
  %v1388 = vpack.c.bf16 %v1332, %v1328
  %v1389 = vpack.c.bf16 %v1337, %v1333
  %v1390 = vpack.c.bf16 %v1338, %v1334
  %v1391 = vpack.c.bf16 %v1339, %v1335
  %v1392 = vpack.c.bf16 %v1340, %v1336
  %v1393 = vpack.c.bf16 %v1345, %v1341
  %v1394 = vpack.c.bf16 %v1346, %v1342
  %v1395 = vpack.c.bf16 %v1347, %v1343
  %v1396 = vpack.c.bf16 %v1348, %v1344
  %v1397 = vpack.c.bf16 %v1353, %v1349
  %v1398 = vpack.c.bf16 %v1354, %v1350
  %v1399 = vpack.c.bf16 %v1355, %v1351
  %v1400 = vpack.c.bf16 %v1356, %v1352
  %v1401 = vpack.c.bf16 %v1361, %v1357
  %v1402 = vpack.c.bf16 %v1362, %v1358
  %v1403 = vpack.c.bf16 %v1363, %v1359
  %v1404 = vpack.c.bf16 %v1364, %v1360
  %v1405 = vpack.c.bf16 %v1369, %v1365
  %v1406 = vpack.c.bf16 %v1370, %v1366
  %v1407 = vpack.c.bf16 %v1371, %v1367
  %v1408 = vpack.c.bf16 %v1372, %v1368
  %v1409 = vpack.c.bf16 %v1373, %v1373
  %v1410 = vpack.c.bf16 %v1374, %v1374
  %v1411 = vpack.c.bf16 %v1375, %v1375
  %v1412 = vpack.c.bf16 %v1376, %v1376
  %v1413 = vld [vmem:[%s5] sm:$0xf]
  %v1414 = vld [vmem:[%s5 + $0x4] sm:$0xf]
  %v1415 = vld [vmem:[%s5 + $0x8] sm:$0xf]
  %v1416 = vld [vmem:[%s5 + $0xc] sm:$0xf]
  %v1417 = vld [vmem:[%s5 + $0x10] sm:$0xf]
  %v1418 = vld [vmem:[%s5 + $0x14] sm:$0xf]
  %v1419 = vld [vmem:[%s5 + $0x18] sm:$0xf]
  %v1420 = vld [vmem:[%s5 + $0x1c] sm:$0xf]
  %v1421 = vld [vmem:[%s5 + $0x20] sm:$0xf]
  %v1422 = vld [vmem:[%s5 + $0x24] sm:$0xf]
  %v1423 = vld [vmem:[%s5 + $0x28] sm:$0xf]
  %v1424 = vld [vmem:[%s5 + $0x2c] sm:$0xf]
  %v1425 = vld [vmem:[%s5 + $0x30] sm:$0xf]
  %v1426 = vld [vmem:[%s5 + $0x34] sm:$0xf]
  %v1427 = vld [vmem:[%s5 + $0x38] sm:$0xf]
  %v1428 = vld [vmem:[%s5 + $0x3c] sm:$0xf]
  %v1429 = vld [vmem:[%s5 + $0x40] sm:$0xf]
  %v1430 = vld [vmem:[%s5 + $0x44] sm:$0xf]
  %v1431 = vld [vmem:[%s5 + $0x48] sm:$0xf]
  %v1432 = vld [vmem:[%s5 + $0x4c] sm:$0xf]
  %v1433 = vld [vmem:[%s5 + $0x50] sm:$0xf]
  %v1434 = vld [vmem:[%s5 + $0x54] sm:$0xf]
  %v1435 = vld [vmem:[%s5 + $0x58] sm:$0xf]
  %v1436 = vld [vmem:[%s5 + $0x5c] sm:$0xf]
  %v1437 = vld [vmem:[%s5 + $0x60] sm:$0xf]
  %v1438 = vld [vmem:[%s5 + $0x64] sm:$0xf]
  %v1439 = vld [vmem:[%s5 + $0x68] sm:$0xf]
  %v1440 = vld [vmem:[%s5 + $0x6c] sm:$0xf]
  %v1441 = vld [vmem:[%s5 + $0x70] sm:$0xf]
  %v1442 = vld [vmem:[%s5 + $0x74] sm:$0xf]
  %v1443 = vld [vmem:[%s5 + $0x78] sm:$0xf]
  %v1444 = vld [vmem:[%s5 + $0x7c] sm:$0xf]
  %v1445 = vld [vmem:[%s5 + $0x80] sm:$0xf]
  %v1446 = vld [vmem:[%s5 + $0x84] sm:$0xf]
  %v1447 = vld [vmem:[%s5 + $0x88] sm:$0xf]
  %v1448 = vld [vmem:[%s5 + $0x8c] sm:$0xf]
  %v1449 = vld [vmem:[%s5 + $0x90] sm:$0xf]
  %v1450 = vld [vmem:[%s5 + $0x94] sm:$0xf]
  %v1451 = vld [vmem:[%s5 + $0x98] sm:$0xf]
  %v1452 = vld [vmem:[%s5 + $0x9c] sm:$0xf]
  %v1453 = vld [vmem:[%s5 + $0xa0] sm:$0xf]
  %v1454 = vld [vmem:[%s5 + $0xa4] sm:$0xf]
  %v1455 = vld [vmem:[%s5 + $0xa8] sm:$0xf]
  %v1456 = vld [vmem:[%s5 + $0xac] sm:$0xf]
  %v1457 = vld [vmem:[%s5 + $0xb0] sm:$0xf]
  %v1458 = vld [vmem:[%s5 + $0xb4] sm:$0xf]
  %v1459 = vld [vmem:[%s5 + $0xb8] sm:$0xf]
  %v1460 = vld [vmem:[%s5 + $0xbc] sm:$0xf]
  %v1461 = vld [vmem:[%s5 + $0xc0] sm:$0xf]
  %v1462 = vld [vmem:[%s5 + $0xc4] sm:$0xf]
  %v1463 = vld [vmem:[%s5 + $0xc8] sm:$0xf]
  %v1464 = vld [vmem:[%s5 + $0xcc] sm:$0xf]
  %v1465 = vld [vmem:[%s5 + $0xd0] sm:$0xf]
  %v1466 = vld [vmem:[%s5 + $0xd4] sm:$0xf]
  %v1467 = vld [vmem:[%s5 + $0xd8] sm:$0xf]
  %v1468 = vld [vmem:[%s5 + $0xdc] sm:$0xf]
  %v1469 = vld [vmem:[%s5 + $0xe0] sm:$0xf]
  %v1470 = vld [vmem:[%s5 + $0xe4] sm:$0xf]
  %v1471 = vld [vmem:[%s5 + $0xe8] sm:$0xf]
  %v1472 = vld [vmem:[%s5 + $0xec] sm:$0xf]
  %v1473 = vld [vmem:[%s5 + $0xf0] sm:$0xf]
  %v1474 = vld [vmem:[%s5 + $0xf4] sm:$0xf]
  %v1475 = vld [vmem:[%s5 + $0xf8] sm:$0xf]
  %v1476 = vld [vmem:[%s5 + $0xfc] sm:$0xf]
  %v1477 = vld [vmem:[%s6] sm:$0x1]
  %v1479 = vlaneseq
  %v1480 = vshrl.u32 %v1479, 7
  %v1481 = vsub.s32 0, %v1480
  %v1482 = vrot.slane %v1477, %v1481
  %v1548 = vunpack.c.l.b16 %v1413
  %v1549 = vunpack.c.l.b16 %v1414
  %v1550 = vunpack.c.l.b16 %v1415
  %v1551 = vunpack.c.l.b16 %v1416
  %v1552 = vunpack.c.l.b16 %v1417
  %v1553 = vunpack.c.l.b16 %v1418
  %v1554 = vunpack.c.l.b16 %v1419
  %v1555 = vunpack.c.l.b16 %v1420
  %v1556 = vunpack.c.l.b16 %v1421
  %v1557 = vunpack.c.l.b16 %v1422
  %v1558 = vunpack.c.l.b16 %v1423
  %v1559 = vunpack.c.l.b16 %v1424
  %v1560 = vunpack.c.l.b16 %v1425
  %v1561 = vunpack.c.l.b16 %v1426
  %v1562 = vunpack.c.l.b16 %v1427
  %v1563 = vunpack.c.l.b16 %v1428
  %v1564 = vunpack.c.l.b16 %v1429
  %v1565 = vunpack.c.l.b16 %v1430
  %v1566 = vunpack.c.l.b16 %v1431
  %v1567 = vunpack.c.l.b16 %v1432
  %v1568 = vunpack.c.l.b16 %v1433
  %v1569 = vunpack.c.l.b16 %v1434
  %v1570 = vunpack.c.l.b16 %v1435
  %v1571 = vunpack.c.l.b16 %v1436
  %v1572 = vunpack.c.l.b16 %v1437
  %v1573 = vunpack.c.l.b16 %v1438
  %v1574 = vunpack.c.l.b16 %v1439
  %v1575 = vunpack.c.l.b16 %v1440
  %v1576 = vunpack.c.l.b16 %v1441
  %v1577 = vunpack.c.l.b16 %v1442
  %v1578 = vunpack.c.l.b16 %v1443
  %v1579 = vunpack.c.l.b16 %v1444
  %v1580 = vunpack.c.l.b16 %v1445
  %v1581 = vunpack.c.l.b16 %v1446
  %v1582 = vunpack.c.l.b16 %v1447
  %v1583 = vunpack.c.l.b16 %v1448
  %v1584 = vunpack.c.l.b16 %v1449
  %v1585 = vunpack.c.l.b16 %v1450
  %v1586 = vunpack.c.l.b16 %v1451
  %v1587 = vunpack.c.l.b16 %v1452
  %v1588 = vunpack.c.l.b16 %v1453
  %v1589 = vunpack.c.l.b16 %v1454
  %v1590 = vunpack.c.l.b16 %v1455
  %v1591 = vunpack.c.l.b16 %v1456
  %v1592 = vunpack.c.l.b16 %v1457
  %v1593 = vunpack.c.l.b16 %v1458
  %v1594 = vunpack.c.l.b16 %v1459
  %v1595 = vunpack.c.l.b16 %v1460
  %v1596 = vunpack.c.l.b16 %v1461
  %v1597 = vunpack.c.l.b16 %v1462
  %v1598 = vunpack.c.l.b16 %v1463
  %v1599 = vunpack.c.l.b16 %v1464
  %v1600 = vunpack.c.l.b16 %v1465
  %v1601 = vunpack.c.l.b16 %v1466
  %v1602 = vunpack.c.l.b16 %v1467
  %v1603 = vunpack.c.l.b16 %v1468
  %v1604 = vunpack.c.l.b16 %v1469
  %v1605 = vunpack.c.l.b16 %v1470
  %v1606 = vunpack.c.l.b16 %v1471
  %v1607 = vunpack.c.l.b16 %v1472
  %v1608 = vunpack.c.l.b16 %v1473
  %v1609 = vunpack.c.l.b16 %v1474
  %v1610 = vunpack.c.l.b16 %v1475
  %v1611 = vunpack.c.l.b16 %v1476
  %v1612 = vpack.c.b16 %v1549, %v1548
  %v1613 = vpack.c.b16 %v1551, %v1550
  %v1614 = vpack.c.b16 %v1553, %v1552
  %v1615 = vpack.c.b16 %v1555, %v1554
  %v1616 = vpack.c.b16 %v1557, %v1556
  %v1617 = vpack.c.b16 %v1559, %v1558
  %v1618 = vpack.c.b16 %v1561, %v1560
  %v1619 = vpack.c.b16 %v1563, %v1562
  %v1620 = vpack.c.b16 %v1565, %v1564
  %v1621 = vpack.c.b16 %v1567, %v1566
  %v1622 = vpack.c.b16 %v1569, %v1568
  %v1623 = vpack.c.b16 %v1571, %v1570
  %v1624 = vpack.c.b16 %v1573, %v1572
  %v1625 = vpack.c.b16 %v1575, %v1574
  %v1626 = vpack.c.b16 %v1577, %v1576
  %v1627 = vpack.c.b16 %v1579, %v1578
  %v1628 = vpack.c.b16 %v1581, %v1580
  %v1629 = vpack.c.b16 %v1583, %v1582
  %v1630 = vpack.c.b16 %v1585, %v1584
  %v1631 = vpack.c.b16 %v1587, %v1586
  %v1632 = vpack.c.b16 %v1589, %v1588
  %v1633 = vpack.c.b16 %v1591, %v1590
  %v1634 = vpack.c.b16 %v1593, %v1592
  %v1635 = vpack.c.b16 %v1595, %v1594
  %v1636 = vpack.c.b16 %v1597, %v1596
  %v1637 = vpack.c.b16 %v1599, %v1598
  %v1638 = vpack.c.b16 %v1601, %v1600
  %v1639 = vpack.c.b16 %v1603, %v1602
  %v1640 = vpack.c.b16 %v1605, %v1604
  %v1641 = vpack.c.b16 %v1607, %v1606
  %v1642 = vpack.c.b16 %v1609, %v1608
  %v1643 = vpack.c.b16 %v1611, %v1610
  %1676 = vmatprep.subr.bf16.mxu0 0
  %1677 = vmatpush1.bf16.msra.mxu0 %v1612
  %1678 = vmatprep.subr.bf16.mxu0 0
  %1679 = vmatpush1.bf16.msra.mxu0 %v1613
  %1680 = vmatprep.subr.bf16.mxu0 0
  %1681 = vmatpush1.bf16.msra.mxu0 %v1614
  %1682 = vmatprep.subr.bf16.mxu0 0
  %1683 = vmatpush1.bf16.msra.mxu0 %v1615
  %1684 = vmatprep.subr.bf16.mxu0 0
  %1685 = vmatpush1.bf16.msra.mxu0 %v1616
  %1686 = vmatprep.subr.bf16.mxu0 0
  %1687 = vmatpush1.bf16.msra.mxu0 %v1617
  %1688 = vmatprep.subr.bf16.mxu0 0
  %1689 = vmatpush1.bf16.msra.mxu0 %v1618
  %1690 = vmatprep.subr.bf16.mxu0 0
  %1691 = vmatpush1.bf16.msra.mxu0 %v1619
  %1692 = vmatprep.subr.bf16.mxu0 0
  %1693 = vmatpush1.bf16.msra.mxu0 %v1620
  %1694 = vmatprep.subr.bf16.mxu0 0
  %1695 = vmatpush1.bf16.msra.mxu0 %v1621
  %1696 = vmatprep.subr.bf16.mxu0 0
  %1697 = vmatpush1.bf16.msra.mxu0 %v1622
  %1698 = vmatprep.subr.bf16.mxu0 0
  %1699 = vmatpush1.bf16.msra.mxu0 %v1623
  %1700 = vmatprep.subr.bf16.mxu0 0
  %1701 = vmatpush1.bf16.msra.mxu0 %v1624
  %1702 = vmatprep.subr.bf16.mxu0 0
  %1703 = vmatpush1.bf16.msra.mxu0 %v1625
  %1704 = vmatprep.subr.bf16.mxu0 0
  %1705 = vmatpush1.bf16.msra.mxu0 %v1626
  %1706 = vmatprep.subr.bf16.mxu0 0
  %1707 = vmatpush1.bf16.msra.mxu0 %v1627
  %1708 = vmatprep.mubr.bf16.mxu0 %v1378
  %1709 = vmatmul.mubr.bf16.gmra.mrb[0].mxu0 %v1377
  %v1710 = vpop.f32.mrb[0].mxu0
  %v1711 = vadd.f32 %v1482, %v1710
  %v1712 = vpop.f32.mrb[0].mxu0
  %v1713 = vpop.f32.mrb[0].mxu0
  %v1714 = vadd.f32 %v1482, %v1713
  %v1715 = vpop.f32.mrb[0].mxu0
  %1716 = vmatprep.mubr.bf16.mxu0 %v1382
  %1717 = vmatmul.mubr.bf16.gmra.mrb[0].mxu0 %v1381
  %v1718 = vpop.f32.mrb[0].mxu0
  %v1719 = vadd.f32 %v1482, %v1718
  %v1720 = vpop.f32.mrb[0].mxu0
  %v1721 = vpop.f32.mrb[0].mxu0
  %v1722 = vadd.f32 %v1482, %v1721
  %v1723 = vpop.f32.mrb[0].mxu0
  %1724 = vmatprep.mubr.bf16.mxu0 %v1386
  %1725 = vmatmul.mubr.bf16.gmra.mrb[0].mxu0 %v1385
  %v1726 = vpop.f32.mrb[0].mxu0
  %v1727 = vadd.f32 %v1482, %v1726
  %v1728 = vpop.f32.mrb[0].mxu0
  %v1729 = vpop.f32.mrb[0].mxu0
  %v1730 = vadd.f32 %v1482, %v1729
  %v1731 = vpop.f32.mrb[0].mxu0
  %1732 = vmatprep.mubr.bf16.mxu0 %v1390
  %1733 = vmatmul.mubr.bf16.gmra.mrb[0].mxu0 %v1389
  %v1734 = vpop.f32.mrb[0].mxu0
  %v1735 = vadd.f32 %v1482, %v1734
  %v1736 = vpop.f32.mrb[0].mxu0
  %v1737 = vpop.f32.mrb[0].mxu0
  %v1738 = vadd.f32 %v1482, %v1737
  %v1739 = vpop.f32.mrb[0].mxu0
  %1740 = vmatprep.mubr.bf16.mxu0 %v1394
  %1741 = vmatmul.mubr.bf16.gmra.mrb[0].mxu0 %v1393
  %v1742 = vpop.f32.mrb[0].mxu0
  %v1743 = vadd.f32 %v1482, %v1742
  %v1744 = vpop.f32.mrb[0].mxu0
  %v1745 = vpop.f32.mrb[0].mxu0
  %v1746 = vadd.f32 %v1482, %v1745
  %v1747 = vpop.f32.mrb[0].mxu0
  %1748 = vmatprep.mubr.bf16.mxu0 %v1398
  %1749 = vmatmul.mubr.bf16.gmra.mrb[0].mxu0 %v1397
  %v1750 = vpop.f32.mrb[0].mxu0
  %v1751 = vadd.f32 %v1482, %v1750
  %v1752 = vpop.f32.mrb[0].mxu0
  %v1753 = vpop.f32.mrb[0].mxu0
  %v1754 = vadd.f32 %v1482, %v1753
  %v1755 = vpop.f32.mrb[0].mxu0
  %1756 = vmatprep.mubr.bf16.mxu0 %v1402
  %1757 = vmatmul.mubr.bf16.gmra.mrb[0].mxu0 %v1401
  %v1758 = vpop.f32.mrb[0].mxu0
  %v1759 = vadd.f32 %v1482, %v1758
  %v1760 = vpop.f32.mrb[0].mxu0
  %v1761 = vpop.f32.mrb[0].mxu0
  %v1762 = vadd.f32 %v1482, %v1761
  %v1763 = vpop.f32.mrb[0].mxu0
  %1764 = vmatprep.mubr.bf16.mxu0 %v1406
  %1765 = vmatmul.mubr.bf16.gmra.mrb[0].mxu0 %v1405
  %v1766 = vpop.f32.mrb[0].mxu0
  %v1767 = vadd.f32 %v1482, %v1766
  %v1768 = vpop.f32.mrb[0].mxu0
  %v1769 = vpop.f32.mrb[0].mxu0
  %v1770 = vadd.f32 %v1482, %v1769
  %v1771 = vpop.f32.mrb[0].mxu0
  %1772 = vmatprep.mubr.bf16.mxu0 %v1410
  %1773 = vmatmul.mubr.bf16.gmra.mrb[0].mxu0 %v1409
  %v1774 = vpop.f32.mrb[0].mxu0
  %v1775 = vadd.f32 %v1482, %v1774
  %v1776 = vpop.f32.mrb[0].mxu0
  %v1777 = vpop.f32.mrb[0].mxu0
  %v1778 = vpop.f32.mrb[0].mxu0
  %1779 = vdwg.mxu0
  %1780 = vmatprep.subr.bf16.mxu0 0
  %1781 = vmatpush1.bf16.msra.mxu0 %v1628
  %1782 = vmatprep.subr.bf16.mxu0 0
  %1783 = vmatpush1.bf16.msra.mxu0 %v1629
  %1784 = vmatprep.subr.bf16.mxu0 0
  %1785 = vmatpush1.bf16.msra.mxu0 %v1630
  %1786 = vmatprep.subr.bf16.mxu0 0
  %1787 = vmatpush1.bf16.msra.mxu0 %v1631
  %1788 = vmatprep.subr.bf16.mxu0 0
  %1789 = vmatpush1.bf16.msra.mxu0 %v1632
  %1790 = vmatprep.subr.bf16.mxu0 0
  %1791 = vmatpush1.bf16.msra.mxu0 %v1633
  %1792 = vmatprep.subr.bf16.mxu0 0
  %1793 = vmatpush1.bf16.msra.mxu0 %v1634
  %1794 = vmatprep.subr.bf16.mxu0 0
  %1795 = vmatpush1.bf16.msra.mxu0 %v1635
  %1796 = vmatprep.subr.bf16.mxu0 0
  %1797 = vmatpush1.bf16.msra.mxu0 %v1636
  %1798 = vmatprep.subr.bf16.mxu0 0
  %1799 = vmatpush1.bf16.msra.mxu0 %v1637
  %1800 = vmatprep.subr.bf16.mxu0 0
  %1801 = vmatpush1.bf16.msra.mxu0 %v1638
  %1802 = vmatprep.subr.bf16.mxu0 0
  %1803 = vmatpush1.bf16.msra.mxu0 %v1639
  %1804 = vmatprep.subr.bf16.mxu0 0
  %1805 = vmatpush1.bf16.msra.mxu0 %v1640
  %1806 = vmatprep.subr.bf16.mxu0 0
  %1807 = vmatpush1.bf16.msra.mxu0 %v1641
  %1808 = vmatprep.subr.bf16.mxu0 0
  %1809 = vmatpush1.bf16.msra.mxu0 %v1642
  %1810 = vmatprep.subr.bf16.mxu0 0
  %1811 = vmatpush1.bf16.msra.mxu0 %v1643
  %1812 = vmatprep.mubr.bf16.mxu0 %v1380
  %1813 = vmatmul.mubr.bf16.gmra.mrb[0].mxu0 %v1379
  %v1814 = vpop.f32.mrb[0].mxu0
  %v1815 = vadd.f32 %v1711, %v1814
  %v1816 = vpop.f32.mrb[0].mxu0
  %v1817 = vpop.f32.mrb[0].mxu0
  %v1818 = vadd.f32 %v1714, %v1817
  %v1819 = vpop.f32.mrb[0].mxu0
  %1820 = vmatprep.mubr.bf16.mxu0 %v1384
  %1821 = vmatmul.mubr.bf16.gmra.mrb[0].mxu0 %v1383
  %v1822 = vpop.f32.mrb[0].mxu0
  %v1823 = vadd.f32 %v1719, %v1822
  %v1824 = vpop.f32.mrb[0].mxu0
  %v1825 = vpop.f32.mrb[0].mxu0
  %v1826 = vadd.f32 %v1722, %v1825
  %v1827 = vpop.f32.mrb[0].mxu0
  %1828 = vmatprep.mubr.bf16.mxu0 %v1388
  %1829 = vmatmul.mubr.bf16.gmra.mrb[0].mxu0 %v1387
  %v1830 = vpop.f32.mrb[0].mxu0
  %v1831 = vadd.f32 %v1727, %v1830
  %v1832 = vpop.f32.mrb[0].mxu0
  %v1833 = vpop.f32.mrb[0].mxu0
  %v1834 = vadd.f32 %v1730, %v1833
  %v1835 = vpop.f32.mrb[0].mxu0
  %1836 = vmatprep.mubr.bf16.mxu0 %v1392
  %1837 = vmatmul.mubr.bf16.gmra.mrb[0].mxu0 %v1391
  %v1838 = vpop.f32.mrb[0].mxu0
  %v1839 = vadd.f32 %v1735, %v1838
  %v1840 = vpop.f32.mrb[0].mxu0
  %v1841 = vpop.f32.mrb[0].mxu0
  %v1842 = vadd.f32 %v1738, %v1841
  %v1843 = vpop.f32.mrb[0].mxu0
  %1844 = vmatprep.mubr.bf16.mxu0 %v1396
  %1845 = vmatmul.mubr.bf16.gmra.mrb[0].mxu0 %v1395
  %v1846 = vpop.f32.mrb[0].mxu0
  %v1847 = vadd.f32 %v1743, %v1846
  %v1848 = vpop.f32.mrb[0].mxu0
  %v1849 = vpop.f32.mrb[0].mxu0
  %v1850 = vadd.f32 %v1746, %v1849
  %v1851 = vpop.f32.mrb[0].mxu0
  %1852 = vmatprep.mubr.bf16.mxu0 %v1400
  %1853 = vmatmul.mubr.bf16.gmra.mrb[0].mxu0 %v1399
  %v1854 = vpop.f32.mrb[0].mxu0
  %v1855 = vadd.f32 %v1751, %v1854
  %v1856 = vpop.f32.mrb[0].mxu0
  %v1857 = vpop.f32.mrb[0].mxu0
  %v1858 = vadd.f32 %v1754, %v1857
  %v1859 = vpop.f32.mrb[0].mxu0
  %1860 = vmatprep.mubr.bf16.mxu0 %v1404
  %1861 = vmatmul.mubr.bf16.gmra.mrb[0].mxu0 %v1403
  %v1862 = vpop.f32.mrb[0].mxu0
  %v1863 = vadd.f32 %v1759, %v1862
  %v1864 = vpop.f32.mrb[0].mxu0
  %v1865 = vpop.f32.mrb[0].mxu0
  %v1866 = vadd.f32 %v1762, %v1865
  %v1867 = vpop.f32.mrb[0].mxu0
  %1868 = vmatprep.mubr.bf16.mxu0 %v1408
  %1869 = vmatmul.mubr.bf16.gmra.mrb[0].mxu0 %v1407
  %v1870 = vpop.f32.mrb[0].mxu0
  %v1871 = vadd.f32 %v1767, %v1870
  %v1872 = vpop.f32.mrb[0].mxu0
  %v1873 = vpop.f32.mrb[0].mxu0
  %v1874 = vadd.f32 %v1770, %v1873
  %v1875 = vpop.f32.mrb[0].mxu0
  %1876 = vmatprep.mubr.bf16.mxu0 %v1412
  %1877 = vmatmul.mubr.bf16.gmra.mrb[0].mxu0 %v1411
  %v1878 = vpop.f32.mrb[0].mxu0
  %v1879 = vadd.f32 %v1775, %v1878
  %v1880 = vpop.f32.mrb[0].mxu0
  %v1881 = vpop.f32.mrb[0].mxu0
  %v1882 = vpop.f32.mrb[0].mxu0
  %1883 = vdwg.mxu0
  %v1884 = vadd.f32 %v44, %v1815
  %v1885 = vadd.f32 %v45, %v1818
  %v1886 = vadd.f32 %v46, %v1823
  %v1887 = vadd.f32 %v47, %v1826
  %v1888 = vadd.f32 %v48, %v1831
  %v1889 = vadd.f32 %v49, %v1834
  %v1890 = vadd.f32 %v50, %v1839
  %v1891 = vadd.f32 %v51, %v1842
  %v1892 = vadd.f32 %v52, %v1847
  %v1893 = vadd.f32 %v53, %v1850
  %v1894 = vadd.f32 %v54, %v1855
  %v1895 = vadd.f32 %v55, %v1858
  %v1896 = vadd.f32 %v56, %v1863
  %v1897 = vadd.f32 %v57, %v1866
  %v1898 = vadd.f32 %v58, %v1871
  %v1899 = vadd.f32 %v59, %v1874
  %v1900 = vadd.f32 %v60, %v1879
  %v1901 = vpack.c.bf16 %v1885, %v1884
  %v1902 = vpack.c.bf16 %v1887, %v1886
  %v1903 = vpack.c.bf16 %v1889, %v1888
  %v1904 = vpack.c.bf16 %v1891, %v1890
  %v1905 = vpack.c.bf16 %v1893, %v1892
  %v1906 = vpack.c.bf16 %v1895, %v1894
  %v1907 = vpack.c.bf16 %v1897, %v1896
  %v1908 = vpack.c.bf16 %v1899, %v1898
  %v1909 = vpack.c.bf16 %v1900, %v1900
  %v1919 = vunpack.c.l.b16 %v1901
  %v1920 = vunpack.c.h.b16 %v1901
  %v1921 = vunpack.c.l.b16 %v1902
  %v1922 = vunpack.c.h.b16 %v1902
  %v1923 = vunpack.c.l.b16 %v1903
  %v1924 = vunpack.c.h.b16 %v1903
  %v1925 = vunpack.c.l.b16 %v1904
  %v1926 = vunpack.c.h.b16 %v1904
  %v1927 = vunpack.c.l.b16 %v1905
  %v1928 = vunpack.c.h.b16 %v1905
  %v1929 = vunpack.c.l.b16 %v1906
  %v1930 = vunpack.c.h.b16 %v1906
  %v1931 = vunpack.c.l.b16 %v1907
  %v1932 = vunpack.c.h.b16 %v1907
  %v1933 = vunpack.c.l.b16 %v1908
  %v1934 = vunpack.c.h.b16 %v1908
  %v1935 = vunpack.c.l.b16 %v1909
  %v1936 = vpack.c.b16 %v1919, %v1919
  %v1937 = vpack.c.b16 %v1920, %v1920
  %v1938 = vpack.c.b16 %v1921, %v1921
  %v1939 = vpack.c.b16 %v1922, %v1922
  %v1940 = vpack.c.b16 %v1923, %v1923
  %v1941 = vpack.c.b16 %v1924, %v1924
  %v1942 = vpack.c.b16 %v1925, %v1925
  %v1943 = vpack.c.b16 %v1926, %v1926
  %v1944 = vpack.c.b16 %v1927, %v1927
  %v1945 = vpack.c.b16 %v1928, %v1928
  %v1946 = vpack.c.b16 %v1929, %v1929
  %v1947 = vpack.c.b16 %v1930, %v1930
  %v1948 = vpack.c.b16 %v1931, %v1931
  %v1949 = vpack.c.b16 %v1932, %v1932
  %v1950 = vpack.c.b16 %v1933, %v1933
  %v1951 = vpack.c.b16 %v1934, %v1934
  %v1952 = vpack.c.b16 %v1935, %v1935
  %1970 = vst [vmem:[%s7] sm:$0xf] %v1936
  %1971 = vst [vmem:[%s7 + $0x4] sm:$0xf] %v1937
  %1972 = vst [vmem:[%s7 + $0x8] sm:$0xf] %v1938
  %1973 = vst [vmem:[%s7 + $0xc] sm:$0xf] %v1939
  %1974 = vst [vmem:[%s7 + $0x10] sm:$0xf] %v1940
  %1975 = vst [vmem:[%s7 + $0x14] sm:$0xf] %v1941
  %1976 = vst [vmem:[%s7 + $0x18] sm:$0xf] %v1942
  %1977 = vst [vmem:[%s7 + $0x1c] sm:$0xf] %v1943
  %1978 = vst [vmem:[%s7 + $0x20] sm:$0xf] %v1944
  %1979 = vst [vmem:[%s7 + $0x24] sm:$0xf] %v1945
  %1980 = vst [vmem:[%s7 + $0x28] sm:$0xf] %v1946
  %1981 = vst [vmem:[%s7 + $0x2c] sm:$0xf] %v1947
  %1982 = vst [vmem:[%s7 + $0x30] sm:$0xf] %v1948
  %1983 = vst [vmem:[%s7 + $0x34] sm:$0xf] %v1949
  %1984 = vst [vmem:[%s7 + $0x38] sm:$0xf] %v1950
  %1985 = vst [vmem:[%s7 + $0x3c] sm:$0xf] %v1951
  %1986 = vst [vmem:[%s7 + $0x40] sm:$0x1] %v1952
  // Predicated region
  $region30: #{_lambda_.28} parent=0 // pred_check
    _
  $region31: #{_lambda_.28} parent=0 // pred_check_branch
    %1988 = sbr.rel (0) target = $region33
  $region32: #{_lambda_.28} parent=0 // pred_region
    _
  $region33: #{_lambda_.28} parent=0 // pred_fallthru
    _
  // Predicated region
  $region34: #{_lambda_.28} parent=0 // pred_check
    _
  $region35: #{_lambda_.28} parent=0 // pred_check_branch
    %1990 = sbr.rel (0) target = $region37
  $region36: #{_lambda_.28} parent=0 // pred_region
    _
  $region37: #{_lambda_.28} parent=0 // pred_fallthru
    _

</llo_original>
